<compile_context>
chip_gen: v5e
topology: v5e:2x2
jax: 0.10.0
libtpu: 0.0.40
codegen_flags: <defaults>
</compile_context>

<pallas_src>
import jax
import jax.numpy as jnp
from jax import lax
from jax.experimental import pallas as pl
from jax.experimental.pallas import tpu as pltpu

# ---- model hyperparameters (match VanillaCNN.__init__) ------------------------
IN_C, OUT_C, K = 3, 32, 7
H, W = 32, 32
OH, OW = H - K + 1, W - K + 1                   # 26, 26 (stride 1, padding 0)
PH, PW = (OH - 2) // 2 + 1, (OW - 2) // 2 + 1   # 13, 13
FC_IN = OUT_C * PH * PW                         # 5408
N_CLASSES = 10

# ---- padded / kernel-internal layout sizes ------------------------------------
LANE = 128
CW = IN_C * W                                   # 96 used lanes of the input slab
K_PAD = K * LANE                                # 896  contraction dim (kh, [ci,w | pad])
HALF_N = PW * OUT_C                             # 416  real conv cols per w-parity
HALF_PAD = 512                                  # padded to 4 vregs
CONV_N = 2 * HALF_PAD                           # 1024 conv cols (parity_w, pw, co | pad)
NCLS_PAD = LANE                                 # fc output padded to one full vreg
BLOCK_B = 8                                     # samples per grid step


# ---- fused Pallas kernel --------------------------------------------------------
def _fused_cnn_kernel(x_ref, wband_ref, cbias_ref, fcw_ref, fcb_ref, o_ref):
    # x_ref:     (32, B, 128)    input slab, lanes = ci*32 + w (96 used, rest 0), f32
    # wband_ref: (896, 1024)     banded conv weights, rows (kh, ci, w | pad),
    #                            cols (parity_w, pw, co | pad), bf16
    # cbias_ref: (1, 1024)       conv bias in the same column order (0 on pads), f32
    # fcw_ref:   (13, 512, 128)  fc weights, (ph, [pw, co | pad], class | pad), bf16
    # fcb_ref:   (1, 128)        fc bias (0 on pads), f32
    # o_ref:     (B, 128)        logits, first 10 lanes valid, f32
    xv = x_ref[...]
    bb = xv.shape[1]

    # ---- in-kernel patch building: 7 lane-aligned 128-wide taps -----------------
    taps = [xv[kh:kh + OH] for kh in range(K)]              # each (26, B, 128)
    patches = jnp.concatenate(taps, axis=-1)                # (26, B, 896)
    lhs = patches.reshape(OH * bb, K_PAD).astype(jnp.bfloat16)

    # ---- conv as one MXU matmul, M = 26*B ---------------------------------------
    conv = jnp.dot(lhs, wband_ref[...],
                   preferred_element_type=jnp.float32)      # (26B, 1024)
    conv = jnp.maximum(conv + cbias_ref[...], 0.0)          # bias + ReLU

    # ---- 2x2 / stride-2 max-pool on the VPU (fully lane-aligned) ----------------
    conv = conv.reshape(PH, 2, bb, CONV_N)                  # rows -> (ph, parity_h, b)
    rowmax = jnp.maximum(conv[:, 0], conv[:, 1])            # (13, B, 1024)
    pooled = jnp.maximum(rowmax[..., :HALF_PAD],
                         rowmax[..., HALF_PAD:])            # (13, B, 512)

    # ---- fused FC: batched contraction over ph, then leading-dim reduce ---------
    part = jnp.einsum("pbf,pfn->pbn",
                      pooled.astype(jnp.bfloat16), fcw_ref[...],
                      preferred_element_type=jnp.float32)   # (13, B, 128)
    logits = part.sum(axis=0) + fcb_ref[...]                # (B, 128)
    o_ref[...] = logits.astype(o_ref.dtype)


# ---- parameter prep (plain JAX, tiny) -------------------------------------------
def _banded_conv_weight(conv_w):
    # (896, 1024): rows (kh, ci, w | pad), cols (parity_w, pw, co | pad)
    # band[(kh,ci,w),(ow,co)] = conv_w[co,ci,kh,w-ow] if 0 <= w-ow < K else 0
    w_idx = jnp.arange(W)
    ow_idx = jnp.arange(OW)
    kw_rel = w_idx[:, None] - ow_idx[None, :]                  # (32, 26)
    valid = ((kw_rel >= 0) & (kw_rel < K)).astype(conv_w.dtype)
    kw_c = jnp.clip(kw_rel, 0, K - 1)
    wt = conv_w.transpose(2, 1, 3, 0)                          # (kh, ci, kw, co)
    band = wt[:, :, kw_c, :] * valid[None, None, :, :, None]   # (7, 3, 32, 26, 32)
    band = band.reshape(K, IN_C, W, PW, 2, OUT_C)              # split ow -> (pw, parity)
    band = band.transpose(0, 1, 2, 4, 3, 5)                    # (kh, ci, w, parity, pw, co)
    band = band.reshape(K, CW, 2, HALF_N)
    band = jnp.pad(band, ((0, 0), (0, LANE - CW),
                          (0, 0), (0, HALF_PAD - HALF_N)))     # (7, 128, 2, 512)
    return band.reshape(K_PAD, CONV_N)                         # (896, 1024)


@jax.jit
def vanilla_cnn_forward(x, conv_w, conv_b, fc_w, fc_b):
    n = x.shape[0]
    n_pad = ((n + BLOCK_B - 1) // BLOCK_B) * BLOCK_B
    if n_pad != n:
        x = jnp.pad(x, ((0, n_pad - n), (0, 0), (0, 0), (0, 0)))

    # Input slab: (H, N, 128), lanes = ci*32 + w, zero-padded from 96 -> 128.
    x_t = x.transpose(2, 0, 1, 3).reshape(H, n_pad, CW)
    x_t = jnp.pad(x_t, ((0, 0), (0, 0), (0, LANE - CW)))

    w_band = _banded_conv_weight(conv_w).astype(jnp.bfloat16)  # (896, 1024)
    half_bias = jnp.concatenate(
        [jnp.tile(conv_b, PW), jnp.zeros(HALF_PAD - HALF_N, conv_b.dtype)])
    cbias = jnp.tile(half_bias, 2)[None, :].astype(jnp.float32)        # (1, 1024)

    # FC weights in the kernel's feature order (ph, [pw, co]), padded to 512 / 128.
    fcw = (fc_w.reshape(N_CLASSES, OUT_C, PH, PW)
               .transpose(2, 3, 1, 0)                                  # (ph, pw, co, n)
               .reshape(PH, HALF_N, N_CLASSES))
    fcw = jnp.pad(fcw, ((0, 0), (0, HALF_PAD - HALF_N),
                        (0, NCLS_PAD - N_CLASSES))).astype(jnp.bfloat16)
    fcb = jnp.pad(fc_b, (0, NCLS_PAD - N_CLASSES))[None, :].astype(jnp.float32)

    steps = n_pad // BLOCK_B
    cost = pl.CostEstimate(
        flops=steps * (2 * OH * BLOCK_B * K_PAD * CONV_N
                       + 2 * BLOCK_B * PH * HALF_PAD * NCLS_PAD),
        transcendentals=0,
        bytes_accessed=(x_t.size * 4 + w_band.size * 2 + cbias.size * 4
                        + fcw.size * 2 + fcb.size * 4 + n_pad * NCLS_PAD * 4))

    out = pl.pallas_call(
        _fused_cnn_kernel,
        out_shape=jax.ShapeDtypeStruct((n_pad, NCLS_PAD), jnp.float32),
        grid=(steps,),
        in_specs=[
            pl.BlockSpec((H, BLOCK_B, LANE), lambda i: (0, i, 0)),
            pl.BlockSpec((K_PAD, CONV_N), lambda i: (0, 0)),
            pl.BlockSpec((1, CONV_N), lambda i: (0, 0)),
            pl.BlockSpec((PH, HALF_PAD, NCLS_PAD), lambda i: (0, 0, 0)),
            pl.BlockSpec((1, NCLS_PAD), lambda i: (0, 0)),
        ],
        out_specs=pl.BlockSpec((BLOCK_B, NCLS_PAD), lambda i: (i, 0)),
        compiler_params=pltpu.CompilerParams(
            dimension_semantics=("parallel",),
            vmem_limit_bytes=32 * 1024 * 1024),
        cost_estimate=cost,
    )(x_t, w_band, cbias, fcw, fcb)
    return out[:n, :N_CLASSES]


# ---- pure-JAX reference for verification ----------------------------------------
def reference_forward(x, conv_w, conv_b, fc_w, fc_b):
    y = lax.conv_general_dilated(
        x, conv_w, window_strides=(1, 1), padding="VALID",
        dimension_numbers=("NCHW", "OIHW", "NCHW"))
    y = jnp.maximum(y + conv_b[None, :, None, None], 0.0)
    y = lax.reduce_window(y, -jnp.inf, lax.max,
                          (1, 1, 2, 2), (1, 1, 2, 2), "VALID")
    y = y.reshape(x.shape[0], -1)
    return y @ fc_w.T + fc_b


if __name__ == "__main__":
    key = jax.random.PRNGKey(0)
    kx, k1, k2, k3, k4 = jax.random.split(key, 5)

    # deterministic synthetic parameters (PyTorch-default-like uniform init)
    cb = 1.0 / jnp.sqrt(float(IN_C * K * K))
    fb = 1.0 / jnp.sqrt(float(FC_IN))
    conv_w = jax.random.uniform(k1, (OUT_C, IN_C, K, K), jnp.float32, -cb, cb)
    conv_b = jax.random.uniform(k2, (OUT_C,), jnp.float32, -cb, cb)
    fc_w = jax.random.uniform(k3, (N_CLASSES, FC_IN), jnp.float32, -fb, fb)
    fc_b = jax.random.uniform(k4, (N_CLASSES,), jnp.float32, -fb, fb)

    # input: NCHW, matches nn.Conv2d(3, 32, 7) on 32x32 images
    x = jax.random.normal(kx, (2, IN_C, H, W), jnp.float32)

    out = vanilla_cnn_forward(x, conv_w, conv_b, fc_w, fc_b)
    out = jax.block_until_ready(out)
    assert out.shape == (2, N_CLASSES) and out.dtype == jnp.float32

    ref = reference_forward(x, conv_w, conv_b, fc_w, fc_b)
    assert jnp.allclose(out, ref, rtol=1e-2, atol=1e-2), "mismatch vs JAX reference"

    print("KERNEL_OK")
</pallas_src>

<mosaic_0001>
module attributes {stable_mosaic.version = 11 : i64} {
  func.func @_fused_cnn_kernel(%arg0: i32, %arg1: memref<32x8x128xf32, #tpu.memory_space<vmem>>, %arg2: memref<896x1024xbf16, #tpu.memory_space<vmem>>, %arg3: memref<1x1024xf32, #tpu.memory_space<vmem>>, %arg4: memref<13x512x128xbf16, #tpu.memory_space<vmem>>, %arg5: memref<1x128xf32, #tpu.memory_space<vmem>>, %arg6: memref<8x128xf32, #tpu.memory_space<vmem>>) attributes {dimension_semantics = [#tpu.dimension_semantics<parallel>], iteration_bounds = array<i64: 1>, scalar_prefetch = 0 : i64, scratch_operands = 0 : i64, tpu.core_type = #tpu.core_type<tc>, window_params = [{transform_indices = @transform_0, window_bounds = array<i64: 32, 8, 128>}, {pipeline_mode = #tpu.pipeline_mode<synchronous>, transform_indices = @transform_1, window_bounds = array<i64: 896, 1024>}, {pipeline_mode = #tpu.pipeline_mode<synchronous>, transform_indices = @transform_2, window_bounds = array<i64: 1, 1024>}, {pipeline_mode = #tpu.pipeline_mode<synchronous>, transform_indices = @transform_3, window_bounds = array<i64: 13, 512, 128>}, {pipeline_mode = #tpu.pipeline_mode<synchronous>, transform_indices = @transform_4, window_bounds = array<i64: 1, 128>}, {transform_indices = @transform_5, window_bounds = array<i64: 8, 128>}]} {
    %c0 = arith.constant 0 : index
    %c0_0 = arith.constant 0 : index
    %c0_1 = arith.constant 0 : index
    %0 = vector.load %arg1[%c0, %c0_0, %c0_1] : memref<32x8x128xf32, #tpu.memory_space<vmem>>, vector<32x8x128xf32>
    %1 = vector.extract_strided_slice %0 {offsets = [0, 0, 0], sizes = [26, 8, 128], strides = [1, 1, 1]} : vector<32x8x128xf32> to vector<26x8x128xf32>
    %2 = vector.extract_strided_slice %0 {offsets = [1, 0, 0], sizes = [26, 8, 128], strides = [1, 1, 1]} : vector<32x8x128xf32> to vector<26x8x128xf32>
    %3 = vector.extract_strided_slice %0 {offsets = [2, 0, 0], sizes = [26, 8, 128], strides = [1, 1, 1]} : vector<32x8x128xf32> to vector<26x8x128xf32>
    %4 = vector.extract_strided_slice %0 {offsets = [3, 0, 0], sizes = [26, 8, 128], strides = [1, 1, 1]} : vector<32x8x128xf32> to vector<26x8x128xf32>
    %5 = vector.extract_strided_slice %0 {offsets = [4, 0, 0], sizes = [26, 8, 128], strides = [1, 1, 1]} : vector<32x8x128xf32> to vector<26x8x128xf32>
    %6 = vector.extract_strided_slice %0 {offsets = [5, 0, 0], sizes = [26, 8, 128], strides = [1, 1, 1]} : vector<32x8x128xf32> to vector<26x8x128xf32>
    %7 = vector.extract_strided_slice %0 {offsets = [6, 0, 0], sizes = [26, 8, 128], strides = [1, 1, 1]} : vector<32x8x128xf32> to vector<26x8x128xf32>
    %8 = tpu.concatenate %1, %2, %3, %4, %5, %6, %7 in 2 : vector<26x8x128xf32>, vector<26x8x128xf32>, vector<26x8x128xf32>, vector<26x8x128xf32>, vector<26x8x128xf32>, vector<26x8x128xf32>, vector<26x8x128xf32> -> vector<26x8x896xf32>
    %9 = vector.shape_cast %8 : vector<26x8x896xf32> to vector<208x896xf32>
    %10 = arith.truncf %9 : vector<208x896xf32> to vector<208x896xbf16>
    %c0_2 = arith.constant 0 : index
    %c0_3 = arith.constant 0 : index
    %11 = vector.load %arg2[%c0_2, %c0_3] : memref<896x1024xbf16, #tpu.memory_space<vmem>>, vector<896x1024xbf16>
    %cst = arith.constant dense<0.000000e+00> : vector<208x1024xf32>
    %12 = tpu.matmul %10, %11, %cst {dimension_numbers = #tpu.dot_dimension_numbers<[1], [0], [0], [1], [0, 0, 1, 1], [], []>} : vector<208x896xbf16>, vector<896x1024xbf16>, vector<208x1024xf32> -> vector<208x1024xf32>
    %c0_4 = arith.constant 0 : index
    %c0_5 = arith.constant 0 : index
    %13 = vector.load %arg3[%c0_4, %c0_5] : memref<1x1024xf32, #tpu.memory_space<vmem>>, vector<1x1024xf32>
    %14 = vector.broadcast %13 : vector<1x1024xf32> to vector<208x1024xf32>
    %15 = arith.addf %12, %14 : vector<208x1024xf32>
    %cst_6 = arith.constant 0.000000e+00 : f32
    %16 = vector.broadcast %cst_6 : f32 to vector<208x1024xf32>
    %17 = arith.maximumf %15, %16 : vector<208x1024xf32>
    %18 = vector.shape_cast %17 : vector<208x1024xf32> to vector<13x2x8x1024xf32>
    %19 = vector.extract_strided_slice %18 {offsets = [0, 0, 0, 0], sizes = [13, 1, 8, 1024], strides = [1, 1, 1, 1]} : vector<13x2x8x1024xf32> to vector<13x1x8x1024xf32>
    %20 = vector.shape_cast %19 : vector<13x1x8x1024xf32> to vector<13x8x1024xf32>
    %21 = vector.extract_strided_slice %18 {offsets = [0, 1, 0, 0], sizes = [13, 1, 8, 1024], strides = [1, 1, 1, 1]} : vector<13x2x8x1024xf32> to vector<13x1x8x1024xf32>
    %22 = vector.shape_cast %21 : vector<13x1x8x1024xf32> to vector<13x8x1024xf32>
    %23 = arith.maximumf %20, %22 : vector<13x8x1024xf32>
    %24 = vector.extract_strided_slice %23 {offsets = [0, 0, 0], sizes = [13, 8, 512], strides = [1, 1, 1]} : vector<13x8x1024xf32> to vector<13x8x512xf32>
    %25 = vector.extract_strided_slice %23 {offsets = [0, 0, 512], sizes = [13, 8, 512], strides = [1, 1, 1]} : vector<13x8x1024xf32> to vector<13x8x512xf32>
    %26 = arith.maximumf %24, %25 : vector<13x8x512xf32>
    %27 = arith.truncf %26 : vector<13x8x512xf32> to vector<13x8x512xbf16>
    %c0_7 = arith.constant 0 : index
    %c0_8 = arith.constant 0 : index
    %c0_9 = arith.constant 0 : index
    %28 = vector.load %arg4[%c0_7, %c0_8, %c0_9] : memref<13x512x128xbf16, #tpu.memory_space<vmem>>, vector<13x512x128xbf16>
    "tpu.trace_start"() <{level = 10 : i32, message = "pbf,pfn->pbn"}> : () -> ()
    %cst_10 = arith.constant dense<0.000000e+00> : vector<13x8x128xf32>
    %29 = tpu.matmul %27, %28, %cst_10 {dimension_numbers = #tpu.dot_dimension_numbers<[2], [1], [1], [2], [0, 0, 0, 1, 1, 2], [0], [0]>} : vector<13x8x512xbf16>, vector<13x512x128xbf16>, vector<13x8x128xf32> -> vector<13x8x128xf32>
    "tpu.trace_stop"() : () -> ()
    %cst_11 = arith.constant dense<0.000000e+00> : vector<8x128xf32>
    %30 = vector.multi_reduction <add>, %29, %cst_11 [0] : vector<13x8x128xf32> to vector<8x128xf32>
    %c0_12 = arith.constant 0 : index
    %c0_13 = arith.constant 0 : index
    %31 = vector.load %arg5[%c0_12, %c0_13] : memref<1x128xf32, #tpu.memory_space<vmem>>, vector<1x128xf32>
    %32 = vector.broadcast %31 : vector<1x128xf32> to vector<8x128xf32>
    %33 = arith.addf %30, %32 : vector<8x128xf32>
    %c0_14 = arith.constant 0 : index
    %c0_15 = arith.constant 0 : index
    %34 = vector.load %arg6[%c0_14, %c0_15] : memref<8x128xf32, #tpu.memory_space<vmem>>, vector<8x128xf32>
    tpu.vector_store %arg6[%c0_14, %c0_15], %33 {strides = array<i32>} : memref<8x128xf32, #tpu.memory_space<vmem>>, vector<8x128xf32>,
    return
  }
  func.func @transform_0(%arg0: i32) -> (i32, i32, i32) {
    %c0_i32 = arith.constant 0 : i32
    %c0_i32_0 = arith.constant 0 : i32
    %c0_i32_1 = arith.constant 0 : i32
    return %c0_i32, %arg0, %c0_i32_0 : i32, i32, i32
  }
  func.func @transform_1(%arg0: i32) -> (i32, i32) {
    %c0_i32 = arith.constant 0 : i32
    %c0_i32_0 = arith.constant 0 : i32
    %c0_i32_1 = arith.constant 0 : i32
    return %c0_i32, %c0_i32_0 : i32, i32
  }
  func.func @transform_2(%arg0: i32) -> (i32, i32) {
    %c0_i32 = arith.constant 0 : i32
    %c0_i32_0 = arith.constant 0 : i32
    %c0_i32_1 = arith.constant 0 : i32
    return %c0_i32, %c0_i32_0 : i32, i32
  }
  func.func @transform_3(%arg0: i32) -> (i32, i32, i32) {
    %c0_i32 = arith.constant 0 : i32
    %c0_i32_0 = arith.constant 0 : i32
    %c0_i32_1 = arith.constant 0 : i32
    %c0_i32_2 = arith.constant 0 : i32
    return %c0_i32, %c0_i32_0, %c0_i32_1 : i32, i32, i32
  }
  func.func @transform_4(%arg0: i32) -> (i32, i32) {
    %c0_i32 = arith.constant 0 : i32
    %c0_i32_0 = arith.constant 0 : i32
    %c0_i32_1 = arith.constant 0 : i32
    return %c0_i32, %c0_i32_0 : i32, i32
  }
  func.func @transform_5(%arg0: i32) -> (i32, i32) {
    %c0_i32 = arith.constant 0 : i32
    %c0_i32_0 = arith.constant 0 : i32
    return %arg0, %c0_i32 : i32, i32
  }
}

</mosaic_0001>

<llo_original>
// kernel: tile.13
$region0: #{tile.13}
  #allocation0 [shape = 's32[1]{0}', space=sflag, size = 0x4, scoped, tag = 'scoped memory for tile.13']
  %s0 = inlined_call_operand.vmem [shape: f32[32], index: 0, kind: input, shape index: {}]
  %s1 = inlined_call_operand.vmem [shape: f32[13,32], index: 1, kind: output, shape index: {}]
  // Predicated region
  $region2: #{tile.13} parent=0 // pred_check
    _
  $region3: #{tile.13} parent=0 // pred_check_branch
    %3 = sbr.rel (0) target = $region5
  $region4: #{tile.13} parent=0 // pred_region
    _
  $region5: #{tile.13} parent=0 // pred_fallthru
    _
  %v4 = vld [vmem:[%s0] ss:$0 sm:$0xff]
  %5 = vst [vmem:[%s1] sm:$0xff] %v4
  %s6 = scalar_lea.vmem %s1, 8
  %7 = vst [vmem:[%s6] sm:$0xff] %v4

// kernel: tile.14
$region0: #{tile.14}
  %s0 = inlined_call_operand.vmem [shape: f32[13,32], index: 0, kind: input, shape index: {}]
  %s1 = inlined_call_operand.vmem [shape: f32[416], index: 1, kind: output, shape index: {}]
  $region1: #{tile.14} parent=0
    #allocation0 [shape = 'u8[4096]{0}', space=vmem, size = 0x1000, scoped, tag = 'scoped mem for output reshape']
    %v2 = vld [vmem:[%s0] ss:$4 sm:$0xf]
    %vm3 = vcmask 261120
    %4 = vst.msk [vmem:[#allocation0] sm:$0xf] %vm3, %v2
    %s5 = scalar_lea.vmem %s0, 3
    %v6 = vld [vmem:[%s5] ss:$4 sm:$0x7]
    %7 = vrot.lane.b32.xlu0 %v6, 96
    %v8 = vpop.permute.xlu0 %7
    %vm9 = vcmask 1048320
    %10 = vst.msk [vmem:[#allocation0] sm:$0x7] %vm9, %v8
    %s11 = scalar_lea.vmem %s0, 2
    %v12 = vld [vmem:[%s11] ss:$4 sm:$0x7]
    %13 = vrot.lane.b32.xlu0 %v12, 64
    %v14 = vpop.permute.xlu0 %13
    %vm15 = vcmask 785920
    %16 = vst.msk [vmem:[#allocation0] sm:$0x7] %vm15, %v14
    %s17 = scalar_lea.vmem %s0, 1
    %v18 = vld [vmem:[%s17] ss:$4 sm:$0x7]
    %19 = vrot.lane.b32.xlu0 %v18, 32
    %v20 = vpop.permute.xlu0 %19
    %vm21 = vcmask 523520
    %22 = vst.msk [vmem:[#allocation0] sm:$0x7] %vm21, %v20
    %s24 = ssub.s32 16, 1
    %v25 = vld [vmem:[#allocation0] sm:%s24]
    %s27 = ssub.s32 16, 1
    %28 = vst [vmem:[%s1] sm:%s27] %v25

// kernel: vanilla_cnn_forward.1
$region0: #{vanilla_cnn_forward.1}
  #allocation0 [shape = 'u32[]', space=smem, size = 0x4, offset = 0x4, fixed_abs, tag = 'smem constant byte address 0x4 - core index']
  #allocation1 [shape = 'u32[72,128]{1,0:T(1,128)}', space=vmem, size = 0x9000, scoped, tag = 'internal scratch']
  %s0 = inlined_call_operand.vmem [shape: f32[32,8,128], index: 0, kind: input, shape index: {}]
  %s1 = inlined_call_operand.vmem [shape: bf16[896,1024], index: 1, kind: input, shape index: {}]
  %s2 = inlined_call_operand.vmem [shape: f32[1,1024], index: 2, kind: input, shape index: {}]
  %s3 = inlined_call_operand.vmem [shape: bf16[13,512,128], index: 3, kind: input, shape index: {}]
  %s4 = inlined_call_operand.vmem [shape: f32[1,128], index: 4, kind: input, shape index: {}]
  %s5 = inlined_call_operand.vmem [shape: f32[8,128], index: 5, kind: output, shape index: {}]
  %s6 = sld [smem:[#allocation0]]
  $region30: #{vanilla_cnn_forward.1} parent=0
    _
  %s8 = ssub.s32 1, %s6
  %s9 = scalar_select 0, %s8, %s6
  // Predicated region
  $region2: #{vanilla_cnn_forward.1} parent=0 // pred_check
    _
  $region3: #{vanilla_cnn_forward.1} parent=0 // pred_check_branch
    %11 = sbr.rel (0) target = $region5
  $region4: #{vanilla_cnn_forward.1} parent=0 // pred_region
    _
  $region5: #{vanilla_cnn_forward.1} parent=0 // pred_fallthru
    _
  // Predicated region
  $region6: #{vanilla_cnn_forward.1} parent=0 // pred_check
    _
  $region7: #{vanilla_cnn_forward.1} parent=0 // pred_check_branch
    %13 = sbr.rel (0) target = $region9
  $region8: #{vanilla_cnn_forward.1} parent=0 // pred_region
    _
  $region9: #{vanilla_cnn_forward.1} parent=0 // pred_fallthru
    _
  // Predicated region
  $region10: #{vanilla_cnn_forward.1} parent=0 // pred_check
    _
  $region11: #{vanilla_cnn_forward.1} parent=0 // pred_check_branch
    %15 = sbr.rel (0) target = $region13
  $region12: #{vanilla_cnn_forward.1} parent=0 // pred_region
    _
  $region13: #{vanilla_cnn_forward.1} parent=0 // pred_fallthru
    _
  // Predicated region
  $region14: #{vanilla_cnn_forward.1} parent=0 // pred_check
    _
  $region15: #{vanilla_cnn_forward.1} parent=0 // pred_check_branch
    %17 = sbr.rel (0) target = $region17
  $region16: #{vanilla_cnn_forward.1} parent=0 // pred_region
    _
  $region17: #{vanilla_cnn_forward.1} parent=0 // pred_fallthru
    _
  // Predicated region
  $region18: #{vanilla_cnn_forward.1} parent=0 // pred_check
    _
  $region19: #{vanilla_cnn_forward.1} parent=0 // pred_check_branch
    %19 = sbr.rel (0) target = $region21
  $region20: #{vanilla_cnn_forward.1} parent=0 // pred_region
    _
  $region21: #{vanilla_cnn_forward.1} parent=0 // pred_fallthru
    _
  %v20 = vld [vmem:[%s0] sm:$0xff]
  %v21 = vld [vmem:[%s0 + $0x8] sm:$0xff]
  %v22 = vld [vmem:[%s0 + $0x10] sm:$0xff]
  %v23 = vld [vmem:[%s0 + $0x18] sm:$0xff]
  %v24 = vld [vmem:[%s0 + $0x20] sm:$0xff]
  %v25 = vld [vmem:[%s0 + $0x28] sm:$0xff]
  %v26 = vld [vmem:[%s0 + $0x30] sm:$0xff]
  %v27 = vld [vmem:[%s0 + $0x38] sm:$0xff]
  %v28 = vld [vmem:[%s0 + $0x40] sm:$0xff]
  %v29 = vld [vmem:[%s0 + $0x48] sm:$0xff]
  %v30 = vld [vmem:[%s0 + $0x50] sm:$0xff]
  %v31 = vld [vmem:[%s0 + $0x58] sm:$0xff]
  %v32 = vld [vmem:[%s0 + $0x60] sm:$0xff]
  %v33 = vld [vmem:[%s0 + $0x68] sm:$0xff]
  %v34 = vld [vmem:[%s0 + $0x70] sm:$0xff]
  %v35 = vld [vmem:[%s0 + $0x78] sm:$0xff]
  %v36 = vld [vmem:[%s0 + $0x80] sm:$0xff]
  %v37 = vld [vmem:[%s0 + $0x88] sm:$0xff]
  %v38 = vld [vmem:[%s0 + $0x90] sm:$0xff]
  %v39 = vld [vmem:[%s0 + $0x98] sm:$0xff]
  %v40 = vld [vmem:[%s0 + $0xa0] sm:$0xff]
  %v41 = vld [vmem:[%s0 + $0xa8] sm:$0xff]
  %v42 = vld [vmem:[%s0 + $0xb0] sm:$0xff]
  %v43 = vld [vmem:[%s0 + $0xb8] sm:$0xff]
  %v44 = vld [vmem:[%s0 + $0xc0] sm:$0xff]
  %v45 = vld [vmem:[%s0 + $0xc8] sm:$0xff]
  %v46 = vld [vmem:[%s0 + $0xd0] sm:$0xff]
  %v47 = vld [vmem:[%s0 + $0xd8] sm:$0xff]
  %v48 = vld [vmem:[%s0 + $0xe0] sm:$0xff]
  %v49 = vld [vmem:[%s0 + $0xe8] sm:$0xff]
  %v50 = vld [vmem:[%s0 + $0xf0] sm:$0xff]
  %v51 = vld [vmem:[%s0 + $0xf8] sm:$0xff]
  %v52 = vpack.c.bf16 %v21, %v20
  %v53 = vpack.c.bf16 %v22, %v21
  %v54 = vpack.c.bf16 %v23, %v22
  %v55 = vpack.c.bf16 %v24, %v23
  %v56 = vpack.c.bf16 %v25, %v24
  %v57 = vpack.c.bf16 %v26, %v25
  %v58 = vpack.c.bf16 %v27, %v26
  %v59 = vpack.c.bf16 %v28, %v27
  %v60 = vpack.c.bf16 %v29, %v28
  %v61 = vpack.c.bf16 %v30, %v29
  %v62 = vpack.c.bf16 %v31, %v30
  %v63 = vpack.c.bf16 %v32, %v31
  %v64 = vpack.c.bf16 %v33, %v32
  %v65 = vpack.c.bf16 %v34, %v33
  %v66 = vpack.c.bf16 %v35, %v34
  %v67 = vpack.c.bf16 %v36, %v35
  %v68 = vpack.c.bf16 %v37, %v36
  %v69 = vpack.c.bf16 %v38, %v37
  %v70 = vpack.c.bf16 %v39, %v38
  %v71 = vpack.c.bf16 %v40, %v39
  %v72 = vpack.c.bf16 %v41, %v40
  %v73 = vpack.c.bf16 %v42, %v41
  %v74 = vpack.c.bf16 %v43, %v42
  %v75 = vpack.c.bf16 %v44, %v43
  %v76 = vpack.c.bf16 %v45, %v44
  %v77 = vpack.c.bf16 %v46, %v45
  %v78 = vpack.c.bf16 %v47, %v46
  %v79 = vpack.c.bf16 %v48, %v47
  %v80 = vpack.c.bf16 %v49, %v48
  %v81 = vpack.c.bf16 %v50, %v49
  %v82 = vpack.c.bf16 %v51, %v50
  %v83 = vld [vmem:[%s1] sm:$0xff]
  %v84 = vld [vmem:[%s1 + $0x8] sm:$0xff]
  %v85 = vld [vmem:[%s1 + $0x10] sm:$0xff]
  %v86 = vld [vmem:[%s1 + $0x18] sm:$0xff]
  %v87 = vld [vmem:[%s1 + $0x20] sm:$0xff]
  %v88 = vld [vmem:[%s1 + $0x28] sm:$0xff]
  %v89 = vld [vmem:[%s1 + $0x30] sm:$0xff]
  %v90 = vld [vmem:[%s1 + $0x38] sm:$0xff]
  %v91 = vld [vmem:[%s1 + $0x40] sm:$0xff]
  %v92 = vld [vmem:[%s1 + $0x48] sm:$0xff]
  %v93 = vld [vmem:[%s1 + $0x50] sm:$0xff]
  %v94 = vld [vmem:[%s1 + $0x58] sm:$0xff]
  %v95 = vld [vmem:[%s1 + $0x60] sm:$0xff]
  %v96 = vld [vmem:[%s1 + $0x68] sm:$0xff]
  %v97 = vld [vmem:[%s1 + $0x70] sm:$0xff]
  %v98 = vld [vmem:[%s1 + $0x78] sm:$0xff]
  %v99 = vld [vmem:[%s1 + $0x80] sm:$0xff]
  %v100 = vld [vmem:[%s1 + $0x88] sm:$0xff]
  %v101 = vld [vmem:[%s1 + $0x90] sm:$0xff]
  %v102 = vld [vmem:[%s1 + $0x98] sm:$0xff]
  %v103 = vld [vmem:[%s1 + $0xa0] sm:$0xff]
  %v104 = vld [vmem:[%s1 + $0xa8] sm:$0xff]
  %v105 = vld [vmem:[%s1 + $0xb0] sm:$0xff]
  %v106 = vld [vmem:[%s1 + $0xb8] sm:$0xff]
  %v107 = vld [vmem:[%s1 + $0xc0] sm:$0xff]
  %v108 = vld [vmem:[%s1 + $0xc8] sm:$0xff]
  %v109 = vld [vmem:[%s1 + $0xd0] sm:$0xff]
  %v110 = vld [vmem:[%s1 + $0xd8] sm:$0xff]
  %v111 = vld [vmem:[%s1 + $0xe0] sm:$0xff]
  %v112 = vld [vmem:[%s1 + $0xe8] sm:$0xff]
  %v113 = vld [vmem:[%s1 + $0xf0] sm:$0xff]
  %v114 = vld [vmem:[%s1 + $0xf8] sm:$0xff]
  %v115 = vld [vmem:[%s1 + $0x100] sm:$0xff]
  %v116 = vld [vmem:[%s1 + $0x108] sm:$0xff]
  %v117 = vld [vmem:[%s1 + $0x110] sm:$0xff]
  %v118 = vld [vmem:[%s1 + $0x118] sm:$0xff]
  %v119 = vld [vmem:[%s1 + $0x120] sm:$0xff]
  %v120 = vld [vmem:[%s1 + $0x128] sm:$0xff]
  %v121 = vld [vmem:[%s1 + $0x130] sm:$0xff]
  %v122 = vld [vmem:[%s1 + $0x138] sm:$0xff]
  %v123 = vld [vmem:[%s1 + $0x140] sm:$0xff]
  %v124 = vld [vmem:[%s1 + $0x148] sm:$0xff]
  %v125 = vld [vmem:[%s1 + $0x150] sm:$0xff]
  %v126 = vld [vmem:[%s1 + $0x158] sm:$0xff]
  %v127 = vld [vmem:[%s1 + $0x160] sm:$0xff]
  %v128 = vld [vmem:[%s1 + $0x168] sm:$0xff]
  %v129 = vld [vmem:[%s1 + $0x170] sm:$0xff]
  %v130 = vld [vmem:[%s1 + $0x178] sm:$0xff]
  %v131 = vld [vmem:[%s1 + $0x180] sm:$0xff]
  %v132 = vld [vmem:[%s1 + $0x188] sm:$0xff]
  %v133 = vld [vmem:[%s1 + $0x190] sm:$0xff]
  %v134 = vld [vmem:[%s1 + $0x198] sm:$0xff]
  %v135 = vld [vmem:[%s1 + $0x1a0] sm:$0xff]
  %v136 = vld [vmem:[%s1 + $0x1a8] sm:$0xff]
  %v137 = vld [vmem:[%s1 + $0x1b0] sm:$0xff]
  %v138 = vld [vmem:[%s1 + $0x1b8] sm:$0xff]
  %v139 = vld [vmem:[%s1 + $0x1c0] sm:$0xff]
  %v140 = vld [vmem:[%s1 + $0x1c8] sm:$0xff]
  %v141 = vld [vmem:[%s1 + $0x1d0] sm:$0xff]
  %v142 = vld [vmem:[%s1 + $0x1d8] sm:$0xff]
  %v143 = vld [vmem:[%s1 + $0x1e0] sm:$0xff]
  %v144 = vld [vmem:[%s1 + $0x1e8] sm:$0xff]
  %v145 = vld [vmem:[%s1 + $0x1f0] sm:$0xff]
  %v146 = vld [vmem:[%s1 + $0x1f8] sm:$0xff]
  %v147 = vld [vmem:[%s1 + $0x200] sm:$0xff]
  %v148 = vld [vmem:[%s1 + $0x208] sm:$0xff]
  %v149 = vld [vmem:[%s1 + $0x210] sm:$0xff]
  %v150 = vld [vmem:[%s1 + $0x218] sm:$0xff]
  %v151 = vld [vmem:[%s1 + $0x220] sm:$0xff]
  %v152 = vld [vmem:[%s1 + $0x228] sm:$0xff]
  %v153 = vld [vmem:[%s1 + $0x230] sm:$0xff]
  %v154 = vld [vmem:[%s1 + $0x238] sm:$0xff]
  %v155 = vld [vmem:[%s1 + $0x240] sm:$0xff]
  %v156 = vld [vmem:[%s1 + $0x248] sm:$0xff]
  %v157 = vld [vmem:[%s1 + $0x250] sm:$0xff]
  %v158 = vld [vmem:[%s1 + $0x258] sm:$0xff]
  %v159 = vld [vmem:[%s1 + $0x260] sm:$0xff]
  %v160 = vld [vmem:[%s1 + $0x268] sm:$0xff]
  %v161 = vld [vmem:[%s1 + $0x270] sm:$0xff]
  %v162 = vld [vmem:[%s1 + $0x278] sm:$0xff]
  %v163 = vld [vmem:[%s1 + $0x280] sm:$0xff]
  %v164 = vld [vmem:[%s1 + $0x288] sm:$0xff]
  %v165 = vld [vmem:[%s1 + $0x290] sm:$0xff]
  %v166 = vld [vmem:[%s1 + $0x298] sm:$0xff]
  %v167 = vld [vmem:[%s1 + $0x2a0] sm:$0xff]
  %v168 = vld [vmem:[%s1 + $0x2a8] sm:$0xff]
  %v169 = vld [vmem:[%s1 + $0x2b0] sm:$0xff]
  %v170 = vld [vmem:[%s1 + $0x2b8] sm:$0xff]
  %v171 = vld [vmem:[%s1 + $0x2c0] sm:$0xff]
  %v172 = vld [vmem:[%s1 + $0x2c8] sm:$0xff]
  %v173 = vld [vmem:[%s1 + $0x2d0] sm:$0xff]
  %v174 = vld [vmem:[%s1 + $0x2d8] sm:$0xff]
  %v175 = vld [vmem:[%s1 + $0x2e0] sm:$0xff]
  %v176 = vld [vmem:[%s1 + $0x2e8] sm:$0xff]
  %v177 = vld [vmem:[%s1 + $0x2f0] sm:$0xff]
  %v178 = vld [vmem:[%s1 + $0x2f8] sm:$0xff]
  %v179 = vld [vmem:[%s1 + $0x300] sm:$0xff]
  %v180 = vld [vmem:[%s1 + $0x308] sm:$0xff]
  %v181 = vld [vmem:[%s1 + $0x310] sm:$0xff]
  %v182 = vld [vmem:[%s1 + $0x318] sm:$0xff]
  %v183 = vld [vmem:[%s1 + $0x320] sm:$0xff]
  %v184 = vld [vmem:[%s1 + $0x328] sm:$0xff]
  %v185 = vld [vmem:[%s1 + $0x330] sm:$0xff]
  %v186 = vld [vmem:[%s1 + $0x338] sm:$0xff]
  %v187 = vld [vmem:[%s1 + $0x340] sm:$0xff]
  %v188 = vld [vmem:[%s1 + $0x348] sm:$0xff]
  %v189 = vld [vmem:[%s1 + $0x350] sm:$0xff]
  %v190 = vld [vmem:[%s1 + $0x358] sm:$0xff]
  %v191 = vld [vmem:[%s1 + $0x360] sm:$0xff]
  %v192 = vld [vmem:[%s1 + $0x368] sm:$0xff]
  %v193 = vld [vmem:[%s1 + $0x370] sm:$0xff]
  %v194 = vld [vmem:[%s1 + $0x378] sm:$0xff]
  %v195 = vld [vmem:[%s1 + $0x380] sm:$0xff]
  %v196 = vld [vmem:[%s1 + $0x388] sm:$0xff]
  %v197 = vld [vmem:[%s1 + $0x390] sm:$0xff]
  %v198 = vld [vmem:[%s1 + $0x398] sm:$0xff]
  %v199 = vld [vmem:[%s1 + $0x3a0] sm:$0xff]
  %v200 = vld [vmem:[%s1 + $0x3a8] sm:$0xff]
  %v201 = vld [vmem:[%s1 + $0x3b0] sm:$0xff]
  %v202 = vld [vmem:[%s1 + $0x3b8] sm:$0xff]
  %v203 = vld [vmem:[%s1 + $0x3c0] sm:$0xff]
  %v204 = vld [vmem:[%s1 + $0x3c8] sm:$0xff]
  %v205 = vld [vmem:[%s1 + $0x3d0] sm:$0xff]
  %v206 = vld [vmem:[%s1 + $0x3d8] sm:$0xff]
  %v207 = vld [vmem:[%s1 + $0x3e0] sm:$0xff]
  %v208 = vld [vmem:[%s1 + $0x3e8] sm:$0xff]
  %v209 = vld [vmem:[%s1 + $0x3f0] sm:$0xff]
  %v210 = vld [vmem:[%s1 + $0x3f8] sm:$0xff]
  %v211 = vld [vmem:[%s1 + $0x400] sm:$0xff]
  %v212 = vld [vmem:[%s1 + $0x408] sm:$0xff]
  %v213 = vld [vmem:[%s1 + $0x410] sm:$0xff]
  %v214 = vld [vmem:[%s1 + $0x418] sm:$0xff]
  %v215 = vld [vmem:[%s1 + $0x420] sm:$0xff]
  %v216 = vld [vmem:[%s1 + $0x428] sm:$0xff]
  %v217 = vld [vmem:[%s1 + $0x430] sm:$0xff]
  %v218 = vld [vmem:[%s1 + $0x438] sm:$0xff]
  %v219 = vld [vmem:[%s1 + $0x440] sm:$0xff]
  %v220 = vld [vmem:[%s1 + $0x448] sm:$0xff]
  %v221 = vld [vmem:[%s1 + $0x450] sm:$0xff]
  %v222 = vld [vmem:[%s1 + $0x458] sm:$0xff]
  %v223 = vld [vmem:[%s1 + $0x460] sm:$0xff]
  %v224 = vld [vmem:[%s1 + $0x468] sm:$0xff]
  %v225 = vld [vmem:[%s1 + $0x470] sm:$0xff]
  %v226 = vld [vmem:[%s1 + $0x478] sm:$0xff]
  %v227 = vld [vmem:[%s1 + $0x480] sm:$0xff]
  %v228 = vld [vmem:[%s1 + $0x488] sm:$0xff]
  %v229 = vld [vmem:[%s1 + $0x490] sm:$0xff]
  %v230 = vld [vmem:[%s1 + $0x498] sm:$0xff]
  %v231 = vld [vmem:[%s1 + $0x4a0] sm:$0xff]
  %v232 = vld [vmem:[%s1 + $0x4a8] sm:$0xff]
  %v233 = vld [vmem:[%s1 + $0x4b0] sm:$0xff]
  %v234 = vld [vmem:[%s1 + $0x4b8] sm:$0xff]
  %v235 = vld [vmem:[%s1 + $0x4c0] sm:$0xff]
  %v236 = vld [vmem:[%s1 + $0x4c8] sm:$0xff]
  %v237 = vld [vmem:[%s1 + $0x4d0] sm:$0xff]
  %v238 = vld [vmem:[%s1 + $0x4d8] sm:$0xff]
  %v239 = vld [vmem:[%s1 + $0x4e0] sm:$0xff]
  %v240 = vld [vmem:[%s1 + $0x4e8] sm:$0xff]
  %v241 = vld [vmem:[%s1 + $0x4f0] sm:$0xff]
  %v242 = vld [vmem:[%s1 + $0x4f8] sm:$0xff]
  %v243 = vld [vmem:[%s1 + $0x500] sm:$0xff]
  %v244 = vld [vmem:[%s1 + $0x508] sm:$0xff]
  %v245 = vld [vmem:[%s1 + $0x510] sm:$0xff]
  %v246 = vld [vmem:[%s1 + $0x518] sm:$0xff]
  %v247 = vld [vmem:[%s1 + $0x520] sm:$0xff]
  %v248 = vld [vmem:[%s1 + $0x528] sm:$0xff]
  %v249 = vld [vmem:[%s1 + $0x530] sm:$0xff]
  %v250 = vld [vmem:[%s1 + $0x538] sm:$0xff]
  %v251 = vld [vmem:[%s1 + $0x540] sm:$0xff]
  %v252 = vld [vmem:[%s1 + $0x548] sm:$0xff]
  %v253 = vld [vmem:[%s1 + $0x550] sm:$0xff]
  %v254 = vld [vmem:[%s1 + $0x558] sm:$0xff]
  %v255 = vld [vmem:[%s1 + $0x560] sm:$0xff]
  %v256 = vld [vmem:[%s1 + $0x568] sm:$0xff]
  %v257 = vld [vmem:[%s1 + $0x570] sm:$0xff]
  %v258 = vld [vmem:[%s1 + $0x578] sm:$0xff]
  %v259 = vld [vmem:[%s1 + $0x580] sm:$0xff]
  %v260 = vld [vmem:[%s1 + $0x588] sm:$0xff]
  %v261 = vld [vmem:[%s1 + $0x590] sm:$0xff]
  %v262 = vld [vmem:[%s1 + $0x598] sm:$0xff]
  %v263 = vld [vmem:[%s1 + $0x5a0] sm:$0xff]
  %v264 = vld [vmem:[%s1 + $0x5a8] sm:$0xff]
  %v265 = vld [vmem:[%s1 + $0x5b0] sm:$0xff]
  %v266 = vld [vmem:[%s1 + $0x5b8] sm:$0xff]
  %v267 = vld [vmem:[%s1 + $0x5c0] sm:$0xff]
  %v268 = vld [vmem:[%s1 + $0x5c8] sm:$0xff]
  %v269 = vld [vmem:[%s1 + $0x5d0] sm:$0xff]
  %v270 = vld [vmem:[%s1 + $0x5d8] sm:$0xff]
  %v271 = vld [vmem:[%s1 + $0x5e0] sm:$0xff]
  %v272 = vld [vmem:[%s1 + $0x5e8] sm:$0xff]
  %v273 = vld [vmem:[%s1 + $0x5f0] sm:$0xff]
  %v274 = vld [vmem:[%s1 + $0x5f8] sm:$0xff]
  %v275 = vld [vmem:[%s1 + $0x600] sm:$0xff]
  %v276 = vld [vmem:[%s1 + $0x608] sm:$0xff]
  %v277 = vld [vmem:[%s1 + $0x610] sm:$0xff]
  %v278 = vld [vmem:[%s1 + $0x618] sm:$0xff]
  %v279 = vld [vmem:[%s1 + $0x620] sm:$0xff]
  %v280 = vld [vmem:[%s1 + $0x628] sm:$0xff]
  %v281 = vld [vmem:[%s1 + $0x630] sm:$0xff]
  %v282 = vld [vmem:[%s1 + $0x638] sm:$0xff]
  %v283 = vld [vmem:[%s1 + $0x640] sm:$0xff]
  %v284 = vld [vmem:[%s1 + $0x648] sm:$0xff]
  %v285 = vld [vmem:[%s1 + $0x650] sm:$0xff]
  %v286 = vld [vmem:[%s1 + $0x658] sm:$0xff]
  %v287 = vld [vmem:[%s1 + $0x660] sm:$0xff]
  %v288 = vld [vmem:[%s1 + $0x668] sm:$0xff]
  %v289 = vld [vmem:[%s1 + $0x670] sm:$0xff]
  %v290 = vld [vmem:[%s1 + $0x678] sm:$0xff]
  %v291 = vld [vmem:[%s1 + $0x680] sm:$0xff]
  %v292 = vld [vmem:[%s1 + $0x688] sm:$0xff]
  %v293 = vld [vmem:[%s1 + $0x690] sm:$0xff]
  %v294 = vld [vmem:[%s1 + $0x698] sm:$0xff]
  %v295 = vld [vmem:[%s1 + $0x6a0] sm:$0xff]
  %v296 = vld [vmem:[%s1 + $0x6a8] sm:$0xff]
  %v297 = vld [vmem:[%s1 + $0x6b0] sm:$0xff]
  %v298 = vld [vmem:[%s1 + $0x6b8] sm:$0xff]
  %v299 = vld [vmem:[%s1 + $0x6c0] sm:$0xff]
  %v300 = vld [vmem:[%s1 + $0x6c8] sm:$0xff]
  %v301 = vld [vmem:[%s1 + $0x6d0] sm:$0xff]
  %v302 = vld [vmem:[%s1 + $0x6d8] sm:$0xff]
  %v303 = vld [vmem:[%s1 + $0x6e0] sm:$0xff]
  %v304 = vld [vmem:[%s1 + $0x6e8] sm:$0xff]
  %v305 = vld [vmem:[%s1 + $0x6f0] sm:$0xff]
  %v306 = vld [vmem:[%s1 + $0x6f8] sm:$0xff]
  %v307 = vld [vmem:[%s1 + $0x700] sm:$0xff]
  %v308 = vld [vmem:[%s1 + $0x708] sm:$0xff]
  %v309 = vld [vmem:[%s1 + $0x710] sm:$0xff]
  %v310 = vld [vmem:[%s1 + $0x718] sm:$0xff]
  %v311 = vld [vmem:[%s1 + $0x720] sm:$0xff]
  %v312 = vld [vmem:[%s1 + $0x728] sm:$0xff]
  %v313 = vld [vmem:[%s1 + $0x730] sm:$0xff]
  %v314 = vld [vmem:[%s1 + $0x738] sm:$0xff]
  %v315 = vld [vmem:[%s1 + $0x740] sm:$0xff]
  %v316 = vld [vmem:[%s1 + $0x748] sm:$0xff]
  %v317 = vld [vmem:[%s1 + $0x750] sm:$0xff]
  %v318 = vld [vmem:[%s1 + $0x758] sm:$0xff]
  %v319 = vld [vmem:[%s1 + $0x760] sm:$0xff]
  %v320 = vld [vmem:[%s1 + $0x768] sm:$0xff]
  %v321 = vld [vmem:[%s1 + $0x770] sm:$0xff]
  %v322 = vld [vmem:[%s1 + $0x778] sm:$0xff]
  %v323 = vld [vmem:[%s1 + $0x780] sm:$0xff]
  %v324 = vld [vmem:[%s1 + $0x788] sm:$0xff]
  %v325 = vld [vmem:[%s1 + $0x790] sm:$0xff]
  %v326 = vld [vmem:[%s1 + $0x798] sm:$0xff]
  %v327 = vld [vmem:[%s1 + $0x7a0] sm:$0xff]
  %v328 = vld [vmem:[%s1 + $0x7a8] sm:$0xff]
  %v329 = vld [vmem:[%s1 + $0x7b0] sm:$0xff]
  %v330 = vld [vmem:[%s1 + $0x7b8] sm:$0xff]
  %v331 = vld [vmem:[%s1 + $0x7c0] sm:$0xff]
  %v332 = vld [vmem:[%s1 + $0x7c8] sm:$0xff]
  %v333 = vld [vmem:[%s1 + $0x7d0] sm:$0xff]
  %v334 = vld [vmem:[%s1 + $0x7d8] sm:$0xff]
  %v335 = vld [vmem:[%s1 + $0x7e0] sm:$0xff]
  %v336 = vld [vmem:[%s1 + $0x7e8] sm:$0xff]
  %v337 = vld [vmem:[%s1 + $0x7f0] sm:$0xff]
  %v338 = vld [vmem:[%s1 + $0x7f8] sm:$0xff]
  %v339 = vld [vmem:[%s1 + $0x800] sm:$0xff]
  %v340 = vld [vmem:[%s1 + $0x808] sm:$0xff]
  %v341 = vld [vmem:[%s1 + $0x810] sm:$0xff]
  %v342 = vld [vmem:[%s1 + $0x818] sm:$0xff]
  %v343 = vld [vmem:[%s1 + $0x820] sm:$0xff]
  %v344 = vld [vmem:[%s1 + $0x828] sm:$0xff]
  %v345 = vld [vmem:[%s1 + $0x830] sm:$0xff]
  %v346 = vld [vmem:[%s1 + $0x838] sm:$0xff]
  %v347 = vld [vmem:[%s1 + $0x840] sm:$0xff]
  %v348 = vld [vmem:[%s1 + $0x848] sm:$0xff]
  %v349 = vld [vmem:[%s1 + $0x850] sm:$0xff]
  %v350 = vld [vmem:[%s1 + $0x858] sm:$0xff]
  %v351 = vld [vmem:[%s1 + $0x860] sm:$0xff]
  %v352 = vld [vmem:[%s1 + $0x868] sm:$0xff]
  %v353 = vld [vmem:[%s1 + $0x870] sm:$0xff]
  %v354 = vld [vmem:[%s1 + $0x878] sm:$0xff]
  %v355 = vld [vmem:[%s1 + $0x880] sm:$0xff]
  %v356 = vld [vmem:[%s1 + $0x888] sm:$0xff]
  %v357 = vld [vmem:[%s1 + $0x890] sm:$0xff]
  %v358 = vld [vmem:[%s1 + $0x898] sm:$0xff]
  %v359 = vld [vmem:[%s1 + $0x8a0] sm:$0xff]
  %v360 = vld [vmem:[%s1 + $0x8a8] sm:$0xff]
  %v361 = vld [vmem:[%s1 + $0x8b0] sm:$0xff]
  %v362 = vld [vmem:[%s1 + $0x8b8] sm:$0xff]
  %v363 = vld [vmem:[%s1 + $0x8c0] sm:$0xff]
  %v364 = vld [vmem:[%s1 + $0x8c8] sm:$0xff]
  %v365 = vld [vmem:[%s1 + $0x8d0] sm:$0xff]
  %v366 = vld [vmem:[%s1 + $0x8d8] sm:$0xff]
  %v367 = vld [vmem:[%s1 + $0x8e0] sm:$0xff]
  %v368 = vld [vmem:[%s1 + $0x8e8] sm:$0xff]
  %v369 = vld [vmem:[%s1 + $0x8f0] sm:$0xff]
  %v370 = vld [vmem:[%s1 + $0x8f8] sm:$0xff]
  %v371 = vld [vmem:[%s1 + $0x900] sm:$0xff]
  %v372 = vld [vmem:[%s1 + $0x908] sm:$0xff]
  %v373 = vld [vmem:[%s1 + $0x910] sm:$0xff]
  %v374 = vld [vmem:[%s1 + $0x918] sm:$0xff]
  %v375 = vld [vmem:[%s1 + $0x920] sm:$0xff]
  %v376 = vld [vmem:[%s1 + $0x928] sm:$0xff]
  %v377 = vld [vmem:[%s1 + $0x930] sm:$0xff]
  %v378 = vld [vmem:[%s1 + $0x938] sm:$0xff]
  %v379 = vld [vmem:[%s1 + $0x940] sm:$0xff]
  %v380 = vld [vmem:[%s1 + $0x948] sm:$0xff]
  %v381 = vld [vmem:[%s1 + $0x950] sm:$0xff]
  %v382 = vld [vmem:[%s1 + $0x958] sm:$0xff]
  %v383 = vld [vmem:[%s1 + $0x960] sm:$0xff]
  %v384 = vld [vmem:[%s1 + $0x968] sm:$0xff]
  %v385 = vld [vmem:[%s1 + $0x970] sm:$0xff]
  %v386 = vld [vmem:[%s1 + $0x978] sm:$0xff]
  %v387 = vld [vmem:[%s1 + $0x980] sm:$0xff]
  %v388 = vld [vmem:[%s1 + $0x988] sm:$0xff]
  %v389 = vld [vmem:[%s1 + $0x990] sm:$0xff]
  %v390 = vld [vmem:[%s1 + $0x998] sm:$0xff]
  %v391 = vld [vmem:[%s1 + $0x9a0] sm:$0xff]
  %v392 = vld [vmem:[%s1 + $0x9a8] sm:$0xff]
  %v393 = vld [vmem:[%s1 + $0x9b0] sm:$0xff]
  %v394 = vld [vmem:[%s1 + $0x9b8] sm:$0xff]
  %v395 = vld [vmem:[%s1 + $0x9c0] sm:$0xff]
  %v396 = vld [vmem:[%s1 + $0x9c8] sm:$0xff]
  %v397 = vld [vmem:[%s1 + $0x9d0] sm:$0xff]
  %v398 = vld [vmem:[%s1 + $0x9d8] sm:$0xff]
  %v399 = vld [vmem:[%s1 + $0x9e0] sm:$0xff]
  %v400 = vld [vmem:[%s1 + $0x9e8] sm:$0xff]
  %v401 = vld [vmem:[%s1 + $0x9f0] sm:$0xff]
  %v402 = vld [vmem:[%s1 + $0x9f8] sm:$0xff]
  %v403 = vld [vmem:[%s1 + $0xa00] sm:$0xff]
  %v404 = vld [vmem:[%s1 + $0xa08] sm:$0xff]
  %v405 = vld [vmem:[%s1 + $0xa10] sm:$0xff]
  %v406 = vld [vmem:[%s1 + $0xa18] sm:$0xff]
  %v407 = vld [vmem:[%s1 + $0xa20] sm:$0xff]
  %v408 = vld [vmem:[%s1 + $0xa28] sm:$0xff]
  %v409 = vld [vmem:[%s1 + $0xa30] sm:$0xff]
  %v410 = vld [vmem:[%s1 + $0xa38] sm:$0xff]
  %v411 = vld [vmem:[%s1 + $0xa40] sm:$0xff]
  %v412 = vld [vmem:[%s1 + $0xa48] sm:$0xff]
  %v413 = vld [vmem:[%s1 + $0xa50] sm:$0xff]
  %v414 = vld [vmem:[%s1 + $0xa58] sm:$0xff]
  %v415 = vld [vmem:[%s1 + $0xa60] sm:$0xff]
  %v416 = vld [vmem:[%s1 + $0xa68] sm:$0xff]
  %v417 = vld [vmem:[%s1 + $0xa70] sm:$0xff]
  %v418 = vld [vmem:[%s1 + $0xa78] sm:$0xff]
  %v419 = vld [vmem:[%s1 + $0xa80] sm:$0xff]
  %v420 = vld [vmem:[%s1 + $0xa88] sm:$0xff]
  %v421 = vld [vmem:[%s1 + $0xa90] sm:$0xff]
  %v422 = vld [vmem:[%s1 + $0xa98] sm:$0xff]
  %v423 = vld [vmem:[%s1 + $0xaa0] sm:$0xff]
  %v424 = vld [vmem:[%s1 + $0xaa8] sm:$0xff]
  %v425 = vld [vmem:[%s1 + $0xab0] sm:$0xff]
  %v426 = vld [vmem:[%s1 + $0xab8] sm:$0xff]
  %v427 = vld [vmem:[%s1 + $0xac0] sm:$0xff]
  %v428 = vld [vmem:[%s1 + $0xac8] sm:$0xff]
  %v429 = vld [vmem:[%s1 + $0xad0] sm:$0xff]
  %v430 = vld [vmem:[%s1 + $0xad8] sm:$0xff]
  %v431 = vld [vmem:[%s1 + $0xae0] sm:$0xff]
  %v432 = vld [vmem:[%s1 + $0xae8] sm:$0xff]
  %v433 = vld [vmem:[%s1 + $0xaf0] sm:$0xff]
  %v434 = vld [vmem:[%s1 + $0xaf8] sm:$0xff]
  %v435 = vld [vmem:[%s1 + $0xb00] sm:$0xff]
  %v436 = vld [vmem:[%s1 + $0xb08] sm:$0xff]
  %v437 = vld [vmem:[%s1 + $0xb10] sm:$0xff]
  %v438 = vld [vmem:[%s1 + $0xb18] sm:$0xff]
  %v439 = vld [vmem:[%s1 + $0xb20] sm:$0xff]
  %v440 = vld [vmem:[%s1 + $0xb28] sm:$0xff]
  %v441 = vld [vmem:[%s1 + $0xb30] sm:$0xff]
  %v442 = vld [vmem:[%s1 + $0xb38] sm:$0xff]
  %v443 = vld [vmem:[%s1 + $0xb40] sm:$0xff]
  %v444 = vld [vmem:[%s1 + $0xb48] sm:$0xff]
  %v445 = vld [vmem:[%s1 + $0xb50] sm:$0xff]
  %v446 = vld [vmem:[%s1 + $0xb58] sm:$0xff]
  %v447 = vld [vmem:[%s1 + $0xb60] sm:$0xff]
  %v448 = vld [vmem:[%s1 + $0xb68] sm:$0xff]
  %v449 = vld [vmem:[%s1 + $0xb70] sm:$0xff]
  %v450 = vld [vmem:[%s1 + $0xb78] sm:$0xff]
  %v451 = vld [vmem:[%s1 + $0xb80] sm:$0xff]
  %v452 = vld [vmem:[%s1 + $0xb88] sm:$0xff]
  %v453 = vld [vmem:[%s1 + $0xb90] sm:$0xff]
  %v454 = vld [vmem:[%s1 + $0xb98] sm:$0xff]
  %v455 = vld [vmem:[%s1 + $0xba0] sm:$0xff]
  %v456 = vld [vmem:[%s1 + $0xba8] sm:$0xff]
  %v457 = vld [vmem:[%s1 + $0xbb0] sm:$0xff]
  %v458 = vld [vmem:[%s1 + $0xbb8] sm:$0xff]
  %v459 = vld [vmem:[%s1 + $0xbc0] sm:$0xff]
  %v460 = vld [vmem:[%s1 + $0xbc8] sm:$0xff]
  %v461 = vld [vmem:[%s1 + $0xbd0] sm:$0xff]
  %v462 = vld [vmem:[%s1 + $0xbd8] sm:$0xff]
  %v463 = vld [vmem:[%s1 + $0xbe0] sm:$0xff]
  %v464 = vld [vmem:[%s1 + $0xbe8] sm:$0xff]
  %v465 = vld [vmem:[%s1 + $0xbf0] sm:$0xff]
  %v466 = vld [vmem:[%s1 + $0xbf8] sm:$0xff]
  %v467 = vld [vmem:[%s1 + $0xc00] sm:$0xff]
  %v468 = vld [vmem:[%s1 + $0xc08] sm:$0xff]
  %v469 = vld [vmem:[%s1 + $0xc10] sm:$0xff]
  %v470 = vld [vmem:[%s1 + $0xc18] sm:$0xff]
  %v471 = vld [vmem:[%s1 + $0xc20] sm:$0xff]
  %v472 = vld [vmem:[%s1 + $0xc28] sm:$0xff]
  %v473 = vld [vmem:[%s1 + $0xc30] sm:$0xff]
  %v474 = vld [vmem:[%s1 + $0xc38] sm:$0xff]
  %v475 = vld [vmem:[%s1 + $0xc40] sm:$0xff]
  %v476 = vld [vmem:[%s1 + $0xc48] sm:$0xff]
  %v477 = vld [vmem:[%s1 + $0xc50] sm:$0xff]
  %v478 = vld [vmem:[%s1 + $0xc58] sm:$0xff]
  %v479 = vld [vmem:[%s1 + $0xc60] sm:$0xff]
  %v480 = vld [vmem:[%s1 + $0xc68] sm:$0xff]
  %v481 = vld [vmem:[%s1 + $0xc70] sm:$0xff]
  %v482 = vld [vmem:[%s1 + $0xc78] sm:$0xff]
  %v483 = vld [vmem:[%s1 + $0xc80] sm:$0xff]
  %v484 = vld [vmem:[%s1 + $0xc88] sm:$0xff]
  %v485 = vld [vmem:[%s1 + $0xc90] sm:$0xff]
  %v486 = vld [vmem:[%s1 + $0xc98] sm:$0xff]
  %v487 = vld [vmem:[%s1 + $0xca0] sm:$0xff]
  %v488 = vld [vmem:[%s1 + $0xca8] sm:$0xff]
  %v489 = vld [vmem:[%s1 + $0xcb0] sm:$0xff]
  %v490 = vld [vmem:[%s1 + $0xcb8] sm:$0xff]
  %v491 = vld [vmem:[%s1 + $0xcc0] sm:$0xff]
  %v492 = vld [vmem:[%s1 + $0xcc8] sm:$0xff]
  %v493 = vld [vmem:[%s1 + $0xcd0] sm:$0xff]
  %v494 = vld [vmem:[%s1 + $0xcd8] sm:$0xff]
  %v495 = vld [vmem:[%s1 + $0xce0] sm:$0xff]
  %v496 = vld [vmem:[%s1 + $0xce8] sm:$0xff]
  %v497 = vld [vmem:[%s1 + $0xcf0] sm:$0xff]
  %v498 = vld [vmem:[%s1 + $0xcf8] sm:$0xff]
  %v499 = vld [vmem:[%s1 + $0xd00] sm:$0xff]
  %v500 = vld [vmem:[%s1 + $0xd08] sm:$0xff]
  %v501 = vld [vmem:[%s1 + $0xd10] sm:$0xff]
  %v502 = vld [vmem:[%s1 + $0xd18] sm:$0xff]
  %v503 = vld [vmem:[%s1 + $0xd20] sm:$0xff]
  %v504 = vld [vmem:[%s1 + $0xd28] sm:$0xff]
  %v505 = vld [vmem:[%s1 + $0xd30] sm:$0xff]
  %v506 = vld [vmem:[%s1 + $0xd38] sm:$0xff]
  %v507 = vld [vmem:[%s1 + $0xd40] sm:$0xff]
  %v508 = vld [vmem:[%s1 + $0xd48] sm:$0xff]
  %v509 = vld [vmem:[%s1 + $0xd50] sm:$0xff]
  %v510 = vld [vmem:[%s1 + $0xd58] sm:$0xff]
  %v511 = vld [vmem:[%s1 + $0xd60] sm:$0xff]
  %v512 = vld [vmem:[%s1 + $0xd68] sm:$0xff]
  %v513 = vld [vmem:[%s1 + $0xd70] sm:$0xff]
  %v514 = vld [vmem:[%s1 + $0xd78] sm:$0xff]
  %v515 = vld [vmem:[%s1 + $0xd80] sm:$0xff]
  %v516 = vld [vmem:[%s1 + $0xd88] sm:$0xff]
  %v517 = vld [vmem:[%s1 + $0xd90] sm:$0xff]
  %v518 = vld [vmem:[%s1 + $0xd98] sm:$0xff]
  %v519 = vld [vmem:[%s1 + $0xda0] sm:$0xff]
  %v520 = vld [vmem:[%s1 + $0xda8] sm:$0xff]
  %v521 = vld [vmem:[%s1 + $0xdb0] sm:$0xff]
  %v522 = vld [vmem:[%s1 + $0xdb8] sm:$0xff]
  %v523 = vld [vmem:[%s1 + $0xdc0] sm:$0xff]
  %v524 = vld [vmem:[%s1 + $0xdc8] sm:$0xff]
  %v525 = vld [vmem:[%s1 + $0xdd0] sm:$0xff]
  %v526 = vld [vmem:[%s1 + $0xdd8] sm:$0xff]
  %v527 = vld [vmem:[%s1 + $0xde0] sm:$0xff]
  %v528 = vld [vmem:[%s1 + $0xde8] sm:$0xff]
  %v529 = vld [vmem:[%s1 + $0xdf0] sm:$0xff]
  %v530 = vld [vmem:[%s1 + $0xdf8] sm:$0xff]
  %v531 = vld [vmem:[%s2] sm:$0xff]
  %v533 = vperm.slane %v531, 0
  %v534 = vperm.slane %v531, 1
  %v535 = vperm.slane %v531, 2
  %v536 = vperm.slane %v531, 3
  %v537 = vperm.slane %v531, 4
  %v538 = vperm.slane %v531, 5
  %v539 = vperm.slane %v531, 6
  %v540 = vperm.slane %v531, 7
  %v997 = vunpack.c.l.b16 %v83
  %v998 = vunpack.c.h.b16 %v83
  %v999 = vunpack.c.l.b16 %v84
  %v1000 = vunpack.c.h.b16 %v84
  %v1001 = vunpack.c.l.b16 %v85
  %v1002 = vunpack.c.h.b16 %v85
  %v1003 = vunpack.c.l.b16 %v86
  %v1004 = vunpack.c.h.b16 %v86
  %v1005 = vunpack.c.l.b16 %v87
  %v1006 = vunpack.c.h.b16 %v87
  %v1007 = vunpack.c.l.b16 %v88
  %v1008 = vunpack.c.h.b16 %v88
  %v1009 = vunpack.c.l.b16 %v89
  %v1010 = vunpack.c.h.b16 %v89
  %v1011 = vunpack.c.l.b16 %v90
  %v1012 = vunpack.c.h.b16 %v90
  %v1013 = vunpack.c.l.b16 %v91
  %v1014 = vunpack.c.h.b16 %v91
  %v1015 = vunpack.c.l.b16 %v92
  %v1016 = vunpack.c.h.b16 %v92
  %v1017 = vunpack.c.l.b16 %v93
  %v1018 = vunpack.c.h.b16 %v93
  %v1019 = vunpack.c.l.b16 %v94
  %v1020 = vunpack.c.h.b16 %v94
  %v1021 = vunpack.c.l.b16 %v95
  %v1022 = vunpack.c.h.b16 %v95
  %v1023 = vunpack.c.l.b16 %v96
  %v1024 = vunpack.c.h.b16 %v96
  %v1025 = vunpack.c.l.b16 %v97
  %v1026 = vunpack.c.h.b16 %v97
  %v1027 = vunpack.c.l.b16 %v98
  %v1028 = vunpack.c.h.b16 %v98
  %v1029 = vunpack.c.l.b16 %v99
  %v1030 = vunpack.c.h.b16 %v99
  %v1031 = vunpack.c.l.b16 %v100
  %v1032 = vunpack.c.h.b16 %v100
  %v1033 = vunpack.c.l.b16 %v101
  %v1034 = vunpack.c.h.b16 %v101
  %v1035 = vunpack.c.l.b16 %v102
  %v1036 = vunpack.c.h.b16 %v102
  %v1037 = vunpack.c.l.b16 %v103
  %v1038 = vunpack.c.h.b16 %v103
  %v1039 = vunpack.c.l.b16 %v104
  %v1040 = vunpack.c.h.b16 %v104
  %v1041 = vunpack.c.l.b16 %v105
  %v1042 = vunpack.c.h.b16 %v105
  %v1043 = vunpack.c.l.b16 %v106
  %v1044 = vunpack.c.h.b16 %v106
  %v1045 = vunpack.c.l.b16 %v107
  %v1046 = vunpack.c.h.b16 %v107
  %v1047 = vunpack.c.l.b16 %v108
  %v1048 = vunpack.c.h.b16 %v108
  %v1049 = vunpack.c.l.b16 %v109
  %v1050 = vunpack.c.h.b16 %v109
  %v1051 = vunpack.c.l.b16 %v110
  %v1052 = vunpack.c.h.b16 %v110
  %v1053 = vunpack.c.l.b16 %v111
  %v1054 = vunpack.c.h.b16 %v111
  %v1055 = vunpack.c.l.b16 %v112
  %v1056 = vunpack.c.h.b16 %v112
  %v1057 = vunpack.c.l.b16 %v113
  %v1058 = vunpack.c.h.b16 %v113
  %v1059 = vunpack.c.l.b16 %v114
  %v1060 = vunpack.c.h.b16 %v114
  %v1061 = vunpack.c.l.b16 %v115
  %v1062 = vunpack.c.h.b16 %v115
  %v1063 = vunpack.c.l.b16 %v116
  %v1064 = vunpack.c.h.b16 %v116
  %v1065 = vunpack.c.l.b16 %v117
  %v1066 = vunpack.c.h.b16 %v117
  %v1067 = vunpack.c.l.b16 %v118
  %v1068 = vunpack.c.h.b16 %v118
  %v1069 = vunpack.c.l.b16 %v119
  %v1070 = vunpack.c.h.b16 %v119
  %v1071 = vunpack.c.l.b16 %v120
  %v1072 = vunpack.c.h.b16 %v120
  %v1073 = vunpack.c.l.b16 %v121
  %v1074 = vunpack.c.h.b16 %v121
  %v1075 = vunpack.c.l.b16 %v122
  %v1076 = vunpack.c.h.b16 %v122
  %v1077 = vunpack.c.l.b16 %v123
  %v1078 = vunpack.c.h.b16 %v123
  %v1079 = vunpack.c.l.b16 %v124
  %v1080 = vunpack.c.h.b16 %v124
  %v1081 = vunpack.c.l.b16 %v125
  %v1082 = vunpack.c.h.b16 %v125
  %v1083 = vunpack.c.l.b16 %v126
  %v1084 = vunpack.c.h.b16 %v126
  %v1085 = vunpack.c.l.b16 %v127
  %v1086 = vunpack.c.h.b16 %v127
  %v1087 = vunpack.c.l.b16 %v128
  %v1088 = vunpack.c.h.b16 %v128
  %v1089 = vunpack.c.l.b16 %v129
  %v1090 = vunpack.c.h.b16 %v129
  %v1091 = vunpack.c.l.b16 %v130
  %v1092 = vunpack.c.h.b16 %v130
  %v1093 = vunpack.c.l.b16 %v131
  %v1094 = vunpack.c.h.b16 %v131
  %v1095 = vunpack.c.l.b16 %v132
  %v1096 = vunpack.c.h.b16 %v132
  %v1097 = vunpack.c.l.b16 %v133
  %v1098 = vunpack.c.h.b16 %v133
  %v1099 = vunpack.c.l.b16 %v134
  %v1100 = vunpack.c.h.b16 %v134
  %v1101 = vunpack.c.l.b16 %v135
  %v1102 = vunpack.c.h.b16 %v135
  %v1103 = vunpack.c.l.b16 %v136
  %v1104 = vunpack.c.h.b16 %v136
  %v1105 = vunpack.c.l.b16 %v137
  %v1106 = vunpack.c.h.b16 %v137
  %v1107 = vunpack.c.l.b16 %v138
  %v1108 = vunpack.c.h.b16 %v138
  %v1109 = vunpack.c.l.b16 %v139
  %v1110 = vunpack.c.h.b16 %v139
  %v1111 = vunpack.c.l.b16 %v140
  %v1112 = vunpack.c.h.b16 %v140
  %v1113 = vunpack.c.l.b16 %v141
  %v1114 = vunpack.c.h.b16 %v141
  %v1115 = vunpack.c.l.b16 %v142
  %v1116 = vunpack.c.h.b16 %v142
  %v1117 = vunpack.c.l.b16 %v143
  %v1118 = vunpack.c.h.b16 %v143
  %v1119 = vunpack.c.l.b16 %v144
  %v1120 = vunpack.c.h.b16 %v144
  %v1121 = vunpack.c.l.b16 %v145
  %v1122 = vunpack.c.h.b16 %v145
  %v1123 = vunpack.c.l.b16 %v146
  %v1124 = vunpack.c.h.b16 %v146
  %v1125 = vunpack.c.l.b16 %v147
  %v1126 = vunpack.c.h.b16 %v147
  %v1127 = vunpack.c.l.b16 %v148
  %v1128 = vunpack.c.h.b16 %v148
  %v1129 = vunpack.c.l.b16 %v149
  %v1130 = vunpack.c.h.b16 %v149
  %v1131 = vunpack.c.l.b16 %v150
  %v1132 = vunpack.c.h.b16 %v150
  %v1133 = vunpack.c.l.b16 %v151
  %v1134 = vunpack.c.h.b16 %v151
  %v1135 = vunpack.c.l.b16 %v152
  %v1136 = vunpack.c.h.b16 %v152
  %v1137 = vunpack.c.l.b16 %v153
  %v1138 = vunpack.c.h.b16 %v153
  %v1139 = vunpack.c.l.b16 %v154
  %v1140 = vunpack.c.h.b16 %v154
  %v1141 = vunpack.c.l.b16 %v155
  %v1142 = vunpack.c.h.b16 %v155
  %v1143 = vunpack.c.l.b16 %v156
  %v1144 = vunpack.c.h.b16 %v156
  %v1145 = vunpack.c.l.b16 %v157
  %v1146 = vunpack.c.h.b16 %v157
  %v1147 = vunpack.c.l.b16 %v158
  %v1148 = vunpack.c.h.b16 %v158
  %v1149 = vunpack.c.l.b16 %v159
  %v1150 = vunpack.c.h.b16 %v159
  %v1151 = vunpack.c.l.b16 %v160
  %v1152 = vunpack.c.h.b16 %v160
  %v1153 = vunpack.c.l.b16 %v161
  %v1154 = vunpack.c.h.b16 %v161
  %v1155 = vunpack.c.l.b16 %v162
  %v1156 = vunpack.c.h.b16 %v162
  %v1157 = vunpack.c.l.b16 %v163
  %v1158 = vunpack.c.h.b16 %v163
  %v1159 = vunpack.c.l.b16 %v164
  %v1160 = vunpack.c.h.b16 %v164
  %v1161 = vunpack.c.l.b16 %v165
  %v1162 = vunpack.c.h.b16 %v165
  %v1163 = vunpack.c.l.b16 %v166
  %v1164 = vunpack.c.h.b16 %v166
  %v1165 = vunpack.c.l.b16 %v167
  %v1166 = vunpack.c.h.b16 %v167
  %v1167 = vunpack.c.l.b16 %v168
  %v1168 = vunpack.c.h.b16 %v168
  %v1169 = vunpack.c.l.b16 %v169
  %v1170 = vunpack.c.h.b16 %v169
  %v1171 = vunpack.c.l.b16 %v170
  %v1172 = vunpack.c.h.b16 %v170
  %v1173 = vunpack.c.l.b16 %v171
  %v1174 = vunpack.c.h.b16 %v171
  %v1175 = vunpack.c.l.b16 %v172
  %v1176 = vunpack.c.h.b16 %v172
  %v1177 = vunpack.c.l.b16 %v173
  %v1178 = vunpack.c.h.b16 %v173
  %v1179 = vunpack.c.l.b16 %v174
  %v1180 = vunpack.c.h.b16 %v174
  %v1181 = vunpack.c.l.b16 %v175
  %v1182 = vunpack.c.h.b16 %v175
  %v1183 = vunpack.c.l.b16 %v176
  %v1184 = vunpack.c.h.b16 %v176
  %v1185 = vunpack.c.l.b16 %v177
  %v1186 = vunpack.c.h.b16 %v177
  %v1187 = vunpack.c.l.b16 %v178
  %v1188 = vunpack.c.h.b16 %v178
  %v1189 = vunpack.c.l.b16 %v179
  %v1190 = vunpack.c.h.b16 %v179
  %v1191 = vunpack.c.l.b16 %v180
  %v1192 = vunpack.c.h.b16 %v180
  %v1193 = vunpack.c.l.b16 %v181
  %v1194 = vunpack.c.h.b16 %v181
  %v1195 = vunpack.c.l.b16 %v182
  %v1196 = vunpack.c.h.b16 %v182
  %v1197 = vunpack.c.l.b16 %v183
  %v1198 = vunpack.c.h.b16 %v183
  %v1199 = vunpack.c.l.b16 %v184
  %v1200 = vunpack.c.h.b16 %v184
  %v1201 = vunpack.c.l.b16 %v185
  %v1202 = vunpack.c.h.b16 %v185
  %v1203 = vunpack.c.l.b16 %v186
  %v1204 = vunpack.c.h.b16 %v186
  %v1205 = vunpack.c.l.b16 %v187
  %v1206 = vunpack.c.h.b16 %v187
  %v1207 = vunpack.c.l.b16 %v188
  %v1208 = vunpack.c.h.b16 %v188
  %v1209 = vunpack.c.l.b16 %v189
  %v1210 = vunpack.c.h.b16 %v189
  %v1211 = vunpack.c.l.b16 %v190
  %v1212 = vunpack.c.h.b16 %v190
  %v1213 = vunpack.c.l.b16 %v191
  %v1214 = vunpack.c.h.b16 %v191
  %v1215 = vunpack.c.l.b16 %v192
  %v1216 = vunpack.c.h.b16 %v192
  %v1217 = vunpack.c.l.b16 %v193
  %v1218 = vunpack.c.h.b16 %v193
  %v1219 = vunpack.c.l.b16 %v194
  %v1220 = vunpack.c.h.b16 %v194
  %v1221 = vunpack.c.l.b16 %v195
  %v1222 = vunpack.c.h.b16 %v195
  %v1223 = vunpack.c.l.b16 %v196
  %v1224 = vunpack.c.h.b16 %v196
  %v1225 = vunpack.c.l.b16 %v197
  %v1226 = vunpack.c.h.b16 %v197
  %v1227 = vunpack.c.l.b16 %v198
  %v1228 = vunpack.c.h.b16 %v198
  %v1229 = vunpack.c.l.b16 %v199
  %v1230 = vunpack.c.h.b16 %v199
  %v1231 = vunpack.c.l.b16 %v200
  %v1232 = vunpack.c.h.b16 %v200
  %v1233 = vunpack.c.l.b16 %v201
  %v1234 = vunpack.c.h.b16 %v201
  %v1235 = vunpack.c.l.b16 %v202
  %v1236 = vunpack.c.h.b16 %v202
  %v1237 = vunpack.c.l.b16 %v203
  %v1238 = vunpack.c.h.b16 %v203
  %v1239 = vunpack.c.l.b16 %v204
  %v1240 = vunpack.c.h.b16 %v204
  %v1241 = vunpack.c.l.b16 %v205
  %v1242 = vunpack.c.h.b16 %v205
  %v1243 = vunpack.c.l.b16 %v206
  %v1244 = vunpack.c.h.b16 %v206
  %v1245 = vunpack.c.l.b16 %v207
  %v1246 = vunpack.c.h.b16 %v207
  %v1247 = vunpack.c.l.b16 %v208
  %v1248 = vunpack.c.h.b16 %v208
  %v1249 = vunpack.c.l.b16 %v209
  %v1250 = vunpack.c.h.b16 %v209
  %v1251 = vunpack.c.l.b16 %v210
  %v1252 = vunpack.c.h.b16 %v210
  %v1253 = vunpack.c.l.b16 %v211
  %v1254 = vunpack.c.h.b16 %v211
  %v1255 = vunpack.c.l.b16 %v212
  %v1256 = vunpack.c.h.b16 %v212
  %v1257 = vunpack.c.l.b16 %v213
  %v1258 = vunpack.c.h.b16 %v213
  %v1259 = vunpack.c.l.b16 %v214
  %v1260 = vunpack.c.h.b16 %v214
  %v1261 = vunpack.c.l.b16 %v215
  %v1262 = vunpack.c.h.b16 %v215
  %v1263 = vunpack.c.l.b16 %v216
  %v1264 = vunpack.c.h.b16 %v216
  %v1265 = vunpack.c.l.b16 %v217
  %v1266 = vunpack.c.h.b16 %v217
  %v1267 = vunpack.c.l.b16 %v218
  %v1268 = vunpack.c.h.b16 %v218
  %v1269 = vunpack.c.l.b16 %v219
  %v1270 = vunpack.c.h.b16 %v219
  %v1271 = vunpack.c.l.b16 %v220
  %v1272 = vunpack.c.h.b16 %v220
  %v1273 = vunpack.c.l.b16 %v221
  %v1274 = vunpack.c.h.b16 %v221
  %v1275 = vunpack.c.l.b16 %v222
  %v1276 = vunpack.c.h.b16 %v222
  %v1277 = vunpack.c.l.b16 %v223
  %v1278 = vunpack.c.h.b16 %v223
  %v1279 = vunpack.c.l.b16 %v224
  %v1280 = vunpack.c.h.b16 %v224
  %v1281 = vunpack.c.l.b16 %v225
  %v1282 = vunpack.c.h.b16 %v225
  %v1283 = vunpack.c.l.b16 %v226
  %v1284 = vunpack.c.h.b16 %v226
  %v1285 = vunpack.c.l.b16 %v227
  %v1286 = vunpack.c.h.b16 %v227
  %v1287 = vunpack.c.l.b16 %v228
  %v1288 = vunpack.c.h.b16 %v228
  %v1289 = vunpack.c.l.b16 %v229
  %v1290 = vunpack.c.h.b16 %v229
  %v1291 = vunpack.c.l.b16 %v230
  %v1292 = vunpack.c.h.b16 %v230
  %v1293 = vunpack.c.l.b16 %v231
  %v1294 = vunpack.c.h.b16 %v231
  %v1295 = vunpack.c.l.b16 %v232
  %v1296 = vunpack.c.h.b16 %v232
  %v1297 = vunpack.c.l.b16 %v233
  %v1298 = vunpack.c.h.b16 %v233
  %v1299 = vunpack.c.l.b16 %v234
  %v1300 = vunpack.c.h.b16 %v234
  %v1301 = vunpack.c.l.b16 %v235
  %v1302 = vunpack.c.h.b16 %v235
  %v1303 = vunpack.c.l.b16 %v236
  %v1304 = vunpack.c.h.b16 %v236
  %v1305 = vunpack.c.l.b16 %v237
  %v1306 = vunpack.c.h.b16 %v237
  %v1307 = vunpack.c.l.b16 %v238
  %v1308 = vunpack.c.h.b16 %v238
  %v1309 = vunpack.c.l.b16 %v239
  %v1310 = vunpack.c.h.b16 %v239
  %v1311 = vunpack.c.l.b16 %v240
  %v1312 = vunpack.c.h.b16 %v240
  %v1313 = vunpack.c.l.b16 %v241
  %v1314 = vunpack.c.h.b16 %v241
  %v1315 = vunpack.c.l.b16 %v242
  %v1316 = vunpack.c.h.b16 %v242
  %v1317 = vunpack.c.l.b16 %v243
  %v1318 = vunpack.c.h.b16 %v243
  %v1319 = vunpack.c.l.b16 %v244
  %v1320 = vunpack.c.h.b16 %v244
  %v1321 = vunpack.c.l.b16 %v245
  %v1322 = vunpack.c.h.b16 %v245
  %v1323 = vunpack.c.l.b16 %v246
  %v1324 = vunpack.c.h.b16 %v246
  %v1325 = vunpack.c.l.b16 %v247
  %v1326 = vunpack.c.h.b16 %v247
  %v1327 = vunpack.c.l.b16 %v248
  %v1328 = vunpack.c.h.b16 %v248
  %v1329 = vunpack.c.l.b16 %v249
  %v1330 = vunpack.c.h.b16 %v249
  %v1331 = vunpack.c.l.b16 %v250
  %v1332 = vunpack.c.h.b16 %v250
  %v1333 = vunpack.c.l.b16 %v251
  %v1334 = vunpack.c.h.b16 %v251
  %v1335 = vunpack.c.l.b16 %v252
  %v1336 = vunpack.c.h.b16 %v252
  %v1337 = vunpack.c.l.b16 %v253
  %v1338 = vunpack.c.h.b16 %v253
  %v1339 = vunpack.c.l.b16 %v254
  %v1340 = vunpack.c.h.b16 %v254
  %v1341 = vunpack.c.l.b16 %v255
  %v1342 = vunpack.c.h.b16 %v255
  %v1343 = vunpack.c.l.b16 %v256
  %v1344 = vunpack.c.h.b16 %v256
  %v1345 = vunpack.c.l.b16 %v257
  %v1346 = vunpack.c.h.b16 %v257
  %v1347 = vunpack.c.l.b16 %v258
  %v1348 = vunpack.c.h.b16 %v258
  %v1349 = vunpack.c.l.b16 %v259
  %v1350 = vunpack.c.h.b16 %v259
  %v1351 = vunpack.c.l.b16 %v260
  %v1352 = vunpack.c.h.b16 %v260
  %v1353 = vunpack.c.l.b16 %v261
  %v1354 = vunpack.c.h.b16 %v261
  %v1355 = vunpack.c.l.b16 %v262
  %v1356 = vunpack.c.h.b16 %v262
  %v1357 = vunpack.c.l.b16 %v263
  %v1358 = vunpack.c.h.b16 %v263
  %v1359 = vunpack.c.l.b16 %v264
  %v1360 = vunpack.c.h.b16 %v264
  %v1361 = vunpack.c.l.b16 %v265
  %v1362 = vunpack.c.h.b16 %v265
  %v1363 = vunpack.c.l.b16 %v266
  %v1364 = vunpack.c.h.b16 %v266
  %v1365 = vunpack.c.l.b16 %v267
  %v1366 = vunpack.c.h.b16 %v267
  %v1367 = vunpack.c.l.b16 %v268
  %v1368 = vunpack.c.h.b16 %v268
  %v1369 = vunpack.c.l.b16 %v269
  %v1370 = vunpack.c.h.b16 %v269
  %v1371 = vunpack.c.l.b16 %v270
  %v1372 = vunpack.c.h.b16 %v270
  %v1373 = vunpack.c.l.b16 %v271
  %v1374 = vunpack.c.h.b16 %v271
  %v1375 = vunpack.c.l.b16 %v272
  %v1376 = vunpack.c.h.b16 %v272
  %v1377 = vunpack.c.l.b16 %v273
  %v1378 = vunpack.c.h.b16 %v273
  %v1379 = vunpack.c.l.b16 %v274
  %v1380 = vunpack.c.h.b16 %v274
  %v1381 = vunpack.c.l.b16 %v275
  %v1382 = vunpack.c.h.b16 %v275
  %v1383 = vunpack.c.l.b16 %v276
  %v1384 = vunpack.c.h.b16 %v276
  %v1385 = vunpack.c.l.b16 %v277
  %v1386 = vunpack.c.h.b16 %v277
  %v1387 = vunpack.c.l.b16 %v278
  %v1388 = vunpack.c.h.b16 %v278
  %v1389 = vunpack.c.l.b16 %v279
  %v1390 = vunpack.c.h.b16 %v279
  %v1391 = vunpack.c.l.b16 %v280
  %v1392 = vunpack.c.h.b16 %v280
  %v1393 = vunpack.c.l.b16 %v281
  %v1394 = vunpack.c.h.b16 %v281
  %v1395 = vunpack.c.l.b16 %v282
  %v1396 = vunpack.c.h.b16 %v282
  %v1397 = vunpack.c.l.b16 %v283
  %v1398 = vunpack.c.h.b16 %v283
  %v1399 = vunpack.c.l.b16 %v284
  %v1400 = vunpack.c.h.b16 %v284
  %v1401 = vunpack.c.l.b16 %v285
  %v1402 = vunpack.c.h.b16 %v285
  %v1403 = vunpack.c.l.b16 %v286
  %v1404 = vunpack.c.h.b16 %v286
  %v1405 = vunpack.c.l.b16 %v287
  %v1406 = vunpack.c.h.b16 %v287
  %v1407 = vunpack.c.l.b16 %v288
  %v1408 = vunpack.c.h.b16 %v288
  %v1409 = vunpack.c.l.b16 %v289
  %v1410 = vunpack.c.h.b16 %v289
  %v1411 = vunpack.c.l.b16 %v290
  %v1412 = vunpack.c.h.b16 %v290
  %v1413 = vunpack.c.l.b16 %v291
  %v1414 = vunpack.c.h.b16 %v291
  %v1415 = vunpack.c.l.b16 %v292
  %v1416 = vunpack.c.h.b16 %v292
  %v1417 = vunpack.c.l.b16 %v293
  %v1418 = vunpack.c.h.b16 %v293
  %v1419 = vunpack.c.l.b16 %v294
  %v1420 = vunpack.c.h.b16 %v294
  %v1421 = vunpack.c.l.b16 %v295
  %v1422 = vunpack.c.h.b16 %v295
  %v1423 = vunpack.c.l.b16 %v296
  %v1424 = vunpack.c.h.b16 %v296
  %v1425 = vunpack.c.l.b16 %v297
  %v1426 = vunpack.c.h.b16 %v297
  %v1427 = vunpack.c.l.b16 %v298
  %v1428 = vunpack.c.h.b16 %v298
  %v1429 = vunpack.c.l.b16 %v299
  %v1430 = vunpack.c.h.b16 %v299
  %v1431 = vunpack.c.l.b16 %v300
  %v1432 = vunpack.c.h.b16 %v300
  %v1433 = vunpack.c.l.b16 %v301
  %v1434 = vunpack.c.h.b16 %v301
  %v1435 = vunpack.c.l.b16 %v302
  %v1436 = vunpack.c.h.b16 %v302
  %v1437 = vunpack.c.l.b16 %v303
  %v1438 = vunpack.c.h.b16 %v303
  %v1439 = vunpack.c.l.b16 %v304
  %v1440 = vunpack.c.h.b16 %v304
  %v1441 = vunpack.c.l.b16 %v305
  %v1442 = vunpack.c.h.b16 %v305
  %v1443 = vunpack.c.l.b16 %v306
  %v1444 = vunpack.c.h.b16 %v306
  %v1445 = vunpack.c.l.b16 %v307
  %v1446 = vunpack.c.h.b16 %v307
  %v1447 = vunpack.c.l.b16 %v308
  %v1448 = vunpack.c.h.b16 %v308
  %v1449 = vunpack.c.l.b16 %v309
  %v1450 = vunpack.c.h.b16 %v309
  %v1451 = vunpack.c.l.b16 %v310
  %v1452 = vunpack.c.h.b16 %v310
  %v1453 = vunpack.c.l.b16 %v311
  %v1454 = vunpack.c.h.b16 %v311
  %v1455 = vunpack.c.l.b16 %v312
  %v1456 = vunpack.c.h.b16 %v312
  %v1457 = vunpack.c.l.b16 %v313
  %v1458 = vunpack.c.h.b16 %v313
  %v1459 = vunpack.c.l.b16 %v314
  %v1460 = vunpack.c.h.b16 %v314
  %v1461 = vunpack.c.l.b16 %v315
  %v1462 = vunpack.c.h.b16 %v315
  %v1463 = vunpack.c.l.b16 %v316
  %v1464 = vunpack.c.h.b16 %v316
  %v1465 = vunpack.c.l.b16 %v317
  %v1466 = vunpack.c.h.b16 %v317
  %v1467 = vunpack.c.l.b16 %v318
  %v1468 = vunpack.c.h.b16 %v318
  %v1469 = vunpack.c.l.b16 %v319
  %v1470 = vunpack.c.h.b16 %v319
  %v1471 = vunpack.c.l.b16 %v320
  %v1472 = vunpack.c.h.b16 %v320
  %v1473 = vunpack.c.l.b16 %v321
  %v1474 = vunpack.c.h.b16 %v321
  %v1475 = vunpack.c.l.b16 %v322
  %v1476 = vunpack.c.h.b16 %v322
  %v1477 = vunpack.c.l.b16 %v323
  %v1478 = vunpack.c.h.b16 %v323
  %v1479 = vunpack.c.l.b16 %v324
  %v1480 = vunpack.c.h.b16 %v324
  %v1481 = vunpack.c.l.b16 %v325
  %v1482 = vunpack.c.h.b16 %v325
  %v1483 = vunpack.c.l.b16 %v326
  %v1484 = vunpack.c.h.b16 %v326
  %v1485 = vunpack.c.l.b16 %v327
  %v1486 = vunpack.c.h.b16 %v327
  %v1487 = vunpack.c.l.b16 %v328
  %v1488 = vunpack.c.h.b16 %v328
  %v1489 = vunpack.c.l.b16 %v329
  %v1490 = vunpack.c.h.b16 %v329
  %v1491 = vunpack.c.l.b16 %v330
  %v1492 = vunpack.c.h.b16 %v330
  %v1493 = vunpack.c.l.b16 %v331
  %v1494 = vunpack.c.h.b16 %v331
  %v1495 = vunpack.c.l.b16 %v332
  %v1496 = vunpack.c.h.b16 %v332
  %v1497 = vunpack.c.l.b16 %v333
  %v1498 = vunpack.c.h.b16 %v333
  %v1499 = vunpack.c.l.b16 %v334
  %v1500 = vunpack.c.h.b16 %v334
  %v1501 = vunpack.c.l.b16 %v335
  %v1502 = vunpack.c.h.b16 %v335
  %v1503 = vunpack.c.l.b16 %v336
  %v1504 = vunpack.c.h.b16 %v336
  %v1505 = vunpack.c.l.b16 %v337
  %v1506 = vunpack.c.h.b16 %v337
  %v1507 = vunpack.c.l.b16 %v338
  %v1508 = vunpack.c.h.b16 %v338
  %v1509 = vunpack.c.l.b16 %v339
  %v1510 = vunpack.c.h.b16 %v339
  %v1511 = vunpack.c.l.b16 %v340
  %v1512 = vunpack.c.h.b16 %v340
  %v1513 = vunpack.c.l.b16 %v341
  %v1514 = vunpack.c.h.b16 %v341
  %v1515 = vunpack.c.l.b16 %v342
  %v1516 = vunpack.c.h.b16 %v342
  %v1517 = vunpack.c.l.b16 %v343
  %v1518 = vunpack.c.h.b16 %v343
  %v1519 = vunpack.c.l.b16 %v344
  %v1520 = vunpack.c.h.b16 %v344
  %v1521 = vunpack.c.l.b16 %v345
  %v1522 = vunpack.c.h.b16 %v345
  %v1523 = vunpack.c.l.b16 %v346
  %v1524 = vunpack.c.h.b16 %v346
  %v1525 = vunpack.c.l.b16 %v347
  %v1526 = vunpack.c.h.b16 %v347
  %v1527 = vunpack.c.l.b16 %v348
  %v1528 = vunpack.c.h.b16 %v348
  %v1529 = vunpack.c.l.b16 %v349
  %v1530 = vunpack.c.h.b16 %v349
  %v1531 = vunpack.c.l.b16 %v350
  %v1532 = vunpack.c.h.b16 %v350
  %v1533 = vunpack.c.l.b16 %v351
  %v1534 = vunpack.c.h.b16 %v351
  %v1535 = vunpack.c.l.b16 %v352
  %v1536 = vunpack.c.h.b16 %v352
  %v1537 = vunpack.c.l.b16 %v353
  %v1538 = vunpack.c.h.b16 %v353
  %v1539 = vunpack.c.l.b16 %v354
  %v1540 = vunpack.c.h.b16 %v354
  %v1541 = vunpack.c.l.b16 %v355
  %v1542 = vunpack.c.h.b16 %v355
  %v1543 = vunpack.c.l.b16 %v356
  %v1544 = vunpack.c.h.b16 %v356
  %v1545 = vunpack.c.l.b16 %v357
  %v1546 = vunpack.c.h.b16 %v357
  %v1547 = vunpack.c.l.b16 %v358
  %v1548 = vunpack.c.h.b16 %v358
  %v1549 = vunpack.c.l.b16 %v359
  %v1550 = vunpack.c.h.b16 %v359
  %v1551 = vunpack.c.l.b16 %v360
  %v1552 = vunpack.c.h.b16 %v360
  %v1553 = vunpack.c.l.b16 %v361
  %v1554 = vunpack.c.h.b16 %v361
  %v1555 = vunpack.c.l.b16 %v362
  %v1556 = vunpack.c.h.b16 %v362
  %v1557 = vunpack.c.l.b16 %v363
  %v1558 = vunpack.c.h.b16 %v363
  %v1559 = vunpack.c.l.b16 %v364
  %v1560 = vunpack.c.h.b16 %v364
  %v1561 = vunpack.c.l.b16 %v365
  %v1562 = vunpack.c.h.b16 %v365
  %v1563 = vunpack.c.l.b16 %v366
  %v1564 = vunpack.c.h.b16 %v366
  %v1565 = vunpack.c.l.b16 %v367
  %v1566 = vunpack.c.h.b16 %v367
  %v1567 = vunpack.c.l.b16 %v368
  %v1568 = vunpack.c.h.b16 %v368
  %v1569 = vunpack.c.l.b16 %v369
  %v1570 = vunpack.c.h.b16 %v369
  %v1571 = vunpack.c.l.b16 %v370
  %v1572 = vunpack.c.h.b16 %v370
  %v1573 = vunpack.c.l.b16 %v371
  %v1574 = vunpack.c.h.b16 %v371
  %v1575 = vunpack.c.l.b16 %v372
  %v1576 = vunpack.c.h.b16 %v372
  %v1577 = vunpack.c.l.b16 %v373
  %v1578 = vunpack.c.h.b16 %v373
  %v1579 = vunpack.c.l.b16 %v374
  %v1580 = vunpack.c.h.b16 %v374
  %v1581 = vunpack.c.l.b16 %v375
  %v1582 = vunpack.c.h.b16 %v375
  %v1583 = vunpack.c.l.b16 %v376
  %v1584 = vunpack.c.h.b16 %v376
  %v1585 = vunpack.c.l.b16 %v377
  %v1586 = vunpack.c.h.b16 %v377
  %v1587 = vunpack.c.l.b16 %v378
  %v1588 = vunpack.c.h.b16 %v378
  %v1589 = vunpack.c.l.b16 %v379
  %v1590 = vunpack.c.h.b16 %v379
  %v1591 = vunpack.c.l.b16 %v380
  %v1592 = vunpack.c.h.b16 %v380
  %v1593 = vunpack.c.l.b16 %v381
  %v1594 = vunpack.c.h.b16 %v381
  %v1595 = vunpack.c.l.b16 %v382
  %v1596 = vunpack.c.h.b16 %v382
  %v1597 = vunpack.c.l.b16 %v383
  %v1598 = vunpack.c.h.b16 %v383
  %v1599 = vunpack.c.l.b16 %v384
  %v1600 = vunpack.c.h.b16 %v384
  %v1601 = vunpack.c.l.b16 %v385
  %v1602 = vunpack.c.h.b16 %v385
  %v1603 = vunpack.c.l.b16 %v386
  %v1604 = vunpack.c.h.b16 %v386
  %v1605 = vunpack.c.l.b16 %v387
  %v1606 = vunpack.c.h.b16 %v387
  %v1607 = vunpack.c.l.b16 %v388
  %v1608 = vunpack.c.h.b16 %v388
  %v1609 = vunpack.c.l.b16 %v389
  %v1610 = vunpack.c.h.b16 %v389
  %v1611 = vunpack.c.l.b16 %v390
  %v1612 = vunpack.c.h.b16 %v390
  %v1613 = vunpack.c.l.b16 %v391
  %v1614 = vunpack.c.h.b16 %v391
  %v1615 = vunpack.c.l.b16 %v392
  %v1616 = vunpack.c.h.b16 %v392
  %v1617 = vunpack.c.l.b16 %v393
  %v1618 = vunpack.c.h.b16 %v393
  %v1619 = vunpack.c.l.b16 %v394
  %v1620 = vunpack.c.h.b16 %v394
  %v1621 = vunpack.c.l.b16 %v395
  %v1622 = vunpack.c.h.b16 %v395
  %v1623 = vunpack.c.l.b16 %v396
  %v1624 = vunpack.c.h.b16 %v396
  %v1625 = vunpack.c.l.b16 %v397
  %v1626 = vunpack.c.h.b16 %v397
  %v1627 = vunpack.c.l.b16 %v398
  %v1628 = vunpack.c.h.b16 %v398
  %v1629 = vunpack.c.l.b16 %v399
  %v1630 = vunpack.c.h.b16 %v399
  %v1631 = vunpack.c.l.b16 %v400
  %v1632 = vunpack.c.h.b16 %v400
  %v1633 = vunpack.c.l.b16 %v401
  %v1634 = vunpack.c.h.b16 %v401
  %v1635 = vunpack.c.l.b16 %v402
  %v1636 = vunpack.c.h.b16 %v402
  %v1637 = vunpack.c.l.b16 %v403
  %v1638 = vunpack.c.h.b16 %v403
  %v1639 = vunpack.c.l.b16 %v404
  %v1640 = vunpack.c.h.b16 %v404
  %v1641 = vunpack.c.l.b16 %v405
  %v1642 = vunpack.c.h.b16 %v405
  %v1643 = vunpack.c.l.b16 %v406
  %v1644 = vunpack.c.h.b16 %v406
  %v1645 = vunpack.c.l.b16 %v407
  %v1646 = vunpack.c.h.b16 %v407
  %v1647 = vunpack.c.l.b16 %v408
  %v1648 = vunpack.c.h.b16 %v408
  %v1649 = vunpack.c.l.b16 %v409
  %v1650 = vunpack.c.h.b16 %v409
  %v1651 = vunpack.c.l.b16 %v410
  %v1652 = vunpack.c.h.b16 %v410
  %v1653 = vunpack.c.l.b16 %v411
  %v1654 = vunpack.c.h.b16 %v411
  %v1655 = vunpack.c.l.b16 %v412
  %v1656 = vunpack.c.h.b16 %v412
  %v1657 = vunpack.c.l.b16 %v413
  %v1658 = vunpack.c.h.b16 %v413
  %v1659 = vunpack.c.l.b16 %v414
  %v1660 = vunpack.c.h.b16 %v414
  %v1661 = vunpack.c.l.b16 %v415
  %v1662 = vunpack.c.h.b16 %v415
  %v1663 = vunpack.c.l.b16 %v416
  %v1664 = vunpack.c.h.b16 %v416
  %v1665 = vunpack.c.l.b16 %v417
  %v1666 = vunpack.c.h.b16 %v417
  %v1667 = vunpack.c.l.b16 %v418
  %v1668 = vunpack.c.h.b16 %v418
  %v1669 = vunpack.c.l.b16 %v419
  %v1670 = vunpack.c.h.b16 %v419
  %v1671 = vunpack.c.l.b16 %v420
  %v1672 = vunpack.c.h.b16 %v420
  %v1673 = vunpack.c.l.b16 %v421
  %v1674 = vunpack.c.h.b16 %v421
  %v1675 = vunpack.c.l.b16 %v422
  %v1676 = vunpack.c.h.b16 %v422
  %v1677 = vunpack.c.l.b16 %v423
  %v1678 = vunpack.c.h.b16 %v423
  %v1679 = vunpack.c.l.b16 %v424
  %v1680 = vunpack.c.h.b16 %v424
  %v1681 = vunpack.c.l.b16 %v425
  %v1682 = vunpack.c.h.b16 %v425
  %v1683 = vunpack.c.l.b16 %v426
  %v1684 = vunpack.c.h.b16 %v426
  %v1685 = vunpack.c.l.b16 %v427
  %v1686 = vunpack.c.h.b16 %v427
  %v1687 = vunpack.c.l.b16 %v428
  %v1688 = vunpack.c.h.b16 %v428
  %v1689 = vunpack.c.l.b16 %v429
  %v1690 = vunpack.c.h.b16 %v429
  %v1691 = vunpack.c.l.b16 %v430
  %v1692 = vunpack.c.h.b16 %v430
  %v1693 = vunpack.c.l.b16 %v431
  %v1694 = vunpack.c.h.b16 %v431
  %v1695 = vunpack.c.l.b16 %v432
  %v1696 = vunpack.c.h.b16 %v432
  %v1697 = vunpack.c.l.b16 %v433
  %v1698 = vunpack.c.h.b16 %v433
  %v1699 = vunpack.c.l.b16 %v434
  %v1700 = vunpack.c.h.b16 %v434
  %v1701 = vunpack.c.l.b16 %v435
  %v1702 = vunpack.c.h.b16 %v435
  %v1703 = vunpack.c.l.b16 %v436
  %v1704 = vunpack.c.h.b16 %v436
  %v1705 = vunpack.c.l.b16 %v437
  %v1706 = vunpack.c.h.b16 %v437
  %v1707 = vunpack.c.l.b16 %v438
  %v1708 = vunpack.c.h.b16 %v438
  %v1709 = vunpack.c.l.b16 %v439
  %v1710 = vunpack.c.h.b16 %v439
  %v1711 = vunpack.c.l.b16 %v440
  %v1712 = vunpack.c.h.b16 %v440
  %v1713 = vunpack.c.l.b16 %v441
  %v1714 = vunpack.c.h.b16 %v441
  %v1715 = vunpack.c.l.b16 %v442
  %v1716 = vunpack.c.h.b16 %v442
  %v1717 = vunpack.c.l.b16 %v443
  %v1718 = vunpack.c.h.b16 %v443
  %v1719 = vunpack.c.l.b16 %v444
  %v1720 = vunpack.c.h.b16 %v444
  %v1721 = vunpack.c.l.b16 %v445
  %v1722 = vunpack.c.h.b16 %v445
  %v1723 = vunpack.c.l.b16 %v446
  %v1724 = vunpack.c.h.b16 %v446
  %v1725 = vunpack.c.l.b16 %v447
  %v1726 = vunpack.c.h.b16 %v447
  %v1727 = vunpack.c.l.b16 %v448
  %v1728 = vunpack.c.h.b16 %v448
  %v1729 = vunpack.c.l.b16 %v449
  %v1730 = vunpack.c.h.b16 %v449
  %v1731 = vunpack.c.l.b16 %v450
  %v1732 = vunpack.c.h.b16 %v450
  %v1733 = vunpack.c.l.b16 %v451
  %v1734 = vunpack.c.h.b16 %v451
  %v1735 = vunpack.c.l.b16 %v452
  %v1736 = vunpack.c.h.b16 %v452
  %v1737 = vunpack.c.l.b16 %v453
  %v1738 = vunpack.c.h.b16 %v453
  %v1739 = vunpack.c.l.b16 %v454
  %v1740 = vunpack.c.h.b16 %v454
  %v1741 = vunpack.c.l.b16 %v455
  %v1742 = vunpack.c.h.b16 %v455
  %v1743 = vunpack.c.l.b16 %v456
  %v1744 = vunpack.c.h.b16 %v456
  %v1745 = vunpack.c.l.b16 %v457
  %v1746 = vunpack.c.h.b16 %v457
  %v1747 = vunpack.c.l.b16 %v458
  %v1748 = vunpack.c.h.b16 %v458
  %v1749 = vunpack.c.l.b16 %v459
  %v1750 = vunpack.c.h.b16 %v459
  %v1751 = vunpack.c.l.b16 %v460
  %v1752 = vunpack.c.h.b16 %v460
  %v1753 = vunpack.c.l.b16 %v461
  %v1754 = vunpack.c.h.b16 %v461
  %v1755 = vunpack.c.l.b16 %v462
  %v1756 = vunpack.c.h.b16 %v462
  %v1757 = vunpack.c.l.b16 %v463
  %v1758 = vunpack.c.h.b16 %v463
  %v1759 = vunpack.c.l.b16 %v464
  %v1760 = vunpack.c.h.b16 %v464
  %v1761 = vunpack.c.l.b16 %v465
  %v1762 = vunpack.c.h.b16 %v465
  %v1763 = vunpack.c.l.b16 %v466
  %v1764 = vunpack.c.h.b16 %v466
  %v1765 = vunpack.c.l.b16 %v467
  %v1766 = vunpack.c.h.b16 %v467
  %v1767 = vunpack.c.l.b16 %v468
  %v1768 = vunpack.c.h.b16 %v468
  %v1769 = vunpack.c.l.b16 %v469
  %v1770 = vunpack.c.h.b16 %v469
  %v1771 = vunpack.c.l.b16 %v470
  %v1772 = vunpack.c.h.b16 %v470
  %v1773 = vunpack.c.l.b16 %v471
  %v1774 = vunpack.c.h.b16 %v471
  %v1775 = vunpack.c.l.b16 %v472
  %v1776 = vunpack.c.h.b16 %v472
  %v1777 = vunpack.c.l.b16 %v473
  %v1778 = vunpack.c.h.b16 %v473
  %v1779 = vunpack.c.l.b16 %v474
  %v1780 = vunpack.c.h.b16 %v474
  %v1781 = vunpack.c.l.b16 %v475
  %v1782 = vunpack.c.h.b16 %v475
  %v1783 = vunpack.c.l.b16 %v476
  %v1784 = vunpack.c.h.b16 %v476
  %v1785 = vunpack.c.l.b16 %v477
  %v1786 = vunpack.c.h.b16 %v477
  %v1787 = vunpack.c.l.b16 %v478
  %v1788 = vunpack.c.h.b16 %v478
  %v1789 = vunpack.c.l.b16 %v479
  %v1790 = vunpack.c.h.b16 %v479
  %v1791 = vunpack.c.l.b16 %v480
  %v1792 = vunpack.c.h.b16 %v480
  %v1793 = vunpack.c.l.b16 %v481
  %v1794 = vunpack.c.h.b16 %v481
  %v1795 = vunpack.c.l.b16 %v482
  %v1796 = vunpack.c.h.b16 %v482
  %v1797 = vunpack.c.l.b16 %v483
  %v1798 = vunpack.c.h.b16 %v483
  %v1799 = vunpack.c.l.b16 %v484
  %v1800 = vunpack.c.h.b16 %v484
  %v1801 = vunpack.c.l.b16 %v485
  %v1802 = vunpack.c.h.b16 %v485
  %v1803 = vunpack.c.l.b16 %v486
  %v1804 = vunpack.c.h.b16 %v486
  %v1805 = vunpack.c.l.b16 %v487
  %v1806 = vunpack.c.h.b16 %v487
  %v1807 = vunpack.c.l.b16 %v488
  %v1808 = vunpack.c.h.b16 %v488
  %v1809 = vunpack.c.l.b16 %v489
  %v1810 = vunpack.c.h.b16 %v489
  %v1811 = vunpack.c.l.b16 %v490
  %v1812 = vunpack.c.h.b16 %v490
  %v1813 = vunpack.c.l.b16 %v491
  %v1814 = vunpack.c.h.b16 %v491
  %v1815 = vunpack.c.l.b16 %v492
  %v1816 = vunpack.c.h.b16 %v492
  %v1817 = vunpack.c.l.b16 %v493
  %v1818 = vunpack.c.h.b16 %v493
  %v1819 = vunpack.c.l.b16 %v494
  %v1820 = vunpack.c.h.b16 %v494
  %v1821 = vunpack.c.l.b16 %v495
  %v1822 = vunpack.c.h.b16 %v495
  %v1823 = vunpack.c.l.b16 %v496
  %v1824 = vunpack.c.h.b16 %v496
  %v1825 = vunpack.c.l.b16 %v497
  %v1826 = vunpack.c.h.b16 %v497
  %v1827 = vunpack.c.l.b16 %v498
  %v1828 = vunpack.c.h.b16 %v498
  %v1829 = vunpack.c.l.b16 %v499
  %v1830 = vunpack.c.h.b16 %v499
  %v1831 = vunpack.c.l.b16 %v500
  %v1832 = vunpack.c.h.b16 %v500
  %v1833 = vunpack.c.l.b16 %v501
  %v1834 = vunpack.c.h.b16 %v501
  %v1835 = vunpack.c.l.b16 %v502
  %v1836 = vunpack.c.h.b16 %v502
  %v1837 = vunpack.c.l.b16 %v503
  %v1838 = vunpack.c.h.b16 %v503
  %v1839 = vunpack.c.l.b16 %v504
  %v1840 = vunpack.c.h.b16 %v504
  %v1841 = vunpack.c.l.b16 %v505
  %v1842 = vunpack.c.h.b16 %v505
  %v1843 = vunpack.c.l.b16 %v506
  %v1844 = vunpack.c.h.b16 %v506
  %v1845 = vunpack.c.l.b16 %v507
  %v1846 = vunpack.c.h.b16 %v507
  %v1847 = vunpack.c.l.b16 %v508
  %v1848 = vunpack.c.h.b16 %v508
  %v1849 = vunpack.c.l.b16 %v509
  %v1850 = vunpack.c.h.b16 %v509
  %v1851 = vunpack.c.l.b16 %v510
  %v1852 = vunpack.c.h.b16 %v510
  %v1853 = vunpack.c.l.b16 %v511
  %v1854 = vunpack.c.h.b16 %v511
  %v1855 = vunpack.c.l.b16 %v512
  %v1856 = vunpack.c.h.b16 %v512
  %v1857 = vunpack.c.l.b16 %v513
  %v1858 = vunpack.c.h.b16 %v513
  %v1859 = vunpack.c.l.b16 %v514
  %v1860 = vunpack.c.h.b16 %v514
  %v1861 = vunpack.c.l.b16 %v515
  %v1862 = vunpack.c.h.b16 %v515
  %v1863 = vunpack.c.l.b16 %v516
  %v1864 = vunpack.c.h.b16 %v516
  %v1865 = vunpack.c.l.b16 %v517
  %v1866 = vunpack.c.h.b16 %v517
  %v1867 = vunpack.c.l.b16 %v518
  %v1868 = vunpack.c.h.b16 %v518
  %v1869 = vunpack.c.l.b16 %v519
  %v1870 = vunpack.c.h.b16 %v519
  %v1871 = vunpack.c.l.b16 %v520
  %v1872 = vunpack.c.h.b16 %v520
  %v1873 = vunpack.c.l.b16 %v521
  %v1874 = vunpack.c.h.b16 %v521
  %v1875 = vunpack.c.l.b16 %v522
  %v1876 = vunpack.c.h.b16 %v522
  %v1877 = vunpack.c.l.b16 %v523
  %v1878 = vunpack.c.h.b16 %v523
  %v1879 = vunpack.c.l.b16 %v524
  %v1880 = vunpack.c.h.b16 %v524
  %v1881 = vunpack.c.l.b16 %v525
  %v1882 = vunpack.c.h.b16 %v525
  %v1883 = vunpack.c.l.b16 %v526
  %v1884 = vunpack.c.h.b16 %v526
  %v1885 = vunpack.c.l.b16 %v527
  %v1886 = vunpack.c.h.b16 %v527
  %v1887 = vunpack.c.l.b16 %v528
  %v1888 = vunpack.c.h.b16 %v528
  %v1889 = vunpack.c.l.b16 %v529
  %v1890 = vunpack.c.h.b16 %v529
  %v1891 = vunpack.c.l.b16 %v530
  %v1892 = vunpack.c.h.b16 %v530
  %v1893 = vpack.c.b16 %v1005, %v997
  %v1894 = vpack.c.b16 %v1006, %v998
  %v1895 = vpack.c.b16 %v1007, %v999
  %v1896 = vpack.c.b16 %v1008, %v1000
  %v1897 = vpack.c.b16 %v1009, %v1001
  %v1898 = vpack.c.b16 %v1010, %v1002
  %v1899 = vpack.c.b16 %v1011, %v1003
  %v1900 = vpack.c.b16 %v1012, %v1004
  %v1901 = vpack.c.b16 %v1021, %v1013
  %v1902 = vpack.c.b16 %v1022, %v1014
  %v1903 = vpack.c.b16 %v1023, %v1015
  %v1904 = vpack.c.b16 %v1024, %v1016
  %v1905 = vpack.c.b16 %v1025, %v1017
  %v1906 = vpack.c.b16 %v1026, %v1018
  %v1907 = vpack.c.b16 %v1027, %v1019
  %v1908 = vpack.c.b16 %v1028, %v1020
  %v1909 = vpack.c.b16 %v1037, %v1029
  %v1910 = vpack.c.b16 %v1038, %v1030
  %v1911 = vpack.c.b16 %v1039, %v1031
  %v1912 = vpack.c.b16 %v1040, %v1032
  %v1913 = vpack.c.b16 %v1041, %v1033
  %v1914 = vpack.c.b16 %v1042, %v1034
  %v1915 = vpack.c.b16 %v1043, %v1035
  %v1916 = vpack.c.b16 %v1044, %v1036
  %v1917 = vpack.c.b16 %v1053, %v1045
  %v1918 = vpack.c.b16 %v1054, %v1046
  %v1919 = vpack.c.b16 %v1055, %v1047
  %v1920 = vpack.c.b16 %v1056, %v1048
  %v1921 = vpack.c.b16 %v1057, %v1049
  %v1922 = vpack.c.b16 %v1058, %v1050
  %v1923 = vpack.c.b16 %v1059, %v1051
  %v1924 = vpack.c.b16 %v1060, %v1052
  %v1925 = vpack.c.b16 %v1069, %v1061
  %v1926 = vpack.c.b16 %v1070, %v1062
  %v1927 = vpack.c.b16 %v1071, %v1063
  %v1928 = vpack.c.b16 %v1072, %v1064
  %v1929 = vpack.c.b16 %v1073, %v1065
  %v1930 = vpack.c.b16 %v1074, %v1066
  %v1931 = vpack.c.b16 %v1075, %v1067
  %v1932 = vpack.c.b16 %v1076, %v1068
  %v1933 = vpack.c.b16 %v1085, %v1077
  %v1934 = vpack.c.b16 %v1086, %v1078
  %v1935 = vpack.c.b16 %v1087, %v1079
  %v1936 = vpack.c.b16 %v1088, %v1080
  %v1937 = vpack.c.b16 %v1089, %v1081
  %v1938 = vpack.c.b16 %v1090, %v1082
  %v1939 = vpack.c.b16 %v1091, %v1083
  %v1940 = vpack.c.b16 %v1092, %v1084
  %v1941 = vpack.c.b16 %v1101, %v1093
  %v1942 = vpack.c.b16 %v1102, %v1094
  %v1943 = vpack.c.b16 %v1103, %v1095
  %v1944 = vpack.c.b16 %v1104, %v1096
  %v1945 = vpack.c.b16 %v1105, %v1097
  %v1946 = vpack.c.b16 %v1106, %v1098
  %v1947 = vpack.c.b16 %v1107, %v1099
  %v1948 = vpack.c.b16 %v1108, %v1100
  %v1949 = vpack.c.b16 %v1117, %v1109
  %v1950 = vpack.c.b16 %v1118, %v1110
  %v1951 = vpack.c.b16 %v1119, %v1111
  %v1952 = vpack.c.b16 %v1120, %v1112
  %v1953 = vpack.c.b16 %v1121, %v1113
  %v1954 = vpack.c.b16 %v1122, %v1114
  %v1955 = vpack.c.b16 %v1123, %v1115
  %v1956 = vpack.c.b16 %v1124, %v1116
  %v1957 = vpack.c.b16 %v1133, %v1125
  %v1958 = vpack.c.b16 %v1134, %v1126
  %v1959 = vpack.c.b16 %v1135, %v1127
  %v1960 = vpack.c.b16 %v1136, %v1128
  %v1961 = vpack.c.b16 %v1137, %v1129
  %v1962 = vpack.c.b16 %v1138, %v1130
  %v1963 = vpack.c.b16 %v1139, %v1131
  %v1964 = vpack.c.b16 %v1140, %v1132
  %v1965 = vpack.c.b16 %v1149, %v1141
  %v1966 = vpack.c.b16 %v1150, %v1142
  %v1967 = vpack.c.b16 %v1151, %v1143
  %v1968 = vpack.c.b16 %v1152, %v1144
  %v1969 = vpack.c.b16 %v1153, %v1145
  %v1970 = vpack.c.b16 %v1154, %v1146
  %v1971 = vpack.c.b16 %v1155, %v1147
  %v1972 = vpack.c.b16 %v1156, %v1148
  %v1973 = vpack.c.b16 %v1165, %v1157
  %v1974 = vpack.c.b16 %v1166, %v1158
  %v1975 = vpack.c.b16 %v1167, %v1159
  %v1976 = vpack.c.b16 %v1168, %v1160
  %v1977 = vpack.c.b16 %v1169, %v1161
  %v1978 = vpack.c.b16 %v1170, %v1162
  %v1979 = vpack.c.b16 %v1171, %v1163
  %v1980 = vpack.c.b16 %v1172, %v1164
  %v1981 = vpack.c.b16 %v1181, %v1173
  %v1982 = vpack.c.b16 %v1182, %v1174
  %v1983 = vpack.c.b16 %v1183, %v1175
  %v1984 = vpack.c.b16 %v1184, %v1176
  %v1985 = vpack.c.b16 %v1185, %v1177
  %v1986 = vpack.c.b16 %v1186, %v1178
  %v1987 = vpack.c.b16 %v1187, %v1179
  %v1988 = vpack.c.b16 %v1188, %v1180
  %v1989 = vpack.c.b16 %v1197, %v1189
  %v1990 = vpack.c.b16 %v1198, %v1190
  %v1991 = vpack.c.b16 %v1199, %v1191
  %v1992 = vpack.c.b16 %v1200, %v1192
  %v1993 = vpack.c.b16 %v1201, %v1193
  %v1994 = vpack.c.b16 %v1202, %v1194
  %v1995 = vpack.c.b16 %v1203, %v1195
  %v1996 = vpack.c.b16 %v1204, %v1196
  %v1997 = vpack.c.b16 %v1213, %v1205
  %v1998 = vpack.c.b16 %v1214, %v1206
  %v1999 = vpack.c.b16 %v1215, %v1207
  %v2000 = vpack.c.b16 %v1216, %v1208
  %v2001 = vpack.c.b16 %v1217, %v1209
  %v2002 = vpack.c.b16 %v1218, %v1210
  %v2003 = vpack.c.b16 %v1219, %v1211
  %v2004 = vpack.c.b16 %v1220, %v1212
  %v2005 = vpack.c.b16 %v1229, %v1221
  %v2006 = vpack.c.b16 %v1230, %v1222
  %v2007 = vpack.c.b16 %v1231, %v1223
  %v2008 = vpack.c.b16 %v1232, %v1224
  %v2009 = vpack.c.b16 %v1233, %v1225
  %v2010 = vpack.c.b16 %v1234, %v1226
  %v2011 = vpack.c.b16 %v1235, %v1227
  %v2012 = vpack.c.b16 %v1236, %v1228
  %v2013 = vpack.c.b16 %v1245, %v1237
  %v2014 = vpack.c.b16 %v1246, %v1238
  %v2015 = vpack.c.b16 %v1247, %v1239
  %v2016 = vpack.c.b16 %v1248, %v1240
  %v2017 = vpack.c.b16 %v1249, %v1241
  %v2018 = vpack.c.b16 %v1250, %v1242
  %v2019 = vpack.c.b16 %v1251, %v1243
  %v2020 = vpack.c.b16 %v1252, %v1244
  %v2021 = vpack.c.b16 %v1261, %v1253
  %v2022 = vpack.c.b16 %v1262, %v1254
  %v2023 = vpack.c.b16 %v1263, %v1255
  %v2024 = vpack.c.b16 %v1264, %v1256
  %v2025 = vpack.c.b16 %v1265, %v1257
  %v2026 = vpack.c.b16 %v1266, %v1258
  %v2027 = vpack.c.b16 %v1267, %v1259
  %v2028 = vpack.c.b16 %v1268, %v1260
  %v2029 = vpack.c.b16 %v1277, %v1269
  %v2030 = vpack.c.b16 %v1278, %v1270
  %v2031 = vpack.c.b16 %v1279, %v1271
  %v2032 = vpack.c.b16 %v1280, %v1272
  %v2033 = vpack.c.b16 %v1281, %v1273
  %v2034 = vpack.c.b16 %v1282, %v1274
  %v2035 = vpack.c.b16 %v1283, %v1275
  %v2036 = vpack.c.b16 %v1284, %v1276
  %v2037 = vpack.c.b16 %v1293, %v1285
  %v2038 = vpack.c.b16 %v1294, %v1286
  %v2039 = vpack.c.b16 %v1295, %v1287
  %v2040 = vpack.c.b16 %v1296, %v1288
  %v2041 = vpack.c.b16 %v1297, %v1289
  %v2042 = vpack.c.b16 %v1298, %v1290
  %v2043 = vpack.c.b16 %v1299, %v1291
  %v2044 = vpack.c.b16 %v1300, %v1292
  %v2045 = vpack.c.b16 %v1309, %v1301
  %v2046 = vpack.c.b16 %v1310, %v1302
  %v2047 = vpack.c.b16 %v1311, %v1303
  %v2048 = vpack.c.b16 %v1312, %v1304
  %v2049 = vpack.c.b16 %v1313, %v1305
  %v2050 = vpack.c.b16 %v1314, %v1306
  %v2051 = vpack.c.b16 %v1315, %v1307
  %v2052 = vpack.c.b16 %v1316, %v1308
  %v2053 = vpack.c.b16 %v1325, %v1317
  %v2054 = vpack.c.b16 %v1326, %v1318
  %v2055 = vpack.c.b16 %v1327, %v1319
  %v2056 = vpack.c.b16 %v1328, %v1320
  %v2057 = vpack.c.b16 %v1329, %v1321
  %v2058 = vpack.c.b16 %v1330, %v1322
  %v2059 = vpack.c.b16 %v1331, %v1323
  %v2060 = vpack.c.b16 %v1332, %v1324
  %v2061 = vpack.c.b16 %v1341, %v1333
  %v2062 = vpack.c.b16 %v1342, %v1334
  %v2063 = vpack.c.b16 %v1343, %v1335
  %v2064 = vpack.c.b16 %v1344, %v1336
  %v2065 = vpack.c.b16 %v1345, %v1337
  %v2066 = vpack.c.b16 %v1346, %v1338
  %v2067 = vpack.c.b16 %v1347, %v1339
  %v2068 = vpack.c.b16 %v1348, %v1340
  %v2069 = vpack.c.b16 %v1357, %v1349
  %v2070 = vpack.c.b16 %v1358, %v1350
  %v2071 = vpack.c.b16 %v1359, %v1351
  %v2072 = vpack.c.b16 %v1360, %v1352
  %v2073 = vpack.c.b16 %v1361, %v1353
  %v2074 = vpack.c.b16 %v1362, %v1354
  %v2075 = vpack.c.b16 %v1363, %v1355
  %v2076 = vpack.c.b16 %v1364, %v1356
  %v2077 = vpack.c.b16 %v1373, %v1365
  %v2078 = vpack.c.b16 %v1374, %v1366
  %v2079 = vpack.c.b16 %v1375, %v1367
  %v2080 = vpack.c.b16 %v1376, %v1368
  %v2081 = vpack.c.b16 %v1377, %v1369
  %v2082 = vpack.c.b16 %v1378, %v1370
  %v2083 = vpack.c.b16 %v1379, %v1371
  %v2084 = vpack.c.b16 %v1380, %v1372
  %v2085 = vpack.c.b16 %v1389, %v1381
  %v2086 = vpack.c.b16 %v1390, %v1382
  %v2087 = vpack.c.b16 %v1391, %v1383
  %v2088 = vpack.c.b16 %v1392, %v1384
  %v2089 = vpack.c.b16 %v1393, %v1385
  %v2090 = vpack.c.b16 %v1394, %v1386
  %v2091 = vpack.c.b16 %v1395, %v1387
  %v2092 = vpack.c.b16 %v1396, %v1388
  %v2093 = vpack.c.b16 %v1405, %v1397
  %v2094 = vpack.c.b16 %v1406, %v1398
  %v2095 = vpack.c.b16 %v1407, %v1399
  %v2096 = vpack.c.b16 %v1408, %v1400
  %v2097 = vpack.c.b16 %v1409, %v1401
  %v2098 = vpack.c.b16 %v1410, %v1402
  %v2099 = vpack.c.b16 %v1411, %v1403
  %v2100 = vpack.c.b16 %v1412, %v1404
  %v2101 = vpack.c.b16 %v1421, %v1413
  %v2102 = vpack.c.b16 %v1422, %v1414
  %v2103 = vpack.c.b16 %v1423, %v1415
  %v2104 = vpack.c.b16 %v1424, %v1416
  %v2105 = vpack.c.b16 %v1425, %v1417
  %v2106 = vpack.c.b16 %v1426, %v1418
  %v2107 = vpack.c.b16 %v1427, %v1419
  %v2108 = vpack.c.b16 %v1428, %v1420
  %v2109 = vpack.c.b16 %v1437, %v1429
  %v2110 = vpack.c.b16 %v1438, %v1430
  %v2111 = vpack.c.b16 %v1439, %v1431
  %v2112 = vpack.c.b16 %v1440, %v1432
  %v2113 = vpack.c.b16 %v1441, %v1433
  %v2114 = vpack.c.b16 %v1442, %v1434
  %v2115 = vpack.c.b16 %v1443, %v1435
  %v2116 = vpack.c.b16 %v1444, %v1436
  %v2117 = vpack.c.b16 %v1453, %v1445
  %v2118 = vpack.c.b16 %v1454, %v1446
  %v2119 = vpack.c.b16 %v1455, %v1447
  %v2120 = vpack.c.b16 %v1456, %v1448
  %v2121 = vpack.c.b16 %v1457, %v1449
  %v2122 = vpack.c.b16 %v1458, %v1450
  %v2123 = vpack.c.b16 %v1459, %v1451
  %v2124 = vpack.c.b16 %v1460, %v1452
  %v2125 = vpack.c.b16 %v1469, %v1461
  %v2126 = vpack.c.b16 %v1470, %v1462
  %v2127 = vpack.c.b16 %v1471, %v1463
  %v2128 = vpack.c.b16 %v1472, %v1464
  %v2129 = vpack.c.b16 %v1473, %v1465
  %v2130 = vpack.c.b16 %v1474, %v1466
  %v2131 = vpack.c.b16 %v1475, %v1467
  %v2132 = vpack.c.b16 %v1476, %v1468
  %v2133 = vpack.c.b16 %v1485, %v1477
  %v2134 = vpack.c.b16 %v1486, %v1478
  %v2135 = vpack.c.b16 %v1487, %v1479
  %v2136 = vpack.c.b16 %v1488, %v1480
  %v2137 = vpack.c.b16 %v1489, %v1481
  %v2138 = vpack.c.b16 %v1490, %v1482
  %v2139 = vpack.c.b16 %v1491, %v1483
  %v2140 = vpack.c.b16 %v1492, %v1484
  %v2141 = vpack.c.b16 %v1501, %v1493
  %v2142 = vpack.c.b16 %v1502, %v1494
  %v2143 = vpack.c.b16 %v1503, %v1495
  %v2144 = vpack.c.b16 %v1504, %v1496
  %v2145 = vpack.c.b16 %v1505, %v1497
  %v2146 = vpack.c.b16 %v1506, %v1498
  %v2147 = vpack.c.b16 %v1507, %v1499
  %v2148 = vpack.c.b16 %v1508, %v1500
  %v2149 = vpack.c.b16 %v1517, %v1509
  %v2150 = vpack.c.b16 %v1518, %v1510
  %v2151 = vpack.c.b16 %v1519, %v1511
  %v2152 = vpack.c.b16 %v1520, %v1512
  %v2153 = vpack.c.b16 %v1521, %v1513
  %v2154 = vpack.c.b16 %v1522, %v1514
  %v2155 = vpack.c.b16 %v1523, %v1515
  %v2156 = vpack.c.b16 %v1524, %v1516
  %v2157 = vpack.c.b16 %v1533, %v1525
  %v2158 = vpack.c.b16 %v1534, %v1526
  %v2159 = vpack.c.b16 %v1535, %v1527
  %v2160 = vpack.c.b16 %v1536, %v1528
  %v2161 = vpack.c.b16 %v1537, %v1529
  %v2162 = vpack.c.b16 %v1538, %v1530
  %v2163 = vpack.c.b16 %v1539, %v1531
  %v2164 = vpack.c.b16 %v1540, %v1532
  %v2165 = vpack.c.b16 %v1549, %v1541
  %v2166 = vpack.c.b16 %v1550, %v1542
  %v2167 = vpack.c.b16 %v1551, %v1543
  %v2168 = vpack.c.b16 %v1552, %v1544
  %v2169 = vpack.c.b16 %v1553, %v1545
  %v2170 = vpack.c.b16 %v1554, %v1546
  %v2171 = vpack.c.b16 %v1555, %v1547
  %v2172 = vpack.c.b16 %v1556, %v1548
  %v2173 = vpack.c.b16 %v1565, %v1557
  %v2174 = vpack.c.b16 %v1566, %v1558
  %v2175 = vpack.c.b16 %v1567, %v1559
  %v2176 = vpack.c.b16 %v1568, %v1560
  %v2177 = vpack.c.b16 %v1569, %v1561
  %v2178 = vpack.c.b16 %v1570, %v1562
  %v2179 = vpack.c.b16 %v1571, %v1563
  %v2180 = vpack.c.b16 %v1572, %v1564
  %v2181 = vpack.c.b16 %v1581, %v1573
  %v2182 = vpack.c.b16 %v1582, %v1574
  %v2183 = vpack.c.b16 %v1583, %v1575
  %v2184 = vpack.c.b16 %v1584, %v1576
  %v2185 = vpack.c.b16 %v1585, %v1577
  %v2186 = vpack.c.b16 %v1586, %v1578
  %v2187 = vpack.c.b16 %v1587, %v1579
  %v2188 = vpack.c.b16 %v1588, %v1580
  %v2189 = vpack.c.b16 %v1597, %v1589
  %v2190 = vpack.c.b16 %v1598, %v1590
  %v2191 = vpack.c.b16 %v1599, %v1591
  %v2192 = vpack.c.b16 %v1600, %v1592
  %v2193 = vpack.c.b16 %v1601, %v1593
  %v2194 = vpack.c.b16 %v1602, %v1594
  %v2195 = vpack.c.b16 %v1603, %v1595
  %v2196 = vpack.c.b16 %v1604, %v1596
  %v2197 = vpack.c.b16 %v1613, %v1605
  %v2198 = vpack.c.b16 %v1614, %v1606
  %v2199 = vpack.c.b16 %v1615, %v1607
  %v2200 = vpack.c.b16 %v1616, %v1608
  %v2201 = vpack.c.b16 %v1617, %v1609
  %v2202 = vpack.c.b16 %v1618, %v1610
  %v2203 = vpack.c.b16 %v1619, %v1611
  %v2204 = vpack.c.b16 %v1620, %v1612
  %v2205 = vpack.c.b16 %v1629, %v1621
  %v2206 = vpack.c.b16 %v1630, %v1622
  %v2207 = vpack.c.b16 %v1631, %v1623
  %v2208 = vpack.c.b16 %v1632, %v1624
  %v2209 = vpack.c.b16 %v1633, %v1625
  %v2210 = vpack.c.b16 %v1634, %v1626
  %v2211 = vpack.c.b16 %v1635, %v1627
  %v2212 = vpack.c.b16 %v1636, %v1628
  %v2213 = vpack.c.b16 %v1645, %v1637
  %v2214 = vpack.c.b16 %v1646, %v1638
  %v2215 = vpack.c.b16 %v1647, %v1639
  %v2216 = vpack.c.b16 %v1648, %v1640
  %v2217 = vpack.c.b16 %v1649, %v1641
  %v2218 = vpack.c.b16 %v1650, %v1642
  %v2219 = vpack.c.b16 %v1651, %v1643
  %v2220 = vpack.c.b16 %v1652, %v1644
  %v2221 = vpack.c.b16 %v1661, %v1653
  %v2222 = vpack.c.b16 %v1662, %v1654
  %v2223 = vpack.c.b16 %v1663, %v1655
  %v2224 = vpack.c.b16 %v1664, %v1656
  %v2225 = vpack.c.b16 %v1665, %v1657
  %v2226 = vpack.c.b16 %v1666, %v1658
  %v2227 = vpack.c.b16 %v1667, %v1659
  %v2228 = vpack.c.b16 %v1668, %v1660
  %v2229 = vpack.c.b16 %v1677, %v1669
  %v2230 = vpack.c.b16 %v1678, %v1670
  %v2231 = vpack.c.b16 %v1679, %v1671
  %v2232 = vpack.c.b16 %v1680, %v1672
  %v2233 = vpack.c.b16 %v1681, %v1673
  %v2234 = vpack.c.b16 %v1682, %v1674
  %v2235 = vpack.c.b16 %v1683, %v1675
  %v2236 = vpack.c.b16 %v1684, %v1676
  %v2237 = vpack.c.b16 %v1693, %v1685
  %v2238 = vpack.c.b16 %v1694, %v1686
  %v2239 = vpack.c.b16 %v1695, %v1687
  %v2240 = vpack.c.b16 %v1696, %v1688
  %v2241 = vpack.c.b16 %v1697, %v1689
  %v2242 = vpack.c.b16 %v1698, %v1690
  %v2243 = vpack.c.b16 %v1699, %v1691
  %v2244 = vpack.c.b16 %v1700, %v1692
  %v2245 = vpack.c.b16 %v1709, %v1701
  %v2246 = vpack.c.b16 %v1710, %v1702
  %v2247 = vpack.c.b16 %v1711, %v1703
  %v2248 = vpack.c.b16 %v1712, %v1704
  %v2249 = vpack.c.b16 %v1713, %v1705
  %v2250 = vpack.c.b16 %v1714, %v1706
  %v2251 = vpack.c.b16 %v1715, %v1707
  %v2252 = vpack.c.b16 %v1716, %v1708
  %v2253 = vpack.c.b16 %v1725, %v1717
  %v2254 = vpack.c.b16 %v1726, %v1718
  %v2255 = vpack.c.b16 %v1727, %v1719
  %v2256 = vpack.c.b16 %v1728, %v1720
  %v2257 = vpack.c.b16 %v1729, %v1721
  %v2258 = vpack.c.b16 %v1730, %v1722
  %v2259 = vpack.c.b16 %v1731, %v1723
  %v2260 = vpack.c.b16 %v1732, %v1724
  %v2261 = vpack.c.b16 %v1741, %v1733
  %v2262 = vpack.c.b16 %v1742, %v1734
  %v2263 = vpack.c.b16 %v1743, %v1735
  %v2264 = vpack.c.b16 %v1744, %v1736
  %v2265 = vpack.c.b16 %v1745, %v1737
  %v2266 = vpack.c.b16 %v1746, %v1738
  %v2267 = vpack.c.b16 %v1747, %v1739
  %v2268 = vpack.c.b16 %v1748, %v1740
  %v2269 = vpack.c.b16 %v1757, %v1749
  %v2270 = vpack.c.b16 %v1758, %v1750
  %v2271 = vpack.c.b16 %v1759, %v1751
  %v2272 = vpack.c.b16 %v1760, %v1752
  %v2273 = vpack.c.b16 %v1761, %v1753
  %v2274 = vpack.c.b16 %v1762, %v1754
  %v2275 = vpack.c.b16 %v1763, %v1755
  %v2276 = vpack.c.b16 %v1764, %v1756
  %v2277 = vpack.c.b16 %v1773, %v1765
  %v2278 = vpack.c.b16 %v1774, %v1766
  %v2279 = vpack.c.b16 %v1775, %v1767
  %v2280 = vpack.c.b16 %v1776, %v1768
  %v2281 = vpack.c.b16 %v1777, %v1769
  %v2282 = vpack.c.b16 %v1778, %v1770
  %v2283 = vpack.c.b16 %v1779, %v1771
  %v2284 = vpack.c.b16 %v1780, %v1772
  %v2285 = vpack.c.b16 %v1789, %v1781
  %v2286 = vpack.c.b16 %v1790, %v1782
  %v2287 = vpack.c.b16 %v1791, %v1783
  %v2288 = vpack.c.b16 %v1792, %v1784
  %v2289 = vpack.c.b16 %v1793, %v1785
  %v2290 = vpack.c.b16 %v1794, %v1786
  %v2291 = vpack.c.b16 %v1795, %v1787
  %v2292 = vpack.c.b16 %v1796, %v1788
  %v2293 = vpack.c.b16 %v1805, %v1797
  %v2294 = vpack.c.b16 %v1806, %v1798
  %v2295 = vpack.c.b16 %v1807, %v1799
  %v2296 = vpack.c.b16 %v1808, %v1800
  %v2297 = vpack.c.b16 %v1809, %v1801
  %v2298 = vpack.c.b16 %v1810, %v1802
  %v2299 = vpack.c.b16 %v1811, %v1803
  %v2300 = vpack.c.b16 %v1812, %v1804
  %v2301 = vpack.c.b16 %v1821, %v1813
  %v2302 = vpack.c.b16 %v1822, %v1814
  %v2303 = vpack.c.b16 %v1823, %v1815
  %v2304 = vpack.c.b16 %v1824, %v1816
  %v2305 = vpack.c.b16 %v1825, %v1817
  %v2306 = vpack.c.b16 %v1826, %v1818
  %v2307 = vpack.c.b16 %v1827, %v1819
  %v2308 = vpack.c.b16 %v1828, %v1820
  %v2309 = vpack.c.b16 %v1837, %v1829
  %v2310 = vpack.c.b16 %v1838, %v1830
  %v2311 = vpack.c.b16 %v1839, %v1831
  %v2312 = vpack.c.b16 %v1840, %v1832
  %v2313 = vpack.c.b16 %v1841, %v1833
  %v2314 = vpack.c.b16 %v1842, %v1834
  %v2315 = vpack.c.b16 %v1843, %v1835
  %v2316 = vpack.c.b16 %v1844, %v1836
  %v2317 = vpack.c.b16 %v1853, %v1845
  %v2318 = vpack.c.b16 %v1854, %v1846
  %v2319 = vpack.c.b16 %v1855, %v1847
  %v2320 = vpack.c.b16 %v1856, %v1848
  %v2321 = vpack.c.b16 %v1857, %v1849
  %v2322 = vpack.c.b16 %v1858, %v1850
  %v2323 = vpack.c.b16 %v1859, %v1851
  %v2324 = vpack.c.b16 %v1860, %v1852
  %v2325 = vpack.c.b16 %v1869, %v1861
  %v2326 = vpack.c.b16 %v1870, %v1862
  %v2327 = vpack.c.b16 %v1871, %v1863
  %v2328 = vpack.c.b16 %v1872, %v1864
  %v2329 = vpack.c.b16 %v1873, %v1865
  %v2330 = vpack.c.b16 %v1874, %v1866
  %v2331 = vpack.c.b16 %v1875, %v1867
  %v2332 = vpack.c.b16 %v1876, %v1868
  %v2333 = vpack.c.b16 %v1885, %v1877
  %v2334 = vpack.c.b16 %v1886, %v1878
  %v2335 = vpack.c.b16 %v1887, %v1879
  %v2336 = vpack.c.b16 %v1888, %v1880
  %v2337 = vpack.c.b16 %v1889, %v1881
  %v2338 = vpack.c.b16 %v1890, %v1882
  %v2339 = vpack.c.b16 %v1891, %v1883
  %v2340 = vpack.c.b16 %v1892, %v1884
  %2789 = vmatpush.bf16.msra.mxu0 %v1949
  %2790 = vmatpush.bf16.msra.mxu0 %v1941
  %2791 = vmatpush.bf16.msra.mxu0 %v1933
  %2792 = vmatpush.bf16.msra.mxu0 %v1925
  %2793 = vmatpush.bf16.msra.mxu0 %v1917
  %2794 = vmatpush.bf16.msra.mxu0 %v1909
  %2795 = vmatpush.bf16.msra.mxu0 %v1901
  %2796 = vmatpush.bf16.msra.mxu0 %v1893
  %2797 = vmatmul.bf16.gmra.mxu0 %v52
  %v2798 = vpop.f32.mrf.mxu0
  %v2799 = vadd.f32 %v533, %v2798
  %v2800 = vpop.f32.mrf.mxu0
  %v2801 = vadd.f32 %v533, %v2800
  %2802 = vmatmul.bf16.gmra.mxu0 %v54
  %v2803 = vpop.f32.mrf.mxu0
  %v2804 = vadd.f32 %v533, %v2803
  %v2805 = vpop.f32.mrf.mxu0
  %v2806 = vadd.f32 %v533, %v2805
  %2807 = vmatmul.bf16.gmra.mxu0 %v56
  %v2808 = vpop.f32.mrf.mxu0
  %v2809 = vadd.f32 %v533, %v2808
  %v2810 = vpop.f32.mrf.mxu0
  %v2811 = vadd.f32 %v533, %v2810
  %2812 = vmatmul.bf16.gmra.mxu0 %v58
  %v2813 = vpop.f32.mrf.mxu0
  %v2814 = vadd.f32 %v533, %v2813
  %v2815 = vpop.f32.mrf.mxu0
  %v2816 = vadd.f32 %v533, %v2815
  %2817 = vmatmul.bf16.gmra.mxu0 %v60
  %v2818 = vpop.f32.mrf.mxu0
  %v2819 = vadd.f32 %v533, %v2818
  %v2820 = vpop.f32.mrf.mxu0
  %v2821 = vadd.f32 %v533, %v2820
  %2822 = vmatmul.bf16.gmra.mxu0 %v62
  %v2823 = vpop.f32.mrf.mxu0
  %v2824 = vadd.f32 %v533, %v2823
  %v2825 = vpop.f32.mrf.mxu0
  %v2826 = vadd.f32 %v533, %v2825
  %2827 = vmatmul.bf16.gmra.mxu0 %v64
  %v2828 = vpop.f32.mrf.mxu0
  %v2829 = vadd.f32 %v533, %v2828
  %v2830 = vpop.f32.mrf.mxu0
  %v2831 = vadd.f32 %v533, %v2830
  %2832 = vmatmul.bf16.gmra.mxu0 %v66
  %v2833 = vpop.f32.mrf.mxu0
  %v2834 = vadd.f32 %v533, %v2833
  %v2835 = vpop.f32.mrf.mxu0
  %v2836 = vadd.f32 %v533, %v2835
  %2837 = vmatmul.bf16.gmra.mxu0 %v68
  %v2838 = vpop.f32.mrf.mxu0
  %v2839 = vadd.f32 %v533, %v2838
  %v2840 = vpop.f32.mrf.mxu0
  %v2841 = vadd.f32 %v533, %v2840
  %2842 = vmatmul.bf16.gmra.mxu0 %v70
  %v2843 = vpop.f32.mrf.mxu0
  %v2844 = vadd.f32 %v533, %v2843
  %v2845 = vpop.f32.mrf.mxu0
  %v2846 = vadd.f32 %v533, %v2845
  %2847 = vmatmul.bf16.gmra.mxu0 %v72
  %v2848 = vpop.f32.mrf.mxu0
  %v2849 = vadd.f32 %v533, %v2848
  %v2850 = vpop.f32.mrf.mxu0
  %v2851 = vadd.f32 %v533, %v2850
  %2852 = vmatmul.bf16.gmra.mxu0 %v74
  %v2853 = vpop.f32.mrf.mxu0
  %v2854 = vadd.f32 %v533, %v2853
  %v2855 = vpop.f32.mrf.mxu0
  %v2856 = vadd.f32 %v533, %v2855
  %2857 = vmatmul.bf16.gmra.mxu0 %v76
  %v2858 = vpop.f32.mrf.mxu0
  %v2859 = vadd.f32 %v533, %v2858
  %v2860 = vpop.f32.mrf.mxu0
  %v2861 = vadd.f32 %v533, %v2860
  %2862 = vdwg.mxu0
  %2863 = vmatpush.bf16.msra.mxu0 %v2013
  %2864 = vmatpush.bf16.msra.mxu0 %v2005
  %2865 = vmatpush.bf16.msra.mxu0 %v1997
  %2866 = vmatpush.bf16.msra.mxu0 %v1989
  %2867 = vmatpush.bf16.msra.mxu0 %v1981
  %2868 = vmatpush.bf16.msra.mxu0 %v1973
  %2869 = vmatpush.bf16.msra.mxu0 %v1965
  %2870 = vmatpush.bf16.msra.mxu0 %v1957
  %2871 = vmatmul.bf16.gmra.mxu0 %v53
  %v2872 = vpop.f32.mrf.mxu0
  %v2873 = vadd.f32 %v2799, %v2872
  %v2874 = vpop.f32.mrf.mxu0
  %v2875 = vadd.f32 %v2801, %v2874
  %2876 = vmatmul.bf16.gmra.mxu0 %v55
  %v2877 = vpop.f32.mrf.mxu0
  %v2878 = vadd.f32 %v2804, %v2877
  %v2879 = vpop.f32.mrf.mxu0
  %v2880 = vadd.f32 %v2806, %v2879
  %2881 = vmatmul.bf16.gmra.mxu0 %v57
  %v2882 = vpop.f32.mrf.mxu0
  %v2883 = vadd.f32 %v2809, %v2882
  %v2884 = vpop.f32.mrf.mxu0
  %v2885 = vadd.f32 %v2811, %v2884
  %2886 = vmatmul.bf16.gmra.mxu0 %v59
  %v2887 = vpop.f32.mrf.mxu0
  %v2888 = vadd.f32 %v2814, %v2887
  %v2889 = vpop.f32.mrf.mxu0
  %v2890 = vadd.f32 %v2816, %v2889
  %2891 = vmatmul.bf16.gmra.mxu0 %v61
  %v2892 = vpop.f32.mrf.mxu0
  %v2893 = vadd.f32 %v2819, %v2892
  %v2894 = vpop.f32.mrf.mxu0
  %v2895 = vadd.f32 %v2821, %v2894
  %2896 = vmatmul.bf16.gmra.mxu0 %v63
  %v2897 = vpop.f32.mrf.mxu0
  %v2898 = vadd.f32 %v2824, %v2897
  %v2899 = vpop.f32.mrf.mxu0
  %v2900 = vadd.f32 %v2826, %v2899
  %2901 = vmatmul.bf16.gmra.mxu0 %v65
  %v2902 = vpop.f32.mrf.mxu0
  %v2903 = vadd.f32 %v2829, %v2902
  %v2904 = vpop.f32.mrf.mxu0
  %v2905 = vadd.f32 %v2831, %v2904
  %2906 = vmatmul.bf16.gmra.mxu0 %v67
  %v2907 = vpop.f32.mrf.mxu0
  %v2908 = vadd.f32 %v2834, %v2907
  %v2909 = vpop.f32.mrf.mxu0
  %v2910 = vadd.f32 %v2836, %v2909
  %2911 = vmatmul.bf16.gmra.mxu0 %v69
  %v2912 = vpop.f32.mrf.mxu0
  %v2913 = vadd.f32 %v2839, %v2912
  %v2914 = vpop.f32.mrf.mxu0
  %v2915 = vadd.f32 %v2841, %v2914
  %2916 = vmatmul.bf16.gmra.mxu0 %v71
  %v2917 = vpop.f32.mrf.mxu0
  %v2918 = vadd.f32 %v2844, %v2917
  %v2919 = vpop.f32.mrf.mxu0
  %v2920 = vadd.f32 %v2846, %v2919
  %2921 = vmatmul.bf16.gmra.mxu0 %v73
  %v2922 = vpop.f32.mrf.mxu0
  %v2923 = vadd.f32 %v2849, %v2922
  %v2924 = vpop.f32.mrf.mxu0
  %v2925 = vadd.f32 %v2851, %v2924
  %2926 = vmatmul.bf16.gmra.mxu0 %v75
  %v2927 = vpop.f32.mrf.mxu0
  %v2928 = vadd.f32 %v2854, %v2927
  %v2929 = vpop.f32.mrf.mxu0
  %v2930 = vadd.f32 %v2856, %v2929
  %2931 = vmatmul.bf16.gmra.mxu0 %v77
  %v2932 = vpop.f32.mrf.mxu0
  %v2933 = vadd.f32 %v2859, %v2932
  %v2934 = vpop.f32.mrf.mxu0
  %v2935 = vadd.f32 %v2861, %v2934
  %2936 = vdwg.mxu0
  %2937 = vmatpush.bf16.msra.mxu0 %v2077
  %2938 = vmatpush.bf16.msra.mxu0 %v2069
  %2939 = vmatpush.bf16.msra.mxu0 %v2061
  %2940 = vmatpush.bf16.msra.mxu0 %v2053
  %2941 = vmatpush.bf16.msra.mxu0 %v2045
  %2942 = vmatpush.bf16.msra.mxu0 %v2037
  %2943 = vmatpush.bf16.msra.mxu0 %v2029
  %2944 = vmatpush.bf16.msra.mxu0 %v2021
  %2945 = vmatmul.bf16.gmra.mxu0 %v54
  %v2946 = vpop.f32.mrf.mxu0
  %v2947 = vadd.f32 %v2873, %v2946
  %v2948 = vpop.f32.mrf.mxu0
  %v2949 = vadd.f32 %v2875, %v2948
  %2950 = vmatmul.bf16.gmra.mxu0 %v56
  %v2951 = vpop.f32.mrf.mxu0
  %v2952 = vadd.f32 %v2878, %v2951
  %v2953 = vpop.f32.mrf.mxu0
  %v2954 = vadd.f32 %v2880, %v2953
  %2955 = vmatmul.bf16.gmra.mxu0 %v58
  %v2956 = vpop.f32.mrf.mxu0
  %v2957 = vadd.f32 %v2883, %v2956
  %v2958 = vpop.f32.mrf.mxu0
  %v2959 = vadd.f32 %v2885, %v2958
  %2960 = vmatmul.bf16.gmra.mxu0 %v60
  %v2961 = vpop.f32.mrf.mxu0
  %v2962 = vadd.f32 %v2888, %v2961
  %v2963 = vpop.f32.mrf.mxu0
  %v2964 = vadd.f32 %v2890, %v2963
  %2965 = vmatmul.bf16.gmra.mxu0 %v62
  %v2966 = vpop.f32.mrf.mxu0
  %v2967 = vadd.f32 %v2893, %v2966
  %v2968 = vpop.f32.mrf.mxu0
  %v2969 = vadd.f32 %v2895, %v2968
  %2970 = vmatmul.bf16.gmra.mxu0 %v64
  %v2971 = vpop.f32.mrf.mxu0
  %v2972 = vadd.f32 %v2898, %v2971
  %v2973 = vpop.f32.mrf.mxu0
  %v2974 = vadd.f32 %v2900, %v2973
  %2975 = vmatmul.bf16.gmra.mxu0 %v66
  %v2976 = vpop.f32.mrf.mxu0
  %v2977 = vadd.f32 %v2903, %v2976
  %v2978 = vpop.f32.mrf.mxu0
  %v2979 = vadd.f32 %v2905, %v2978
  %2980 = vmatmul.bf16.gmra.mxu0 %v68
  %v2981 = vpop.f32.mrf.mxu0
  %v2982 = vadd.f32 %v2908, %v2981
  %v2983 = vpop.f32.mrf.mxu0
  %v2984 = vadd.f32 %v2910, %v2983
  %2985 = vmatmul.bf16.gmra.mxu0 %v70
  %v2986 = vpop.f32.mrf.mxu0
  %v2987 = vadd.f32 %v2913, %v2986
  %v2988 = vpop.f32.mrf.mxu0
  %v2989 = vadd.f32 %v2915, %v2988
  %2990 = vmatmul.bf16.gmra.mxu0 %v72
  %v2991 = vpop.f32.mrf.mxu0
  %v2992 = vadd.f32 %v2918, %v2991
  %v2993 = vpop.f32.mrf.mxu0
  %v2994 = vadd.f32 %v2920, %v2993
  %2995 = vmatmul.bf16.gmra.mxu0 %v74
  %v2996 = vpop.f32.mrf.mxu0
  %v2997 = vadd.f32 %v2923, %v2996
  %v2998 = vpop.f32.mrf.mxu0
  %v2999 = vadd.f32 %v2925, %v2998
  %3000 = vmatmul.bf16.gmra.mxu0 %v76
  %v3001 = vpop.f32.mrf.mxu0
  %v3002 = vadd.f32 %v2928, %v3001
  %v3003 = vpop.f32.mrf.mxu0
  %v3004 = vadd.f32 %v2930, %v3003
  %3005 = vmatmul.bf16.gmra.mxu0 %v78
  %v3006 = vpop.f32.mrf.mxu0
  %v3007 = vadd.f32 %v2933, %v3006
  %v3008 = vpop.f32.mrf.mxu0
  %v3009 = vadd.f32 %v2935, %v3008
  %3010 = vdwg.mxu0
  %3011 = vmatpush.bf16.msra.mxu0 %v2141
  %3012 = vmatpush.bf16.msra.mxu0 %v2133
  %3013 = vmatpush.bf16.msra.mxu0 %v2125
  %3014 = vmatpush.bf16.msra.mxu0 %v2117
  %3015 = vmatpush.bf16.msra.mxu0 %v2109
  %3016 = vmatpush.bf16.msra.mxu0 %v2101
  %3017 = vmatpush.bf16.msra.mxu0 %v2093
  %3018 = vmatpush.bf16.msra.mxu0 %v2085
  %3019 = vmatmul.bf16.gmra.mxu0 %v55
  %v3020 = vpop.f32.mrf.mxu0
  %v3021 = vadd.f32 %v2947, %v3020
  %v3022 = vpop.f32.mrf.mxu0
  %v3023 = vadd.f32 %v2949, %v3022
  %3024 = vmatmul.bf16.gmra.mxu0 %v57
  %v3025 = vpop.f32.mrf.mxu0
  %v3026 = vadd.f32 %v2952, %v3025
  %v3027 = vpop.f32.mrf.mxu0
  %v3028 = vadd.f32 %v2954, %v3027
  %3029 = vmatmul.bf16.gmra.mxu0 %v59
  %v3030 = vpop.f32.mrf.mxu0
  %v3031 = vadd.f32 %v2957, %v3030
  %v3032 = vpop.f32.mrf.mxu0
  %v3033 = vadd.f32 %v2959, %v3032
  %3034 = vmatmul.bf16.gmra.mxu0 %v61
  %v3035 = vpop.f32.mrf.mxu0
  %v3036 = vadd.f32 %v2962, %v3035
  %v3037 = vpop.f32.mrf.mxu0
  %v3038 = vadd.f32 %v2964, %v3037
  %3039 = vmatmul.bf16.gmra.mxu0 %v63
  %v3040 = vpop.f32.mrf.mxu0
  %v3041 = vadd.f32 %v2967, %v3040
  %v3042 = vpop.f32.mrf.mxu0
  %v3043 = vadd.f32 %v2969, %v3042
  %3044 = vmatmul.bf16.gmra.mxu0 %v65
  %v3045 = vpop.f32.mrf.mxu0
  %v3046 = vadd.f32 %v2972, %v3045
  %v3047 = vpop.f32.mrf.mxu0
  %v3048 = vadd.f32 %v2974, %v3047
  %3049 = vmatmul.bf16.gmra.mxu0 %v67
  %v3050 = vpop.f32.mrf.mxu0
  %v3051 = vadd.f32 %v2977, %v3050
  %v3052 = vpop.f32.mrf.mxu0
  %v3053 = vadd.f32 %v2979, %v3052
  %3054 = vmatmul.bf16.gmra.mxu0 %v69
  %v3055 = vpop.f32.mrf.mxu0
  %v3056 = vadd.f32 %v2982, %v3055
  %v3057 = vpop.f32.mrf.mxu0
  %v3058 = vadd.f32 %v2984, %v3057
  %3059 = vmatmul.bf16.gmra.mxu0 %v71
  %v3060 = vpop.f32.mrf.mxu0
  %v3061 = vadd.f32 %v2987, %v3060
  %v3062 = vpop.f32.mrf.mxu0
  %v3063 = vadd.f32 %v2989, %v3062
  %3064 = vmatmul.bf16.gmra.mxu0 %v73
  %v3065 = vpop.f32.mrf.mxu0
  %v3066 = vadd.f32 %v2992, %v3065
  %v3067 = vpop.f32.mrf.mxu0
  %v3068 = vadd.f32 %v2994, %v3067
  %3069 = vmatmul.bf16.gmra.mxu0 %v75
  %v3070 = vpop.f32.mrf.mxu0
  %v3071 = vadd.f32 %v2997, %v3070
  %v3072 = vpop.f32.mrf.mxu0
  %v3073 = vadd.f32 %v2999, %v3072
  %3074 = vmatmul.bf16.gmra.mxu0 %v77
  %v3075 = vpop.f32.mrf.mxu0
  %v3076 = vadd.f32 %v3002, %v3075
  %v3077 = vpop.f32.mrf.mxu0
  %v3078 = vadd.f32 %v3004, %v3077
  %3079 = vmatmul.bf16.gmra.mxu0 %v79
  %v3080 = vpop.f32.mrf.mxu0
  %v3081 = vadd.f32 %v3007, %v3080
  %v3082 = vpop.f32.mrf.mxu0
  %v3083 = vadd.f32 %v3009, %v3082
  %3084 = vdwg.mxu0
  %3085 = vmatpush.bf16.msra.mxu0 %v2205
  %3086 = vmatpush.bf16.msra.mxu0 %v2197
  %3087 = vmatpush.bf16.msra.mxu0 %v2189
  %3088 = vmatpush.bf16.msra.mxu0 %v2181
  %3089 = vmatpush.bf16.msra.mxu0 %v2173
  %3090 = vmatpush.bf16.msra.mxu0 %v2165
  %3091 = vmatpush.bf16.msra.mxu0 %v2157
  %3092 = vmatpush.bf16.msra.mxu0 %v2149
  %3093 = vmatmul.bf16.gmra.mxu0 %v56
  %v3094 = vpop.f32.mrf.mxu0
  %v3095 = vadd.f32 %v3021, %v3094
  %v3096 = vpop.f32.mrf.mxu0
  %v3097 = vadd.f32 %v3023, %v3096
  %3098 = vmatmul.bf16.gmra.mxu0 %v58
  %v3099 = vpop.f32.mrf.mxu0
  %v3100 = vadd.f32 %v3026, %v3099
  %v3101 = vpop.f32.mrf.mxu0
  %v3102 = vadd.f32 %v3028, %v3101
  %3103 = vmatmul.bf16.gmra.mxu0 %v60
  %v3104 = vpop.f32.mrf.mxu0
  %v3105 = vadd.f32 %v3031, %v3104
  %v3106 = vpop.f32.mrf.mxu0
  %v3107 = vadd.f32 %v3033, %v3106
  %3108 = vmatmul.bf16.gmra.mxu0 %v62
  %v3109 = vpop.f32.mrf.mxu0
  %v3110 = vadd.f32 %v3036, %v3109
  %v3111 = vpop.f32.mrf.mxu0
  %v3112 = vadd.f32 %v3038, %v3111
  %3113 = vmatmul.bf16.gmra.mxu0 %v64
  %v3114 = vpop.f32.mrf.mxu0
  %v3115 = vadd.f32 %v3041, %v3114
  %v3116 = vpop.f32.mrf.mxu0
  %v3117 = vadd.f32 %v3043, %v3116
  %3118 = vmatmul.bf16.gmra.mxu0 %v66
  %v3119 = vpop.f32.mrf.mxu0
  %v3120 = vadd.f32 %v3046, %v3119
  %v3121 = vpop.f32.mrf.mxu0
  %v3122 = vadd.f32 %v3048, %v3121
  %3123 = vmatmul.bf16.gmra.mxu0 %v68
  %v3124 = vpop.f32.mrf.mxu0
  %v3125 = vadd.f32 %v3051, %v3124
  %v3126 = vpop.f32.mrf.mxu0
  %v3127 = vadd.f32 %v3053, %v3126
  %3128 = vmatmul.bf16.gmra.mxu0 %v70
  %v3129 = vpop.f32.mrf.mxu0
  %v3130 = vadd.f32 %v3056, %v3129
  %v3131 = vpop.f32.mrf.mxu0
  %v3132 = vadd.f32 %v3058, %v3131
  %3133 = vmatmul.bf16.gmra.mxu0 %v72
  %v3134 = vpop.f32.mrf.mxu0
  %v3135 = vadd.f32 %v3061, %v3134
  %v3136 = vpop.f32.mrf.mxu0
  %v3137 = vadd.f32 %v3063, %v3136
  %3138 = vmatmul.bf16.gmra.mxu0 %v74
  %v3139 = vpop.f32.mrf.mxu0
  %v3140 = vadd.f32 %v3066, %v3139
  %v3141 = vpop.f32.mrf.mxu0
  %v3142 = vadd.f32 %v3068, %v3141
  %3143 = vmatmul.bf16.gmra.mxu0 %v76
  %v3144 = vpop.f32.mrf.mxu0
  %v3145 = vadd.f32 %v3071, %v3144
  %v3146 = vpop.f32.mrf.mxu0
  %v3147 = vadd.f32 %v3073, %v3146
  %3148 = vmatmul.bf16.gmra.mxu0 %v78
  %v3149 = vpop.f32.mrf.mxu0
  %v3150 = vadd.f32 %v3076, %v3149
  %v3151 = vpop.f32.mrf.mxu0
  %v3152 = vadd.f32 %v3078, %v3151
  %3153 = vmatmul.bf16.gmra.mxu0 %v80
  %v3154 = vpop.f32.mrf.mxu0
  %v3155 = vadd.f32 %v3081, %v3154
  %v3156 = vpop.f32.mrf.mxu0
  %v3157 = vadd.f32 %v3083, %v3156
  %3158 = vdwg.mxu0
  %3159 = vmatpush.bf16.msra.mxu0 %v2269
  %3160 = vmatpush.bf16.msra.mxu0 %v2261
  %3161 = vmatpush.bf16.msra.mxu0 %v2253
  %3162 = vmatpush.bf16.msra.mxu0 %v2245
  %3163 = vmatpush.bf16.msra.mxu0 %v2237
  %3164 = vmatpush.bf16.msra.mxu0 %v2229
  %3165 = vmatpush.bf16.msra.mxu0 %v2221
  %3166 = vmatpush.bf16.msra.mxu0 %v2213
  %3167 = vmatmul.bf16.gmra.mxu0 %v57
  %v3168 = vpop.f32.mrf.mxu0
  %v3169 = vadd.f32 %v3095, %v3168
  %v3170 = vpop.f32.mrf.mxu0
  %v3171 = vadd.f32 %v3097, %v3170
  %3172 = vmatmul.bf16.gmra.mxu0 %v59
  %v3173 = vpop.f32.mrf.mxu0
  %v3174 = vadd.f32 %v3100, %v3173
  %v3175 = vpop.f32.mrf.mxu0
  %v3176 = vadd.f32 %v3102, %v3175
  %3177 = vmatmul.bf16.gmra.mxu0 %v61
  %v3178 = vpop.f32.mrf.mxu0
  %v3179 = vadd.f32 %v3105, %v3178
  %v3180 = vpop.f32.mrf.mxu0
  %v3181 = vadd.f32 %v3107, %v3180
  %3182 = vmatmul.bf16.gmra.mxu0 %v63
  %v3183 = vpop.f32.mrf.mxu0
  %v3184 = vadd.f32 %v3110, %v3183
  %v3185 = vpop.f32.mrf.mxu0
  %v3186 = vadd.f32 %v3112, %v3185
  %3187 = vmatmul.bf16.gmra.mxu0 %v65
  %v3188 = vpop.f32.mrf.mxu0
  %v3189 = vadd.f32 %v3115, %v3188
  %v3190 = vpop.f32.mrf.mxu0
  %v3191 = vadd.f32 %v3117, %v3190
  %3192 = vmatmul.bf16.gmra.mxu0 %v67
  %v3193 = vpop.f32.mrf.mxu0
  %v3194 = vadd.f32 %v3120, %v3193
  %v3195 = vpop.f32.mrf.mxu0
  %v3196 = vadd.f32 %v3122, %v3195
  %3197 = vmatmul.bf16.gmra.mxu0 %v69
  %v3198 = vpop.f32.mrf.mxu0
  %v3199 = vadd.f32 %v3125, %v3198
  %v3200 = vpop.f32.mrf.mxu0
  %v3201 = vadd.f32 %v3127, %v3200
  %3202 = vmatmul.bf16.gmra.mxu0 %v71
  %v3203 = vpop.f32.mrf.mxu0
  %v3204 = vadd.f32 %v3130, %v3203
  %v3205 = vpop.f32.mrf.mxu0
  %v3206 = vadd.f32 %v3132, %v3205
  %3207 = vmatmul.bf16.gmra.mxu0 %v73
  %v3208 = vpop.f32.mrf.mxu0
  %v3209 = vadd.f32 %v3135, %v3208
  %v3210 = vpop.f32.mrf.mxu0
  %v3211 = vadd.f32 %v3137, %v3210
  %3212 = vmatmul.bf16.gmra.mxu0 %v75
  %v3213 = vpop.f32.mrf.mxu0
  %v3214 = vadd.f32 %v3140, %v3213
  %v3215 = vpop.f32.mrf.mxu0
  %v3216 = vadd.f32 %v3142, %v3215
  %3217 = vmatmul.bf16.gmra.mxu0 %v77
  %v3218 = vpop.f32.mrf.mxu0
  %v3219 = vadd.f32 %v3145, %v3218
  %v3220 = vpop.f32.mrf.mxu0
  %v3221 = vadd.f32 %v3147, %v3220
  %3222 = vmatmul.bf16.gmra.mxu0 %v79
  %v3223 = vpop.f32.mrf.mxu0
  %v3224 = vadd.f32 %v3150, %v3223
  %v3225 = vpop.f32.mrf.mxu0
  %v3226 = vadd.f32 %v3152, %v3225
  %3227 = vmatmul.bf16.gmra.mxu0 %v81
  %v3228 = vpop.f32.mrf.mxu0
  %v3229 = vadd.f32 %v3155, %v3228
  %v3230 = vpop.f32.mrf.mxu0
  %v3231 = vadd.f32 %v3157, %v3230
  %3232 = vdwg.mxu0
  %3233 = vmatpush.bf16.msra.mxu0 %v2333
  %3234 = vmatpush.bf16.msra.mxu0 %v2325
  %3235 = vmatpush.bf16.msra.mxu0 %v2317
  %3236 = vmatpush.bf16.msra.mxu0 %v2309
  %3237 = vmatpush.bf16.msra.mxu0 %v2301
  %3238 = vmatpush.bf16.msra.mxu0 %v2293
  %3239 = vmatpush.bf16.msra.mxu0 %v2285
  %3240 = vmatpush.bf16.msra.mxu0 %v2277
  %3241 = vmatmul.bf16.gmra.mxu0 %v58
  %v3242 = vpop.f32.mrf.mxu0
  %v3243 = vadd.f32 %v3169, %v3242
  %v3244 = vpop.f32.mrf.mxu0
  %v3245 = vadd.f32 %v3171, %v3244
  %3246 = vmatmul.bf16.gmra.mxu0 %v60
  %v3247 = vpop.f32.mrf.mxu0
  %v3248 = vadd.f32 %v3174, %v3247
  %v3249 = vpop.f32.mrf.mxu0
  %v3250 = vadd.f32 %v3176, %v3249
  %3251 = vmatmul.bf16.gmra.mxu0 %v62
  %v3252 = vpop.f32.mrf.mxu0
  %v3253 = vadd.f32 %v3179, %v3252
  %v3254 = vpop.f32.mrf.mxu0
  %v3255 = vadd.f32 %v3181, %v3254
  %3256 = vmatmul.bf16.gmra.mxu0 %v64
  %v3257 = vpop.f32.mrf.mxu0
  %v3258 = vadd.f32 %v3184, %v3257
  %v3259 = vpop.f32.mrf.mxu0
  %v3260 = vadd.f32 %v3186, %v3259
  %3261 = vmatmul.bf16.gmra.mxu0 %v66
  %v3262 = vpop.f32.mrf.mxu0
  %v3263 = vadd.f32 %v3189, %v3262
  %v3264 = vpop.f32.mrf.mxu0
  %v3265 = vadd.f32 %v3191, %v3264
  %3266 = vmatmul.bf16.gmra.mxu0 %v68
  %v3267 = vpop.f32.mrf.mxu0
  %v3268 = vadd.f32 %v3194, %v3267
  %v3269 = vpop.f32.mrf.mxu0
  %v3270 = vadd.f32 %v3196, %v3269
  %3271 = vmatmul.bf16.gmra.mxu0 %v70
  %v3272 = vpop.f32.mrf.mxu0
  %v3273 = vadd.f32 %v3199, %v3272
  %v3274 = vpop.f32.mrf.mxu0
  %v3275 = vadd.f32 %v3201, %v3274
  %3276 = vmatmul.bf16.gmra.mxu0 %v72
  %v3277 = vpop.f32.mrf.mxu0
  %v3278 = vadd.f32 %v3204, %v3277
  %v3279 = vpop.f32.mrf.mxu0
  %v3280 = vadd.f32 %v3206, %v3279
  %3281 = vmatmul.bf16.gmra.mxu0 %v74
  %v3282 = vpop.f32.mrf.mxu0
  %v3283 = vadd.f32 %v3209, %v3282
  %v3284 = vpop.f32.mrf.mxu0
  %v3285 = vadd.f32 %v3211, %v3284
  %3286 = vmatmul.bf16.gmra.mxu0 %v76
  %v3287 = vpop.f32.mrf.mxu0
  %v3288 = vadd.f32 %v3214, %v3287
  %v3289 = vpop.f32.mrf.mxu0
  %v3290 = vadd.f32 %v3216, %v3289
  %3291 = vmatmul.bf16.gmra.mxu0 %v78
  %v3292 = vpop.f32.mrf.mxu0
  %v3293 = vadd.f32 %v3219, %v3292
  %v3294 = vpop.f32.mrf.mxu0
  %v3295 = vadd.f32 %v3221, %v3294
  %3296 = vmatmul.bf16.gmra.mxu0 %v80
  %v3297 = vpop.f32.mrf.mxu0
  %v3298 = vadd.f32 %v3224, %v3297
  %v3299 = vpop.f32.mrf.mxu0
  %v3300 = vadd.f32 %v3226, %v3299
  %3301 = vmatmul.bf16.gmra.mxu0 %v82
  %v3302 = vpop.f32.mrf.mxu0
  %v3303 = vadd.f32 %v3229, %v3302
  %v3304 = vpop.f32.mrf.mxu0
  %v3305 = vadd.f32 %v3231, %v3304
  %3306 = vdwg.mxu0
  %3307 = vmatpush.bf16.msra.mxu0 %v1950
  %3308 = vmatpush.bf16.msra.mxu0 %v1942
  %3309 = vmatpush.bf16.msra.mxu0 %v1934
  %3310 = vmatpush.bf16.msra.mxu0 %v1926
  %3311 = vmatpush.bf16.msra.mxu0 %v1918
  %3312 = vmatpush.bf16.msra.mxu0 %v1910
  %3313 = vmatpush.bf16.msra.mxu0 %v1902
  %3314 = vmatpush.bf16.msra.mxu0 %v1894
  %3315 = vmatmul.bf16.gmra.mxu0 %v52
  %v3316 = vpop.f32.mrf.mxu0
  %v3317 = vadd.f32 %v534, %v3316
  %v3318 = vpop.f32.mrf.mxu0
  %v3319 = vadd.f32 %v534, %v3318
  %3320 = vmatmul.bf16.gmra.mxu0 %v54
  %v3321 = vpop.f32.mrf.mxu0
  %v3322 = vadd.f32 %v534, %v3321
  %v3323 = vpop.f32.mrf.mxu0
  %v3324 = vadd.f32 %v534, %v3323
  %3325 = vmatmul.bf16.gmra.mxu0 %v56
  %v3326 = vpop.f32.mrf.mxu0
  %v3327 = vadd.f32 %v534, %v3326
  %v3328 = vpop.f32.mrf.mxu0
  %v3329 = vadd.f32 %v534, %v3328
  %3330 = vmatmul.bf16.gmra.mxu0 %v58
  %v3331 = vpop.f32.mrf.mxu0
  %v3332 = vadd.f32 %v534, %v3331
  %v3333 = vpop.f32.mrf.mxu0
  %v3334 = vadd.f32 %v534, %v3333
  %3335 = vmatmul.bf16.gmra.mxu0 %v60
  %v3336 = vpop.f32.mrf.mxu0
  %v3337 = vadd.f32 %v534, %v3336
  %v3338 = vpop.f32.mrf.mxu0
  %v3339 = vadd.f32 %v534, %v3338
  %3340 = vmatmul.bf16.gmra.mxu0 %v62
  %v3341 = vpop.f32.mrf.mxu0
  %v3342 = vadd.f32 %v534, %v3341
  %v3343 = vpop.f32.mrf.mxu0
  %v3344 = vadd.f32 %v534, %v3343
  %3345 = vmatmul.bf16.gmra.mxu0 %v64
  %v3346 = vpop.f32.mrf.mxu0
  %v3347 = vadd.f32 %v534, %v3346
  %v3348 = vpop.f32.mrf.mxu0
  %v3349 = vadd.f32 %v534, %v3348
  %3350 = vmatmul.bf16.gmra.mxu0 %v66
  %v3351 = vpop.f32.mrf.mxu0
  %v3352 = vadd.f32 %v534, %v3351
  %v3353 = vpop.f32.mrf.mxu0
  %v3354 = vadd.f32 %v534, %v3353
  %3355 = vmatmul.bf16.gmra.mxu0 %v68
  %v3356 = vpop.f32.mrf.mxu0
  %v3357 = vadd.f32 %v534, %v3356
  %v3358 = vpop.f32.mrf.mxu0
  %v3359 = vadd.f32 %v534, %v3358
  %3360 = vmatmul.bf16.gmra.mxu0 %v70
  %v3361 = vpop.f32.mrf.mxu0
  %v3362 = vadd.f32 %v534, %v3361
  %v3363 = vpop.f32.mrf.mxu0
  %v3364 = vadd.f32 %v534, %v3363
  %3365 = vmatmul.bf16.gmra.mxu0 %v72
  %v3366 = vpop.f32.mrf.mxu0
  %v3367 = vadd.f32 %v534, %v3366
  %v3368 = vpop.f32.mrf.mxu0
  %v3369 = vadd.f32 %v534, %v3368
  %3370 = vmatmul.bf16.gmra.mxu0 %v74
  %v3371 = vpop.f32.mrf.mxu0
  %v3372 = vadd.f32 %v534, %v3371
  %v3373 = vpop.f32.mrf.mxu0
  %v3374 = vadd.f32 %v534, %v3373
  %3375 = vmatmul.bf16.gmra.mxu0 %v76
  %v3376 = vpop.f32.mrf.mxu0
  %v3377 = vadd.f32 %v534, %v3376
  %v3378 = vpop.f32.mrf.mxu0
  %v3379 = vadd.f32 %v534, %v3378
  %3380 = vdwg.mxu0
  %3381 = vmatpush.bf16.msra.mxu0 %v2014
  %3382 = vmatpush.bf16.msra.mxu0 %v2006
  %3383 = vmatpush.bf16.msra.mxu0 %v1998
  %3384 = vmatpush.bf16.msra.mxu0 %v1990
  %3385 = vmatpush.bf16.msra.mxu0 %v1982
  %3386 = vmatpush.bf16.msra.mxu0 %v1974
  %3387 = vmatpush.bf16.msra.mxu0 %v1966
  %3388 = vmatpush.bf16.msra.mxu0 %v1958
  %3389 = vmatmul.bf16.gmra.mxu0 %v53
  %v3390 = vpop.f32.mrf.mxu0
  %v3391 = vadd.f32 %v3317, %v3390
  %v3392 = vpop.f32.mrf.mxu0
  %v3393 = vadd.f32 %v3319, %v3392
  %3394 = vmatmul.bf16.gmra.mxu0 %v55
  %v3395 = vpop.f32.mrf.mxu0
  %v3396 = vadd.f32 %v3322, %v3395
  %v3397 = vpop.f32.mrf.mxu0
  %v3398 = vadd.f32 %v3324, %v3397
  %3399 = vmatmul.bf16.gmra.mxu0 %v57
  %v3400 = vpop.f32.mrf.mxu0
  %v3401 = vadd.f32 %v3327, %v3400
  %v3402 = vpop.f32.mrf.mxu0
  %v3403 = vadd.f32 %v3329, %v3402
  %3404 = vmatmul.bf16.gmra.mxu0 %v59
  %v3405 = vpop.f32.mrf.mxu0
  %v3406 = vadd.f32 %v3332, %v3405
  %v3407 = vpop.f32.mrf.mxu0
  %v3408 = vadd.f32 %v3334, %v3407
  %3409 = vmatmul.bf16.gmra.mxu0 %v61
  %v3410 = vpop.f32.mrf.mxu0
  %v3411 = vadd.f32 %v3337, %v3410
  %v3412 = vpop.f32.mrf.mxu0
  %v3413 = vadd.f32 %v3339, %v3412
  %3414 = vmatmul.bf16.gmra.mxu0 %v63
  %v3415 = vpop.f32.mrf.mxu0
  %v3416 = vadd.f32 %v3342, %v3415
  %v3417 = vpop.f32.mrf.mxu0
  %v3418 = vadd.f32 %v3344, %v3417
  %3419 = vmatmul.bf16.gmra.mxu0 %v65
  %v3420 = vpop.f32.mrf.mxu0
  %v3421 = vadd.f32 %v3347, %v3420
  %v3422 = vpop.f32.mrf.mxu0
  %v3423 = vadd.f32 %v3349, %v3422
  %3424 = vmatmul.bf16.gmra.mxu0 %v67
  %v3425 = vpop.f32.mrf.mxu0
  %v3426 = vadd.f32 %v3352, %v3425
  %v3427 = vpop.f32.mrf.mxu0
  %v3428 = vadd.f32 %v3354, %v3427
  %3429 = vmatmul.bf16.gmra.mxu0 %v69
  %v3430 = vpop.f32.mrf.mxu0
  %v3431 = vadd.f32 %v3357, %v3430
  %v3432 = vpop.f32.mrf.mxu0
  %v3433 = vadd.f32 %v3359, %v3432
  %3434 = vmatmul.bf16.gmra.mxu0 %v71
  %v3435 = vpop.f32.mrf.mxu0
  %v3436 = vadd.f32 %v3362, %v3435
  %v3437 = vpop.f32.mrf.mxu0
  %v3438 = vadd.f32 %v3364, %v3437
  %3439 = vmatmul.bf16.gmra.mxu0 %v73
  %v3440 = vpop.f32.mrf.mxu0
  %v3441 = vadd.f32 %v3367, %v3440
  %v3442 = vpop.f32.mrf.mxu0
  %v3443 = vadd.f32 %v3369, %v3442
  %3444 = vmatmul.bf16.gmra.mxu0 %v75
  %v3445 = vpop.f32.mrf.mxu0
  %v3446 = vadd.f32 %v3372, %v3445
  %v3447 = vpop.f32.mrf.mxu0
  %v3448 = vadd.f32 %v3374, %v3447
  %3449 = vmatmul.bf16.gmra.mxu0 %v77
  %v3450 = vpop.f32.mrf.mxu0
  %v3451 = vadd.f32 %v3377, %v3450
  %v3452 = vpop.f32.mrf.mxu0
  %v3453 = vadd.f32 %v3379, %v3452
  %3454 = vdwg.mxu0
  %3455 = vmatpush.bf16.msra.mxu0 %v2078
  %3456 = vmatpush.bf16.msra.mxu0 %v2070
  %3457 = vmatpush.bf16.msra.mxu0 %v2062
  %3458 = vmatpush.bf16.msra.mxu0 %v2054
  %3459 = vmatpush.bf16.msra.mxu0 %v2046
  %3460 = vmatpush.bf16.msra.mxu0 %v2038
  %3461 = vmatpush.bf16.msra.mxu0 %v2030
  %3462 = vmatpush.bf16.msra.mxu0 %v2022
  %3463 = vmatmul.bf16.gmra.mxu0 %v54
  %v3464 = vpop.f32.mrf.mxu0
  %v3465 = vadd.f32 %v3391, %v3464
  %v3466 = vpop.f32.mrf.mxu0
  %v3467 = vadd.f32 %v3393, %v3466
  %3468 = vmatmul.bf16.gmra.mxu0 %v56
  %v3469 = vpop.f32.mrf.mxu0
  %v3470 = vadd.f32 %v3396, %v3469
  %v3471 = vpop.f32.mrf.mxu0
  %v3472 = vadd.f32 %v3398, %v3471
  %3473 = vmatmul.bf16.gmra.mxu0 %v58
  %v3474 = vpop.f32.mrf.mxu0
  %v3475 = vadd.f32 %v3401, %v3474
  %v3476 = vpop.f32.mrf.mxu0
  %v3477 = vadd.f32 %v3403, %v3476
  %3478 = vmatmul.bf16.gmra.mxu0 %v60
  %v3479 = vpop.f32.mrf.mxu0
  %v3480 = vadd.f32 %v3406, %v3479
  %v3481 = vpop.f32.mrf.mxu0
  %v3482 = vadd.f32 %v3408, %v3481
  %3483 = vmatmul.bf16.gmra.mxu0 %v62
  %v3484 = vpop.f32.mrf.mxu0
  %v3485 = vadd.f32 %v3411, %v3484
  %v3486 = vpop.f32.mrf.mxu0
  %v3487 = vadd.f32 %v3413, %v3486
  %3488 = vmatmul.bf16.gmra.mxu0 %v64
  %v3489 = vpop.f32.mrf.mxu0
  %v3490 = vadd.f32 %v3416, %v3489
  %v3491 = vpop.f32.mrf.mxu0
  %v3492 = vadd.f32 %v3418, %v3491
  %3493 = vmatmul.bf16.gmra.mxu0 %v66
  %v3494 = vpop.f32.mrf.mxu0
  %v3495 = vadd.f32 %v3421, %v3494
  %v3496 = vpop.f32.mrf.mxu0
  %v3497 = vadd.f32 %v3423, %v3496
  %3498 = vmatmul.bf16.gmra.mxu0 %v68
  %v3499 = vpop.f32.mrf.mxu0
  %v3500 = vadd.f32 %v3426, %v3499
  %v3501 = vpop.f32.mrf.mxu0
  %v3502 = vadd.f32 %v3428, %v3501
  %3503 = vmatmul.bf16.gmra.mxu0 %v70
  %v3504 = vpop.f32.mrf.mxu0
  %v3505 = vadd.f32 %v3431, %v3504
  %v3506 = vpop.f32.mrf.mxu0
  %v3507 = vadd.f32 %v3433, %v3506
  %3508 = vmatmul.bf16.gmra.mxu0 %v72
  %v3509 = vpop.f32.mrf.mxu0
  %v3510 = vadd.f32 %v3436, %v3509
  %v3511 = vpop.f32.mrf.mxu0
  %v3512 = vadd.f32 %v3438, %v3511
  %3513 = vmatmul.bf16.gmra.mxu0 %v74
  %v3514 = vpop.f32.mrf.mxu0
  %v3515 = vadd.f32 %v3441, %v3514
  %v3516 = vpop.f32.mrf.mxu0
  %v3517 = vadd.f32 %v3443, %v3516
  %3518 = vmatmul.bf16.gmra.mxu0 %v76
  %v3519 = vpop.f32.mrf.mxu0
  %v3520 = vadd.f32 %v3446, %v3519
  %v3521 = vpop.f32.mrf.mxu0
  %v3522 = vadd.f32 %v3448, %v3521
  %3523 = vmatmul.bf16.gmra.mxu0 %v78
  %v3524 = vpop.f32.mrf.mxu0
  %v3525 = vadd.f32 %v3451, %v3524
  %v3526 = vpop.f32.mrf.mxu0
  %v3527 = vadd.f32 %v3453, %v3526
  %3528 = vdwg.mxu0
  %3529 = vmatpush.bf16.msra.mxu0 %v2142
  %3530 = vmatpush.bf16.msra.mxu0 %v2134
  %3531 = vmatpush.bf16.msra.mxu0 %v2126
  %3532 = vmatpush.bf16.msra.mxu0 %v2118
  %3533 = vmatpush.bf16.msra.mxu0 %v2110
  %3534 = vmatpush.bf16.msra.mxu0 %v2102
  %3535 = vmatpush.bf16.msra.mxu0 %v2094
  %3536 = vmatpush.bf16.msra.mxu0 %v2086
  %3537 = vmatmul.bf16.gmra.mxu0 %v55
  %v3538 = vpop.f32.mrf.mxu0
  %v3539 = vadd.f32 %v3465, %v3538
  %v3540 = vpop.f32.mrf.mxu0
  %v3541 = vadd.f32 %v3467, %v3540
  %3542 = vmatmul.bf16.gmra.mxu0 %v57
  %v3543 = vpop.f32.mrf.mxu0
  %v3544 = vadd.f32 %v3470, %v3543
  %v3545 = vpop.f32.mrf.mxu0
  %v3546 = vadd.f32 %v3472, %v3545
  %3547 = vmatmul.bf16.gmra.mxu0 %v59
  %v3548 = vpop.f32.mrf.mxu0
  %v3549 = vadd.f32 %v3475, %v3548
  %v3550 = vpop.f32.mrf.mxu0
  %v3551 = vadd.f32 %v3477, %v3550
  %3552 = vmatmul.bf16.gmra.mxu0 %v61
  %v3553 = vpop.f32.mrf.mxu0
  %v3554 = vadd.f32 %v3480, %v3553
  %v3555 = vpop.f32.mrf.mxu0
  %v3556 = vadd.f32 %v3482, %v3555
  %3557 = vmatmul.bf16.gmra.mxu0 %v63
  %v3558 = vpop.f32.mrf.mxu0
  %v3559 = vadd.f32 %v3485, %v3558
  %v3560 = vpop.f32.mrf.mxu0
  %v3561 = vadd.f32 %v3487, %v3560
  %3562 = vmatmul.bf16.gmra.mxu0 %v65
  %v3563 = vpop.f32.mrf.mxu0
  %v3564 = vadd.f32 %v3490, %v3563
  %v3565 = vpop.f32.mrf.mxu0
  %v3566 = vadd.f32 %v3492, %v3565
  %3567 = vmatmul.bf16.gmra.mxu0 %v67
  %v3568 = vpop.f32.mrf.mxu0
  %v3569 = vadd.f32 %v3495, %v3568
  %v3570 = vpop.f32.mrf.mxu0
  %v3571 = vadd.f32 %v3497, %v3570
  %3572 = vmatmul.bf16.gmra.mxu0 %v69
  %v3573 = vpop.f32.mrf.mxu0
  %v3574 = vadd.f32 %v3500, %v3573
  %v3575 = vpop.f32.mrf.mxu0
  %v3576 = vadd.f32 %v3502, %v3575
  %3577 = vmatmul.bf16.gmra.mxu0 %v71
  %v3578 = vpop.f32.mrf.mxu0
  %v3579 = vadd.f32 %v3505, %v3578
  %v3580 = vpop.f32.mrf.mxu0
  %v3581 = vadd.f32 %v3507, %v3580
  %3582 = vmatmul.bf16.gmra.mxu0 %v73
  %v3583 = vpop.f32.mrf.mxu0
  %v3584 = vadd.f32 %v3510, %v3583
  %v3585 = vpop.f32.mrf.mxu0
  %v3586 = vadd.f32 %v3512, %v3585
  %3587 = vmatmul.bf16.gmra.mxu0 %v75
  %v3588 = vpop.f32.mrf.mxu0
  %v3589 = vadd.f32 %v3515, %v3588
  %v3590 = vpop.f32.mrf.mxu0
  %v3591 = vadd.f32 %v3517, %v3590
  %3592 = vmatmul.bf16.gmra.mxu0 %v77
  %v3593 = vpop.f32.mrf.mxu0
  %v3594 = vadd.f32 %v3520, %v3593
  %v3595 = vpop.f32.mrf.mxu0
  %v3596 = vadd.f32 %v3522, %v3595
  %3597 = vmatmul.bf16.gmra.mxu0 %v79
  %v3598 = vpop.f32.mrf.mxu0
  %v3599 = vadd.f32 %v3525, %v3598
  %v3600 = vpop.f32.mrf.mxu0
  %v3601 = vadd.f32 %v3527, %v3600
  %3602 = vdwg.mxu0
  %3603 = vmatpush.bf16.msra.mxu0 %v2206
  %3604 = vmatpush.bf16.msra.mxu0 %v2198
  %3605 = vmatpush.bf16.msra.mxu0 %v2190
  %3606 = vmatpush.bf16.msra.mxu0 %v2182
  %3607 = vmatpush.bf16.msra.mxu0 %v2174
  %3608 = vmatpush.bf16.msra.mxu0 %v2166
  %3609 = vmatpush.bf16.msra.mxu0 %v2158
  %3610 = vmatpush.bf16.msra.mxu0 %v2150
  %3611 = vmatmul.bf16.gmra.mxu0 %v56
  %v3612 = vpop.f32.mrf.mxu0
  %v3613 = vadd.f32 %v3539, %v3612
  %v3614 = vpop.f32.mrf.mxu0
  %v3615 = vadd.f32 %v3541, %v3614
  %3616 = vmatmul.bf16.gmra.mxu0 %v58
  %v3617 = vpop.f32.mrf.mxu0
  %v3618 = vadd.f32 %v3544, %v3617
  %v3619 = vpop.f32.mrf.mxu0
  %v3620 = vadd.f32 %v3546, %v3619
  %3621 = vmatmul.bf16.gmra.mxu0 %v60
  %v3622 = vpop.f32.mrf.mxu0
  %v3623 = vadd.f32 %v3549, %v3622
  %v3624 = vpop.f32.mrf.mxu0
  %v3625 = vadd.f32 %v3551, %v3624
  %3626 = vmatmul.bf16.gmra.mxu0 %v62
  %v3627 = vpop.f32.mrf.mxu0
  %v3628 = vadd.f32 %v3554, %v3627
  %v3629 = vpop.f32.mrf.mxu0
  %v3630 = vadd.f32 %v3556, %v3629
  %3631 = vmatmul.bf16.gmra.mxu0 %v64
  %v3632 = vpop.f32.mrf.mxu0
  %v3633 = vadd.f32 %v3559, %v3632
  %v3634 = vpop.f32.mrf.mxu0
  %v3635 = vadd.f32 %v3561, %v3634
  %3636 = vmatmul.bf16.gmra.mxu0 %v66
  %v3637 = vpop.f32.mrf.mxu0
  %v3638 = vadd.f32 %v3564, %v3637
  %v3639 = vpop.f32.mrf.mxu0
  %v3640 = vadd.f32 %v3566, %v3639
  %3641 = vmatmul.bf16.gmra.mxu0 %v68
  %v3642 = vpop.f32.mrf.mxu0
  %v3643 = vadd.f32 %v3569, %v3642
  %v3644 = vpop.f32.mrf.mxu0
  %v3645 = vadd.f32 %v3571, %v3644
  %3646 = vmatmul.bf16.gmra.mxu0 %v70
  %v3647 = vpop.f32.mrf.mxu0
  %v3648 = vadd.f32 %v3574, %v3647
  %v3649 = vpop.f32.mrf.mxu0
  %v3650 = vadd.f32 %v3576, %v3649
  %3651 = vmatmul.bf16.gmra.mxu0 %v72
  %v3652 = vpop.f32.mrf.mxu0
  %v3653 = vadd.f32 %v3579, %v3652
  %v3654 = vpop.f32.mrf.mxu0
  %v3655 = vadd.f32 %v3581, %v3654
  %3656 = vmatmul.bf16.gmra.mxu0 %v74
  %v3657 = vpop.f32.mrf.mxu0
  %v3658 = vadd.f32 %v3584, %v3657
  %v3659 = vpop.f32.mrf.mxu0
  %v3660 = vadd.f32 %v3586, %v3659
  %3661 = vmatmul.bf16.gmra.mxu0 %v76
  %v3662 = vpop.f32.mrf.mxu0
  %v3663 = vadd.f32 %v3589, %v3662
  %v3664 = vpop.f32.mrf.mxu0
  %v3665 = vadd.f32 %v3591, %v3664
  %3666 = vmatmul.bf16.gmra.mxu0 %v78
  %v3667 = vpop.f32.mrf.mxu0
  %v3668 = vadd.f32 %v3594, %v3667
  %v3669 = vpop.f32.mrf.mxu0
  %v3670 = vadd.f32 %v3596, %v3669
  %3671 = vmatmul.bf16.gmra.mxu0 %v80
  %v3672 = vpop.f32.mrf.mxu0
  %v3673 = vadd.f32 %v3599, %v3672
  %v3674 = vpop.f32.mrf.mxu0
  %v3675 = vadd.f32 %v3601, %v3674
  %3676 = vdwg.mxu0
  %3677 = vmatpush.bf16.msra.mxu0 %v2270
  %3678 = vmatpush.bf16.msra.mxu0 %v2262
  %3679 = vmatpush.bf16.msra.mxu0 %v2254
  %3680 = vmatpush.bf16.msra.mxu0 %v2246
  %3681 = vmatpush.bf16.msra.mxu0 %v2238
  %3682 = vmatpush.bf16.msra.mxu0 %v2230
  %3683 = vmatpush.bf16.msra.mxu0 %v2222
  %3684 = vmatpush.bf16.msra.mxu0 %v2214
  %3685 = vmatmul.bf16.gmra.mxu0 %v57
  %v3686 = vpop.f32.mrf.mxu0
  %v3687 = vadd.f32 %v3613, %v3686
  %v3688 = vpop.f32.mrf.mxu0
  %v3689 = vadd.f32 %v3615, %v3688
  %3690 = vmatmul.bf16.gmra.mxu0 %v59
  %v3691 = vpop.f32.mrf.mxu0
  %v3692 = vadd.f32 %v3618, %v3691
  %v3693 = vpop.f32.mrf.mxu0
  %v3694 = vadd.f32 %v3620, %v3693
  %3695 = vmatmul.bf16.gmra.mxu0 %v61
  %v3696 = vpop.f32.mrf.mxu0
  %v3697 = vadd.f32 %v3623, %v3696
  %v3698 = vpop.f32.mrf.mxu0
  %v3699 = vadd.f32 %v3625, %v3698
  %3700 = vmatmul.bf16.gmra.mxu0 %v63
  %v3701 = vpop.f32.mrf.mxu0
  %v3702 = vadd.f32 %v3628, %v3701
  %v3703 = vpop.f32.mrf.mxu0
  %v3704 = vadd.f32 %v3630, %v3703
  %3705 = vmatmul.bf16.gmra.mxu0 %v65
  %v3706 = vpop.f32.mrf.mxu0
  %v3707 = vadd.f32 %v3633, %v3706
  %v3708 = vpop.f32.mrf.mxu0
  %v3709 = vadd.f32 %v3635, %v3708
  %3710 = vmatmul.bf16.gmra.mxu0 %v67
  %v3711 = vpop.f32.mrf.mxu0
  %v3712 = vadd.f32 %v3638, %v3711
  %v3713 = vpop.f32.mrf.mxu0
  %v3714 = vadd.f32 %v3640, %v3713
  %3715 = vmatmul.bf16.gmra.mxu0 %v69
  %v3716 = vpop.f32.mrf.mxu0
  %v3717 = vadd.f32 %v3643, %v3716
  %v3718 = vpop.f32.mrf.mxu0
  %v3719 = vadd.f32 %v3645, %v3718
  %3720 = vmatmul.bf16.gmra.mxu0 %v71
  %v3721 = vpop.f32.mrf.mxu0
  %v3722 = vadd.f32 %v3648, %v3721
  %v3723 = vpop.f32.mrf.mxu0
  %v3724 = vadd.f32 %v3650, %v3723
  %3725 = vmatmul.bf16.gmra.mxu0 %v73
  %v3726 = vpop.f32.mrf.mxu0
  %v3727 = vadd.f32 %v3653, %v3726
  %v3728 = vpop.f32.mrf.mxu0
  %v3729 = vadd.f32 %v3655, %v3728
  %3730 = vmatmul.bf16.gmra.mxu0 %v75
  %v3731 = vpop.f32.mrf.mxu0
  %v3732 = vadd.f32 %v3658, %v3731
  %v3733 = vpop.f32.mrf.mxu0
  %v3734 = vadd.f32 %v3660, %v3733
  %3735 = vmatmul.bf16.gmra.mxu0 %v77
  %v3736 = vpop.f32.mrf.mxu0
  %v3737 = vadd.f32 %v3663, %v3736
  %v3738 = vpop.f32.mrf.mxu0
  %v3739 = vadd.f32 %v3665, %v3738
  %3740 = vmatmul.bf16.gmra.mxu0 %v79
  %v3741 = vpop.f32.mrf.mxu0
  %v3742 = vadd.f32 %v3668, %v3741
  %v3743 = vpop.f32.mrf.mxu0
  %v3744 = vadd.f32 %v3670, %v3743
  %3745 = vmatmul.bf16.gmra.mxu0 %v81
  %v3746 = vpop.f32.mrf.mxu0
  %v3747 = vadd.f32 %v3673, %v3746
  %v3748 = vpop.f32.mrf.mxu0
  %v3749 = vadd.f32 %v3675, %v3748
  %3750 = vdwg.mxu0
  %3751 = vmatpush.bf16.msra.mxu0 %v2334
  %3752 = vmatpush.bf16.msra.mxu0 %v2326
  %3753 = vmatpush.bf16.msra.mxu0 %v2318
  %3754 = vmatpush.bf16.msra.mxu0 %v2310
  %3755 = vmatpush.bf16.msra.mxu0 %v2302
  %3756 = vmatpush.bf16.msra.mxu0 %v2294
  %3757 = vmatpush.bf16.msra.mxu0 %v2286
  %3758 = vmatpush.bf16.msra.mxu0 %v2278
  %3759 = vmatmul.bf16.gmra.mxu0 %v58
  %v3760 = vpop.f32.mrf.mxu0
  %v3761 = vadd.f32 %v3687, %v3760
  %v3762 = vpop.f32.mrf.mxu0
  %v3763 = vadd.f32 %v3689, %v3762
  %3764 = vmatmul.bf16.gmra.mxu0 %v60
  %v3765 = vpop.f32.mrf.mxu0
  %v3766 = vadd.f32 %v3692, %v3765
  %v3767 = vpop.f32.mrf.mxu0
  %v3768 = vadd.f32 %v3694, %v3767
  %3769 = vmatmul.bf16.gmra.mxu0 %v62
  %v3770 = vpop.f32.mrf.mxu0
  %v3771 = vadd.f32 %v3697, %v3770
  %v3772 = vpop.f32.mrf.mxu0
  %v3773 = vadd.f32 %v3699, %v3772
  %3774 = vmatmul.bf16.gmra.mxu0 %v64
  %v3775 = vpop.f32.mrf.mxu0
  %v3776 = vadd.f32 %v3702, %v3775
  %v3777 = vpop.f32.mrf.mxu0
  %v3778 = vadd.f32 %v3704, %v3777
  %3779 = vmatmul.bf16.gmra.mxu0 %v66
  %v3780 = vpop.f32.mrf.mxu0
  %v3781 = vadd.f32 %v3707, %v3780
  %v3782 = vpop.f32.mrf.mxu0
  %v3783 = vadd.f32 %v3709, %v3782
  %3784 = vmatmul.bf16.gmra.mxu0 %v68
  %v3785 = vpop.f32.mrf.mxu0
  %v3786 = vadd.f32 %v3712, %v3785
  %v3787 = vpop.f32.mrf.mxu0
  %v3788 = vadd.f32 %v3714, %v3787
  %3789 = vmatmul.bf16.gmra.mxu0 %v70
  %v3790 = vpop.f32.mrf.mxu0
  %v3791 = vadd.f32 %v3717, %v3790
  %v3792 = vpop.f32.mrf.mxu0
  %v3793 = vadd.f32 %v3719, %v3792
  %3794 = vmatmul.bf16.gmra.mxu0 %v72
  %v3795 = vpop.f32.mrf.mxu0
  %v3796 = vadd.f32 %v3722, %v3795
  %v3797 = vpop.f32.mrf.mxu0
  %v3798 = vadd.f32 %v3724, %v3797
  %3799 = vmatmul.bf16.gmra.mxu0 %v74
  %v3800 = vpop.f32.mrf.mxu0
  %v3801 = vadd.f32 %v3727, %v3800
  %v3802 = vpop.f32.mrf.mxu0
  %v3803 = vadd.f32 %v3729, %v3802
  %3804 = vmatmul.bf16.gmra.mxu0 %v76
  %v3805 = vpop.f32.mrf.mxu0
  %v3806 = vadd.f32 %v3732, %v3805
  %v3807 = vpop.f32.mrf.mxu0
  %v3808 = vadd.f32 %v3734, %v3807
  %3809 = vmatmul.bf16.gmra.mxu0 %v78
  %v3810 = vpop.f32.mrf.mxu0
  %v3811 = vadd.f32 %v3737, %v3810
  %v3812 = vpop.f32.mrf.mxu0
  %v3813 = vadd.f32 %v3739, %v3812
  %3814 = vmatmul.bf16.gmra.mxu0 %v80
  %v3815 = vpop.f32.mrf.mxu0
  %v3816 = vadd.f32 %v3742, %v3815
  %v3817 = vpop.f32.mrf.mxu0
  %v3818 = vadd.f32 %v3744, %v3817
  %3819 = vmatmul.bf16.gmra.mxu0 %v82
  %v3820 = vpop.f32.mrf.mxu0
  %v3821 = vadd.f32 %v3747, %v3820
  %v3822 = vpop.f32.mrf.mxu0
  %v3823 = vadd.f32 %v3749, %v3822
  %3824 = vdwg.mxu0
  %3825 = vmatpush.bf16.msra.mxu0 %v1951
  %3826 = vmatpush.bf16.msra.mxu0 %v1943
  %3827 = vmatpush.bf16.msra.mxu0 %v1935
  %3828 = vmatpush.bf16.msra.mxu0 %v1927
  %3829 = vmatpush.bf16.msra.mxu0 %v1919
  %3830 = vmatpush.bf16.msra.mxu0 %v1911
  %3831 = vmatpush.bf16.msra.mxu0 %v1903
  %3832 = vmatpush.bf16.msra.mxu0 %v1895
  %3833 = vmatmul.bf16.gmra.mxu0 %v52
  %v3834 = vpop.f32.mrf.mxu0
  %v3835 = vadd.f32 %v535, %v3834
  %v3836 = vpop.f32.mrf.mxu0
  %v3837 = vadd.f32 %v535, %v3836
  %3838 = vmatmul.bf16.gmra.mxu0 %v54
  %v3839 = vpop.f32.mrf.mxu0
  %v3840 = vadd.f32 %v535, %v3839
  %v3841 = vpop.f32.mrf.mxu0
  %v3842 = vadd.f32 %v535, %v3841
  %3843 = vmatmul.bf16.gmra.mxu0 %v56
  %v3844 = vpop.f32.mrf.mxu0
  %v3845 = vadd.f32 %v535, %v3844
  %v3846 = vpop.f32.mrf.mxu0
  %v3847 = vadd.f32 %v535, %v3846
  %3848 = vmatmul.bf16.gmra.mxu0 %v58
  %v3849 = vpop.f32.mrf.mxu0
  %v3850 = vadd.f32 %v535, %v3849
  %v3851 = vpop.f32.mrf.mxu0
  %v3852 = vadd.f32 %v535, %v3851
  %3853 = vmatmul.bf16.gmra.mxu0 %v60
  %v3854 = vpop.f32.mrf.mxu0
  %v3855 = vadd.f32 %v535, %v3854
  %v3856 = vpop.f32.mrf.mxu0
  %v3857 = vadd.f32 %v535, %v3856
  %3858 = vmatmul.bf16.gmra.mxu0 %v62
  %v3859 = vpop.f32.mrf.mxu0
  %v3860 = vadd.f32 %v535, %v3859
  %v3861 = vpop.f32.mrf.mxu0
  %v3862 = vadd.f32 %v535, %v3861
  %3863 = vmatmul.bf16.gmra.mxu0 %v64
  %v3864 = vpop.f32.mrf.mxu0
  %v3865 = vadd.f32 %v535, %v3864
  %v3866 = vpop.f32.mrf.mxu0
  %v3867 = vadd.f32 %v535, %v3866
  %3868 = vmatmul.bf16.gmra.mxu0 %v66
  %v3869 = vpop.f32.mrf.mxu0
  %v3870 = vadd.f32 %v535, %v3869
  %v3871 = vpop.f32.mrf.mxu0
  %v3872 = vadd.f32 %v535, %v3871
  %3873 = vmatmul.bf16.gmra.mxu0 %v68
  %v3874 = vpop.f32.mrf.mxu0
  %v3875 = vadd.f32 %v535, %v3874
  %v3876 = vpop.f32.mrf.mxu0
  %v3877 = vadd.f32 %v535, %v3876
  %3878 = vmatmul.bf16.gmra.mxu0 %v70
  %v3879 = vpop.f32.mrf.mxu0
  %v3880 = vadd.f32 %v535, %v3879
  %v3881 = vpop.f32.mrf.mxu0
  %v3882 = vadd.f32 %v535, %v3881
  %3883 = vmatmul.bf16.gmra.mxu0 %v72
  %v3884 = vpop.f32.mrf.mxu0
  %v3885 = vadd.f32 %v535, %v3884
  %v3886 = vpop.f32.mrf.mxu0
  %v3887 = vadd.f32 %v535, %v3886
  %3888 = vmatmul.bf16.gmra.mxu0 %v74
  %v3889 = vpop.f32.mrf.mxu0
  %v3890 = vadd.f32 %v535, %v3889
  %v3891 = vpop.f32.mrf.mxu0
  %v3892 = vadd.f32 %v535, %v3891
  %3893 = vmatmul.bf16.gmra.mxu0 %v76
  %v3894 = vpop.f32.mrf.mxu0
  %v3895 = vadd.f32 %v535, %v3894
  %v3896 = vpop.f32.mrf.mxu0
  %v3897 = vadd.f32 %v535, %v3896
  %3898 = vdwg.mxu0
  %3899 = vmatpush.bf16.msra.mxu0 %v2015
  %3900 = vmatpush.bf16.msra.mxu0 %v2007
  %3901 = vmatpush.bf16.msra.mxu0 %v1999
  %3902 = vmatpush.bf16.msra.mxu0 %v1991
  %3903 = vmatpush.bf16.msra.mxu0 %v1983
  %3904 = vmatpush.bf16.msra.mxu0 %v1975
  %3905 = vmatpush.bf16.msra.mxu0 %v1967
  %3906 = vmatpush.bf16.msra.mxu0 %v1959
  %3907 = vmatmul.bf16.gmra.mxu0 %v53
  %v3908 = vpop.f32.mrf.mxu0
  %v3909 = vadd.f32 %v3835, %v3908
  %v3910 = vpop.f32.mrf.mxu0
  %v3911 = vadd.f32 %v3837, %v3910
  %3912 = vmatmul.bf16.gmra.mxu0 %v55
  %v3913 = vpop.f32.mrf.mxu0
  %v3914 = vadd.f32 %v3840, %v3913
  %v3915 = vpop.f32.mrf.mxu0
  %v3916 = vadd.f32 %v3842, %v3915
  %3917 = vmatmul.bf16.gmra.mxu0 %v57
  %v3918 = vpop.f32.mrf.mxu0
  %v3919 = vadd.f32 %v3845, %v3918
  %v3920 = vpop.f32.mrf.mxu0
  %v3921 = vadd.f32 %v3847, %v3920
  %3922 = vmatmul.bf16.gmra.mxu0 %v59
  %v3923 = vpop.f32.mrf.mxu0
  %v3924 = vadd.f32 %v3850, %v3923
  %v3925 = vpop.f32.mrf.mxu0
  %v3926 = vadd.f32 %v3852, %v3925
  %3927 = vmatmul.bf16.gmra.mxu0 %v61
  %v3928 = vpop.f32.mrf.mxu0
  %v3929 = vadd.f32 %v3855, %v3928
  %v3930 = vpop.f32.mrf.mxu0
  %v3931 = vadd.f32 %v3857, %v3930
  %3932 = vmatmul.bf16.gmra.mxu0 %v63
  %v3933 = vpop.f32.mrf.mxu0
  %v3934 = vadd.f32 %v3860, %v3933
  %v3935 = vpop.f32.mrf.mxu0
  %v3936 = vadd.f32 %v3862, %v3935
  %3937 = vmatmul.bf16.gmra.mxu0 %v65
  %v3938 = vpop.f32.mrf.mxu0
  %v3939 = vadd.f32 %v3865, %v3938
  %v3940 = vpop.f32.mrf.mxu0
  %v3941 = vadd.f32 %v3867, %v3940
  %3942 = vmatmul.bf16.gmra.mxu0 %v67
  %v3943 = vpop.f32.mrf.mxu0
  %v3944 = vadd.f32 %v3870, %v3943
  %v3945 = vpop.f32.mrf.mxu0
  %v3946 = vadd.f32 %v3872, %v3945
  %3947 = vmatmul.bf16.gmra.mxu0 %v69
  %v3948 = vpop.f32.mrf.mxu0
  %v3949 = vadd.f32 %v3875, %v3948
  %v3950 = vpop.f32.mrf.mxu0
  %v3951 = vadd.f32 %v3877, %v3950
  %3952 = vmatmul.bf16.gmra.mxu0 %v71
  %v3953 = vpop.f32.mrf.mxu0
  %v3954 = vadd.f32 %v3880, %v3953
  %v3955 = vpop.f32.mrf.mxu0
  %v3956 = vadd.f32 %v3882, %v3955
  %3957 = vmatmul.bf16.gmra.mxu0 %v73
  %v3958 = vpop.f32.mrf.mxu0
  %v3959 = vadd.f32 %v3885, %v3958
  %v3960 = vpop.f32.mrf.mxu0
  %v3961 = vadd.f32 %v3887, %v3960
  %3962 = vmatmul.bf16.gmra.mxu0 %v75
  %v3963 = vpop.f32.mrf.mxu0
  %v3964 = vadd.f32 %v3890, %v3963
  %v3965 = vpop.f32.mrf.mxu0
  %v3966 = vadd.f32 %v3892, %v3965
  %3967 = vmatmul.bf16.gmra.mxu0 %v77
  %v3968 = vpop.f32.mrf.mxu0
  %v3969 = vadd.f32 %v3895, %v3968
  %v3970 = vpop.f32.mrf.mxu0
  %v3971 = vadd.f32 %v3897, %v3970
  %3972 = vdwg.mxu0
  %3973 = vmatpush.bf16.msra.mxu0 %v2079
  %3974 = vmatpush.bf16.msra.mxu0 %v2071
  %3975 = vmatpush.bf16.msra.mxu0 %v2063
  %3976 = vmatpush.bf16.msra.mxu0 %v2055
  %3977 = vmatpush.bf16.msra.mxu0 %v2047
  %3978 = vmatpush.bf16.msra.mxu0 %v2039
  %3979 = vmatpush.bf16.msra.mxu0 %v2031
  %3980 = vmatpush.bf16.msra.mxu0 %v2023
  %3981 = vmatmul.bf16.gmra.mxu0 %v54
  %v3982 = vpop.f32.mrf.mxu0
  %v3983 = vadd.f32 %v3909, %v3982
  %v3984 = vpop.f32.mrf.mxu0
  %v3985 = vadd.f32 %v3911, %v3984
  %3986 = vmatmul.bf16.gmra.mxu0 %v56
  %v3987 = vpop.f32.mrf.mxu0
  %v3988 = vadd.f32 %v3914, %v3987
  %v3989 = vpop.f32.mrf.mxu0
  %v3990 = vadd.f32 %v3916, %v3989
  %3991 = vmatmul.bf16.gmra.mxu0 %v58
  %v3992 = vpop.f32.mrf.mxu0
  %v3993 = vadd.f32 %v3919, %v3992
  %v3994 = vpop.f32.mrf.mxu0
  %v3995 = vadd.f32 %v3921, %v3994
  %3996 = vmatmul.bf16.gmra.mxu0 %v60
  %v3997 = vpop.f32.mrf.mxu0
  %v3998 = vadd.f32 %v3924, %v3997
  %v3999 = vpop.f32.mrf.mxu0
  %v4000 = vadd.f32 %v3926, %v3999
  %4001 = vmatmul.bf16.gmra.mxu0 %v62
  %v4002 = vpop.f32.mrf.mxu0
  %v4003 = vadd.f32 %v3929, %v4002
  %v4004 = vpop.f32.mrf.mxu0
  %v4005 = vadd.f32 %v3931, %v4004
  %4006 = vmatmul.bf16.gmra.mxu0 %v64
  %v4007 = vpop.f32.mrf.mxu0
  %v4008 = vadd.f32 %v3934, %v4007
  %v4009 = vpop.f32.mrf.mxu0
  %v4010 = vadd.f32 %v3936, %v4009
  %4011 = vmatmul.bf16.gmra.mxu0 %v66
  %v4012 = vpop.f32.mrf.mxu0
  %v4013 = vadd.f32 %v3939, %v4012
  %v4014 = vpop.f32.mrf.mxu0
  %v4015 = vadd.f32 %v3941, %v4014
  %4016 = vmatmul.bf16.gmra.mxu0 %v68
  %v4017 = vpop.f32.mrf.mxu0
  %v4018 = vadd.f32 %v3944, %v4017
  %v4019 = vpop.f32.mrf.mxu0
  %v4020 = vadd.f32 %v3946, %v4019
  %4021 = vmatmul.bf16.gmra.mxu0 %v70
  %v4022 = vpop.f32.mrf.mxu0
  %v4023 = vadd.f32 %v3949, %v4022
  %v4024 = vpop.f32.mrf.mxu0
  %v4025 = vadd.f32 %v3951, %v4024
  %4026 = vmatmul.bf16.gmra.mxu0 %v72
  %v4027 = vpop.f32.mrf.mxu0
  %v4028 = vadd.f32 %v3954, %v4027
  %v4029 = vpop.f32.mrf.mxu0
  %v4030 = vadd.f32 %v3956, %v4029
  %4031 = vmatmul.bf16.gmra.mxu0 %v74
  %v4032 = vpop.f32.mrf.mxu0
  %v4033 = vadd.f32 %v3959, %v4032
  %v4034 = vpop.f32.mrf.mxu0
  %v4035 = vadd.f32 %v3961, %v4034
  %4036 = vmatmul.bf16.gmra.mxu0 %v76
  %v4037 = vpop.f32.mrf.mxu0
  %v4038 = vadd.f32 %v3964, %v4037
  %v4039 = vpop.f32.mrf.mxu0
  %v4040 = vadd.f32 %v3966, %v4039
  %4041 = vmatmul.bf16.gmra.mxu0 %v78
  %v4042 = vpop.f32.mrf.mxu0
  %v4043 = vadd.f32 %v3969, %v4042
  %v4044 = vpop.f32.mrf.mxu0
  %v4045 = vadd.f32 %v3971, %v4044
  %4046 = vdwg.mxu0
  %4047 = vmatpush.bf16.msra.mxu0 %v2143
  %4048 = vmatpush.bf16.msra.mxu0 %v2135
  %4049 = vmatpush.bf16.msra.mxu0 %v2127
  %4050 = vmatpush.bf16.msra.mxu0 %v2119
  %4051 = vmatpush.bf16.msra.mxu0 %v2111
  %4052 = vmatpush.bf16.msra.mxu0 %v2103
  %4053 = vmatpush.bf16.msra.mxu0 %v2095
  %4054 = vmatpush.bf16.msra.mxu0 %v2087
  %4055 = vmatmul.bf16.gmra.mxu0 %v55
  %v4056 = vpop.f32.mrf.mxu0
  %v4057 = vadd.f32 %v3983, %v4056
  %v4058 = vpop.f32.mrf.mxu0
  %v4059 = vadd.f32 %v3985, %v4058
  %4060 = vmatmul.bf16.gmra.mxu0 %v57
  %v4061 = vpop.f32.mrf.mxu0
  %v4062 = vadd.f32 %v3988, %v4061
  %v4063 = vpop.f32.mrf.mxu0
  %v4064 = vadd.f32 %v3990, %v4063
  %4065 = vmatmul.bf16.gmra.mxu0 %v59
  %v4066 = vpop.f32.mrf.mxu0
  %v4067 = vadd.f32 %v3993, %v4066
  %v4068 = vpop.f32.mrf.mxu0
  %v4069 = vadd.f32 %v3995, %v4068
  %4070 = vmatmul.bf16.gmra.mxu0 %v61
  %v4071 = vpop.f32.mrf.mxu0
  %v4072 = vadd.f32 %v3998, %v4071
  %v4073 = vpop.f32.mrf.mxu0
  %v4074 = vadd.f32 %v4000, %v4073
  %4075 = vmatmul.bf16.gmra.mxu0 %v63
  %v4076 = vpop.f32.mrf.mxu0
  %v4077 = vadd.f32 %v4003, %v4076
  %v4078 = vpop.f32.mrf.mxu0
  %v4079 = vadd.f32 %v4005, %v4078
  %4080 = vmatmul.bf16.gmra.mxu0 %v65
  %v4081 = vpop.f32.mrf.mxu0
  %v4082 = vadd.f32 %v4008, %v4081
  %v4083 = vpop.f32.mrf.mxu0
  %v4084 = vadd.f32 %v4010, %v4083
  %4085 = vmatmul.bf16.gmra.mxu0 %v67
  %v4086 = vpop.f32.mrf.mxu0
  %v4087 = vadd.f32 %v4013, %v4086
  %v4088 = vpop.f32.mrf.mxu0
  %v4089 = vadd.f32 %v4015, %v4088
  %4090 = vmatmul.bf16.gmra.mxu0 %v69
  %v4091 = vpop.f32.mrf.mxu0
  %v4092 = vadd.f32 %v4018, %v4091
  %v4093 = vpop.f32.mrf.mxu0
  %v4094 = vadd.f32 %v4020, %v4093
  %4095 = vmatmul.bf16.gmra.mxu0 %v71
  %v4096 = vpop.f32.mrf.mxu0
  %v4097 = vadd.f32 %v4023, %v4096
  %v4098 = vpop.f32.mrf.mxu0
  %v4099 = vadd.f32 %v4025, %v4098
  %4100 = vmatmul.bf16.gmra.mxu0 %v73
  %v4101 = vpop.f32.mrf.mxu0
  %v4102 = vadd.f32 %v4028, %v4101
  %v4103 = vpop.f32.mrf.mxu0
  %v4104 = vadd.f32 %v4030, %v4103
  %4105 = vmatmul.bf16.gmra.mxu0 %v75
  %v4106 = vpop.f32.mrf.mxu0
  %v4107 = vadd.f32 %v4033, %v4106
  %v4108 = vpop.f32.mrf.mxu0
  %v4109 = vadd.f32 %v4035, %v4108
  %4110 = vmatmul.bf16.gmra.mxu0 %v77
  %v4111 = vpop.f32.mrf.mxu0
  %v4112 = vadd.f32 %v4038, %v4111
  %v4113 = vpop.f32.mrf.mxu0
  %v4114 = vadd.f32 %v4040, %v4113
  %4115 = vmatmul.bf16.gmra.mxu0 %v79
  %v4116 = vpop.f32.mrf.mxu0
  %v4117 = vadd.f32 %v4043, %v4116
  %v4118 = vpop.f32.mrf.mxu0
  %v4119 = vadd.f32 %v4045, %v4118
  %4120 = vdwg.mxu0
  %4121 = vmatpush.bf16.msra.mxu0 %v2207
  %4122 = vmatpush.bf16.msra.mxu0 %v2199
  %4123 = vmatpush.bf16.msra.mxu0 %v2191
  %4124 = vmatpush.bf16.msra.mxu0 %v2183
  %4125 = vmatpush.bf16.msra.mxu0 %v2175
  %4126 = vmatpush.bf16.msra.mxu0 %v2167
  %4127 = vmatpush.bf16.msra.mxu0 %v2159
  %4128 = vmatpush.bf16.msra.mxu0 %v2151
  %4129 = vmatmul.bf16.gmra.mxu0 %v56
  %v4130 = vpop.f32.mrf.mxu0
  %v4131 = vadd.f32 %v4057, %v4130
  %v4132 = vpop.f32.mrf.mxu0
  %v4133 = vadd.f32 %v4059, %v4132
  %4134 = vmatmul.bf16.gmra.mxu0 %v58
  %v4135 = vpop.f32.mrf.mxu0
  %v4136 = vadd.f32 %v4062, %v4135
  %v4137 = vpop.f32.mrf.mxu0
  %v4138 = vadd.f32 %v4064, %v4137
  %4139 = vmatmul.bf16.gmra.mxu0 %v60
  %v4140 = vpop.f32.mrf.mxu0
  %v4141 = vadd.f32 %v4067, %v4140
  %v4142 = vpop.f32.mrf.mxu0
  %v4143 = vadd.f32 %v4069, %v4142
  %4144 = vmatmul.bf16.gmra.mxu0 %v62
  %v4145 = vpop.f32.mrf.mxu0
  %v4146 = vadd.f32 %v4072, %v4145
  %v4147 = vpop.f32.mrf.mxu0
  %v4148 = vadd.f32 %v4074, %v4147
  %4149 = vmatmul.bf16.gmra.mxu0 %v64
  %v4150 = vpop.f32.mrf.mxu0
  %v4151 = vadd.f32 %v4077, %v4150
  %v4152 = vpop.f32.mrf.mxu0
  %v4153 = vadd.f32 %v4079, %v4152
  %4154 = vmatmul.bf16.gmra.mxu0 %v66
  %v4155 = vpop.f32.mrf.mxu0
  %v4156 = vadd.f32 %v4082, %v4155
  %v4157 = vpop.f32.mrf.mxu0
  %v4158 = vadd.f32 %v4084, %v4157
  %4159 = vmatmul.bf16.gmra.mxu0 %v68
  %v4160 = vpop.f32.mrf.mxu0
  %v4161 = vadd.f32 %v4087, %v4160
  %v4162 = vpop.f32.mrf.mxu0
  %v4163 = vadd.f32 %v4089, %v4162
  %4164 = vmatmul.bf16.gmra.mxu0 %v70
  %v4165 = vpop.f32.mrf.mxu0
  %v4166 = vadd.f32 %v4092, %v4165
  %v4167 = vpop.f32.mrf.mxu0
  %v4168 = vadd.f32 %v4094, %v4167
  %4169 = vmatmul.bf16.gmra.mxu0 %v72
  %v4170 = vpop.f32.mrf.mxu0
  %v4171 = vadd.f32 %v4097, %v4170
  %v4172 = vpop.f32.mrf.mxu0
  %v4173 = vadd.f32 %v4099, %v4172
  %4174 = vmatmul.bf16.gmra.mxu0 %v74
  %v4175 = vpop.f32.mrf.mxu0
  %v4176 = vadd.f32 %v4102, %v4175
  %v4177 = vpop.f32.mrf.mxu0
  %v4178 = vadd.f32 %v4104, %v4177
  %4179 = vmatmul.bf16.gmra.mxu0 %v76
  %v4180 = vpop.f32.mrf.mxu0
  %v4181 = vadd.f32 %v4107, %v4180
  %v4182 = vpop.f32.mrf.mxu0
  %v4183 = vadd.f32 %v4109, %v4182
  %4184 = vmatmul.bf16.gmra.mxu0 %v78
  %v4185 = vpop.f32.mrf.mxu0
  %v4186 = vadd.f32 %v4112, %v4185
  %v4187 = vpop.f32.mrf.mxu0
  %v4188 = vadd.f32 %v4114, %v4187
  %4189 = vmatmul.bf16.gmra.mxu0 %v80
  %v4190 = vpop.f32.mrf.mxu0
  %v4191 = vadd.f32 %v4117, %v4190
  %v4192 = vpop.f32.mrf.mxu0
  %v4193 = vadd.f32 %v4119, %v4192
  %4194 = vdwg.mxu0
  %4195 = vmatpush.bf16.msra.mxu0 %v2271
  %4196 = vmatpush.bf16.msra.mxu0 %v2263
  %4197 = vmatpush.bf16.msra.mxu0 %v2255
  %4198 = vmatpush.bf16.msra.mxu0 %v2247
  %4199 = vmatpush.bf16.msra.mxu0 %v2239
  %4200 = vmatpush.bf16.msra.mxu0 %v2231
  %4201 = vmatpush.bf16.msra.mxu0 %v2223
  %4202 = vmatpush.bf16.msra.mxu0 %v2215
  %4203 = vmatmul.bf16.gmra.mxu0 %v57
  %v4204 = vpop.f32.mrf.mxu0
  %v4205 = vadd.f32 %v4131, %v4204
  %v4206 = vpop.f32.mrf.mxu0
  %v4207 = vadd.f32 %v4133, %v4206
  %4208 = vmatmul.bf16.gmra.mxu0 %v59
  %v4209 = vpop.f32.mrf.mxu0
  %v4210 = vadd.f32 %v4136, %v4209
  %v4211 = vpop.f32.mrf.mxu0
  %v4212 = vadd.f32 %v4138, %v4211
  %4213 = vmatmul.bf16.gmra.mxu0 %v61
  %v4214 = vpop.f32.mrf.mxu0
  %v4215 = vadd.f32 %v4141, %v4214
  %v4216 = vpop.f32.mrf.mxu0
  %v4217 = vadd.f32 %v4143, %v4216
  %4218 = vmatmul.bf16.gmra.mxu0 %v63
  %v4219 = vpop.f32.mrf.mxu0
  %v4220 = vadd.f32 %v4146, %v4219
  %v4221 = vpop.f32.mrf.mxu0
  %v4222 = vadd.f32 %v4148, %v4221
  %4223 = vmatmul.bf16.gmra.mxu0 %v65
  %v4224 = vpop.f32.mrf.mxu0
  %v4225 = vadd.f32 %v4151, %v4224
  %v4226 = vpop.f32.mrf.mxu0
  %v4227 = vadd.f32 %v4153, %v4226
  %4228 = vmatmul.bf16.gmra.mxu0 %v67
  %v4229 = vpop.f32.mrf.mxu0
  %v4230 = vadd.f32 %v4156, %v4229
  %v4231 = vpop.f32.mrf.mxu0
  %v4232 = vadd.f32 %v4158, %v4231
  %4233 = vmatmul.bf16.gmra.mxu0 %v69
  %v4234 = vpop.f32.mrf.mxu0
  %v4235 = vadd.f32 %v4161, %v4234
  %v4236 = vpop.f32.mrf.mxu0
  %v4237 = vadd.f32 %v4163, %v4236
  %4238 = vmatmul.bf16.gmra.mxu0 %v71
  %v4239 = vpop.f32.mrf.mxu0
  %v4240 = vadd.f32 %v4166, %v4239
  %v4241 = vpop.f32.mrf.mxu0
  %v4242 = vadd.f32 %v4168, %v4241
  %4243 = vmatmul.bf16.gmra.mxu0 %v73
  %v4244 = vpop.f32.mrf.mxu0
  %v4245 = vadd.f32 %v4171, %v4244
  %v4246 = vpop.f32.mrf.mxu0
  %v4247 = vadd.f32 %v4173, %v4246
  %4248 = vmatmul.bf16.gmra.mxu0 %v75
  %v4249 = vpop.f32.mrf.mxu0
  %v4250 = vadd.f32 %v4176, %v4249
  %v4251 = vpop.f32.mrf.mxu0
  %v4252 = vadd.f32 %v4178, %v4251
  %4253 = vmatmul.bf16.gmra.mxu0 %v77
  %v4254 = vpop.f32.mrf.mxu0
  %v4255 = vadd.f32 %v4181, %v4254
  %v4256 = vpop.f32.mrf.mxu0
  %v4257 = vadd.f32 %v4183, %v4256
  %4258 = vmatmul.bf16.gmra.mxu0 %v79
  %v4259 = vpop.f32.mrf.mxu0
  %v4260 = vadd.f32 %v4186, %v4259
  %v4261 = vpop.f32.mrf.mxu0
  %v4262 = vadd.f32 %v4188, %v4261
  %4263 = vmatmul.bf16.gmra.mxu0 %v81
  %v4264 = vpop.f32.mrf.mxu0
  %v4265 = vadd.f32 %v4191, %v4264
  %v4266 = vpop.f32.mrf.mxu0
  %v4267 = vadd.f32 %v4193, %v4266
  %4268 = vdwg.mxu0
  %4269 = vmatpush.bf16.msra.mxu0 %v2335
  %4270 = vmatpush.bf16.msra.mxu0 %v2327
  %4271 = vmatpush.bf16.msra.mxu0 %v2319
  %4272 = vmatpush.bf16.msra.mxu0 %v2311
  %4273 = vmatpush.bf16.msra.mxu0 %v2303
  %4274 = vmatpush.bf16.msra.mxu0 %v2295
  %4275 = vmatpush.bf16.msra.mxu0 %v2287
  %4276 = vmatpush.bf16.msra.mxu0 %v2279
  %4277 = vmatmul.bf16.gmra.mxu0 %v58
  %v4278 = vpop.f32.mrf.mxu0
  %v4279 = vadd.f32 %v4205, %v4278
  %v4280 = vpop.f32.mrf.mxu0
  %v4281 = vadd.f32 %v4207, %v4280
  %4282 = vmatmul.bf16.gmra.mxu0 %v60
  %v4283 = vpop.f32.mrf.mxu0
  %v4284 = vadd.f32 %v4210, %v4283
  %v4285 = vpop.f32.mrf.mxu0
  %v4286 = vadd.f32 %v4212, %v4285
  %4287 = vmatmul.bf16.gmra.mxu0 %v62
  %v4288 = vpop.f32.mrf.mxu0
  %v4289 = vadd.f32 %v4215, %v4288
  %v4290 = vpop.f32.mrf.mxu0
  %v4291 = vadd.f32 %v4217, %v4290
  %4292 = vmatmul.bf16.gmra.mxu0 %v64
  %v4293 = vpop.f32.mrf.mxu0
  %v4294 = vadd.f32 %v4220, %v4293
  %v4295 = vpop.f32.mrf.mxu0
  %v4296 = vadd.f32 %v4222, %v4295
  %4297 = vmatmul.bf16.gmra.mxu0 %v66
  %v4298 = vpop.f32.mrf.mxu0
  %v4299 = vadd.f32 %v4225, %v4298
  %v4300 = vpop.f32.mrf.mxu0
  %v4301 = vadd.f32 %v4227, %v4300
  %4302 = vmatmul.bf16.gmra.mxu0 %v68
  %v4303 = vpop.f32.mrf.mxu0
  %v4304 = vadd.f32 %v4230, %v4303
  %v4305 = vpop.f32.mrf.mxu0
  %v4306 = vadd.f32 %v4232, %v4305
  %4307 = vmatmul.bf16.gmra.mxu0 %v70
  %v4308 = vpop.f32.mrf.mxu0
  %v4309 = vadd.f32 %v4235, %v4308
  %v4310 = vpop.f32.mrf.mxu0
  %v4311 = vadd.f32 %v4237, %v4310
  %4312 = vmatmul.bf16.gmra.mxu0 %v72
  %v4313 = vpop.f32.mrf.mxu0
  %v4314 = vadd.f32 %v4240, %v4313
  %v4315 = vpop.f32.mrf.mxu0
  %v4316 = vadd.f32 %v4242, %v4315
  %4317 = vmatmul.bf16.gmra.mxu0 %v74
  %v4318 = vpop.f32.mrf.mxu0
  %v4319 = vadd.f32 %v4245, %v4318
  %v4320 = vpop.f32.mrf.mxu0
  %v4321 = vadd.f32 %v4247, %v4320
  %4322 = vmatmul.bf16.gmra.mxu0 %v76
  %v4323 = vpop.f32.mrf.mxu0
  %v4324 = vadd.f32 %v4250, %v4323
  %v4325 = vpop.f32.mrf.mxu0
  %v4326 = vadd.f32 %v4252, %v4325
  %4327 = vmatmul.bf16.gmra.mxu0 %v78
  %v4328 = vpop.f32.mrf.mxu0
  %v4329 = vadd.f32 %v4255, %v4328
  %v4330 = vpop.f32.mrf.mxu0
  %v4331 = vadd.f32 %v4257, %v4330
  %4332 = vmatmul.bf16.gmra.mxu0 %v80
  %v4333 = vpop.f32.mrf.mxu0
  %v4334 = vadd.f32 %v4260, %v4333
  %v4335 = vpop.f32.mrf.mxu0
  %v4336 = vadd.f32 %v4262, %v4335
  %4337 = vmatmul.bf16.gmra.mxu0 %v82
  %v4338 = vpop.f32.mrf.mxu0
  %v4339 = vadd.f32 %v4265, %v4338
  %v4340 = vpop.f32.mrf.mxu0
  %v4341 = vadd.f32 %v4267, %v4340
  %4342 = vdwg.mxu0
  %4343 = vmatpush.bf16.msra.mxu0 %v1952
  %4344 = vmatpush.bf16.msra.mxu0 %v1944
  %4345 = vmatpush.bf16.msra.mxu0 %v1936
  %4346 = vmatpush.bf16.msra.mxu0 %v1928
  %4347 = vmatpush.bf16.msra.mxu0 %v1920
  %4348 = vmatpush.bf16.msra.mxu0 %v1912
  %4349 = vmatpush.bf16.msra.mxu0 %v1904
  %4350 = vmatpush.bf16.msra.mxu0 %v1896
  %4351 = vmatmul.bf16.gmra.mxu0 %v52
  %v4352 = vpop.f32.mrf.mxu0
  %v4353 = vadd.f32 %v536, %v4352
  %v4354 = vpop.f32.mrf.mxu0
  %v4355 = vadd.f32 %v536, %v4354
  %4356 = vmatmul.bf16.gmra.mxu0 %v54
  %v4357 = vpop.f32.mrf.mxu0
  %v4358 = vadd.f32 %v536, %v4357
  %v4359 = vpop.f32.mrf.mxu0
  %v4360 = vadd.f32 %v536, %v4359
  %4361 = vmatmul.bf16.gmra.mxu0 %v56
  %v4362 = vpop.f32.mrf.mxu0
  %v4363 = vadd.f32 %v536, %v4362
  %v4364 = vpop.f32.mrf.mxu0
  %v4365 = vadd.f32 %v536, %v4364
  %4366 = vmatmul.bf16.gmra.mxu0 %v58
  %v4367 = vpop.f32.mrf.mxu0
  %v4368 = vadd.f32 %v536, %v4367
  %v4369 = vpop.f32.mrf.mxu0
  %v4370 = vadd.f32 %v536, %v4369
  %4371 = vmatmul.bf16.gmra.mxu0 %v60
  %v4372 = vpop.f32.mrf.mxu0
  %v4373 = vadd.f32 %v536, %v4372
  %v4374 = vpop.f32.mrf.mxu0
  %v4375 = vadd.f32 %v536, %v4374
  %4376 = vmatmul.bf16.gmra.mxu0 %v62
  %v4377 = vpop.f32.mrf.mxu0
  %v4378 = vadd.f32 %v536, %v4377
  %v4379 = vpop.f32.mrf.mxu0
  %v4380 = vadd.f32 %v536, %v4379
  %4381 = vmatmul.bf16.gmra.mxu0 %v64
  %v4382 = vpop.f32.mrf.mxu0
  %v4383 = vadd.f32 %v536, %v4382
  %v4384 = vpop.f32.mrf.mxu0
  %v4385 = vadd.f32 %v536, %v4384
  %4386 = vmatmul.bf16.gmra.mxu0 %v66
  %v4387 = vpop.f32.mrf.mxu0
  %v4388 = vadd.f32 %v536, %v4387
  %v4389 = vpop.f32.mrf.mxu0
  %v4390 = vadd.f32 %v536, %v4389
  %4391 = vmatmul.bf16.gmra.mxu0 %v68
  %v4392 = vpop.f32.mrf.mxu0
  %v4393 = vadd.f32 %v536, %v4392
  %v4394 = vpop.f32.mrf.mxu0
  %v4395 = vadd.f32 %v536, %v4394
  %4396 = vmatmul.bf16.gmra.mxu0 %v70
  %v4397 = vpop.f32.mrf.mxu0
  %v4398 = vadd.f32 %v536, %v4397
  %v4399 = vpop.f32.mrf.mxu0
  %v4400 = vadd.f32 %v536, %v4399
  %4401 = vmatmul.bf16.gmra.mxu0 %v72
  %v4402 = vpop.f32.mrf.mxu0
  %v4403 = vadd.f32 %v536, %v4402
  %v4404 = vpop.f32.mrf.mxu0
  %v4405 = vadd.f32 %v536, %v4404
  %4406 = vmatmul.bf16.gmra.mxu0 %v74
  %v4407 = vpop.f32.mrf.mxu0
  %v4408 = vadd.f32 %v536, %v4407
  %v4409 = vpop.f32.mrf.mxu0
  %v4410 = vadd.f32 %v536, %v4409
  %4411 = vmatmul.bf16.gmra.mxu0 %v76
  %v4412 = vpop.f32.mrf.mxu0
  %v4413 = vadd.f32 %v536, %v4412
  %v4414 = vpop.f32.mrf.mxu0
  %v4415 = vadd.f32 %v536, %v4414
  %4416 = vdwg.mxu0
  %4417 = vmatpush.bf16.msra.mxu0 %v2016
  %4418 = vmatpush.bf16.msra.mxu0 %v2008
  %4419 = vmatpush.bf16.msra.mxu0 %v2000
  %4420 = vmatpush.bf16.msra.mxu0 %v1992
  %4421 = vmatpush.bf16.msra.mxu0 %v1984
  %4422 = vmatpush.bf16.msra.mxu0 %v1976
  %4423 = vmatpush.bf16.msra.mxu0 %v1968
  %4424 = vmatpush.bf16.msra.mxu0 %v1960
  %4425 = vmatmul.bf16.gmra.mxu0 %v53
  %v4426 = vpop.f32.mrf.mxu0
  %v4427 = vadd.f32 %v4353, %v4426
  %v4428 = vpop.f32.mrf.mxu0
  %v4429 = vadd.f32 %v4355, %v4428
  %4430 = vmatmul.bf16.gmra.mxu0 %v55
  %v4431 = vpop.f32.mrf.mxu0
  %v4432 = vadd.f32 %v4358, %v4431
  %v4433 = vpop.f32.mrf.mxu0
  %v4434 = vadd.f32 %v4360, %v4433
  %4435 = vmatmul.bf16.gmra.mxu0 %v57
  %v4436 = vpop.f32.mrf.mxu0
  %v4437 = vadd.f32 %v4363, %v4436
  %v4438 = vpop.f32.mrf.mxu0
  %v4439 = vadd.f32 %v4365, %v4438
  %4440 = vmatmul.bf16.gmra.mxu0 %v59
  %v4441 = vpop.f32.mrf.mxu0
  %v4442 = vadd.f32 %v4368, %v4441
  %v4443 = vpop.f32.mrf.mxu0
  %v4444 = vadd.f32 %v4370, %v4443
  %4445 = vmatmul.bf16.gmra.mxu0 %v61
  %v4446 = vpop.f32.mrf.mxu0
  %v4447 = vadd.f32 %v4373, %v4446
  %v4448 = vpop.f32.mrf.mxu0
  %v4449 = vadd.f32 %v4375, %v4448
  %4450 = vmatmul.bf16.gmra.mxu0 %v63
  %v4451 = vpop.f32.mrf.mxu0
  %v4452 = vadd.f32 %v4378, %v4451
  %v4453 = vpop.f32.mrf.mxu0
  %v4454 = vadd.f32 %v4380, %v4453
  %4455 = vmatmul.bf16.gmra.mxu0 %v65
  %v4456 = vpop.f32.mrf.mxu0
  %v4457 = vadd.f32 %v4383, %v4456
  %v4458 = vpop.f32.mrf.mxu0
  %v4459 = vadd.f32 %v4385, %v4458
  %4460 = vmatmul.bf16.gmra.mxu0 %v67
  %v4461 = vpop.f32.mrf.mxu0
  %v4462 = vadd.f32 %v4388, %v4461
  %v4463 = vpop.f32.mrf.mxu0
  %v4464 = vadd.f32 %v4390, %v4463
  %4465 = vmatmul.bf16.gmra.mxu0 %v69
  %v4466 = vpop.f32.mrf.mxu0
  %v4467 = vadd.f32 %v4393, %v4466
  %v4468 = vpop.f32.mrf.mxu0
  %v4469 = vadd.f32 %v4395, %v4468
  %4470 = vmatmul.bf16.gmra.mxu0 %v71
  %v4471 = vpop.f32.mrf.mxu0
  %v4472 = vadd.f32 %v4398, %v4471
  %v4473 = vpop.f32.mrf.mxu0
  %v4474 = vadd.f32 %v4400, %v4473
  %4475 = vmatmul.bf16.gmra.mxu0 %v73
  %v4476 = vpop.f32.mrf.mxu0
  %v4477 = vadd.f32 %v4403, %v4476
  %v4478 = vpop.f32.mrf.mxu0
  %v4479 = vadd.f32 %v4405, %v4478
  %4480 = vmatmul.bf16.gmra.mxu0 %v75
  %v4481 = vpop.f32.mrf.mxu0
  %v4482 = vadd.f32 %v4408, %v4481
  %v4483 = vpop.f32.mrf.mxu0
  %v4484 = vadd.f32 %v4410, %v4483
  %4485 = vmatmul.bf16.gmra.mxu0 %v77
  %v4486 = vpop.f32.mrf.mxu0
  %v4487 = vadd.f32 %v4413, %v4486
  %v4488 = vpop.f32.mrf.mxu0
  %v4489 = vadd.f32 %v4415, %v4488
  %4490 = vdwg.mxu0
  %4491 = vmatpush.bf16.msra.mxu0 %v2080
  %4492 = vmatpush.bf16.msra.mxu0 %v2072
  %4493 = vmatpush.bf16.msra.mxu0 %v2064
  %4494 = vmatpush.bf16.msra.mxu0 %v2056
  %4495 = vmatpush.bf16.msra.mxu0 %v2048
  %4496 = vmatpush.bf16.msra.mxu0 %v2040
  %4497 = vmatpush.bf16.msra.mxu0 %v2032
  %4498 = vmatpush.bf16.msra.mxu0 %v2024
  %4499 = vmatmul.bf16.gmra.mxu0 %v54
  %v4500 = vpop.f32.mrf.mxu0
  %v4501 = vadd.f32 %v4427, %v4500
  %v4502 = vpop.f32.mrf.mxu0
  %v4503 = vadd.f32 %v4429, %v4502
  %4504 = vmatmul.bf16.gmra.mxu0 %v56
  %v4505 = vpop.f32.mrf.mxu0
  %v4506 = vadd.f32 %v4432, %v4505
  %v4507 = vpop.f32.mrf.mxu0
  %v4508 = vadd.f32 %v4434, %v4507
  %4509 = vmatmul.bf16.gmra.mxu0 %v58
  %v4510 = vpop.f32.mrf.mxu0
  %v4511 = vadd.f32 %v4437, %v4510
  %v4512 = vpop.f32.mrf.mxu0
  %v4513 = vadd.f32 %v4439, %v4512
  %4514 = vmatmul.bf16.gmra.mxu0 %v60
  %v4515 = vpop.f32.mrf.mxu0
  %v4516 = vadd.f32 %v4442, %v4515
  %v4517 = vpop.f32.mrf.mxu0
  %v4518 = vadd.f32 %v4444, %v4517
  %4519 = vmatmul.bf16.gmra.mxu0 %v62
  %v4520 = vpop.f32.mrf.mxu0
  %v4521 = vadd.f32 %v4447, %v4520
  %v4522 = vpop.f32.mrf.mxu0
  %v4523 = vadd.f32 %v4449, %v4522
  %4524 = vmatmul.bf16.gmra.mxu0 %v64
  %v4525 = vpop.f32.mrf.mxu0
  %v4526 = vadd.f32 %v4452, %v4525
  %v4527 = vpop.f32.mrf.mxu0
  %v4528 = vadd.f32 %v4454, %v4527
  %4529 = vmatmul.bf16.gmra.mxu0 %v66
  %v4530 = vpop.f32.mrf.mxu0
  %v4531 = vadd.f32 %v4457, %v4530
  %v4532 = vpop.f32.mrf.mxu0
  %v4533 = vadd.f32 %v4459, %v4532
  %4534 = vmatmul.bf16.gmra.mxu0 %v68
  %v4535 = vpop.f32.mrf.mxu0
  %v4536 = vadd.f32 %v4462, %v4535
  %v4537 = vpop.f32.mrf.mxu0
  %v4538 = vadd.f32 %v4464, %v4537
  %4539 = vmatmul.bf16.gmra.mxu0 %v70
  %v4540 = vpop.f32.mrf.mxu0
  %v4541 = vadd.f32 %v4467, %v4540
  %v4542 = vpop.f32.mrf.mxu0
  %v4543 = vadd.f32 %v4469, %v4542
  %4544 = vmatmul.bf16.gmra.mxu0 %v72
  %v4545 = vpop.f32.mrf.mxu0
  %v4546 = vadd.f32 %v4472, %v4545
  %v4547 = vpop.f32.mrf.mxu0
  %v4548 = vadd.f32 %v4474, %v4547
  %4549 = vmatmul.bf16.gmra.mxu0 %v74
  %v4550 = vpop.f32.mrf.mxu0
  %v4551 = vadd.f32 %v4477, %v4550
  %v4552 = vpop.f32.mrf.mxu0
  %v4553 = vadd.f32 %v4479, %v4552
  %4554 = vmatmul.bf16.gmra.mxu0 %v76
  %v4555 = vpop.f32.mrf.mxu0
  %v4556 = vadd.f32 %v4482, %v4555
  %v4557 = vpop.f32.mrf.mxu0
  %v4558 = vadd.f32 %v4484, %v4557
  %4559 = vmatmul.bf16.gmra.mxu0 %v78
  %v4560 = vpop.f32.mrf.mxu0
  %v4561 = vadd.f32 %v4487, %v4560
  %v4562 = vpop.f32.mrf.mxu0
  %v4563 = vadd.f32 %v4489, %v4562
  %4564 = vdwg.mxu0
  %4565 = vmatpush.bf16.msra.mxu0 %v2144
  %4566 = vmatpush.bf16.msra.mxu0 %v2136
  %4567 = vmatpush.bf16.msra.mxu0 %v2128
  %4568 = vmatpush.bf16.msra.mxu0 %v2120
  %4569 = vmatpush.bf16.msra.mxu0 %v2112
  %4570 = vmatpush.bf16.msra.mxu0 %v2104
  %4571 = vmatpush.bf16.msra.mxu0 %v2096
  %4572 = vmatpush.bf16.msra.mxu0 %v2088
  %4573 = vmatmul.bf16.gmra.mxu0 %v55
  %v4574 = vpop.f32.mrf.mxu0
  %v4575 = vadd.f32 %v4501, %v4574
  %v4576 = vpop.f32.mrf.mxu0
  %v4577 = vadd.f32 %v4503, %v4576
  %4578 = vmatmul.bf16.gmra.mxu0 %v57
  %v4579 = vpop.f32.mrf.mxu0
  %v4580 = vadd.f32 %v4506, %v4579
  %v4581 = vpop.f32.mrf.mxu0
  %v4582 = vadd.f32 %v4508, %v4581
  %4583 = vmatmul.bf16.gmra.mxu0 %v59
  %v4584 = vpop.f32.mrf.mxu0
  %v4585 = vadd.f32 %v4511, %v4584
  %v4586 = vpop.f32.mrf.mxu0
  %v4587 = vadd.f32 %v4513, %v4586
  %4588 = vmatmul.bf16.gmra.mxu0 %v61
  %v4589 = vpop.f32.mrf.mxu0
  %v4590 = vadd.f32 %v4516, %v4589
  %v4591 = vpop.f32.mrf.mxu0
  %v4592 = vadd.f32 %v4518, %v4591
  %4593 = vmatmul.bf16.gmra.mxu0 %v63
  %v4594 = vpop.f32.mrf.mxu0
  %v4595 = vadd.f32 %v4521, %v4594
  %v4596 = vpop.f32.mrf.mxu0
  %v4597 = vadd.f32 %v4523, %v4596
  %4598 = vmatmul.bf16.gmra.mxu0 %v65
  %v4599 = vpop.f32.mrf.mxu0
  %v4600 = vadd.f32 %v4526, %v4599
  %v4601 = vpop.f32.mrf.mxu0
  %v4602 = vadd.f32 %v4528, %v4601
  %4603 = vmatmul.bf16.gmra.mxu0 %v67
  %v4604 = vpop.f32.mrf.mxu0
  %v4605 = vadd.f32 %v4531, %v4604
  %v4606 = vpop.f32.mrf.mxu0
  %v4607 = vadd.f32 %v4533, %v4606
  %4608 = vmatmul.bf16.gmra.mxu0 %v69
  %v4609 = vpop.f32.mrf.mxu0
  %v4610 = vadd.f32 %v4536, %v4609
  %v4611 = vpop.f32.mrf.mxu0
  %v4612 = vadd.f32 %v4538, %v4611
  %4613 = vmatmul.bf16.gmra.mxu0 %v71
  %v4614 = vpop.f32.mrf.mxu0
  %v4615 = vadd.f32 %v4541, %v4614
  %v4616 = vpop.f32.mrf.mxu0
  %v4617 = vadd.f32 %v4543, %v4616
  %4618 = vmatmul.bf16.gmra.mxu0 %v73
  %v4619 = vpop.f32.mrf.mxu0
  %v4620 = vadd.f32 %v4546, %v4619
  %v4621 = vpop.f32.mrf.mxu0
  %v4622 = vadd.f32 %v4548, %v4621
  %4623 = vmatmul.bf16.gmra.mxu0 %v75
  %v4624 = vpop.f32.mrf.mxu0
  %v4625 = vadd.f32 %v4551, %v4624
  %v4626 = vpop.f32.mrf.mxu0
  %v4627 = vadd.f32 %v4553, %v4626
  %4628 = vmatmul.bf16.gmra.mxu0 %v77
  %v4629 = vpop.f32.mrf.mxu0
  %v4630 = vadd.f32 %v4556, %v4629
  %v4631 = vpop.f32.mrf.mxu0
  %v4632 = vadd.f32 %v4558, %v4631
  %4633 = vmatmul.bf16.gmra.mxu0 %v79
  %v4634 = vpop.f32.mrf.mxu0
  %v4635 = vadd.f32 %v4561, %v4634
  %v4636 = vpop.f32.mrf.mxu0
  %v4637 = vadd.f32 %v4563, %v4636
  %4638 = vdwg.mxu0
  %4639 = vmatpush.bf16.msra.mxu0 %v2208
  %4640 = vmatpush.bf16.msra.mxu0 %v2200
  %4641 = vmatpush.bf16.msra.mxu0 %v2192
  %4642 = vmatpush.bf16.msra.mxu0 %v2184
  %4643 = vmatpush.bf16.msra.mxu0 %v2176
  %4644 = vmatpush.bf16.msra.mxu0 %v2168
  %4645 = vmatpush.bf16.msra.mxu0 %v2160
  %4646 = vmatpush.bf16.msra.mxu0 %v2152
  %4647 = vmatmul.bf16.gmra.mxu0 %v56
  %v4648 = vpop.f32.mrf.mxu0
  %v4649 = vadd.f32 %v4575, %v4648
  %v4650 = vpop.f32.mrf.mxu0
  %v4651 = vadd.f32 %v4577, %v4650
  %4652 = vmatmul.bf16.gmra.mxu0 %v58
  %v4653 = vpop.f32.mrf.mxu0
  %v4654 = vadd.f32 %v4580, %v4653
  %v4655 = vpop.f32.mrf.mxu0
  %v4656 = vadd.f32 %v4582, %v4655
  %4657 = vmatmul.bf16.gmra.mxu0 %v60
  %v4658 = vpop.f32.mrf.mxu0
  %v4659 = vadd.f32 %v4585, %v4658
  %v4660 = vpop.f32.mrf.mxu0
  %v4661 = vadd.f32 %v4587, %v4660
  %4662 = vmatmul.bf16.gmra.mxu0 %v62
  %v4663 = vpop.f32.mrf.mxu0
  %v4664 = vadd.f32 %v4590, %v4663
  %v4665 = vpop.f32.mrf.mxu0
  %v4666 = vadd.f32 %v4592, %v4665
  %4667 = vmatmul.bf16.gmra.mxu0 %v64
  %v4668 = vpop.f32.mrf.mxu0
  %v4669 = vadd.f32 %v4595, %v4668
  %v4670 = vpop.f32.mrf.mxu0
  %v4671 = vadd.f32 %v4597, %v4670
  %4672 = vmatmul.bf16.gmra.mxu0 %v66
  %v4673 = vpop.f32.mrf.mxu0
  %v4674 = vadd.f32 %v4600, %v4673
  %v4675 = vpop.f32.mrf.mxu0
  %v4676 = vadd.f32 %v4602, %v4675
  %4677 = vmatmul.bf16.gmra.mxu0 %v68
  %v4678 = vpop.f32.mrf.mxu0
  %v4679 = vadd.f32 %v4605, %v4678
  %v4680 = vpop.f32.mrf.mxu0
  %v4681 = vadd.f32 %v4607, %v4680
  %4682 = vmatmul.bf16.gmra.mxu0 %v70
  %v4683 = vpop.f32.mrf.mxu0
  %v4684 = vadd.f32 %v4610, %v4683
  %v4685 = vpop.f32.mrf.mxu0
  %v4686 = vadd.f32 %v4612, %v4685
  %4687 = vmatmul.bf16.gmra.mxu0 %v72
  %v4688 = vpop.f32.mrf.mxu0
  %v4689 = vadd.f32 %v4615, %v4688
  %v4690 = vpop.f32.mrf.mxu0
  %v4691 = vadd.f32 %v4617, %v4690
  %4692 = vmatmul.bf16.gmra.mxu0 %v74
  %v4693 = vpop.f32.mrf.mxu0
  %v4694 = vadd.f32 %v4620, %v4693
  %v4695 = vpop.f32.mrf.mxu0
  %v4696 = vadd.f32 %v4622, %v4695
  %4697 = vmatmul.bf16.gmra.mxu0 %v76
  %v4698 = vpop.f32.mrf.mxu0
  %v4699 = vadd.f32 %v4625, %v4698
  %v4700 = vpop.f32.mrf.mxu0
  %v4701 = vadd.f32 %v4627, %v4700
  %4702 = vmatmul.bf16.gmra.mxu0 %v78
  %v4703 = vpop.f32.mrf.mxu0
  %v4704 = vadd.f32 %v4630, %v4703
  %v4705 = vpop.f32.mrf.mxu0
  %v4706 = vadd.f32 %v4632, %v4705
  %4707 = vmatmul.bf16.gmra.mxu0 %v80
  %v4708 = vpop.f32.mrf.mxu0
  %v4709 = vadd.f32 %v4635, %v4708
  %v4710 = vpop.f32.mrf.mxu0
  %v4711 = vadd.f32 %v4637, %v4710
  %4712 = vdwg.mxu0
  %4713 = vmatpush.bf16.msra.mxu0 %v2272
  %4714 = vmatpush.bf16.msra.mxu0 %v2264
  %4715 = vmatpush.bf16.msra.mxu0 %v2256
  %4716 = vmatpush.bf16.msra.mxu0 %v2248
  %4717 = vmatpush.bf16.msra.mxu0 %v2240
  %4718 = vmatpush.bf16.msra.mxu0 %v2232
  %4719 = vmatpush.bf16.msra.mxu0 %v2224
  %4720 = vmatpush.bf16.msra.mxu0 %v2216
  %4721 = vmatmul.bf16.gmra.mxu0 %v57
  %v4722 = vpop.f32.mrf.mxu0
  %v4723 = vadd.f32 %v4649, %v4722
  %v4724 = vpop.f32.mrf.mxu0
  %v4725 = vadd.f32 %v4651, %v4724
  %4726 = vmatmul.bf16.gmra.mxu0 %v59
  %v4727 = vpop.f32.mrf.mxu0
  %v4728 = vadd.f32 %v4654, %v4727
  %v4729 = vpop.f32.mrf.mxu0
  %v4730 = vadd.f32 %v4656, %v4729
  %4731 = vmatmul.bf16.gmra.mxu0 %v61
  %v4732 = vpop.f32.mrf.mxu0
  %v4733 = vadd.f32 %v4659, %v4732
  %v4734 = vpop.f32.mrf.mxu0
  %v4735 = vadd.f32 %v4661, %v4734
  %4736 = vmatmul.bf16.gmra.mxu0 %v63
  %v4737 = vpop.f32.mrf.mxu0
  %v4738 = vadd.f32 %v4664, %v4737
  %v4739 = vpop.f32.mrf.mxu0
  %v4740 = vadd.f32 %v4666, %v4739
  %4741 = vmatmul.bf16.gmra.mxu0 %v65
  %v4742 = vpop.f32.mrf.mxu0
  %v4743 = vadd.f32 %v4669, %v4742
  %v4744 = vpop.f32.mrf.mxu0
  %v4745 = vadd.f32 %v4671, %v4744
  %4746 = vmatmul.bf16.gmra.mxu0 %v67
  %v4747 = vpop.f32.mrf.mxu0
  %v4748 = vadd.f32 %v4674, %v4747
  %v4749 = vpop.f32.mrf.mxu0
  %v4750 = vadd.f32 %v4676, %v4749
  %4751 = vmatmul.bf16.gmra.mxu0 %v69
  %v4752 = vpop.f32.mrf.mxu0
  %v4753 = vadd.f32 %v4679, %v4752
  %v4754 = vpop.f32.mrf.mxu0
  %v4755 = vadd.f32 %v4681, %v4754
  %4756 = vmatmul.bf16.gmra.mxu0 %v71
  %v4757 = vpop.f32.mrf.mxu0
  %v4758 = vadd.f32 %v4684, %v4757
  %v4759 = vpop.f32.mrf.mxu0
  %v4760 = vadd.f32 %v4686, %v4759
  %4761 = vmatmul.bf16.gmra.mxu0 %v73
  %v4762 = vpop.f32.mrf.mxu0
  %v4763 = vadd.f32 %v4689, %v4762
  %v4764 = vpop.f32.mrf.mxu0
  %v4765 = vadd.f32 %v4691, %v4764
  %4766 = vmatmul.bf16.gmra.mxu0 %v75
  %v4767 = vpop.f32.mrf.mxu0
  %v4768 = vadd.f32 %v4694, %v4767
  %v4769 = vpop.f32.mrf.mxu0
  %v4770 = vadd.f32 %v4696, %v4769
  %4771 = vmatmul.bf16.gmra.mxu0 %v77
  %v4772 = vpop.f32.mrf.mxu0
  %v4773 = vadd.f32 %v4699, %v4772
  %v4774 = vpop.f32.mrf.mxu0
  %v4775 = vadd.f32 %v4701, %v4774
  %4776 = vmatmul.bf16.gmra.mxu0 %v79
  %v4777 = vpop.f32.mrf.mxu0
  %v4778 = vadd.f32 %v4704, %v4777
  %v4779 = vpop.f32.mrf.mxu0
  %v4780 = vadd.f32 %v4706, %v4779
  %4781 = vmatmul.bf16.gmra.mxu0 %v81
  %v4782 = vpop.f32.mrf.mxu0
  %v4783 = vadd.f32 %v4709, %v4782
  %v4784 = vpop.f32.mrf.mxu0
  %v4785 = vadd.f32 %v4711, %v4784
  %4786 = vdwg.mxu0
  %4787 = vmatpush.bf16.msra.mxu0 %v2336
  %4788 = vmatpush.bf16.msra.mxu0 %v2328
  %4789 = vmatpush.bf16.msra.mxu0 %v2320
  %4790 = vmatpush.bf16.msra.mxu0 %v2312
  %4791 = vmatpush.bf16.msra.mxu0 %v2304
  %4792 = vmatpush.bf16.msra.mxu0 %v2296
  %4793 = vmatpush.bf16.msra.mxu0 %v2288
  %4794 = vmatpush.bf16.msra.mxu0 %v2280
  %4795 = vmatmul.bf16.gmra.mxu0 %v58
  %v4796 = vpop.f32.mrf.mxu0
  %v4797 = vadd.f32 %v4723, %v4796
  %v4798 = vpop.f32.mrf.mxu0
  %v4799 = vadd.f32 %v4725, %v4798
  %4800 = vmatmul.bf16.gmra.mxu0 %v60
  %v4801 = vpop.f32.mrf.mxu0
  %v4802 = vadd.f32 %v4728, %v4801
  %v4803 = vpop.f32.mrf.mxu0
  %v4804 = vadd.f32 %v4730, %v4803
  %4805 = vmatmul.bf16.gmra.mxu0 %v62
  %v4806 = vpop.f32.mrf.mxu0
  %v4807 = vadd.f32 %v4733, %v4806
  %v4808 = vpop.f32.mrf.mxu0
  %v4809 = vadd.f32 %v4735, %v4808
  %4810 = vmatmul.bf16.gmra.mxu0 %v64
  %v4811 = vpop.f32.mrf.mxu0
  %v4812 = vadd.f32 %v4738, %v4811
  %v4813 = vpop.f32.mrf.mxu0
  %v4814 = vadd.f32 %v4740, %v4813
  %4815 = vmatmul.bf16.gmra.mxu0 %v66
  %v4816 = vpop.f32.mrf.mxu0
  %v4817 = vadd.f32 %v4743, %v4816
  %v4818 = vpop.f32.mrf.mxu0
  %v4819 = vadd.f32 %v4745, %v4818
  %4820 = vmatmul.bf16.gmra.mxu0 %v68
  %v4821 = vpop.f32.mrf.mxu0
  %v4822 = vadd.f32 %v4748, %v4821
  %v4823 = vpop.f32.mrf.mxu0
  %v4824 = vadd.f32 %v4750, %v4823
  %4825 = vmatmul.bf16.gmra.mxu0 %v70
  %v4826 = vpop.f32.mrf.mxu0
  %v4827 = vadd.f32 %v4753, %v4826
  %v4828 = vpop.f32.mrf.mxu0
  %v4829 = vadd.f32 %v4755, %v4828
  %4830 = vmatmul.bf16.gmra.mxu0 %v72
  %v4831 = vpop.f32.mrf.mxu0
  %v4832 = vadd.f32 %v4758, %v4831
  %v4833 = vpop.f32.mrf.mxu0
  %v4834 = vadd.f32 %v4760, %v4833
  %4835 = vmatmul.bf16.gmra.mxu0 %v74
  %v4836 = vpop.f32.mrf.mxu0
  %v4837 = vadd.f32 %v4763, %v4836
  %v4838 = vpop.f32.mrf.mxu0
  %v4839 = vadd.f32 %v4765, %v4838
  %4840 = vmatmul.bf16.gmra.mxu0 %v76
  %v4841 = vpop.f32.mrf.mxu0
  %v4842 = vadd.f32 %v4768, %v4841
  %v4843 = vpop.f32.mrf.mxu0
  %v4844 = vadd.f32 %v4770, %v4843
  %4845 = vmatmul.bf16.gmra.mxu0 %v78
  %v4846 = vpop.f32.mrf.mxu0
  %v4847 = vadd.f32 %v4773, %v4846
  %v4848 = vpop.f32.mrf.mxu0
  %v4849 = vadd.f32 %v4775, %v4848
  %4850 = vmatmul.bf16.gmra.mxu0 %v80
  %v4851 = vpop.f32.mrf.mxu0
  %v4852 = vadd.f32 %v4778, %v4851
  %v4853 = vpop.f32.mrf.mxu0
  %v4854 = vadd.f32 %v4780, %v4853
  %4855 = vmatmul.bf16.gmra.mxu0 %v82
  %v4856 = vpop.f32.mrf.mxu0
  %v4857 = vadd.f32 %v4783, %v4856
  %v4858 = vpop.f32.mrf.mxu0
  %v4859 = vadd.f32 %v4785, %v4858
  %4860 = vdwg.mxu0
  %4861 = vmatpush.bf16.msra.mxu0 %v1953
  %4862 = vmatpush.bf16.msra.mxu0 %v1945
  %4863 = vmatpush.bf16.msra.mxu0 %v1937
  %4864 = vmatpush.bf16.msra.mxu0 %v1929
  %4865 = vmatpush.bf16.msra.mxu0 %v1921
  %4866 = vmatpush.bf16.msra.mxu0 %v1913
  %4867 = vmatpush.bf16.msra.mxu0 %v1905
  %4868 = vmatpush.bf16.msra.mxu0 %v1897
  %4869 = vmatmul.bf16.gmra.mxu0 %v52
  %v4870 = vpop.f32.mrf.mxu0
  %v4871 = vadd.f32 %v537, %v4870
  %v4872 = vpop.f32.mrf.mxu0
  %v4873 = vadd.f32 %v537, %v4872
  %4874 = vmatmul.bf16.gmra.mxu0 %v54
  %v4875 = vpop.f32.mrf.mxu0
  %v4876 = vadd.f32 %v537, %v4875
  %v4877 = vpop.f32.mrf.mxu0
  %v4878 = vadd.f32 %v537, %v4877
  %4879 = vmatmul.bf16.gmra.mxu0 %v56
  %v4880 = vpop.f32.mrf.mxu0
  %v4881 = vadd.f32 %v537, %v4880
  %v4882 = vpop.f32.mrf.mxu0
  %v4883 = vadd.f32 %v537, %v4882
  %4884 = vmatmul.bf16.gmra.mxu0 %v58
  %v4885 = vpop.f32.mrf.mxu0
  %v4886 = vadd.f32 %v537, %v4885
  %v4887 = vpop.f32.mrf.mxu0
  %v4888 = vadd.f32 %v537, %v4887
  %4889 = vmatmul.bf16.gmra.mxu0 %v60
  %v4890 = vpop.f32.mrf.mxu0
  %v4891 = vadd.f32 %v537, %v4890
  %v4892 = vpop.f32.mrf.mxu0
  %v4893 = vadd.f32 %v537, %v4892
  %4894 = vmatmul.bf16.gmra.mxu0 %v62
  %v4895 = vpop.f32.mrf.mxu0
  %v4896 = vadd.f32 %v537, %v4895
  %v4897 = vpop.f32.mrf.mxu0
  %v4898 = vadd.f32 %v537, %v4897
  %4899 = vmatmul.bf16.gmra.mxu0 %v64
  %v4900 = vpop.f32.mrf.mxu0
  %v4901 = vadd.f32 %v537, %v4900
  %v4902 = vpop.f32.mrf.mxu0
  %v4903 = vadd.f32 %v537, %v4902
  %4904 = vmatmul.bf16.gmra.mxu0 %v66
  %v4905 = vpop.f32.mrf.mxu0
  %v4906 = vadd.f32 %v537, %v4905
  %v4907 = vpop.f32.mrf.mxu0
  %v4908 = vadd.f32 %v537, %v4907
  %4909 = vmatmul.bf16.gmra.mxu0 %v68
  %v4910 = vpop.f32.mrf.mxu0
  %v4911 = vadd.f32 %v537, %v4910
  %v4912 = vpop.f32.mrf.mxu0
  %v4913 = vadd.f32 %v537, %v4912
  %4914 = vmatmul.bf16.gmra.mxu0 %v70
  %v4915 = vpop.f32.mrf.mxu0
  %v4916 = vadd.f32 %v537, %v4915
  %v4917 = vpop.f32.mrf.mxu0
  %v4918 = vadd.f32 %v537, %v4917
  %4919 = vmatmul.bf16.gmra.mxu0 %v72
  %v4920 = vpop.f32.mrf.mxu0
  %v4921 = vadd.f32 %v537, %v4920
  %v4922 = vpop.f32.mrf.mxu0
  %v4923 = vadd.f32 %v537, %v4922
  %4924 = vmatmul.bf16.gmra.mxu0 %v74
  %v4925 = vpop.f32.mrf.mxu0
  %v4926 = vadd.f32 %v537, %v4925
  %v4927 = vpop.f32.mrf.mxu0
  %v4928 = vadd.f32 %v537, %v4927
  %4929 = vmatmul.bf16.gmra.mxu0 %v76
  %v4930 = vpop.f32.mrf.mxu0
  %v4931 = vadd.f32 %v537, %v4930
  %v4932 = vpop.f32.mrf.mxu0
  %v4933 = vadd.f32 %v537, %v4932
  %4934 = vdwg.mxu0
  %4935 = vmatpush.bf16.msra.mxu0 %v2017
  %4936 = vmatpush.bf16.msra.mxu0 %v2009
  %4937 = vmatpush.bf16.msra.mxu0 %v2001
  %4938 = vmatpush.bf16.msra.mxu0 %v1993
  %4939 = vmatpush.bf16.msra.mxu0 %v1985
  %4940 = vmatpush.bf16.msra.mxu0 %v1977
  %4941 = vmatpush.bf16.msra.mxu0 %v1969
  %4942 = vmatpush.bf16.msra.mxu0 %v1961
  %4943 = vmatmul.bf16.gmra.mxu0 %v53
  %v4944 = vpop.f32.mrf.mxu0
  %v4945 = vadd.f32 %v4871, %v4944
  %v4946 = vpop.f32.mrf.mxu0
  %v4947 = vadd.f32 %v4873, %v4946
  %4948 = vmatmul.bf16.gmra.mxu0 %v55
  %v4949 = vpop.f32.mrf.mxu0
  %v4950 = vadd.f32 %v4876, %v4949
  %v4951 = vpop.f32.mrf.mxu0
  %v4952 = vadd.f32 %v4878, %v4951
  %4953 = vmatmul.bf16.gmra.mxu0 %v57
  %v4954 = vpop.f32.mrf.mxu0
  %v4955 = vadd.f32 %v4881, %v4954
  %v4956 = vpop.f32.mrf.mxu0
  %v4957 = vadd.f32 %v4883, %v4956
  %4958 = vmatmul.bf16.gmra.mxu0 %v59
  %v4959 = vpop.f32.mrf.mxu0
  %v4960 = vadd.f32 %v4886, %v4959
  %v4961 = vpop.f32.mrf.mxu0
  %v4962 = vadd.f32 %v4888, %v4961
  %4963 = vmatmul.bf16.gmra.mxu0 %v61
  %v4964 = vpop.f32.mrf.mxu0
  %v4965 = vadd.f32 %v4891, %v4964
  %v4966 = vpop.f32.mrf.mxu0
  %v4967 = vadd.f32 %v4893, %v4966
  %4968 = vmatmul.bf16.gmra.mxu0 %v63
  %v4969 = vpop.f32.mrf.mxu0
  %v4970 = vadd.f32 %v4896, %v4969
  %v4971 = vpop.f32.mrf.mxu0
  %v4972 = vadd.f32 %v4898, %v4971
  %4973 = vmatmul.bf16.gmra.mxu0 %v65
  %v4974 = vpop.f32.mrf.mxu0
  %v4975 = vadd.f32 %v4901, %v4974
  %v4976 = vpop.f32.mrf.mxu0
  %v4977 = vadd.f32 %v4903, %v4976
  %4978 = vmatmul.bf16.gmra.mxu0 %v67
  %v4979 = vpop.f32.mrf.mxu0
  %v4980 = vadd.f32 %v4906, %v4979
  %v4981 = vpop.f32.mrf.mxu0
  %v4982 = vadd.f32 %v4908, %v4981
  %4983 = vmatmul.bf16.gmra.mxu0 %v69
  %v4984 = vpop.f32.mrf.mxu0
  %v4985 = vadd.f32 %v4911, %v4984
  %v4986 = vpop.f32.mrf.mxu0
  %v4987 = vadd.f32 %v4913, %v4986
  %4988 = vmatmul.bf16.gmra.mxu0 %v71
  %v4989 = vpop.f32.mrf.mxu0
  %v4990 = vadd.f32 %v4916, %v4989
  %v4991 = vpop.f32.mrf.mxu0
  %v4992 = vadd.f32 %v4918, %v4991
  %4993 = vmatmul.bf16.gmra.mxu0 %v73
  %v4994 = vpop.f32.mrf.mxu0
  %v4995 = vadd.f32 %v4921, %v4994
  %v4996 = vpop.f32.mrf.mxu0
  %v4997 = vadd.f32 %v4923, %v4996
  %4998 = vmatmul.bf16.gmra.mxu0 %v75
  %v4999 = vpop.f32.mrf.mxu0
  %v5000 = vadd.f32 %v4926, %v4999
  %v5001 = vpop.f32.mrf.mxu0
  %v5002 = vadd.f32 %v4928, %v5001
  %5003 = vmatmul.bf16.gmra.mxu0 %v77
  %v5004 = vpop.f32.mrf.mxu0
  %v5005 = vadd.f32 %v4931, %v5004
  %v5006 = vpop.f32.mrf.mxu0
  %v5007 = vadd.f32 %v4933, %v5006
  %5008 = vdwg.mxu0
  %5009 = vmatpush.bf16.msra.mxu0 %v2081
  %5010 = vmatpush.bf16.msra.mxu0 %v2073
  %5011 = vmatpush.bf16.msra.mxu0 %v2065
  %5012 = vmatpush.bf16.msra.mxu0 %v2057
  %5013 = vmatpush.bf16.msra.mxu0 %v2049
  %5014 = vmatpush.bf16.msra.mxu0 %v2041
  %5015 = vmatpush.bf16.msra.mxu0 %v2033
  %5016 = vmatpush.bf16.msra.mxu0 %v2025
  %5017 = vmatmul.bf16.gmra.mxu0 %v54
  %v5018 = vpop.f32.mrf.mxu0
  %v5019 = vadd.f32 %v4945, %v5018
  %v5020 = vpop.f32.mrf.mxu0
  %v5021 = vadd.f32 %v4947, %v5020
  %5022 = vmatmul.bf16.gmra.mxu0 %v56
  %v5023 = vpop.f32.mrf.mxu0
  %v5024 = vadd.f32 %v4950, %v5023
  %v5025 = vpop.f32.mrf.mxu0
  %v5026 = vadd.f32 %v4952, %v5025
  %5027 = vmatmul.bf16.gmra.mxu0 %v58
  %v5028 = vpop.f32.mrf.mxu0
  %v5029 = vadd.f32 %v4955, %v5028
  %v5030 = vpop.f32.mrf.mxu0
  %v5031 = vadd.f32 %v4957, %v5030
  %5032 = vmatmul.bf16.gmra.mxu0 %v60
  %v5033 = vpop.f32.mrf.mxu0
  %v5034 = vadd.f32 %v4960, %v5033
  %v5035 = vpop.f32.mrf.mxu0
  %v5036 = vadd.f32 %v4962, %v5035
  %5037 = vmatmul.bf16.gmra.mxu0 %v62
  %v5038 = vpop.f32.mrf.mxu0
  %v5039 = vadd.f32 %v4965, %v5038
  %v5040 = vpop.f32.mrf.mxu0
  %v5041 = vadd.f32 %v4967, %v5040
  %5042 = vmatmul.bf16.gmra.mxu0 %v64
  %v5043 = vpop.f32.mrf.mxu0
  %v5044 = vadd.f32 %v4970, %v5043
  %v5045 = vpop.f32.mrf.mxu0
  %v5046 = vadd.f32 %v4972, %v5045
  %5047 = vmatmul.bf16.gmra.mxu0 %v66
  %v5048 = vpop.f32.mrf.mxu0
  %v5049 = vadd.f32 %v4975, %v5048
  %v5050 = vpop.f32.mrf.mxu0
  %v5051 = vadd.f32 %v4977, %v5050
  %5052 = vmatmul.bf16.gmra.mxu0 %v68
  %v5053 = vpop.f32.mrf.mxu0
  %v5054 = vadd.f32 %v4980, %v5053
  %v5055 = vpop.f32.mrf.mxu0
  %v5056 = vadd.f32 %v4982, %v5055
  %5057 = vmatmul.bf16.gmra.mxu0 %v70
  %v5058 = vpop.f32.mrf.mxu0
  %v5059 = vadd.f32 %v4985, %v5058
  %v5060 = vpop.f32.mrf.mxu0
  %v5061 = vadd.f32 %v4987, %v5060
  %5062 = vmatmul.bf16.gmra.mxu0 %v72
  %v5063 = vpop.f32.mrf.mxu0
  %v5064 = vadd.f32 %v4990, %v5063
  %v5065 = vpop.f32.mrf.mxu0
  %v5066 = vadd.f32 %v4992, %v5065
  %5067 = vmatmul.bf16.gmra.mxu0 %v74
  %v5068 = vpop.f32.mrf.mxu0
  %v5069 = vadd.f32 %v4995, %v5068
  %v5070 = vpop.f32.mrf.mxu0
  %v5071 = vadd.f32 %v4997, %v5070
  %5072 = vmatmul.bf16.gmra.mxu0 %v76
  %v5073 = vpop.f32.mrf.mxu0
  %v5074 = vadd.f32 %v5000, %v5073
  %v5075 = vpop.f32.mrf.mxu0
  %v5076 = vadd.f32 %v5002, %v5075
  %5077 = vmatmul.bf16.gmra.mxu0 %v78
  %v5078 = vpop.f32.mrf.mxu0
  %v5079 = vadd.f32 %v5005, %v5078
  %v5080 = vpop.f32.mrf.mxu0
  %v5081 = vadd.f32 %v5007, %v5080
  %5082 = vdwg.mxu0
  %5083 = vmatpush.bf16.msra.mxu0 %v2145
  %5084 = vmatpush.bf16.msra.mxu0 %v2137
  %5085 = vmatpush.bf16.msra.mxu0 %v2129
  %5086 = vmatpush.bf16.msra.mxu0 %v2121
  %5087 = vmatpush.bf16.msra.mxu0 %v2113
  %5088 = vmatpush.bf16.msra.mxu0 %v2105
  %5089 = vmatpush.bf16.msra.mxu0 %v2097
  %5090 = vmatpush.bf16.msra.mxu0 %v2089
  %5091 = vmatmul.bf16.gmra.mxu0 %v55
  %v5092 = vpop.f32.mrf.mxu0
  %v5093 = vadd.f32 %v5019, %v5092
  %v5094 = vpop.f32.mrf.mxu0
  %v5095 = vadd.f32 %v5021, %v5094
  %5096 = vmatmul.bf16.gmra.mxu0 %v57
  %v5097 = vpop.f32.mrf.mxu0
  %v5098 = vadd.f32 %v5024, %v5097
  %v5099 = vpop.f32.mrf.mxu0
  %v5100 = vadd.f32 %v5026, %v5099
  %5101 = vmatmul.bf16.gmra.mxu0 %v59
  %v5102 = vpop.f32.mrf.mxu0
  %v5103 = vadd.f32 %v5029, %v5102
  %v5104 = vpop.f32.mrf.mxu0
  %v5105 = vadd.f32 %v5031, %v5104
  %5106 = vmatmul.bf16.gmra.mxu0 %v61
  %v5107 = vpop.f32.mrf.mxu0
  %v5108 = vadd.f32 %v5034, %v5107
  %v5109 = vpop.f32.mrf.mxu0
  %v5110 = vadd.f32 %v5036, %v5109
  %5111 = vmatmul.bf16.gmra.mxu0 %v63
  %v5112 = vpop.f32.mrf.mxu0
  %v5113 = vadd.f32 %v5039, %v5112
  %v5114 = vpop.f32.mrf.mxu0
  %v5115 = vadd.f32 %v5041, %v5114
  %5116 = vmatmul.bf16.gmra.mxu0 %v65
  %v5117 = vpop.f32.mrf.mxu0
  %v5118 = vadd.f32 %v5044, %v5117
  %v5119 = vpop.f32.mrf.mxu0
  %v5120 = vadd.f32 %v5046, %v5119
  %5121 = vmatmul.bf16.gmra.mxu0 %v67
  %v5122 = vpop.f32.mrf.mxu0
  %v5123 = vadd.f32 %v5049, %v5122
  %v5124 = vpop.f32.mrf.mxu0
  %v5125 = vadd.f32 %v5051, %v5124
  %5126 = vmatmul.bf16.gmra.mxu0 %v69
  %v5127 = vpop.f32.mrf.mxu0
  %v5128 = vadd.f32 %v5054, %v5127
  %v5129 = vpop.f32.mrf.mxu0
  %v5130 = vadd.f32 %v5056, %v5129
  %5131 = vmatmul.bf16.gmra.mxu0 %v71
  %v5132 = vpop.f32.mrf.mxu0
  %v5133 = vadd.f32 %v5059, %v5132
  %v5134 = vpop.f32.mrf.mxu0
  %v5135 = vadd.f32 %v5061, %v5134
  %5136 = vmatmul.bf16.gmra.mxu0 %v73
  %v5137 = vpop.f32.mrf.mxu0
  %v5138 = vadd.f32 %v5064, %v5137
  %v5139 = vpop.f32.mrf.mxu0
  %v5140 = vadd.f32 %v5066, %v5139
  %5141 = vmatmul.bf16.gmra.mxu0 %v75
  %v5142 = vpop.f32.mrf.mxu0
  %v5143 = vadd.f32 %v5069, %v5142
  %v5144 = vpop.f32.mrf.mxu0
  %v5145 = vadd.f32 %v5071, %v5144
  %5146 = vmatmul.bf16.gmra.mxu0 %v77
  %v5147 = vpop.f32.mrf.mxu0
  %v5148 = vadd.f32 %v5074, %v5147
  %v5149 = vpop.f32.mrf.mxu0
  %v5150 = vadd.f32 %v5076, %v5149
  %5151 = vmatmul.bf16.gmra.mxu0 %v79
  %v5152 = vpop.f32.mrf.mxu0
  %v5153 = vadd.f32 %v5079, %v5152
  %v5154 = vpop.f32.mrf.mxu0
  %v5155 = vadd.f32 %v5081, %v5154
  %5156 = vdwg.mxu0
  %5157 = vmatpush.bf16.msra.mxu0 %v2209
  %5158 = vmatpush.bf16.msra.mxu0 %v2201
  %5159 = vmatpush.bf16.msra.mxu0 %v2193
  %5160 = vmatpush.bf16.msra.mxu0 %v2185
  %5161 = vmatpush.bf16.msra.mxu0 %v2177
  %5162 = vmatpush.bf16.msra.mxu0 %v2169
  %5163 = vmatpush.bf16.msra.mxu0 %v2161
  %5164 = vmatpush.bf16.msra.mxu0 %v2153
  %5165 = vmatmul.bf16.gmra.mxu0 %v56
  %v5166 = vpop.f32.mrf.mxu0
  %v5167 = vadd.f32 %v5093, %v5166
  %v5168 = vpop.f32.mrf.mxu0
  %v5169 = vadd.f32 %v5095, %v5168
  %5170 = vmatmul.bf16.gmra.mxu0 %v58
  %v5171 = vpop.f32.mrf.mxu0
  %v5172 = vadd.f32 %v5098, %v5171
  %v5173 = vpop.f32.mrf.mxu0
  %v5174 = vadd.f32 %v5100, %v5173
  %5175 = vmatmul.bf16.gmra.mxu0 %v60
  %v5176 = vpop.f32.mrf.mxu0
  %v5177 = vadd.f32 %v5103, %v5176
  %v5178 = vpop.f32.mrf.mxu0
  %v5179 = vadd.f32 %v5105, %v5178
  %5180 = vmatmul.bf16.gmra.mxu0 %v62
  %v5181 = vpop.f32.mrf.mxu0
  %v5182 = vadd.f32 %v5108, %v5181
  %v5183 = vpop.f32.mrf.mxu0
  %v5184 = vadd.f32 %v5110, %v5183
  %5185 = vmatmul.bf16.gmra.mxu0 %v64
  %v5186 = vpop.f32.mrf.mxu0
  %v5187 = vadd.f32 %v5113, %v5186
  %v5188 = vpop.f32.mrf.mxu0
  %v5189 = vadd.f32 %v5115, %v5188
  %5190 = vmatmul.bf16.gmra.mxu0 %v66
  %v5191 = vpop.f32.mrf.mxu0
  %v5192 = vadd.f32 %v5118, %v5191
  %v5193 = vpop.f32.mrf.mxu0
  %v5194 = vadd.f32 %v5120, %v5193
  %5195 = vmatmul.bf16.gmra.mxu0 %v68
  %v5196 = vpop.f32.mrf.mxu0
  %v5197 = vadd.f32 %v5123, %v5196
  %v5198 = vpop.f32.mrf.mxu0
  %v5199 = vadd.f32 %v5125, %v5198
  %5200 = vmatmul.bf16.gmra.mxu0 %v70
  %v5201 = vpop.f32.mrf.mxu0
  %v5202 = vadd.f32 %v5128, %v5201
  %v5203 = vpop.f32.mrf.mxu0
  %v5204 = vadd.f32 %v5130, %v5203
  %5205 = vmatmul.bf16.gmra.mxu0 %v72
  %v5206 = vpop.f32.mrf.mxu0
  %v5207 = vadd.f32 %v5133, %v5206
  %v5208 = vpop.f32.mrf.mxu0
  %v5209 = vadd.f32 %v5135, %v5208
  %5210 = vmatmul.bf16.gmra.mxu0 %v74
  %v5211 = vpop.f32.mrf.mxu0
  %v5212 = vadd.f32 %v5138, %v5211
  %v5213 = vpop.f32.mrf.mxu0
  %v5214 = vadd.f32 %v5140, %v5213
  %5215 = vmatmul.bf16.gmra.mxu0 %v76
  %v5216 = vpop.f32.mrf.mxu0
  %v5217 = vadd.f32 %v5143, %v5216
  %v5218 = vpop.f32.mrf.mxu0
  %v5219 = vadd.f32 %v5145, %v5218
  %5220 = vmatmul.bf16.gmra.mxu0 %v78
  %v5221 = vpop.f32.mrf.mxu0
  %v5222 = vadd.f32 %v5148, %v5221
  %v5223 = vpop.f32.mrf.mxu0
  %v5224 = vadd.f32 %v5150, %v5223
  %5225 = vmatmul.bf16.gmra.mxu0 %v80
  %v5226 = vpop.f32.mrf.mxu0
  %v5227 = vadd.f32 %v5153, %v5226
  %v5228 = vpop.f32.mrf.mxu0
  %v5229 = vadd.f32 %v5155, %v5228
  %5230 = vdwg.mxu0
  %5231 = vmatpush.bf16.msra.mxu0 %v2273
  %5232 = vmatpush.bf16.msra.mxu0 %v2265
  %5233 = vmatpush.bf16.msra.mxu0 %v2257
  %5234 = vmatpush.bf16.msra.mxu0 %v2249
  %5235 = vmatpush.bf16.msra.mxu0 %v2241
  %5236 = vmatpush.bf16.msra.mxu0 %v2233
  %5237 = vmatpush.bf16.msra.mxu0 %v2225
  %5238 = vmatpush.bf16.msra.mxu0 %v2217
  %5239 = vmatmul.bf16.gmra.mxu0 %v57
  %v5240 = vpop.f32.mrf.mxu0
  %v5241 = vadd.f32 %v5167, %v5240
  %v5242 = vpop.f32.mrf.mxu0
  %v5243 = vadd.f32 %v5169, %v5242
  %5244 = vmatmul.bf16.gmra.mxu0 %v59
  %v5245 = vpop.f32.mrf.mxu0
  %v5246 = vadd.f32 %v5172, %v5245
  %v5247 = vpop.f32.mrf.mxu0
  %v5248 = vadd.f32 %v5174, %v5247
  %5249 = vmatmul.bf16.gmra.mxu0 %v61
  %v5250 = vpop.f32.mrf.mxu0
  %v5251 = vadd.f32 %v5177, %v5250
  %v5252 = vpop.f32.mrf.mxu0
  %v5253 = vadd.f32 %v5179, %v5252
  %5254 = vmatmul.bf16.gmra.mxu0 %v63
  %v5255 = vpop.f32.mrf.mxu0
  %v5256 = vadd.f32 %v5182, %v5255
  %v5257 = vpop.f32.mrf.mxu0
  %v5258 = vadd.f32 %v5184, %v5257
  %5259 = vmatmul.bf16.gmra.mxu0 %v65
  %v5260 = vpop.f32.mrf.mxu0
  %v5261 = vadd.f32 %v5187, %v5260
  %v5262 = vpop.f32.mrf.mxu0
  %v5263 = vadd.f32 %v5189, %v5262
  %5264 = vmatmul.bf16.gmra.mxu0 %v67
  %v5265 = vpop.f32.mrf.mxu0
  %v5266 = vadd.f32 %v5192, %v5265
  %v5267 = vpop.f32.mrf.mxu0
  %v5268 = vadd.f32 %v5194, %v5267
  %5269 = vmatmul.bf16.gmra.mxu0 %v69
  %v5270 = vpop.f32.mrf.mxu0
  %v5271 = vadd.f32 %v5197, %v5270
  %v5272 = vpop.f32.mrf.mxu0
  %v5273 = vadd.f32 %v5199, %v5272
  %5274 = vmatmul.bf16.gmra.mxu0 %v71
  %v5275 = vpop.f32.mrf.mxu0
  %v5276 = vadd.f32 %v5202, %v5275
  %v5277 = vpop.f32.mrf.mxu0
  %v5278 = vadd.f32 %v5204, %v5277
  %5279 = vmatmul.bf16.gmra.mxu0 %v73
  %v5280 = vpop.f32.mrf.mxu0
  %v5281 = vadd.f32 %v5207, %v5280
  %v5282 = vpop.f32.mrf.mxu0
  %v5283 = vadd.f32 %v5209, %v5282
  %5284 = vmatmul.bf16.gmra.mxu0 %v75
  %v5285 = vpop.f32.mrf.mxu0
  %v5286 = vadd.f32 %v5212, %v5285
  %v5287 = vpop.f32.mrf.mxu0
  %v5288 = vadd.f32 %v5214, %v5287
  %5289 = vmatmul.bf16.gmra.mxu0 %v77
  %v5290 = vpop.f32.mrf.mxu0
  %v5291 = vadd.f32 %v5217, %v5290
  %v5292 = vpop.f32.mrf.mxu0
  %v5293 = vadd.f32 %v5219, %v5292
  %5294 = vmatmul.bf16.gmra.mxu0 %v79
  %v5295 = vpop.f32.mrf.mxu0
  %v5296 = vadd.f32 %v5222, %v5295
  %v5297 = vpop.f32.mrf.mxu0
  %v5298 = vadd.f32 %v5224, %v5297
  %5299 = vmatmul.bf16.gmra.mxu0 %v81
  %v5300 = vpop.f32.mrf.mxu0
  %v5301 = vadd.f32 %v5227, %v5300
  %v5302 = vpop.f32.mrf.mxu0
  %v5303 = vadd.f32 %v5229, %v5302
  %5304 = vdwg.mxu0
  %5305 = vmatpush.bf16.msra.mxu0 %v2337
  %5306 = vmatpush.bf16.msra.mxu0 %v2329
  %5307 = vmatpush.bf16.msra.mxu0 %v2321
  %5308 = vmatpush.bf16.msra.mxu0 %v2313
  %5309 = vmatpush.bf16.msra.mxu0 %v2305
  %5310 = vmatpush.bf16.msra.mxu0 %v2297
  %5311 = vmatpush.bf16.msra.mxu0 %v2289
  %5312 = vmatpush.bf16.msra.mxu0 %v2281
  %5313 = vmatmul.bf16.gmra.mxu0 %v58
  %v5314 = vpop.f32.mrf.mxu0
  %v5315 = vadd.f32 %v5241, %v5314
  %v5316 = vpop.f32.mrf.mxu0
  %v5317 = vadd.f32 %v5243, %v5316
  %5318 = vmatmul.bf16.gmra.mxu0 %v60
  %v5319 = vpop.f32.mrf.mxu0
  %v5320 = vadd.f32 %v5246, %v5319
  %v5321 = vpop.f32.mrf.mxu0
  %v5322 = vadd.f32 %v5248, %v5321
  %5323 = vmatmul.bf16.gmra.mxu0 %v62
  %v5324 = vpop.f32.mrf.mxu0
  %v5325 = vadd.f32 %v5251, %v5324
  %v5326 = vpop.f32.mrf.mxu0
  %v5327 = vadd.f32 %v5253, %v5326
  %5328 = vmatmul.bf16.gmra.mxu0 %v64
  %v5329 = vpop.f32.mrf.mxu0
  %v5330 = vadd.f32 %v5256, %v5329
  %v5331 = vpop.f32.mrf.mxu0
  %v5332 = vadd.f32 %v5258, %v5331
  %5333 = vmatmul.bf16.gmra.mxu0 %v66
  %v5334 = vpop.f32.mrf.mxu0
  %v5335 = vadd.f32 %v5261, %v5334
  %v5336 = vpop.f32.mrf.mxu0
  %v5337 = vadd.f32 %v5263, %v5336
  %5338 = vmatmul.bf16.gmra.mxu0 %v68
  %v5339 = vpop.f32.mrf.mxu0
  %v5340 = vadd.f32 %v5266, %v5339
  %v5341 = vpop.f32.mrf.mxu0
  %v5342 = vadd.f32 %v5268, %v5341
  %5343 = vmatmul.bf16.gmra.mxu0 %v70
  %v5344 = vpop.f32.mrf.mxu0
  %v5345 = vadd.f32 %v5271, %v5344
  %v5346 = vpop.f32.mrf.mxu0
  %v5347 = vadd.f32 %v5273, %v5346
  %5348 = vmatmul.bf16.gmra.mxu0 %v72
  %v5349 = vpop.f32.mrf.mxu0
  %v5350 = vadd.f32 %v5276, %v5349
  %v5351 = vpop.f32.mrf.mxu0
  %v5352 = vadd.f32 %v5278, %v5351
  %5353 = vmatmul.bf16.gmra.mxu0 %v74
  %v5354 = vpop.f32.mrf.mxu0
  %v5355 = vadd.f32 %v5281, %v5354
  %v5356 = vpop.f32.mrf.mxu0
  %v5357 = vadd.f32 %v5283, %v5356
  %5358 = vmatmul.bf16.gmra.mxu0 %v76
  %v5359 = vpop.f32.mrf.mxu0
  %v5360 = vadd.f32 %v5286, %v5359
  %v5361 = vpop.f32.mrf.mxu0
  %v5362 = vadd.f32 %v5288, %v5361
  %5363 = vmatmul.bf16.gmra.mxu0 %v78
  %v5364 = vpop.f32.mrf.mxu0
  %v5365 = vadd.f32 %v5291, %v5364
  %v5366 = vpop.f32.mrf.mxu0
  %v5367 = vadd.f32 %v5293, %v5366
  %5368 = vmatmul.bf16.gmra.mxu0 %v80
  %v5369 = vpop.f32.mrf.mxu0
  %v5370 = vadd.f32 %v5296, %v5369
  %v5371 = vpop.f32.mrf.mxu0
  %v5372 = vadd.f32 %v5298, %v5371
  %5373 = vmatmul.bf16.gmra.mxu0 %v82
  %v5374 = vpop.f32.mrf.mxu0
  %v5375 = vadd.f32 %v5301, %v5374
  %v5376 = vpop.f32.mrf.mxu0
  %v5377 = vadd.f32 %v5303, %v5376
  %5378 = vdwg.mxu0
  %5379 = vmatpush.bf16.msra.mxu0 %v1954
  %5380 = vmatpush.bf16.msra.mxu0 %v1946
  %5381 = vmatpush.bf16.msra.mxu0 %v1938
  %5382 = vmatpush.bf16.msra.mxu0 %v1930
  %5383 = vmatpush.bf16.msra.mxu0 %v1922
  %5384 = vmatpush.bf16.msra.mxu0 %v1914
  %5385 = vmatpush.bf16.msra.mxu0 %v1906
  %5386 = vmatpush.bf16.msra.mxu0 %v1898
  %5387 = vmatmul.bf16.gmra.mxu0 %v52
  %v5388 = vpop.f32.mrf.mxu0
  %v5389 = vadd.f32 %v538, %v5388
  %v5390 = vpop.f32.mrf.mxu0
  %v5391 = vadd.f32 %v538, %v5390
  %5392 = vmatmul.bf16.gmra.mxu0 %v54
  %v5393 = vpop.f32.mrf.mxu0
  %v5394 = vadd.f32 %v538, %v5393
  %v5395 = vpop.f32.mrf.mxu0
  %v5396 = vadd.f32 %v538, %v5395
  %5397 = vmatmul.bf16.gmra.mxu0 %v56
  %v5398 = vpop.f32.mrf.mxu0
  %v5399 = vadd.f32 %v538, %v5398
  %v5400 = vpop.f32.mrf.mxu0
  %v5401 = vadd.f32 %v538, %v5400
  %5402 = vmatmul.bf16.gmra.mxu0 %v58
  %v5403 = vpop.f32.mrf.mxu0
  %v5404 = vadd.f32 %v538, %v5403
  %v5405 = vpop.f32.mrf.mxu0
  %v5406 = vadd.f32 %v538, %v5405
  %5407 = vmatmul.bf16.gmra.mxu0 %v60
  %v5408 = vpop.f32.mrf.mxu0
  %v5409 = vadd.f32 %v538, %v5408
  %v5410 = vpop.f32.mrf.mxu0
  %v5411 = vadd.f32 %v538, %v5410
  %5412 = vmatmul.bf16.gmra.mxu0 %v62
  %v5413 = vpop.f32.mrf.mxu0
  %v5414 = vadd.f32 %v538, %v5413
  %v5415 = vpop.f32.mrf.mxu0
  %v5416 = vadd.f32 %v538, %v5415
  %5417 = vmatmul.bf16.gmra.mxu0 %v64
  %v5418 = vpop.f32.mrf.mxu0
  %v5419 = vadd.f32 %v538, %v5418
  %v5420 = vpop.f32.mrf.mxu0
  %v5421 = vadd.f32 %v538, %v5420
  %5422 = vmatmul.bf16.gmra.mxu0 %v66
  %v5423 = vpop.f32.mrf.mxu0
  %v5424 = vadd.f32 %v538, %v5423
  %v5425 = vpop.f32.mrf.mxu0
  %v5426 = vadd.f32 %v538, %v5425
  %5427 = vmatmul.bf16.gmra.mxu0 %v68
  %v5428 = vpop.f32.mrf.mxu0
  %v5429 = vadd.f32 %v538, %v5428
  %v5430 = vpop.f32.mrf.mxu0
  %v5431 = vadd.f32 %v538, %v5430
  %5432 = vmatmul.bf16.gmra.mxu0 %v70
  %v5433 = vpop.f32.mrf.mxu0
  %v5434 = vadd.f32 %v538, %v5433
  %v5435 = vpop.f32.mrf.mxu0
  %v5436 = vadd.f32 %v538, %v5435
  %5437 = vmatmul.bf16.gmra.mxu0 %v72
  %v5438 = vpop.f32.mrf.mxu0
  %v5439 = vadd.f32 %v538, %v5438
  %v5440 = vpop.f32.mrf.mxu0
  %v5441 = vadd.f32 %v538, %v5440
  %5442 = vmatmul.bf16.gmra.mxu0 %v74
  %v5443 = vpop.f32.mrf.mxu0
  %v5444 = vadd.f32 %v538, %v5443
  %v5445 = vpop.f32.mrf.mxu0
  %v5446 = vadd.f32 %v538, %v5445
  %5447 = vmatmul.bf16.gmra.mxu0 %v76
  %v5448 = vpop.f32.mrf.mxu0
  %v5449 = vadd.f32 %v538, %v5448
  %v5450 = vpop.f32.mrf.mxu0
  %v5451 = vadd.f32 %v538, %v5450
  %5452 = vdwg.mxu0
  %5453 = vmatpush.bf16.msra.mxu0 %v2018
  %5454 = vmatpush.bf16.msra.mxu0 %v2010
  %5455 = vmatpush.bf16.msra.mxu0 %v2002
  %5456 = vmatpush.bf16.msra.mxu0 %v1994
  %5457 = vmatpush.bf16.msra.mxu0 %v1986
  %5458 = vmatpush.bf16.msra.mxu0 %v1978
  %5459 = vmatpush.bf16.msra.mxu0 %v1970
  %5460 = vmatpush.bf16.msra.mxu0 %v1962
  %5461 = vmatmul.bf16.gmra.mxu0 %v53
  %v5462 = vpop.f32.mrf.mxu0
  %v5463 = vadd.f32 %v5389, %v5462
  %v5464 = vpop.f32.mrf.mxu0
  %v5465 = vadd.f32 %v5391, %v5464
  %5466 = vmatmul.bf16.gmra.mxu0 %v55
  %v5467 = vpop.f32.mrf.mxu0
  %v5468 = vadd.f32 %v5394, %v5467
  %v5469 = vpop.f32.mrf.mxu0
  %v5470 = vadd.f32 %v5396, %v5469
  %5471 = vmatmul.bf16.gmra.mxu0 %v57
  %v5472 = vpop.f32.mrf.mxu0
  %v5473 = vadd.f32 %v5399, %v5472
  %v5474 = vpop.f32.mrf.mxu0
  %v5475 = vadd.f32 %v5401, %v5474
  %5476 = vmatmul.bf16.gmra.mxu0 %v59
  %v5477 = vpop.f32.mrf.mxu0
  %v5478 = vadd.f32 %v5404, %v5477
  %v5479 = vpop.f32.mrf.mxu0
  %v5480 = vadd.f32 %v5406, %v5479
  %5481 = vmatmul.bf16.gmra.mxu0 %v61
  %v5482 = vpop.f32.mrf.mxu0
  %v5483 = vadd.f32 %v5409, %v5482
  %v5484 = vpop.f32.mrf.mxu0
  %v5485 = vadd.f32 %v5411, %v5484
  %5486 = vmatmul.bf16.gmra.mxu0 %v63
  %v5487 = vpop.f32.mrf.mxu0
  %v5488 = vadd.f32 %v5414, %v5487
  %v5489 = vpop.f32.mrf.mxu0
  %v5490 = vadd.f32 %v5416, %v5489
  %5491 = vmatmul.bf16.gmra.mxu0 %v65
  %v5492 = vpop.f32.mrf.mxu0
  %v5493 = vadd.f32 %v5419, %v5492
  %v5494 = vpop.f32.mrf.mxu0
  %v5495 = vadd.f32 %v5421, %v5494
  %5496 = vmatmul.bf16.gmra.mxu0 %v67
  %v5497 = vpop.f32.mrf.mxu0
  %v5498 = vadd.f32 %v5424, %v5497
  %v5499 = vpop.f32.mrf.mxu0
  %v5500 = vadd.f32 %v5426, %v5499
  %5501 = vmatmul.bf16.gmra.mxu0 %v69
  %v5502 = vpop.f32.mrf.mxu0
  %v5503 = vadd.f32 %v5429, %v5502
  %v5504 = vpop.f32.mrf.mxu0
  %v5505 = vadd.f32 %v5431, %v5504
  %5506 = vmatmul.bf16.gmra.mxu0 %v71
  %v5507 = vpop.f32.mrf.mxu0
  %v5508 = vadd.f32 %v5434, %v5507
  %v5509 = vpop.f32.mrf.mxu0
  %v5510 = vadd.f32 %v5436, %v5509
  %5511 = vmatmul.bf16.gmra.mxu0 %v73
  %v5512 = vpop.f32.mrf.mxu0
  %v5513 = vadd.f32 %v5439, %v5512
  %v5514 = vpop.f32.mrf.mxu0
  %v5515 = vadd.f32 %v5441, %v5514
  %5516 = vmatmul.bf16.gmra.mxu0 %v75
  %v5517 = vpop.f32.mrf.mxu0
  %v5518 = vadd.f32 %v5444, %v5517
  %v5519 = vpop.f32.mrf.mxu0
  %v5520 = vadd.f32 %v5446, %v5519
  %5521 = vmatmul.bf16.gmra.mxu0 %v77
  %v5522 = vpop.f32.mrf.mxu0
  %v5523 = vadd.f32 %v5449, %v5522
  %v5524 = vpop.f32.mrf.mxu0
  %v5525 = vadd.f32 %v5451, %v5524
  %5526 = vdwg.mxu0
  %5527 = vmatpush.bf16.msra.mxu0 %v2082
  %5528 = vmatpush.bf16.msra.mxu0 %v2074
  %5529 = vmatpush.bf16.msra.mxu0 %v2066
  %5530 = vmatpush.bf16.msra.mxu0 %v2058
  %5531 = vmatpush.bf16.msra.mxu0 %v2050
  %5532 = vmatpush.bf16.msra.mxu0 %v2042
  %5533 = vmatpush.bf16.msra.mxu0 %v2034
  %5534 = vmatpush.bf16.msra.mxu0 %v2026
  %5535 = vmatmul.bf16.gmra.mxu0 %v54
  %v5536 = vpop.f32.mrf.mxu0
  %v5537 = vadd.f32 %v5463, %v5536
  %v5538 = vpop.f32.mrf.mxu0
  %v5539 = vadd.f32 %v5465, %v5538
  %5540 = vmatmul.bf16.gmra.mxu0 %v56
  %v5541 = vpop.f32.mrf.mxu0
  %v5542 = vadd.f32 %v5468, %v5541
  %v5543 = vpop.f32.mrf.mxu0
  %v5544 = vadd.f32 %v5470, %v5543
  %5545 = vmatmul.bf16.gmra.mxu0 %v58
  %v5546 = vpop.f32.mrf.mxu0
  %v5547 = vadd.f32 %v5473, %v5546
  %v5548 = vpop.f32.mrf.mxu0
  %v5549 = vadd.f32 %v5475, %v5548
  %5550 = vmatmul.bf16.gmra.mxu0 %v60
  %v5551 = vpop.f32.mrf.mxu0
  %v5552 = vadd.f32 %v5478, %v5551
  %v5553 = vpop.f32.mrf.mxu0
  %v5554 = vadd.f32 %v5480, %v5553
  %5555 = vmatmul.bf16.gmra.mxu0 %v62
  %v5556 = vpop.f32.mrf.mxu0
  %v5557 = vadd.f32 %v5483, %v5556
  %v5558 = vpop.f32.mrf.mxu0
  %v5559 = vadd.f32 %v5485, %v5558
  %5560 = vmatmul.bf16.gmra.mxu0 %v64
  %v5561 = vpop.f32.mrf.mxu0
  %v5562 = vadd.f32 %v5488, %v5561
  %v5563 = vpop.f32.mrf.mxu0
  %v5564 = vadd.f32 %v5490, %v5563
  %5565 = vmatmul.bf16.gmra.mxu0 %v66
  %v5566 = vpop.f32.mrf.mxu0
  %v5567 = vadd.f32 %v5493, %v5566
  %v5568 = vpop.f32.mrf.mxu0
  %v5569 = vadd.f32 %v5495, %v5568
  %5570 = vmatmul.bf16.gmra.mxu0 %v68
  %v5571 = vpop.f32.mrf.mxu0
  %v5572 = vadd.f32 %v5498, %v5571
  %v5573 = vpop.f32.mrf.mxu0
  %v5574 = vadd.f32 %v5500, %v5573
  %5575 = vmatmul.bf16.gmra.mxu0 %v70
  %v5576 = vpop.f32.mrf.mxu0
  %v5577 = vadd.f32 %v5503, %v5576
  %v5578 = vpop.f32.mrf.mxu0
  %v5579 = vadd.f32 %v5505, %v5578
  %5580 = vmatmul.bf16.gmra.mxu0 %v72
  %v5581 = vpop.f32.mrf.mxu0
  %v5582 = vadd.f32 %v5508, %v5581
  %v5583 = vpop.f32.mrf.mxu0
  %v5584 = vadd.f32 %v5510, %v5583
  %5585 = vmatmul.bf16.gmra.mxu0 %v74
  %v5586 = vpop.f32.mrf.mxu0
  %v5587 = vadd.f32 %v5513, %v5586
  %v5588 = vpop.f32.mrf.mxu0
  %v5589 = vadd.f32 %v5515, %v5588
  %5590 = vmatmul.bf16.gmra.mxu0 %v76
  %v5591 = vpop.f32.mrf.mxu0
  %v5592 = vadd.f32 %v5518, %v5591
  %v5593 = vpop.f32.mrf.mxu0
  %v5594 = vadd.f32 %v5520, %v5593
  %5595 = vmatmul.bf16.gmra.mxu0 %v78
  %v5596 = vpop.f32.mrf.mxu0
  %v5597 = vadd.f32 %v5523, %v5596
  %v5598 = vpop.f32.mrf.mxu0
  %v5599 = vadd.f32 %v5525, %v5598
  %5600 = vdwg.mxu0
  %5601 = vmatpush.bf16.msra.mxu0 %v2146
  %5602 = vmatpush.bf16.msra.mxu0 %v2138
  %5603 = vmatpush.bf16.msra.mxu0 %v2130
  %5604 = vmatpush.bf16.msra.mxu0 %v2122
  %5605 = vmatpush.bf16.msra.mxu0 %v2114
  %5606 = vmatpush.bf16.msra.mxu0 %v2106
  %5607 = vmatpush.bf16.msra.mxu0 %v2098
  %5608 = vmatpush.bf16.msra.mxu0 %v2090
  %5609 = vmatmul.bf16.gmra.mxu0 %v55
  %v5610 = vpop.f32.mrf.mxu0
  %v5611 = vadd.f32 %v5537, %v5610
  %v5612 = vpop.f32.mrf.mxu0
  %v5613 = vadd.f32 %v5539, %v5612
  %5614 = vmatmul.bf16.gmra.mxu0 %v57
  %v5615 = vpop.f32.mrf.mxu0
  %v5616 = vadd.f32 %v5542, %v5615
  %v5617 = vpop.f32.mrf.mxu0
  %v5618 = vadd.f32 %v5544, %v5617
  %5619 = vmatmul.bf16.gmra.mxu0 %v59
  %v5620 = vpop.f32.mrf.mxu0
  %v5621 = vadd.f32 %v5547, %v5620
  %v5622 = vpop.f32.mrf.mxu0
  %v5623 = vadd.f32 %v5549, %v5622
  %5624 = vmatmul.bf16.gmra.mxu0 %v61
  %v5625 = vpop.f32.mrf.mxu0
  %v5626 = vadd.f32 %v5552, %v5625
  %v5627 = vpop.f32.mrf.mxu0
  %v5628 = vadd.f32 %v5554, %v5627
  %5629 = vmatmul.bf16.gmra.mxu0 %v63
  %v5630 = vpop.f32.mrf.mxu0
  %v5631 = vadd.f32 %v5557, %v5630
  %v5632 = vpop.f32.mrf.mxu0
  %v5633 = vadd.f32 %v5559, %v5632
  %5634 = vmatmul.bf16.gmra.mxu0 %v65
  %v5635 = vpop.f32.mrf.mxu0
  %v5636 = vadd.f32 %v5562, %v5635
  %v5637 = vpop.f32.mrf.mxu0
  %v5638 = vadd.f32 %v5564, %v5637
  %5639 = vmatmul.bf16.gmra.mxu0 %v67
  %v5640 = vpop.f32.mrf.mxu0
  %v5641 = vadd.f32 %v5567, %v5640
  %v5642 = vpop.f32.mrf.mxu0
  %v5643 = vadd.f32 %v5569, %v5642
  %5644 = vmatmul.bf16.gmra.mxu0 %v69
  %v5645 = vpop.f32.mrf.mxu0
  %v5646 = vadd.f32 %v5572, %v5645
  %v5647 = vpop.f32.mrf.mxu0
  %v5648 = vadd.f32 %v5574, %v5647
  %5649 = vmatmul.bf16.gmra.mxu0 %v71
  %v5650 = vpop.f32.mrf.mxu0
  %v5651 = vadd.f32 %v5577, %v5650
  %v5652 = vpop.f32.mrf.mxu0
  %v5653 = vadd.f32 %v5579, %v5652
  %5654 = vmatmul.bf16.gmra.mxu0 %v73
  %v5655 = vpop.f32.mrf.mxu0
  %v5656 = vadd.f32 %v5582, %v5655
  %v5657 = vpop.f32.mrf.mxu0
  %v5658 = vadd.f32 %v5584, %v5657
  %5659 = vmatmul.bf16.gmra.mxu0 %v75
  %v5660 = vpop.f32.mrf.mxu0
  %v5661 = vadd.f32 %v5587, %v5660
  %v5662 = vpop.f32.mrf.mxu0
  %v5663 = vadd.f32 %v5589, %v5662
  %5664 = vmatmul.bf16.gmra.mxu0 %v77
  %v5665 = vpop.f32.mrf.mxu0
  %v5666 = vadd.f32 %v5592, %v5665
  %v5667 = vpop.f32.mrf.mxu0
  %v5668 = vadd.f32 %v5594, %v5667
  %5669 = vmatmul.bf16.gmra.mxu0 %v79
  %v5670 = vpop.f32.mrf.mxu0
  %v5671 = vadd.f32 %v5597, %v5670
  %v5672 = vpop.f32.mrf.mxu0
  %v5673 = vadd.f32 %v5599, %v5672
  %5674 = vdwg.mxu0
  %5675 = vmatpush.bf16.msra.mxu0 %v2210
  %5676 = vmatpush.bf16.msra.mxu0 %v2202
  %5677 = vmatpush.bf16.msra.mxu0 %v2194
  %5678 = vmatpush.bf16.msra.mxu0 %v2186
  %5679 = vmatpush.bf16.msra.mxu0 %v2178
  %5680 = vmatpush.bf16.msra.mxu0 %v2170
  %5681 = vmatpush.bf16.msra.mxu0 %v2162
  %5682 = vmatpush.bf16.msra.mxu0 %v2154
  %5683 = vmatmul.bf16.gmra.mxu0 %v56
  %v5684 = vpop.f32.mrf.mxu0
  %v5685 = vadd.f32 %v5611, %v5684
  %v5686 = vpop.f32.mrf.mxu0
  %v5687 = vadd.f32 %v5613, %v5686
  %5688 = vmatmul.bf16.gmra.mxu0 %v58
  %v5689 = vpop.f32.mrf.mxu0
  %v5690 = vadd.f32 %v5616, %v5689
  %v5691 = vpop.f32.mrf.mxu0
  %v5692 = vadd.f32 %v5618, %v5691
  %5693 = vmatmul.bf16.gmra.mxu0 %v60
  %v5694 = vpop.f32.mrf.mxu0
  %v5695 = vadd.f32 %v5621, %v5694
  %v5696 = vpop.f32.mrf.mxu0
  %v5697 = vadd.f32 %v5623, %v5696
  %5698 = vmatmul.bf16.gmra.mxu0 %v62
  %v5699 = vpop.f32.mrf.mxu0
  %v5700 = vadd.f32 %v5626, %v5699
  %v5701 = vpop.f32.mrf.mxu0
  %v5702 = vadd.f32 %v5628, %v5701
  %5703 = vmatmul.bf16.gmra.mxu0 %v64
  %v5704 = vpop.f32.mrf.mxu0
  %v5705 = vadd.f32 %v5631, %v5704
  %v5706 = vpop.f32.mrf.mxu0
  %v5707 = vadd.f32 %v5633, %v5706
  %5708 = vmatmul.bf16.gmra.mxu0 %v66
  %v5709 = vpop.f32.mrf.mxu0
  %v5710 = vadd.f32 %v5636, %v5709
  %v5711 = vpop.f32.mrf.mxu0
  %v5712 = vadd.f32 %v5638, %v5711
  %5713 = vmatmul.bf16.gmra.mxu0 %v68
  %v5714 = vpop.f32.mrf.mxu0
  %v5715 = vadd.f32 %v5641, %v5714
  %v5716 = vpop.f32.mrf.mxu0
  %v5717 = vadd.f32 %v5643, %v5716
  %5718 = vmatmul.bf16.gmra.mxu0 %v70
  %v5719 = vpop.f32.mrf.mxu0
  %v5720 = vadd.f32 %v5646, %v5719
  %v5721 = vpop.f32.mrf.mxu0
  %v5722 = vadd.f32 %v5648, %v5721
  %5723 = vmatmul.bf16.gmra.mxu0 %v72
  %v5724 = vpop.f32.mrf.mxu0
  %v5725 = vadd.f32 %v5651, %v5724
  %v5726 = vpop.f32.mrf.mxu0
  %v5727 = vadd.f32 %v5653, %v5726
  %5728 = vmatmul.bf16.gmra.mxu0 %v74
  %v5729 = vpop.f32.mrf.mxu0
  %v5730 = vadd.f32 %v5656, %v5729
  %v5731 = vpop.f32.mrf.mxu0
  %v5732 = vadd.f32 %v5658, %v5731
  %5733 = vmatmul.bf16.gmra.mxu0 %v76
  %v5734 = vpop.f32.mrf.mxu0
  %v5735 = vadd.f32 %v5661, %v5734
  %v5736 = vpop.f32.mrf.mxu0
  %v5737 = vadd.f32 %v5663, %v5736
  %5738 = vmatmul.bf16.gmra.mxu0 %v78
  %v5739 = vpop.f32.mrf.mxu0
  %v5740 = vadd.f32 %v5666, %v5739
  %v5741 = vpop.f32.mrf.mxu0
  %v5742 = vadd.f32 %v5668, %v5741
  %5743 = vmatmul.bf16.gmra.mxu0 %v80
  %v5744 = vpop.f32.mrf.mxu0
  %v5745 = vadd.f32 %v5671, %v5744
  %v5746 = vpop.f32.mrf.mxu0
  %v5747 = vadd.f32 %v5673, %v5746
  %5748 = vdwg.mxu0
  %5749 = vmatpush.bf16.msra.mxu0 %v2274
  %5750 = vmatpush.bf16.msra.mxu0 %v2266
  %5751 = vmatpush.bf16.msra.mxu0 %v2258
  %5752 = vmatpush.bf16.msra.mxu0 %v2250
  %5753 = vmatpush.bf16.msra.mxu0 %v2242
  %5754 = vmatpush.bf16.msra.mxu0 %v2234
  %5755 = vmatpush.bf16.msra.mxu0 %v2226
  %5756 = vmatpush.bf16.msra.mxu0 %v2218
  %5757 = vmatmul.bf16.gmra.mxu0 %v57
  %v5758 = vpop.f32.mrf.mxu0
  %v5759 = vadd.f32 %v5685, %v5758
  %v5760 = vpop.f32.mrf.mxu0
  %v5761 = vadd.f32 %v5687, %v5760
  %5762 = vmatmul.bf16.gmra.mxu0 %v59
  %v5763 = vpop.f32.mrf.mxu0
  %v5764 = vadd.f32 %v5690, %v5763
  %v5765 = vpop.f32.mrf.mxu0
  %v5766 = vadd.f32 %v5692, %v5765
  %5767 = vmatmul.bf16.gmra.mxu0 %v61
  %v5768 = vpop.f32.mrf.mxu0
  %v5769 = vadd.f32 %v5695, %v5768
  %v5770 = vpop.f32.mrf.mxu0
  %v5771 = vadd.f32 %v5697, %v5770
  %5772 = vmatmul.bf16.gmra.mxu0 %v63
  %v5773 = vpop.f32.mrf.mxu0
  %v5774 = vadd.f32 %v5700, %v5773
  %v5775 = vpop.f32.mrf.mxu0
  %v5776 = vadd.f32 %v5702, %v5775
  %5777 = vmatmul.bf16.gmra.mxu0 %v65
  %v5778 = vpop.f32.mrf.mxu0
  %v5779 = vadd.f32 %v5705, %v5778
  %v5780 = vpop.f32.mrf.mxu0
  %v5781 = vadd.f32 %v5707, %v5780
  %5782 = vmatmul.bf16.gmra.mxu0 %v67
  %v5783 = vpop.f32.mrf.mxu0
  %v5784 = vadd.f32 %v5710, %v5783
  %v5785 = vpop.f32.mrf.mxu0
  %v5786 = vadd.f32 %v5712, %v5785
  %5787 = vmatmul.bf16.gmra.mxu0 %v69
  %v5788 = vpop.f32.mrf.mxu0
  %v5789 = vadd.f32 %v5715, %v5788
  %v5790 = vpop.f32.mrf.mxu0
  %v5791 = vadd.f32 %v5717, %v5790
  %5792 = vmatmul.bf16.gmra.mxu0 %v71
  %v5793 = vpop.f32.mrf.mxu0
  %v5794 = vadd.f32 %v5720, %v5793
  %v5795 = vpop.f32.mrf.mxu0
  %v5796 = vadd.f32 %v5722, %v5795
  %5797 = vmatmul.bf16.gmra.mxu0 %v73
  %v5798 = vpop.f32.mrf.mxu0
  %v5799 = vadd.f32 %v5725, %v5798
  %v5800 = vpop.f32.mrf.mxu0
  %v5801 = vadd.f32 %v5727, %v5800
  %5802 = vmatmul.bf16.gmra.mxu0 %v75
  %v5803 = vpop.f32.mrf.mxu0
  %v5804 = vadd.f32 %v5730, %v5803
  %v5805 = vpop.f32.mrf.mxu0
  %v5806 = vadd.f32 %v5732, %v5805
  %5807 = vmatmul.bf16.gmra.mxu0 %v77
  %v5808 = vpop.f32.mrf.mxu0
  %v5809 = vadd.f32 %v5735, %v5808
  %v5810 = vpop.f32.mrf.mxu0
  %v5811 = vadd.f32 %v5737, %v5810
  %5812 = vmatmul.bf16.gmra.mxu0 %v79
  %v5813 = vpop.f32.mrf.mxu0
  %v5814 = vadd.f32 %v5740, %v5813
  %v5815 = vpop.f32.mrf.mxu0
  %v5816 = vadd.f32 %v5742, %v5815
  %5817 = vmatmul.bf16.gmra.mxu0 %v81
  %v5818 = vpop.f32.mrf.mxu0
  %v5819 = vadd.f32 %v5745, %v5818
  %v5820 = vpop.f32.mrf.mxu0
  %v5821 = vadd.f32 %v5747, %v5820
  %5822 = vdwg.mxu0
  %5823 = vmatpush.bf16.msra.mxu0 %v2338
  %5824 = vmatpush.bf16.msra.mxu0 %v2330
  %5825 = vmatpush.bf16.msra.mxu0 %v2322
  %5826 = vmatpush.bf16.msra.mxu0 %v2314
  %5827 = vmatpush.bf16.msra.mxu0 %v2306
  %5828 = vmatpush.bf16.msra.mxu0 %v2298
  %5829 = vmatpush.bf16.msra.mxu0 %v2290
  %5830 = vmatpush.bf16.msra.mxu0 %v2282
  %5831 = vmatmul.bf16.gmra.mxu0 %v58
  %v5832 = vpop.f32.mrf.mxu0
  %v5833 = vadd.f32 %v5759, %v5832
  %v5834 = vpop.f32.mrf.mxu0
  %v5835 = vadd.f32 %v5761, %v5834
  %5836 = vmatmul.bf16.gmra.mxu0 %v60
  %v5837 = vpop.f32.mrf.mxu0
  %v5838 = vadd.f32 %v5764, %v5837
  %v5839 = vpop.f32.mrf.mxu0
  %v5840 = vadd.f32 %v5766, %v5839
  %5841 = vmatmul.bf16.gmra.mxu0 %v62
  %v5842 = vpop.f32.mrf.mxu0
  %v5843 = vadd.f32 %v5769, %v5842
  %v5844 = vpop.f32.mrf.mxu0
  %v5845 = vadd.f32 %v5771, %v5844
  %5846 = vmatmul.bf16.gmra.mxu0 %v64
  %v5847 = vpop.f32.mrf.mxu0
  %v5848 = vadd.f32 %v5774, %v5847
  %v5849 = vpop.f32.mrf.mxu0
  %v5850 = vadd.f32 %v5776, %v5849
  %5851 = vmatmul.bf16.gmra.mxu0 %v66
  %v5852 = vpop.f32.mrf.mxu0
  %v5853 = vadd.f32 %v5779, %v5852
  %v5854 = vpop.f32.mrf.mxu0
  %v5855 = vadd.f32 %v5781, %v5854
  %5856 = vmatmul.bf16.gmra.mxu0 %v68
  %v5857 = vpop.f32.mrf.mxu0
  %v5858 = vadd.f32 %v5784, %v5857
  %v5859 = vpop.f32.mrf.mxu0
  %v5860 = vadd.f32 %v5786, %v5859
  %5861 = vmatmul.bf16.gmra.mxu0 %v70
  %v5862 = vpop.f32.mrf.mxu0
  %v5863 = vadd.f32 %v5789, %v5862
  %v5864 = vpop.f32.mrf.mxu0
  %v5865 = vadd.f32 %v5791, %v5864
  %5866 = vmatmul.bf16.gmra.mxu0 %v72
  %v5867 = vpop.f32.mrf.mxu0
  %v5868 = vadd.f32 %v5794, %v5867
  %v5869 = vpop.f32.mrf.mxu0
  %v5870 = vadd.f32 %v5796, %v5869
  %5871 = vmatmul.bf16.gmra.mxu0 %v74
  %v5872 = vpop.f32.mrf.mxu0
  %v5873 = vadd.f32 %v5799, %v5872
  %v5874 = vpop.f32.mrf.mxu0
  %v5875 = vadd.f32 %v5801, %v5874
  %5876 = vmatmul.bf16.gmra.mxu0 %v76
  %v5877 = vpop.f32.mrf.mxu0
  %v5878 = vadd.f32 %v5804, %v5877
  %v5879 = vpop.f32.mrf.mxu0
  %v5880 = vadd.f32 %v5806, %v5879
  %5881 = vmatmul.bf16.gmra.mxu0 %v78
  %v5882 = vpop.f32.mrf.mxu0
  %v5883 = vadd.f32 %v5809, %v5882
  %v5884 = vpop.f32.mrf.mxu0
  %v5885 = vadd.f32 %v5811, %v5884
  %5886 = vmatmul.bf16.gmra.mxu0 %v80
  %v5887 = vpop.f32.mrf.mxu0
  %v5888 = vadd.f32 %v5814, %v5887
  %v5889 = vpop.f32.mrf.mxu0
  %v5890 = vadd.f32 %v5816, %v5889
  %5891 = vmatmul.bf16.gmra.mxu0 %v82
  %v5892 = vpop.f32.mrf.mxu0
  %v5893 = vadd.f32 %v5819, %v5892
  %v5894 = vpop.f32.mrf.mxu0
  %v5895 = vadd.f32 %v5821, %v5894
  %5896 = vdwg.mxu0
  %5897 = vmatpush.bf16.msra.mxu0 %v1955
  %5898 = vmatpush.bf16.msra.mxu0 %v1947
  %5899 = vmatpush.bf16.msra.mxu0 %v1939
  %5900 = vmatpush.bf16.msra.mxu0 %v1931
  %5901 = vmatpush.bf16.msra.mxu0 %v1923
  %5902 = vmatpush.bf16.msra.mxu0 %v1915
  %5903 = vmatpush.bf16.msra.mxu0 %v1907
  %5904 = vmatpush.bf16.msra.mxu0 %v1899
  %5905 = vmatmul.bf16.gmra.mxu0 %v52
  %v5906 = vpop.f32.mrf.mxu0
  %v5907 = vadd.f32 %v539, %v5906
  %v5908 = vpop.f32.mrf.mxu0
  %v5909 = vadd.f32 %v539, %v5908
  %5910 = vmatmul.bf16.gmra.mxu0 %v54
  %v5911 = vpop.f32.mrf.mxu0
  %v5912 = vadd.f32 %v539, %v5911
  %v5913 = vpop.f32.mrf.mxu0
  %v5914 = vadd.f32 %v539, %v5913
  %5915 = vmatmul.bf16.gmra.mxu0 %v56
  %v5916 = vpop.f32.mrf.mxu0
  %v5917 = vadd.f32 %v539, %v5916
  %v5918 = vpop.f32.mrf.mxu0
  %v5919 = vadd.f32 %v539, %v5918
  %5920 = vmatmul.bf16.gmra.mxu0 %v58
  %v5921 = vpop.f32.mrf.mxu0
  %v5922 = vadd.f32 %v539, %v5921
  %v5923 = vpop.f32.mrf.mxu0
  %v5924 = vadd.f32 %v539, %v5923
  %5925 = vmatmul.bf16.gmra.mxu0 %v60
  %v5926 = vpop.f32.mrf.mxu0
  %v5927 = vadd.f32 %v539, %v5926
  %v5928 = vpop.f32.mrf.mxu0
  %v5929 = vadd.f32 %v539, %v5928
  %5930 = vmatmul.bf16.gmra.mxu0 %v62
  %v5931 = vpop.f32.mrf.mxu0
  %v5932 = vadd.f32 %v539, %v5931
  %v5933 = vpop.f32.mrf.mxu0
  %v5934 = vadd.f32 %v539, %v5933
  %5935 = vmatmul.bf16.gmra.mxu0 %v64
  %v5936 = vpop.f32.mrf.mxu0
  %v5937 = vadd.f32 %v539, %v5936
  %v5938 = vpop.f32.mrf.mxu0
  %v5939 = vadd.f32 %v539, %v5938
  %5940 = vmatmul.bf16.gmra.mxu0 %v66
  %v5941 = vpop.f32.mrf.mxu0
  %v5942 = vadd.f32 %v539, %v5941
  %v5943 = vpop.f32.mrf.mxu0
  %v5944 = vadd.f32 %v539, %v5943
  %5945 = vmatmul.bf16.gmra.mxu0 %v68
  %v5946 = vpop.f32.mrf.mxu0
  %v5947 = vadd.f32 %v539, %v5946
  %v5948 = vpop.f32.mrf.mxu0
  %v5949 = vadd.f32 %v539, %v5948
  %5950 = vmatmul.bf16.gmra.mxu0 %v70
  %v5951 = vpop.f32.mrf.mxu0
  %v5952 = vadd.f32 %v539, %v5951
  %v5953 = vpop.f32.mrf.mxu0
  %v5954 = vadd.f32 %v539, %v5953
  %5955 = vmatmul.bf16.gmra.mxu0 %v72
  %v5956 = vpop.f32.mrf.mxu0
  %v5957 = vadd.f32 %v539, %v5956
  %v5958 = vpop.f32.mrf.mxu0
  %v5959 = vadd.f32 %v539, %v5958
  %5960 = vmatmul.bf16.gmra.mxu0 %v74
  %v5961 = vpop.f32.mrf.mxu0
  %v5962 = vadd.f32 %v539, %v5961
  %v5963 = vpop.f32.mrf.mxu0
  %v5964 = vadd.f32 %v539, %v5963
  %5965 = vmatmul.bf16.gmra.mxu0 %v76
  %v5966 = vpop.f32.mrf.mxu0
  %v5967 = vadd.f32 %v539, %v5966
  %v5968 = vpop.f32.mrf.mxu0
  %v5969 = vadd.f32 %v539, %v5968
  %5970 = vdwg.mxu0
  %5971 = vmatpush.bf16.msra.mxu0 %v2019
  %5972 = vmatpush.bf16.msra.mxu0 %v2011
  %5973 = vmatpush.bf16.msra.mxu0 %v2003
  %5974 = vmatpush.bf16.msra.mxu0 %v1995
  %5975 = vmatpush.bf16.msra.mxu0 %v1987
  %5976 = vmatpush.bf16.msra.mxu0 %v1979
  %5977 = vmatpush.bf16.msra.mxu0 %v1971
  %5978 = vmatpush.bf16.msra.mxu0 %v1963
  %5979 = vmatmul.bf16.gmra.mxu0 %v53
  %v5980 = vpop.f32.mrf.mxu0
  %v5981 = vadd.f32 %v5907, %v5980
  %v5982 = vpop.f32.mrf.mxu0
  %v5983 = vadd.f32 %v5909, %v5982
  %5984 = vmatmul.bf16.gmra.mxu0 %v55
  %v5985 = vpop.f32.mrf.mxu0
  %v5986 = vadd.f32 %v5912, %v5985
  %v5987 = vpop.f32.mrf.mxu0
  %v5988 = vadd.f32 %v5914, %v5987
  %5989 = vmatmul.bf16.gmra.mxu0 %v57
  %v5990 = vpop.f32.mrf.mxu0
  %v5991 = vadd.f32 %v5917, %v5990
  %v5992 = vpop.f32.mrf.mxu0
  %v5993 = vadd.f32 %v5919, %v5992
  %5994 = vmatmul.bf16.gmra.mxu0 %v59
  %v5995 = vpop.f32.mrf.mxu0
  %v5996 = vadd.f32 %v5922, %v5995
  %v5997 = vpop.f32.mrf.mxu0
  %v5998 = vadd.f32 %v5924, %v5997
  %5999 = vmatmul.bf16.gmra.mxu0 %v61
  %v6000 = vpop.f32.mrf.mxu0
  %v6001 = vadd.f32 %v5927, %v6000
  %v6002 = vpop.f32.mrf.mxu0
  %v6003 = vadd.f32 %v5929, %v6002
  %6004 = vmatmul.bf16.gmra.mxu0 %v63
  %v6005 = vpop.f32.mrf.mxu0
  %v6006 = vadd.f32 %v5932, %v6005
  %v6007 = vpop.f32.mrf.mxu0
  %v6008 = vadd.f32 %v5934, %v6007
  %6009 = vmatmul.bf16.gmra.mxu0 %v65
  %v6010 = vpop.f32.mrf.mxu0
  %v6011 = vadd.f32 %v5937, %v6010
  %v6012 = vpop.f32.mrf.mxu0
  %v6013 = vadd.f32 %v5939, %v6012
  %6014 = vmatmul.bf16.gmra.mxu0 %v67
  %v6015 = vpop.f32.mrf.mxu0
  %v6016 = vadd.f32 %v5942, %v6015
  %v6017 = vpop.f32.mrf.mxu0
  %v6018 = vadd.f32 %v5944, %v6017
  %6019 = vmatmul.bf16.gmra.mxu0 %v69
  %v6020 = vpop.f32.mrf.mxu0
  %v6021 = vadd.f32 %v5947, %v6020
  %v6022 = vpop.f32.mrf.mxu0
  %v6023 = vadd.f32 %v5949, %v6022
  %6024 = vmatmul.bf16.gmra.mxu0 %v71
  %v6025 = vpop.f32.mrf.mxu0
  %v6026 = vadd.f32 %v5952, %v6025
  %v6027 = vpop.f32.mrf.mxu0
  %v6028 = vadd.f32 %v5954, %v6027
  %6029 = vmatmul.bf16.gmra.mxu0 %v73
  %v6030 = vpop.f32.mrf.mxu0
  %v6031 = vadd.f32 %v5957, %v6030
  %v6032 = vpop.f32.mrf.mxu0
  %v6033 = vadd.f32 %v5959, %v6032
  %6034 = vmatmul.bf16.gmra.mxu0 %v75
  %v6035 = vpop.f32.mrf.mxu0
  %v6036 = vadd.f32 %v5962, %v6035
  %v6037 = vpop.f32.mrf.mxu0
  %v6038 = vadd.f32 %v5964, %v6037
  %6039 = vmatmul.bf16.gmra.mxu0 %v77
  %v6040 = vpop.f32.mrf.mxu0
  %v6041 = vadd.f32 %v5967, %v6040
  %v6042 = vpop.f32.mrf.mxu0
  %v6043 = vadd.f32 %v5969, %v6042
  %6044 = vdwg.mxu0
  %6045 = vmatpush.bf16.msra.mxu0 %v2083
  %6046 = vmatpush.bf16.msra.mxu0 %v2075
  %6047 = vmatpush.bf16.msra.mxu0 %v2067
  %6048 = vmatpush.bf16.msra.mxu0 %v2059
  %6049 = vmatpush.bf16.msra.mxu0 %v2051
  %6050 = vmatpush.bf16.msra.mxu0 %v2043
  %6051 = vmatpush.bf16.msra.mxu0 %v2035
  %6052 = vmatpush.bf16.msra.mxu0 %v2027
  %6053 = vmatmul.bf16.gmra.mxu0 %v54
  %v6054 = vpop.f32.mrf.mxu0
  %v6055 = vadd.f32 %v5981, %v6054
  %v6056 = vpop.f32.mrf.mxu0
  %v6057 = vadd.f32 %v5983, %v6056
  %6058 = vmatmul.bf16.gmra.mxu0 %v56
  %v6059 = vpop.f32.mrf.mxu0
  %v6060 = vadd.f32 %v5986, %v6059
  %v6061 = vpop.f32.mrf.mxu0
  %v6062 = vadd.f32 %v5988, %v6061
  %6063 = vmatmul.bf16.gmra.mxu0 %v58
  %v6064 = vpop.f32.mrf.mxu0
  %v6065 = vadd.f32 %v5991, %v6064
  %v6066 = vpop.f32.mrf.mxu0
  %v6067 = vadd.f32 %v5993, %v6066
  %6068 = vmatmul.bf16.gmra.mxu0 %v60
  %v6069 = vpop.f32.mrf.mxu0
  %v6070 = vadd.f32 %v5996, %v6069
  %v6071 = vpop.f32.mrf.mxu0
  %v6072 = vadd.f32 %v5998, %v6071
  %6073 = vmatmul.bf16.gmra.mxu0 %v62
  %v6074 = vpop.f32.mrf.mxu0
  %v6075 = vadd.f32 %v6001, %v6074
  %v6076 = vpop.f32.mrf.mxu0
  %v6077 = vadd.f32 %v6003, %v6076
  %6078 = vmatmul.bf16.gmra.mxu0 %v64
  %v6079 = vpop.f32.mrf.mxu0
  %v6080 = vadd.f32 %v6006, %v6079
  %v6081 = vpop.f32.mrf.mxu0
  %v6082 = vadd.f32 %v6008, %v6081
  %6083 = vmatmul.bf16.gmra.mxu0 %v66
  %v6084 = vpop.f32.mrf.mxu0
  %v6085 = vadd.f32 %v6011, %v6084
  %v6086 = vpop.f32.mrf.mxu0
  %v6087 = vadd.f32 %v6013, %v6086
  %6088 = vmatmul.bf16.gmra.mxu0 %v68
  %v6089 = vpop.f32.mrf.mxu0
  %v6090 = vadd.f32 %v6016, %v6089
  %v6091 = vpop.f32.mrf.mxu0
  %v6092 = vadd.f32 %v6018, %v6091
  %6093 = vmatmul.bf16.gmra.mxu0 %v70
  %v6094 = vpop.f32.mrf.mxu0
  %v6095 = vadd.f32 %v6021, %v6094
  %v6096 = vpop.f32.mrf.mxu0
  %v6097 = vadd.f32 %v6023, %v6096
  %6098 = vmatmul.bf16.gmra.mxu0 %v72
  %v6099 = vpop.f32.mrf.mxu0
  %v6100 = vadd.f32 %v6026, %v6099
  %v6101 = vpop.f32.mrf.mxu0
  %v6102 = vadd.f32 %v6028, %v6101
  %6103 = vmatmul.bf16.gmra.mxu0 %v74
  %v6104 = vpop.f32.mrf.mxu0
  %v6105 = vadd.f32 %v6031, %v6104
  %v6106 = vpop.f32.mrf.mxu0
  %v6107 = vadd.f32 %v6033, %v6106
  %6108 = vmatmul.bf16.gmra.mxu0 %v76
  %v6109 = vpop.f32.mrf.mxu0
  %v6110 = vadd.f32 %v6036, %v6109
  %v6111 = vpop.f32.mrf.mxu0
  %v6112 = vadd.f32 %v6038, %v6111
  %6113 = vmatmul.bf16.gmra.mxu0 %v78
  %v6114 = vpop.f32.mrf.mxu0
  %v6115 = vadd.f32 %v6041, %v6114
  %v6116 = vpop.f32.mrf.mxu0
  %v6117 = vadd.f32 %v6043, %v6116
  %6118 = vdwg.mxu0
  %6119 = vmatpush.bf16.msra.mxu0 %v2147
  %6120 = vmatpush.bf16.msra.mxu0 %v2139
  %6121 = vmatpush.bf16.msra.mxu0 %v2131
  %6122 = vmatpush.bf16.msra.mxu0 %v2123
  %6123 = vmatpush.bf16.msra.mxu0 %v2115
  %6124 = vmatpush.bf16.msra.mxu0 %v2107
  %6125 = vmatpush.bf16.msra.mxu0 %v2099
  %6126 = vmatpush.bf16.msra.mxu0 %v2091
  %6127 = vmatmul.bf16.gmra.mxu0 %v55
  %v6128 = vpop.f32.mrf.mxu0
  %v6129 = vadd.f32 %v6055, %v6128
  %v6130 = vpop.f32.mrf.mxu0
  %v6131 = vadd.f32 %v6057, %v6130
  %6132 = vmatmul.bf16.gmra.mxu0 %v57
  %v6133 = vpop.f32.mrf.mxu0
  %v6134 = vadd.f32 %v6060, %v6133
  %v6135 = vpop.f32.mrf.mxu0
  %v6136 = vadd.f32 %v6062, %v6135
  %6137 = vmatmul.bf16.gmra.mxu0 %v59
  %v6138 = vpop.f32.mrf.mxu0
  %v6139 = vadd.f32 %v6065, %v6138
  %v6140 = vpop.f32.mrf.mxu0
  %v6141 = vadd.f32 %v6067, %v6140
  %6142 = vmatmul.bf16.gmra.mxu0 %v61
  %v6143 = vpop.f32.mrf.mxu0
  %v6144 = vadd.f32 %v6070, %v6143
  %v6145 = vpop.f32.mrf.mxu0
  %v6146 = vadd.f32 %v6072, %v6145
  %6147 = vmatmul.bf16.gmra.mxu0 %v63
  %v6148 = vpop.f32.mrf.mxu0
  %v6149 = vadd.f32 %v6075, %v6148
  %v6150 = vpop.f32.mrf.mxu0
  %v6151 = vadd.f32 %v6077, %v6150
  %6152 = vmatmul.bf16.gmra.mxu0 %v65
  %v6153 = vpop.f32.mrf.mxu0
  %v6154 = vadd.f32 %v6080, %v6153
  %v6155 = vpop.f32.mrf.mxu0
  %v6156 = vadd.f32 %v6082, %v6155
  %6157 = vmatmul.bf16.gmra.mxu0 %v67
  %v6158 = vpop.f32.mrf.mxu0
  %v6159 = vadd.f32 %v6085, %v6158
  %v6160 = vpop.f32.mrf.mxu0
  %v6161 = vadd.f32 %v6087, %v6160
  %6162 = vmatmul.bf16.gmra.mxu0 %v69
  %v6163 = vpop.f32.mrf.mxu0
  %v6164 = vadd.f32 %v6090, %v6163
  %v6165 = vpop.f32.mrf.mxu0
  %v6166 = vadd.f32 %v6092, %v6165
  %6167 = vmatmul.bf16.gmra.mxu0 %v71
  %v6168 = vpop.f32.mrf.mxu0
  %v6169 = vadd.f32 %v6095, %v6168
  %v6170 = vpop.f32.mrf.mxu0
  %v6171 = vadd.f32 %v6097, %v6170
  %6172 = vmatmul.bf16.gmra.mxu0 %v73
  %v6173 = vpop.f32.mrf.mxu0
  %v6174 = vadd.f32 %v6100, %v6173
  %v6175 = vpop.f32.mrf.mxu0
  %v6176 = vadd.f32 %v6102, %v6175
  %6177 = vmatmul.bf16.gmra.mxu0 %v75
  %v6178 = vpop.f32.mrf.mxu0
  %v6179 = vadd.f32 %v6105, %v6178
  %v6180 = vpop.f32.mrf.mxu0
  %v6181 = vadd.f32 %v6107, %v6180
  %6182 = vmatmul.bf16.gmra.mxu0 %v77
  %v6183 = vpop.f32.mrf.mxu0
  %v6184 = vadd.f32 %v6110, %v6183
  %v6185 = vpop.f32.mrf.mxu0
  %v6186 = vadd.f32 %v6112, %v6185
  %6187 = vmatmul.bf16.gmra.mxu0 %v79
  %v6188 = vpop.f32.mrf.mxu0
  %v6189 = vadd.f32 %v6115, %v6188
  %v6190 = vpop.f32.mrf.mxu0
  %v6191 = vadd.f32 %v6117, %v6190
  %6192 = vdwg.mxu0
  %6193 = vmatpush.bf16.msra.mxu0 %v2211
  %6194 = vmatpush.bf16.msra.mxu0 %v2203
  %6195 = vmatpush.bf16.msra.mxu0 %v2195
  %6196 = vmatpush.bf16.msra.mxu0 %v2187
  %6197 = vmatpush.bf16.msra.mxu0 %v2179
  %6198 = vmatpush.bf16.msra.mxu0 %v2171
  %6199 = vmatpush.bf16.msra.mxu0 %v2163
  %6200 = vmatpush.bf16.msra.mxu0 %v2155
  %6201 = vmatmul.bf16.gmra.mxu0 %v56
  %v6202 = vpop.f32.mrf.mxu0
  %v6203 = vadd.f32 %v6129, %v6202
  %v6204 = vpop.f32.mrf.mxu0
  %v6205 = vadd.f32 %v6131, %v6204
  %6206 = vmatmul.bf16.gmra.mxu0 %v58
  %v6207 = vpop.f32.mrf.mxu0
  %v6208 = vadd.f32 %v6134, %v6207
  %v6209 = vpop.f32.mrf.mxu0
  %v6210 = vadd.f32 %v6136, %v6209
  %6211 = vmatmul.bf16.gmra.mxu0 %v60
  %v6212 = vpop.f32.mrf.mxu0
  %v6213 = vadd.f32 %v6139, %v6212
  %v6214 = vpop.f32.mrf.mxu0
  %v6215 = vadd.f32 %v6141, %v6214
  %6216 = vmatmul.bf16.gmra.mxu0 %v62
  %v6217 = vpop.f32.mrf.mxu0
  %v6218 = vadd.f32 %v6144, %v6217
  %v6219 = vpop.f32.mrf.mxu0
  %v6220 = vadd.f32 %v6146, %v6219
  %6221 = vmatmul.bf16.gmra.mxu0 %v64
  %v6222 = vpop.f32.mrf.mxu0
  %v6223 = vadd.f32 %v6149, %v6222
  %v6224 = vpop.f32.mrf.mxu0
  %v6225 = vadd.f32 %v6151, %v6224
  %6226 = vmatmul.bf16.gmra.mxu0 %v66
  %v6227 = vpop.f32.mrf.mxu0
  %v6228 = vadd.f32 %v6154, %v6227
  %v6229 = vpop.f32.mrf.mxu0
  %v6230 = vadd.f32 %v6156, %v6229
  %6231 = vmatmul.bf16.gmra.mxu0 %v68
  %v6232 = vpop.f32.mrf.mxu0
  %v6233 = vadd.f32 %v6159, %v6232
  %v6234 = vpop.f32.mrf.mxu0
  %v6235 = vadd.f32 %v6161, %v6234
  %6236 = vmatmul.bf16.gmra.mxu0 %v70
  %v6237 = vpop.f32.mrf.mxu0
  %v6238 = vadd.f32 %v6164, %v6237
  %v6239 = vpop.f32.mrf.mxu0
  %v6240 = vadd.f32 %v6166, %v6239
  %6241 = vmatmul.bf16.gmra.mxu0 %v72
  %v6242 = vpop.f32.mrf.mxu0
  %v6243 = vadd.f32 %v6169, %v6242
  %v6244 = vpop.f32.mrf.mxu0
  %v6245 = vadd.f32 %v6171, %v6244
  %6246 = vmatmul.bf16.gmra.mxu0 %v74
  %v6247 = vpop.f32.mrf.mxu0
  %v6248 = vadd.f32 %v6174, %v6247
  %v6249 = vpop.f32.mrf.mxu0
  %v6250 = vadd.f32 %v6176, %v6249
  %6251 = vmatmul.bf16.gmra.mxu0 %v76
  %v6252 = vpop.f32.mrf.mxu0
  %v6253 = vadd.f32 %v6179, %v6252
  %v6254 = vpop.f32.mrf.mxu0
  %v6255 = vadd.f32 %v6181, %v6254
  %6256 = vmatmul.bf16.gmra.mxu0 %v78
  %v6257 = vpop.f32.mrf.mxu0
  %v6258 = vadd.f32 %v6184, %v6257
  %v6259 = vpop.f32.mrf.mxu0
  %v6260 = vadd.f32 %v6186, %v6259
  %6261 = vmatmul.bf16.gmra.mxu0 %v80
  %v6262 = vpop.f32.mrf.mxu0
  %v6263 = vadd.f32 %v6189, %v6262
  %v6264 = vpop.f32.mrf.mxu0
  %v6265 = vadd.f32 %v6191, %v6264
  %6266 = vdwg.mxu0
  %6267 = vmatpush.bf16.msra.mxu0 %v2275
  %6268 = vmatpush.bf16.msra.mxu0 %v2267
  %6269 = vmatpush.bf16.msra.mxu0 %v2259
  %6270 = vmatpush.bf16.msra.mxu0 %v2251
  %6271 = vmatpush.bf16.msra.mxu0 %v2243
  %6272 = vmatpush.bf16.msra.mxu0 %v2235
  %6273 = vmatpush.bf16.msra.mxu0 %v2227
  %6274 = vmatpush.bf16.msra.mxu0 %v2219
  %6275 = vmatmul.bf16.gmra.mxu0 %v57
  %v6276 = vpop.f32.mrf.mxu0
  %v6277 = vadd.f32 %v6203, %v6276
  %v6278 = vpop.f32.mrf.mxu0
  %v6279 = vadd.f32 %v6205, %v6278
  %6280 = vmatmul.bf16.gmra.mxu0 %v59
  %v6281 = vpop.f32.mrf.mxu0
  %v6282 = vadd.f32 %v6208, %v6281
  %v6283 = vpop.f32.mrf.mxu0
  %v6284 = vadd.f32 %v6210, %v6283
  %6285 = vmatmul.bf16.gmra.mxu0 %v61
  %v6286 = vpop.f32.mrf.mxu0
  %v6287 = vadd.f32 %v6213, %v6286
  %v6288 = vpop.f32.mrf.mxu0
  %v6289 = vadd.f32 %v6215, %v6288
  %6290 = vmatmul.bf16.gmra.mxu0 %v63
  %v6291 = vpop.f32.mrf.mxu0
  %v6292 = vadd.f32 %v6218, %v6291
  %v6293 = vpop.f32.mrf.mxu0
  %v6294 = vadd.f32 %v6220, %v6293
  %6295 = vmatmul.bf16.gmra.mxu0 %v65
  %v6296 = vpop.f32.mrf.mxu0
  %v6297 = vadd.f32 %v6223, %v6296
  %v6298 = vpop.f32.mrf.mxu0
  %v6299 = vadd.f32 %v6225, %v6298
  %6300 = vmatmul.bf16.gmra.mxu0 %v67
  %v6301 = vpop.f32.mrf.mxu0
  %v6302 = vadd.f32 %v6228, %v6301
  %v6303 = vpop.f32.mrf.mxu0
  %v6304 = vadd.f32 %v6230, %v6303
  %6305 = vmatmul.bf16.gmra.mxu0 %v69
  %v6306 = vpop.f32.mrf.mxu0
  %v6307 = vadd.f32 %v6233, %v6306
  %v6308 = vpop.f32.mrf.mxu0
  %v6309 = vadd.f32 %v6235, %v6308
  %6310 = vmatmul.bf16.gmra.mxu0 %v71
  %v6311 = vpop.f32.mrf.mxu0
  %v6312 = vadd.f32 %v6238, %v6311
  %v6313 = vpop.f32.mrf.mxu0
  %v6314 = vadd.f32 %v6240, %v6313
  %6315 = vmatmul.bf16.gmra.mxu0 %v73
  %v6316 = vpop.f32.mrf.mxu0
  %v6317 = vadd.f32 %v6243, %v6316
  %v6318 = vpop.f32.mrf.mxu0
  %v6319 = vadd.f32 %v6245, %v6318
  %6320 = vmatmul.bf16.gmra.mxu0 %v75
  %v6321 = vpop.f32.mrf.mxu0
  %v6322 = vadd.f32 %v6248, %v6321
  %v6323 = vpop.f32.mrf.mxu0
  %v6324 = vadd.f32 %v6250, %v6323
  %6325 = vmatmul.bf16.gmra.mxu0 %v77
  %v6326 = vpop.f32.mrf.mxu0
  %v6327 = vadd.f32 %v6253, %v6326
  %v6328 = vpop.f32.mrf.mxu0
  %v6329 = vadd.f32 %v6255, %v6328
  %6330 = vmatmul.bf16.gmra.mxu0 %v79
  %v6331 = vpop.f32.mrf.mxu0
  %v6332 = vadd.f32 %v6258, %v6331
  %v6333 = vpop.f32.mrf.mxu0
  %v6334 = vadd.f32 %v6260, %v6333
  %6335 = vmatmul.bf16.gmra.mxu0 %v81
  %v6336 = vpop.f32.mrf.mxu0
  %v6337 = vadd.f32 %v6263, %v6336
  %v6338 = vpop.f32.mrf.mxu0
  %v6339 = vadd.f32 %v6265, %v6338
  %6340 = vdwg.mxu0
  %6341 = vmatpush.bf16.msra.mxu0 %v2339
  %6342 = vmatpush.bf16.msra.mxu0 %v2331
  %6343 = vmatpush.bf16.msra.mxu0 %v2323
  %6344 = vmatpush.bf16.msra.mxu0 %v2315
  %6345 = vmatpush.bf16.msra.mxu0 %v2307
  %6346 = vmatpush.bf16.msra.mxu0 %v2299
  %6347 = vmatpush.bf16.msra.mxu0 %v2291
  %6348 = vmatpush.bf16.msra.mxu0 %v2283
  %6349 = vmatmul.bf16.gmra.mxu0 %v58
  %v6350 = vpop.f32.mrf.mxu0
  %v6351 = vadd.f32 %v6277, %v6350
  %v6352 = vpop.f32.mrf.mxu0
  %v6353 = vadd.f32 %v6279, %v6352
  %6354 = vmatmul.bf16.gmra.mxu0 %v60
  %v6355 = vpop.f32.mrf.mxu0
  %v6356 = vadd.f32 %v6282, %v6355
  %v6357 = vpop.f32.mrf.mxu0
  %v6358 = vadd.f32 %v6284, %v6357
  %6359 = vmatmul.bf16.gmra.mxu0 %v62
  %v6360 = vpop.f32.mrf.mxu0
  %v6361 = vadd.f32 %v6287, %v6360
  %v6362 = vpop.f32.mrf.mxu0
  %v6363 = vadd.f32 %v6289, %v6362
  %6364 = vmatmul.bf16.gmra.mxu0 %v64
  %v6365 = vpop.f32.mrf.mxu0
  %v6366 = vadd.f32 %v6292, %v6365
  %v6367 = vpop.f32.mrf.mxu0
  %v6368 = vadd.f32 %v6294, %v6367
  %6369 = vmatmul.bf16.gmra.mxu0 %v66
  %v6370 = vpop.f32.mrf.mxu0
  %v6371 = vadd.f32 %v6297, %v6370
  %v6372 = vpop.f32.mrf.mxu0
  %v6373 = vadd.f32 %v6299, %v6372
  %6374 = vmatmul.bf16.gmra.mxu0 %v68
  %v6375 = vpop.f32.mrf.mxu0
  %v6376 = vadd.f32 %v6302, %v6375
  %v6377 = vpop.f32.mrf.mxu0
  %v6378 = vadd.f32 %v6304, %v6377
  %6379 = vmatmul.bf16.gmra.mxu0 %v70
  %v6380 = vpop.f32.mrf.mxu0
  %v6381 = vadd.f32 %v6307, %v6380
  %v6382 = vpop.f32.mrf.mxu0
  %v6383 = vadd.f32 %v6309, %v6382
  %6384 = vmatmul.bf16.gmra.mxu0 %v72
  %v6385 = vpop.f32.mrf.mxu0
  %v6386 = vadd.f32 %v6312, %v6385
  %v6387 = vpop.f32.mrf.mxu0
  %v6388 = vadd.f32 %v6314, %v6387
  %6389 = vmatmul.bf16.gmra.mxu0 %v74
  %v6390 = vpop.f32.mrf.mxu0
  %v6391 = vadd.f32 %v6317, %v6390
  %v6392 = vpop.f32.mrf.mxu0
  %v6393 = vadd.f32 %v6319, %v6392
  %6394 = vmatmul.bf16.gmra.mxu0 %v76
  %v6395 = vpop.f32.mrf.mxu0
  %v6396 = vadd.f32 %v6322, %v6395
  %v6397 = vpop.f32.mrf.mxu0
  %v6398 = vadd.f32 %v6324, %v6397
  %6399 = vmatmul.bf16.gmra.mxu0 %v78
  %v6400 = vpop.f32.mrf.mxu0
  %v6401 = vadd.f32 %v6327, %v6400
  %v6402 = vpop.f32.mrf.mxu0
  %v6403 = vadd.f32 %v6329, %v6402
  %6404 = vmatmul.bf16.gmra.mxu0 %v80
  %v6405 = vpop.f32.mrf.mxu0
  %v6406 = vadd.f32 %v6332, %v6405
  %v6407 = vpop.f32.mrf.mxu0
  %v6408 = vadd.f32 %v6334, %v6407
  %6409 = vmatmul.bf16.gmra.mxu0 %v82
  %v6410 = vpop.f32.mrf.mxu0
  %v6411 = vadd.f32 %v6337, %v6410
  %v6412 = vpop.f32.mrf.mxu0
  %v6413 = vadd.f32 %v6339, %v6412
  %6414 = vdwg.mxu0
  %6415 = vmatpush.bf16.msra.mxu0 %v1956
  %6416 = vmatpush.bf16.msra.mxu0 %v1948
  %6417 = vmatpush.bf16.msra.mxu0 %v1940
  %6418 = vmatpush.bf16.msra.mxu0 %v1932
  %6419 = vmatpush.bf16.msra.mxu0 %v1924
  %6420 = vmatpush.bf16.msra.mxu0 %v1916
  %6421 = vmatpush.bf16.msra.mxu0 %v1908
  %6422 = vmatpush.bf16.msra.mxu0 %v1900
  %6423 = vmatmul.bf16.gmra.mxu0 %v52
  %v6424 = vpop.f32.mrf.mxu0
  %v6425 = vadd.f32 %v540, %v6424
  %v6426 = vpop.f32.mrf.mxu0
  %v6427 = vadd.f32 %v540, %v6426
  %6428 = vmatmul.bf16.gmra.mxu0 %v54
  %v6429 = vpop.f32.mrf.mxu0
  %v6430 = vadd.f32 %v540, %v6429
  %v6431 = vpop.f32.mrf.mxu0
  %v6432 = vadd.f32 %v540, %v6431
  %6433 = vmatmul.bf16.gmra.mxu0 %v56
  %v6434 = vpop.f32.mrf.mxu0
  %v6435 = vadd.f32 %v540, %v6434
  %v6436 = vpop.f32.mrf.mxu0
  %v6437 = vadd.f32 %v540, %v6436
  %6438 = vmatmul.bf16.gmra.mxu0 %v58
  %v6439 = vpop.f32.mrf.mxu0
  %v6440 = vadd.f32 %v540, %v6439
  %v6441 = vpop.f32.mrf.mxu0
  %v6442 = vadd.f32 %v540, %v6441
  %6443 = vmatmul.bf16.gmra.mxu0 %v60
  %v6444 = vpop.f32.mrf.mxu0
  %v6445 = vadd.f32 %v540, %v6444
  %v6446 = vpop.f32.mrf.mxu0
  %v6447 = vadd.f32 %v540, %v6446
  %6448 = vmatmul.bf16.gmra.mxu0 %v62
  %v6449 = vpop.f32.mrf.mxu0
  %v6450 = vadd.f32 %v540, %v6449
  %v6451 = vpop.f32.mrf.mxu0
  %v6452 = vadd.f32 %v540, %v6451
  %6453 = vmatmul.bf16.gmra.mxu0 %v64
  %v6454 = vpop.f32.mrf.mxu0
  %v6455 = vadd.f32 %v540, %v6454
  %v6456 = vpop.f32.mrf.mxu0
  %v6457 = vadd.f32 %v540, %v6456
  %6458 = vmatmul.bf16.gmra.mxu0 %v66
  %v6459 = vpop.f32.mrf.mxu0
  %v6460 = vadd.f32 %v540, %v6459
  %v6461 = vpop.f32.mrf.mxu0
  %v6462 = vadd.f32 %v540, %v6461
  %6463 = vmatmul.bf16.gmra.mxu0 %v68
  %v6464 = vpop.f32.mrf.mxu0
  %v6465 = vadd.f32 %v540, %v6464
  %v6466 = vpop.f32.mrf.mxu0
  %v6467 = vadd.f32 %v540, %v6466
  %6468 = vmatmul.bf16.gmra.mxu0 %v70
  %v6469 = vpop.f32.mrf.mxu0
  %v6470 = vadd.f32 %v540, %v6469
  %v6471 = vpop.f32.mrf.mxu0
  %v6472 = vadd.f32 %v540, %v6471
  %6473 = vmatmul.bf16.gmra.mxu0 %v72
  %v6474 = vpop.f32.mrf.mxu0
  %v6475 = vadd.f32 %v540, %v6474
  %v6476 = vpop.f32.mrf.mxu0
  %v6477 = vadd.f32 %v540, %v6476
  %6478 = vmatmul.bf16.gmra.mxu0 %v74
  %v6479 = vpop.f32.mrf.mxu0
  %v6480 = vadd.f32 %v540, %v6479
  %v6481 = vpop.f32.mrf.mxu0
  %v6482 = vadd.f32 %v540, %v6481
  %6483 = vmatmul.bf16.gmra.mxu0 %v76
  %v6484 = vpop.f32.mrf.mxu0
  %v6485 = vadd.f32 %v540, %v6484
  %v6486 = vpop.f32.mrf.mxu0
  %v6487 = vadd.f32 %v540, %v6486
  %6488 = vdwg.mxu0
  %6489 = vmatpush.bf16.msra.mxu0 %v2020
  %6490 = vmatpush.bf16.msra.mxu0 %v2012
  %6491 = vmatpush.bf16.msra.mxu0 %v2004
  %6492 = vmatpush.bf16.msra.mxu0 %v1996
  %6493 = vmatpush.bf16.msra.mxu0 %v1988
  %6494 = vmatpush.bf16.msra.mxu0 %v1980
  %6495 = vmatpush.bf16.msra.mxu0 %v1972
  %6496 = vmatpush.bf16.msra.mxu0 %v1964
  %6497 = vmatmul.bf16.gmra.mxu0 %v53
  %v6498 = vpop.f32.mrf.mxu0
  %v6499 = vadd.f32 %v6425, %v6498
  %v6500 = vpop.f32.mrf.mxu0
  %v6501 = vadd.f32 %v6427, %v6500
  %6502 = vmatmul.bf16.gmra.mxu0 %v55
  %v6503 = vpop.f32.mrf.mxu0
  %v6504 = vadd.f32 %v6430, %v6503
  %v6505 = vpop.f32.mrf.mxu0
  %v6506 = vadd.f32 %v6432, %v6505
  %6507 = vmatmul.bf16.gmra.mxu0 %v57
  %v6508 = vpop.f32.mrf.mxu0
  %v6509 = vadd.f32 %v6435, %v6508
  %v6510 = vpop.f32.mrf.mxu0
  %v6511 = vadd.f32 %v6437, %v6510
  %6512 = vmatmul.bf16.gmra.mxu0 %v59
  %v6513 = vpop.f32.mrf.mxu0
  %v6514 = vadd.f32 %v6440, %v6513
  %v6515 = vpop.f32.mrf.mxu0
  %v6516 = vadd.f32 %v6442, %v6515
  %6517 = vmatmul.bf16.gmra.mxu0 %v61
  %v6518 = vpop.f32.mrf.mxu0
  %v6519 = vadd.f32 %v6445, %v6518
  %v6520 = vpop.f32.mrf.mxu0
  %v6521 = vadd.f32 %v6447, %v6520
  %6522 = vmatmul.bf16.gmra.mxu0 %v63
  %v6523 = vpop.f32.mrf.mxu0
  %v6524 = vadd.f32 %v6450, %v6523
  %v6525 = vpop.f32.mrf.mxu0
  %v6526 = vadd.f32 %v6452, %v6525
  %6527 = vmatmul.bf16.gmra.mxu0 %v65
  %v6528 = vpop.f32.mrf.mxu0
  %v6529 = vadd.f32 %v6455, %v6528
  %v6530 = vpop.f32.mrf.mxu0
  %v6531 = vadd.f32 %v6457, %v6530
  %6532 = vmatmul.bf16.gmra.mxu0 %v67
  %v6533 = vpop.f32.mrf.mxu0
  %v6534 = vadd.f32 %v6460, %v6533
  %v6535 = vpop.f32.mrf.mxu0
  %v6536 = vadd.f32 %v6462, %v6535
  %6537 = vmatmul.bf16.gmra.mxu0 %v69
  %v6538 = vpop.f32.mrf.mxu0
  %v6539 = vadd.f32 %v6465, %v6538
  %v6540 = vpop.f32.mrf.mxu0
  %v6541 = vadd.f32 %v6467, %v6540
  %6542 = vmatmul.bf16.gmra.mxu0 %v71
  %v6543 = vpop.f32.mrf.mxu0
  %v6544 = vadd.f32 %v6470, %v6543
  %v6545 = vpop.f32.mrf.mxu0
  %v6546 = vadd.f32 %v6472, %v6545
  %6547 = vmatmul.bf16.gmra.mxu0 %v73
  %v6548 = vpop.f32.mrf.mxu0
  %v6549 = vadd.f32 %v6475, %v6548
  %v6550 = vpop.f32.mrf.mxu0
  %v6551 = vadd.f32 %v6477, %v6550
  %6552 = vmatmul.bf16.gmra.mxu0 %v75
  %v6553 = vpop.f32.mrf.mxu0
  %v6554 = vadd.f32 %v6480, %v6553
  %v6555 = vpop.f32.mrf.mxu0
  %v6556 = vadd.f32 %v6482, %v6555
  %6557 = vmatmul.bf16.gmra.mxu0 %v77
  %v6558 = vpop.f32.mrf.mxu0
  %v6559 = vadd.f32 %v6485, %v6558
  %v6560 = vpop.f32.mrf.mxu0
  %v6561 = vadd.f32 %v6487, %v6560
  %6562 = vdwg.mxu0
  %6563 = vmatpush.bf16.msra.mxu0 %v2084
  %6564 = vmatpush.bf16.msra.mxu0 %v2076
  %6565 = vmatpush.bf16.msra.mxu0 %v2068
  %6566 = vmatpush.bf16.msra.mxu0 %v2060
  %6567 = vmatpush.bf16.msra.mxu0 %v2052
  %6568 = vmatpush.bf16.msra.mxu0 %v2044
  %6569 = vmatpush.bf16.msra.mxu0 %v2036
  %6570 = vmatpush.bf16.msra.mxu0 %v2028
  %6571 = vmatmul.bf16.gmra.mxu0 %v54
  %v6572 = vpop.f32.mrf.mxu0
  %v6573 = vadd.f32 %v6499, %v6572
  %v6574 = vpop.f32.mrf.mxu0
  %v6575 = vadd.f32 %v6501, %v6574
  %6576 = vmatmul.bf16.gmra.mxu0 %v56
  %v6577 = vpop.f32.mrf.mxu0
  %v6578 = vadd.f32 %v6504, %v6577
  %v6579 = vpop.f32.mrf.mxu0
  %v6580 = vadd.f32 %v6506, %v6579
  %6581 = vmatmul.bf16.gmra.mxu0 %v58
  %v6582 = vpop.f32.mrf.mxu0
  %v6583 = vadd.f32 %v6509, %v6582
  %v6584 = vpop.f32.mrf.mxu0
  %v6585 = vadd.f32 %v6511, %v6584
  %6586 = vmatmul.bf16.gmra.mxu0 %v60
  %v6587 = vpop.f32.mrf.mxu0
  %v6588 = vadd.f32 %v6514, %v6587
  %v6589 = vpop.f32.mrf.mxu0
  %v6590 = vadd.f32 %v6516, %v6589
  %6591 = vmatmul.bf16.gmra.mxu0 %v62
  %v6592 = vpop.f32.mrf.mxu0
  %v6593 = vadd.f32 %v6519, %v6592
  %v6594 = vpop.f32.mrf.mxu0
  %v6595 = vadd.f32 %v6521, %v6594
  %6596 = vmatmul.bf16.gmra.mxu0 %v64
  %v6597 = vpop.f32.mrf.mxu0
  %v6598 = vadd.f32 %v6524, %v6597
  %v6599 = vpop.f32.mrf.mxu0
  %v6600 = vadd.f32 %v6526, %v6599
  %6601 = vmatmul.bf16.gmra.mxu0 %v66
  %v6602 = vpop.f32.mrf.mxu0
  %v6603 = vadd.f32 %v6529, %v6602
  %v6604 = vpop.f32.mrf.mxu0
  %v6605 = vadd.f32 %v6531, %v6604
  %6606 = vmatmul.bf16.gmra.mxu0 %v68
  %v6607 = vpop.f32.mrf.mxu0
  %v6608 = vadd.f32 %v6534, %v6607
  %v6609 = vpop.f32.mrf.mxu0
  %v6610 = vadd.f32 %v6536, %v6609
  %6611 = vmatmul.bf16.gmra.mxu0 %v70
  %v6612 = vpop.f32.mrf.mxu0
  %v6613 = vadd.f32 %v6539, %v6612
  %v6614 = vpop.f32.mrf.mxu0
  %v6615 = vadd.f32 %v6541, %v6614
  %6616 = vmatmul.bf16.gmra.mxu0 %v72
  %v6617 = vpop.f32.mrf.mxu0
  %v6618 = vadd.f32 %v6544, %v6617
  %v6619 = vpop.f32.mrf.mxu0
  %v6620 = vadd.f32 %v6546, %v6619
  %6621 = vmatmul.bf16.gmra.mxu0 %v74
  %v6622 = vpop.f32.mrf.mxu0
  %v6623 = vadd.f32 %v6549, %v6622
  %v6624 = vpop.f32.mrf.mxu0
  %v6625 = vadd.f32 %v6551, %v6624
  %6626 = vmatmul.bf16.gmra.mxu0 %v76
  %v6627 = vpop.f32.mrf.mxu0
  %v6628 = vadd.f32 %v6554, %v6627
  %v6629 = vpop.f32.mrf.mxu0
  %v6630 = vadd.f32 %v6556, %v6629
  %6631 = vmatmul.bf16.gmra.mxu0 %v78
  %v6632 = vpop.f32.mrf.mxu0
  %v6633 = vadd.f32 %v6559, %v6632
  %v6634 = vpop.f32.mrf.mxu0
  %v6635 = vadd.f32 %v6561, %v6634
  %6636 = vdwg.mxu0
  %6637 = vmatpush.bf16.msra.mxu0 %v2148
  %6638 = vmatpush.bf16.msra.mxu0 %v2140
  %6639 = vmatpush.bf16.msra.mxu0 %v2132
  %6640 = vmatpush.bf16.msra.mxu0 %v2124
  %6641 = vmatpush.bf16.msra.mxu0 %v2116
  %6642 = vmatpush.bf16.msra.mxu0 %v2108
  %6643 = vmatpush.bf16.msra.mxu0 %v2100
  %6644 = vmatpush.bf16.msra.mxu0 %v2092
  %6645 = vmatmul.bf16.gmra.mxu0 %v55
  %v6646 = vpop.f32.mrf.mxu0
  %v6647 = vadd.f32 %v6573, %v6646
  %v6648 = vpop.f32.mrf.mxu0
  %v6649 = vadd.f32 %v6575, %v6648
  %6650 = vmatmul.bf16.gmra.mxu0 %v57
  %v6651 = vpop.f32.mrf.mxu0
  %v6652 = vadd.f32 %v6578, %v6651
  %v6653 = vpop.f32.mrf.mxu0
  %v6654 = vadd.f32 %v6580, %v6653
  %6655 = vmatmul.bf16.gmra.mxu0 %v59
  %v6656 = vpop.f32.mrf.mxu0
  %v6657 = vadd.f32 %v6583, %v6656
  %v6658 = vpop.f32.mrf.mxu0
  %v6659 = vadd.f32 %v6585, %v6658
  %6660 = vmatmul.bf16.gmra.mxu0 %v61
  %v6661 = vpop.f32.mrf.mxu0
  %v6662 = vadd.f32 %v6588, %v6661
  %v6663 = vpop.f32.mrf.mxu0
  %v6664 = vadd.f32 %v6590, %v6663
  %6665 = vmatmul.bf16.gmra.mxu0 %v63
  %v6666 = vpop.f32.mrf.mxu0
  %v6667 = vadd.f32 %v6593, %v6666
  %v6668 = vpop.f32.mrf.mxu0
  %v6669 = vadd.f32 %v6595, %v6668
  %6670 = vmatmul.bf16.gmra.mxu0 %v65
  %v6671 = vpop.f32.mrf.mxu0
  %v6672 = vadd.f32 %v6598, %v6671
  %v6673 = vpop.f32.mrf.mxu0
  %v6674 = vadd.f32 %v6600, %v6673
  %6675 = vmatmul.bf16.gmra.mxu0 %v67
  %v6676 = vpop.f32.mrf.mxu0
  %v6677 = vadd.f32 %v6603, %v6676
  %v6678 = vpop.f32.mrf.mxu0
  %v6679 = vadd.f32 %v6605, %v6678
  %6680 = vmatmul.bf16.gmra.mxu0 %v69
  %v6681 = vpop.f32.mrf.mxu0
  %v6682 = vadd.f32 %v6608, %v6681
  %v6683 = vpop.f32.mrf.mxu0
  %v6684 = vadd.f32 %v6610, %v6683
  %6685 = vmatmul.bf16.gmra.mxu0 %v71
  %v6686 = vpop.f32.mrf.mxu0
  %v6687 = vadd.f32 %v6613, %v6686
  %v6688 = vpop.f32.mrf.mxu0
  %v6689 = vadd.f32 %v6615, %v6688
  %6690 = vmatmul.bf16.gmra.mxu0 %v73
  %v6691 = vpop.f32.mrf.mxu0
  %v6692 = vadd.f32 %v6618, %v6691
  %v6693 = vpop.f32.mrf.mxu0
  %v6694 = vadd.f32 %v6620, %v6693
  %6695 = vmatmul.bf16.gmra.mxu0 %v75
  %v6696 = vpop.f32.mrf.mxu0
  %v6697 = vadd.f32 %v6623, %v6696
  %v6698 = vpop.f32.mrf.mxu0
  %v6699 = vadd.f32 %v6625, %v6698
  %6700 = vmatmul.bf16.gmra.mxu0 %v77
  %v6701 = vpop.f32.mrf.mxu0
  %v6702 = vadd.f32 %v6628, %v6701
  %v6703 = vpop.f32.mrf.mxu0
  %v6704 = vadd.f32 %v6630, %v6703
  %6705 = vmatmul.bf16.gmra.mxu0 %v79
  %v6706 = vpop.f32.mrf.mxu0
  %v6707 = vadd.f32 %v6633, %v6706
  %v6708 = vpop.f32.mrf.mxu0
  %v6709 = vadd.f32 %v6635, %v6708
  %6710 = vdwg.mxu0
  %6711 = vmatpush.bf16.msra.mxu0 %v2212
  %6712 = vmatpush.bf16.msra.mxu0 %v2204
  %6713 = vmatpush.bf16.msra.mxu0 %v2196
  %6714 = vmatpush.bf16.msra.mxu0 %v2188
  %6715 = vmatpush.bf16.msra.mxu0 %v2180
  %6716 = vmatpush.bf16.msra.mxu0 %v2172
  %6717 = vmatpush.bf16.msra.mxu0 %v2164
  %6718 = vmatpush.bf16.msra.mxu0 %v2156
  %6719 = vmatmul.bf16.gmra.mxu0 %v56
  %v6720 = vpop.f32.mrf.mxu0
  %v6721 = vadd.f32 %v6647, %v6720
  %v6722 = vpop.f32.mrf.mxu0
  %v6723 = vadd.f32 %v6649, %v6722
  %6724 = vmatmul.bf16.gmra.mxu0 %v58
  %v6725 = vpop.f32.mrf.mxu0
  %v6726 = vadd.f32 %v6652, %v6725
  %v6727 = vpop.f32.mrf.mxu0
  %v6728 = vadd.f32 %v6654, %v6727
  %6729 = vmatmul.bf16.gmra.mxu0 %v60
  %v6730 = vpop.f32.mrf.mxu0
  %v6731 = vadd.f32 %v6657, %v6730
  %v6732 = vpop.f32.mrf.mxu0
  %v6733 = vadd.f32 %v6659, %v6732
  %6734 = vmatmul.bf16.gmra.mxu0 %v62
  %v6735 = vpop.f32.mrf.mxu0
  %v6736 = vadd.f32 %v6662, %v6735
  %v6737 = vpop.f32.mrf.mxu0
  %v6738 = vadd.f32 %v6664, %v6737
  %6739 = vmatmul.bf16.gmra.mxu0 %v64
  %v6740 = vpop.f32.mrf.mxu0
  %v6741 = vadd.f32 %v6667, %v6740
  %v6742 = vpop.f32.mrf.mxu0
  %v6743 = vadd.f32 %v6669, %v6742
  %6744 = vmatmul.bf16.gmra.mxu0 %v66
  %v6745 = vpop.f32.mrf.mxu0
  %v6746 = vadd.f32 %v6672, %v6745
  %v6747 = vpop.f32.mrf.mxu0
  %v6748 = vadd.f32 %v6674, %v6747
  %6749 = vmatmul.bf16.gmra.mxu0 %v68
  %v6750 = vpop.f32.mrf.mxu0
  %v6751 = vadd.f32 %v6677, %v6750
  %v6752 = vpop.f32.mrf.mxu0
  %v6753 = vadd.f32 %v6679, %v6752
  %6754 = vmatmul.bf16.gmra.mxu0 %v70
  %v6755 = vpop.f32.mrf.mxu0
  %v6756 = vadd.f32 %v6682, %v6755
  %v6757 = vpop.f32.mrf.mxu0
  %v6758 = vadd.f32 %v6684, %v6757
  %6759 = vmatmul.bf16.gmra.mxu0 %v72
  %v6760 = vpop.f32.mrf.mxu0
  %v6761 = vadd.f32 %v6687, %v6760
  %v6762 = vpop.f32.mrf.mxu0
  %v6763 = vadd.f32 %v6689, %v6762
  %6764 = vmatmul.bf16.gmra.mxu0 %v74
  %v6765 = vpop.f32.mrf.mxu0
  %v6766 = vadd.f32 %v6692, %v6765
  %v6767 = vpop.f32.mrf.mxu0
  %v6768 = vadd.f32 %v6694, %v6767
  %6769 = vmatmul.bf16.gmra.mxu0 %v76
  %v6770 = vpop.f32.mrf.mxu0
  %v6771 = vadd.f32 %v6697, %v6770
  %v6772 = vpop.f32.mrf.mxu0
  %v6773 = vadd.f32 %v6699, %v6772
  %6774 = vmatmul.bf16.gmra.mxu0 %v78
  %v6775 = vpop.f32.mrf.mxu0
  %v6776 = vadd.f32 %v6702, %v6775
  %v6777 = vpop.f32.mrf.mxu0
  %v6778 = vadd.f32 %v6704, %v6777
  %6779 = vmatmul.bf16.gmra.mxu0 %v80
  %v6780 = vpop.f32.mrf.mxu0
  %v6781 = vadd.f32 %v6707, %v6780
  %v6782 = vpop.f32.mrf.mxu0
  %v6783 = vadd.f32 %v6709, %v6782
  %6784 = vdwg.mxu0
  %6785 = vmatpush.bf16.msra.mxu0 %v2276
  %6786 = vmatpush.bf16.msra.mxu0 %v2268
  %6787 = vmatpush.bf16.msra.mxu0 %v2260
  %6788 = vmatpush.bf16.msra.mxu0 %v2252
  %6789 = vmatpush.bf16.msra.mxu0 %v2244
  %6790 = vmatpush.bf16.msra.mxu0 %v2236
  %6791 = vmatpush.bf16.msra.mxu0 %v2228
  %6792 = vmatpush.bf16.msra.mxu0 %v2220
  %6793 = vmatmul.bf16.gmra.mxu0 %v57
  %v6794 = vpop.f32.mrf.mxu0
  %v6795 = vadd.f32 %v6721, %v6794
  %v6796 = vpop.f32.mrf.mxu0
  %v6797 = vadd.f32 %v6723, %v6796
  %6798 = vmatmul.bf16.gmra.mxu0 %v59
  %v6799 = vpop.f32.mrf.mxu0
  %v6800 = vadd.f32 %v6726, %v6799
  %v6801 = vpop.f32.mrf.mxu0
  %v6802 = vadd.f32 %v6728, %v6801
  %6803 = vmatmul.bf16.gmra.mxu0 %v61
  %v6804 = vpop.f32.mrf.mxu0
  %v6805 = vadd.f32 %v6731, %v6804
  %v6806 = vpop.f32.mrf.mxu0
  %v6807 = vadd.f32 %v6733, %v6806
  %6808 = vmatmul.bf16.gmra.mxu0 %v63
  %v6809 = vpop.f32.mrf.mxu0
  %v6810 = vadd.f32 %v6736, %v6809
  %v6811 = vpop.f32.mrf.mxu0
  %v6812 = vadd.f32 %v6738, %v6811
  %6813 = vmatmul.bf16.gmra.mxu0 %v65
  %v6814 = vpop.f32.mrf.mxu0
  %v6815 = vadd.f32 %v6741, %v6814
  %v6816 = vpop.f32.mrf.mxu0
  %v6817 = vadd.f32 %v6743, %v6816
  %6818 = vmatmul.bf16.gmra.mxu0 %v67
  %v6819 = vpop.f32.mrf.mxu0
  %v6820 = vadd.f32 %v6746, %v6819
  %v6821 = vpop.f32.mrf.mxu0
  %v6822 = vadd.f32 %v6748, %v6821
  %6823 = vmatmul.bf16.gmra.mxu0 %v69
  %v6824 = vpop.f32.mrf.mxu0
  %v6825 = vadd.f32 %v6751, %v6824
  %v6826 = vpop.f32.mrf.mxu0
  %v6827 = vadd.f32 %v6753, %v6826
  %6828 = vmatmul.bf16.gmra.mxu0 %v71
  %v6829 = vpop.f32.mrf.mxu0
  %v6830 = vadd.f32 %v6756, %v6829
  %v6831 = vpop.f32.mrf.mxu0
  %v6832 = vadd.f32 %v6758, %v6831
  %6833 = vmatmul.bf16.gmra.mxu0 %v73
  %v6834 = vpop.f32.mrf.mxu0
  %v6835 = vadd.f32 %v6761, %v6834
  %v6836 = vpop.f32.mrf.mxu0
  %v6837 = vadd.f32 %v6763, %v6836
  %6838 = vmatmul.bf16.gmra.mxu0 %v75
  %v6839 = vpop.f32.mrf.mxu0
  %v6840 = vadd.f32 %v6766, %v6839
  %v6841 = vpop.f32.mrf.mxu0
  %v6842 = vadd.f32 %v6768, %v6841
  %6843 = vmatmul.bf16.gmra.mxu0 %v77
  %v6844 = vpop.f32.mrf.mxu0
  %v6845 = vadd.f32 %v6771, %v6844
  %v6846 = vpop.f32.mrf.mxu0
  %v6847 = vadd.f32 %v6773, %v6846
  %6848 = vmatmul.bf16.gmra.mxu0 %v79
  %v6849 = vpop.f32.mrf.mxu0
  %v6850 = vadd.f32 %v6776, %v6849
  %v6851 = vpop.f32.mrf.mxu0
  %v6852 = vadd.f32 %v6778, %v6851
  %6853 = vmatmul.bf16.gmra.mxu0 %v81
  %v6854 = vpop.f32.mrf.mxu0
  %v6855 = vadd.f32 %v6781, %v6854
  %v6856 = vpop.f32.mrf.mxu0
  %v6857 = vadd.f32 %v6783, %v6856
  %6858 = vdwg.mxu0
  %6859 = vmatpush.bf16.msra.mxu0 %v2340
  %6860 = vmatpush.bf16.msra.mxu0 %v2332
  %6861 = vmatpush.bf16.msra.mxu0 %v2324
  %6862 = vmatpush.bf16.msra.mxu0 %v2316
  %6863 = vmatpush.bf16.msra.mxu0 %v2308
  %6864 = vmatpush.bf16.msra.mxu0 %v2300
  %6865 = vmatpush.bf16.msra.mxu0 %v2292
  %6866 = vmatpush.bf16.msra.mxu0 %v2284
  %6867 = vmatmul.bf16.gmra.mxu0 %v58
  %v6868 = vpop.f32.mrf.mxu0
  %v6869 = vadd.f32 %v6795, %v6868
  %v6870 = vpop.f32.mrf.mxu0
  %v6871 = vadd.f32 %v6797, %v6870
  %6872 = vmatmul.bf16.gmra.mxu0 %v60
  %v6873 = vpop.f32.mrf.mxu0
  %v6874 = vadd.f32 %v6800, %v6873
  %v6875 = vpop.f32.mrf.mxu0
  %v6876 = vadd.f32 %v6802, %v6875
  %6877 = vmatmul.bf16.gmra.mxu0 %v62
  %v6878 = vpop.f32.mrf.mxu0
  %v6879 = vadd.f32 %v6805, %v6878
  %v6880 = vpop.f32.mrf.mxu0
  %v6881 = vadd.f32 %v6807, %v6880
  %6882 = vmatmul.bf16.gmra.mxu0 %v64
  %v6883 = vpop.f32.mrf.mxu0
  %v6884 = vadd.f32 %v6810, %v6883
  %v6885 = vpop.f32.mrf.mxu0
  %v6886 = vadd.f32 %v6812, %v6885
  %6887 = vmatmul.bf16.gmra.mxu0 %v66
  %v6888 = vpop.f32.mrf.mxu0
  %v6889 = vadd.f32 %v6815, %v6888
  %v6890 = vpop.f32.mrf.mxu0
  %v6891 = vadd.f32 %v6817, %v6890
  %6892 = vmatmul.bf16.gmra.mxu0 %v68
  %v6893 = vpop.f32.mrf.mxu0
  %v6894 = vadd.f32 %v6820, %v6893
  %v6895 = vpop.f32.mrf.mxu0
  %v6896 = vadd.f32 %v6822, %v6895
  %6897 = vmatmul.bf16.gmra.mxu0 %v70
  %v6898 = vpop.f32.mrf.mxu0
  %v6899 = vadd.f32 %v6825, %v6898
  %v6900 = vpop.f32.mrf.mxu0
  %v6901 = vadd.f32 %v6827, %v6900
  %6902 = vmatmul.bf16.gmra.mxu0 %v72
  %v6903 = vpop.f32.mrf.mxu0
  %v6904 = vadd.f32 %v6830, %v6903
  %v6905 = vpop.f32.mrf.mxu0
  %v6906 = vadd.f32 %v6832, %v6905
  %6907 = vmatmul.bf16.gmra.mxu0 %v74
  %v6908 = vpop.f32.mrf.mxu0
  %v6909 = vadd.f32 %v6835, %v6908
  %v6910 = vpop.f32.mrf.mxu0
  %v6911 = vadd.f32 %v6837, %v6910
  %6912 = vmatmul.bf16.gmra.mxu0 %v76
  %v6913 = vpop.f32.mrf.mxu0
  %v6914 = vadd.f32 %v6840, %v6913
  %v6915 = vpop.f32.mrf.mxu0
  %v6916 = vadd.f32 %v6842, %v6915
  %6917 = vmatmul.bf16.gmra.mxu0 %v78
  %v6918 = vpop.f32.mrf.mxu0
  %v6919 = vadd.f32 %v6845, %v6918
  %v6920 = vpop.f32.mrf.mxu0
  %v6921 = vadd.f32 %v6847, %v6920
  %6922 = vmatmul.bf16.gmra.mxu0 %v80
  %v6923 = vpop.f32.mrf.mxu0
  %v6924 = vadd.f32 %v6850, %v6923
  %v6925 = vpop.f32.mrf.mxu0
  %v6926 = vadd.f32 %v6852, %v6925
  %6927 = vmatmul.bf16.gmra.mxu0 %v82
  %v6928 = vpop.f32.mrf.mxu0
  %v6929 = vadd.f32 %v6855, %v6928
  %v6930 = vpop.f32.mrf.mxu0
  %v6931 = vadd.f32 %v6857, %v6930
  %6932 = vdwg.mxu0
  %v6933 = vmax.f32 %v3243, 0.0
  %v6934 = vmax.f32 %v3761, 0.0
  %v6935 = vmax.f32 %v4279, 0.0
  %v6936 = vmax.f32 %v4797, 0.0
  %v6937 = vmax.f32 %v5315, 0.0
  %v6938 = vmax.f32 %v5833, 0.0
  %v6939 = vmax.f32 %v6351, 0.0
  %v6940 = vmax.f32 %v6869, 0.0
  %v6941 = vmax.f32 %v3245, 0.0
  %v6942 = vmax.f32 %v3763, 0.0
  %v6943 = vmax.f32 %v4281, 0.0
  %v6944 = vmax.f32 %v4799, 0.0
  %v6945 = vmax.f32 %v5317, 0.0
  %v6946 = vmax.f32 %v5835, 0.0
  %v6947 = vmax.f32 %v6353, 0.0
  %v6948 = vmax.f32 %v6871, 0.0
  %v6949 = vmax.f32 %v3248, 0.0
  %v6950 = vmax.f32 %v3766, 0.0
  %v6951 = vmax.f32 %v4284, 0.0
  %v6952 = vmax.f32 %v4802, 0.0
  %v6953 = vmax.f32 %v5320, 0.0
  %v6954 = vmax.f32 %v5838, 0.0
  %v6955 = vmax.f32 %v6356, 0.0
  %v6956 = vmax.f32 %v6874, 0.0
  %v6957 = vmax.f32 %v3250, 0.0
  %v6958 = vmax.f32 %v3768, 0.0
  %v6959 = vmax.f32 %v4286, 0.0
  %v6960 = vmax.f32 %v4804, 0.0
  %v6961 = vmax.f32 %v5322, 0.0
  %v6962 = vmax.f32 %v5840, 0.0
  %v6963 = vmax.f32 %v6358, 0.0
  %v6964 = vmax.f32 %v6876, 0.0
  %v6965 = vmax.f32 %v3253, 0.0
  %v6966 = vmax.f32 %v3771, 0.0
  %v6967 = vmax.f32 %v4289, 0.0
  %v6968 = vmax.f32 %v4807, 0.0
  %v6969 = vmax.f32 %v5325, 0.0
  %v6970 = vmax.f32 %v5843, 0.0
  %v6971 = vmax.f32 %v6361, 0.0
  %v6972 = vmax.f32 %v6879, 0.0
  %v6973 = vmax.f32 %v3255, 0.0
  %v6974 = vmax.f32 %v3773, 0.0
  %v6975 = vmax.f32 %v4291, 0.0
  %v6976 = vmax.f32 %v4809, 0.0
  %v6977 = vmax.f32 %v5327, 0.0
  %v6978 = vmax.f32 %v5845, 0.0
  %v6979 = vmax.f32 %v6363, 0.0
  %v6980 = vmax.f32 %v6881, 0.0
  %v6981 = vmax.f32 %v3258, 0.0
  %v6982 = vmax.f32 %v3776, 0.0
  %v6983 = vmax.f32 %v4294, 0.0
  %v6984 = vmax.f32 %v4812, 0.0
  %v6985 = vmax.f32 %v5330, 0.0
  %v6986 = vmax.f32 %v5848, 0.0
  %v6987 = vmax.f32 %v6366, 0.0
  %v6988 = vmax.f32 %v6884, 0.0
  %v6989 = vmax.f32 %v3260, 0.0
  %v6990 = vmax.f32 %v3778, 0.0
  %v6991 = vmax.f32 %v4296, 0.0
  %v6992 = vmax.f32 %v4814, 0.0
  %v6993 = vmax.f32 %v5332, 0.0
  %v6994 = vmax.f32 %v5850, 0.0
  %v6995 = vmax.f32 %v6368, 0.0
  %v6996 = vmax.f32 %v6886, 0.0
  %v6997 = vmax.f32 %v3263, 0.0
  %v6998 = vmax.f32 %v3781, 0.0
  %v6999 = vmax.f32 %v4299, 0.0
  %v7000 = vmax.f32 %v4817, 0.0
  %v7001 = vmax.f32 %v5335, 0.0
  %v7002 = vmax.f32 %v5853, 0.0
  %v7003 = vmax.f32 %v6371, 0.0
  %v7004 = vmax.f32 %v6889, 0.0
  %v7005 = vmax.f32 %v3265, 0.0
  %v7006 = vmax.f32 %v3783, 0.0
  %v7007 = vmax.f32 %v4301, 0.0
  %v7008 = vmax.f32 %v4819, 0.0
  %v7009 = vmax.f32 %v5337, 0.0
  %v7010 = vmax.f32 %v5855, 0.0
  %v7011 = vmax.f32 %v6373, 0.0
  %v7012 = vmax.f32 %v6891, 0.0
  %v7013 = vmax.f32 %v3268, 0.0
  %v7014 = vmax.f32 %v3786, 0.0
  %v7015 = vmax.f32 %v4304, 0.0
  %v7016 = vmax.f32 %v4822, 0.0
  %v7017 = vmax.f32 %v5340, 0.0
  %v7018 = vmax.f32 %v5858, 0.0
  %v7019 = vmax.f32 %v6376, 0.0
  %v7020 = vmax.f32 %v6894, 0.0
  %v7021 = vmax.f32 %v3270, 0.0
  %v7022 = vmax.f32 %v3788, 0.0
  %v7023 = vmax.f32 %v4306, 0.0
  %v7024 = vmax.f32 %v4824, 0.0
  %v7025 = vmax.f32 %v5342, 0.0
  %v7026 = vmax.f32 %v5860, 0.0
  %v7027 = vmax.f32 %v6378, 0.0
  %v7028 = vmax.f32 %v6896, 0.0
  %v7029 = vmax.f32 %v3273, 0.0
  %v7030 = vmax.f32 %v3791, 0.0
  %v7031 = vmax.f32 %v4309, 0.0
  %v7032 = vmax.f32 %v4827, 0.0
  %v7033 = vmax.f32 %v5345, 0.0
  %v7034 = vmax.f32 %v5863, 0.0
  %v7035 = vmax.f32 %v6381, 0.0
  %v7036 = vmax.f32 %v6899, 0.0
  %v7037 = vmax.f32 %v3275, 0.0
  %v7038 = vmax.f32 %v3793, 0.0
  %v7039 = vmax.f32 %v4311, 0.0
  %v7040 = vmax.f32 %v4829, 0.0
  %v7041 = vmax.f32 %v5347, 0.0
  %v7042 = vmax.f32 %v5865, 0.0
  %v7043 = vmax.f32 %v6383, 0.0
  %v7044 = vmax.f32 %v6901, 0.0
  %v7045 = vmax.f32 %v3278, 0.0
  %v7046 = vmax.f32 %v3796, 0.0
  %v7047 = vmax.f32 %v4314, 0.0
  %v7048 = vmax.f32 %v4832, 0.0
  %v7049 = vmax.f32 %v5350, 0.0
  %v7050 = vmax.f32 %v5868, 0.0
  %v7051 = vmax.f32 %v6386, 0.0
  %v7052 = vmax.f32 %v6904, 0.0
  %v7053 = vmax.f32 %v3280, 0.0
  %v7054 = vmax.f32 %v3798, 0.0
  %v7055 = vmax.f32 %v4316, 0.0
  %v7056 = vmax.f32 %v4834, 0.0
  %v7057 = vmax.f32 %v5352, 0.0
  %v7058 = vmax.f32 %v5870, 0.0
  %v7059 = vmax.f32 %v6388, 0.0
  %v7060 = vmax.f32 %v6906, 0.0
  %v7061 = vmax.f32 %v3283, 0.0
  %v7062 = vmax.f32 %v3801, 0.0
  %v7063 = vmax.f32 %v4319, 0.0
  %v7064 = vmax.f32 %v4837, 0.0
  %v7065 = vmax.f32 %v5355, 0.0
  %v7066 = vmax.f32 %v5873, 0.0
  %v7067 = vmax.f32 %v6391, 0.0
  %v7068 = vmax.f32 %v6909, 0.0
  %v7069 = vmax.f32 %v3285, 0.0
  %v7070 = vmax.f32 %v3803, 0.0
  %v7071 = vmax.f32 %v4321, 0.0
  %v7072 = vmax.f32 %v4839, 0.0
  %v7073 = vmax.f32 %v5357, 0.0
  %v7074 = vmax.f32 %v5875, 0.0
  %v7075 = vmax.f32 %v6393, 0.0
  %v7076 = vmax.f32 %v6911, 0.0
  %v7077 = vmax.f32 %v3288, 0.0
  %v7078 = vmax.f32 %v3806, 0.0
  %v7079 = vmax.f32 %v4324, 0.0
  %v7080 = vmax.f32 %v4842, 0.0
  %v7081 = vmax.f32 %v5360, 0.0
  %v7082 = vmax.f32 %v5878, 0.0
  %v7083 = vmax.f32 %v6396, 0.0
  %v7084 = vmax.f32 %v6914, 0.0
  %v7085 = vmax.f32 %v3290, 0.0
  %v7086 = vmax.f32 %v3808, 0.0
  %v7087 = vmax.f32 %v4326, 0.0
  %v7088 = vmax.f32 %v4844, 0.0
  %v7089 = vmax.f32 %v5362, 0.0
  %v7090 = vmax.f32 %v5880, 0.0
  %v7091 = vmax.f32 %v6398, 0.0
  %v7092 = vmax.f32 %v6916, 0.0
  %v7093 = vmax.f32 %v3293, 0.0
  %v7094 = vmax.f32 %v3811, 0.0
  %v7095 = vmax.f32 %v4329, 0.0
  %v7096 = vmax.f32 %v4847, 0.0
  %v7097 = vmax.f32 %v5365, 0.0
  %v7098 = vmax.f32 %v5883, 0.0
  %v7099 = vmax.f32 %v6401, 0.0
  %v7100 = vmax.f32 %v6919, 0.0
  %v7101 = vmax.f32 %v3295, 0.0
  %v7102 = vmax.f32 %v3813, 0.0
  %v7103 = vmax.f32 %v4331, 0.0
  %v7104 = vmax.f32 %v4849, 0.0
  %v7105 = vmax.f32 %v5367, 0.0
  %v7106 = vmax.f32 %v5885, 0.0
  %v7107 = vmax.f32 %v6403, 0.0
  %v7108 = vmax.f32 %v6921, 0.0
  %v7109 = vmax.f32 %v3298, 0.0
  %v7110 = vmax.f32 %v3816, 0.0
  %v7111 = vmax.f32 %v4334, 0.0
  %v7112 = vmax.f32 %v4852, 0.0
  %v7113 = vmax.f32 %v5370, 0.0
  %v7114 = vmax.f32 %v5888, 0.0
  %v7115 = vmax.f32 %v6406, 0.0
  %v7116 = vmax.f32 %v6924, 0.0
  %v7117 = vmax.f32 %v3300, 0.0
  %v7118 = vmax.f32 %v3818, 0.0
  %v7119 = vmax.f32 %v4336, 0.0
  %v7120 = vmax.f32 %v4854, 0.0
  %v7121 = vmax.f32 %v5372, 0.0
  %v7122 = vmax.f32 %v5890, 0.0
  %v7123 = vmax.f32 %v6408, 0.0
  %v7124 = vmax.f32 %v6926, 0.0
  %v7125 = vmax.f32 %v3303, 0.0
  %v7126 = vmax.f32 %v3821, 0.0
  %v7127 = vmax.f32 %v4339, 0.0
  %v7128 = vmax.f32 %v4857, 0.0
  %v7129 = vmax.f32 %v5375, 0.0
  %v7130 = vmax.f32 %v5893, 0.0
  %v7131 = vmax.f32 %v6411, 0.0
  %v7132 = vmax.f32 %v6929, 0.0
  %v7133 = vmax.f32 %v3305, 0.0
  %v7134 = vmax.f32 %v3823, 0.0
  %v7135 = vmax.f32 %v4341, 0.0
  %v7136 = vmax.f32 %v4859, 0.0
  %v7137 = vmax.f32 %v5377, 0.0
  %v7138 = vmax.f32 %v5895, 0.0
  %v7139 = vmax.f32 %v6413, 0.0
  %v7140 = vmax.f32 %v6931, 0.0
  %v7141 = vmax.f32 %v6933, %v6941
  %v7142 = vmax.f32 %v6934, %v6942
  %v7143 = vmax.f32 %v6935, %v6943
  %v7144 = vmax.f32 %v6936, %v6944
  %v7145 = vmax.f32 %v6937, %v6945
  %v7146 = vmax.f32 %v6938, %v6946
  %v7147 = vmax.f32 %v6939, %v6947
  %v7148 = vmax.f32 %v6940, %v6948
  %v7149 = vmax.f32 %v6949, %v6957
  %v7150 = vmax.f32 %v6950, %v6958
  %v7151 = vmax.f32 %v6951, %v6959
  %v7152 = vmax.f32 %v6952, %v6960
  %v7153 = vmax.f32 %v6953, %v6961
  %v7154 = vmax.f32 %v6954, %v6962
  %v7155 = vmax.f32 %v6955, %v6963
  %v7156 = vmax.f32 %v6956, %v6964
  %v7157 = vmax.f32 %v6965, %v6973
  %v7158 = vmax.f32 %v6966, %v6974
  %v7159 = vmax.f32 %v6967, %v6975
  %v7160 = vmax.f32 %v6968, %v6976
  %v7161 = vmax.f32 %v6969, %v6977
  %v7162 = vmax.f32 %v6970, %v6978
  %v7163 = vmax.f32 %v6971, %v6979
  %v7164 = vmax.f32 %v6972, %v6980
  %v7165 = vmax.f32 %v6981, %v6989
  %v7166 = vmax.f32 %v6982, %v6990
  %v7167 = vmax.f32 %v6983, %v6991
  %v7168 = vmax.f32 %v6984, %v6992
  %v7169 = vmax.f32 %v6985, %v6993
  %v7170 = vmax.f32 %v6986, %v6994
  %v7171 = vmax.f32 %v6987, %v6995
  %v7172 = vmax.f32 %v6988, %v6996
  %v7173 = vmax.f32 %v6997, %v7005
  %v7174 = vmax.f32 %v6998, %v7006
  %v7175 = vmax.f32 %v6999, %v7007
  %v7176 = vmax.f32 %v7000, %v7008
  %v7177 = vmax.f32 %v7001, %v7009
  %v7178 = vmax.f32 %v7002, %v7010
  %v7179 = vmax.f32 %v7003, %v7011
  %v7180 = vmax.f32 %v7004, %v7012
  %v7181 = vmax.f32 %v7013, %v7021
  %v7182 = vmax.f32 %v7014, %v7022
  %v7183 = vmax.f32 %v7015, %v7023
  %v7184 = vmax.f32 %v7016, %v7024
  %v7185 = vmax.f32 %v7017, %v7025
  %v7186 = vmax.f32 %v7018, %v7026
  %v7187 = vmax.f32 %v7019, %v7027
  %v7188 = vmax.f32 %v7020, %v7028
  %v7189 = vmax.f32 %v7029, %v7037
  %v7190 = vmax.f32 %v7030, %v7038
  %v7191 = vmax.f32 %v7031, %v7039
  %v7192 = vmax.f32 %v7032, %v7040
  %v7193 = vmax.f32 %v7033, %v7041
  %v7194 = vmax.f32 %v7034, %v7042
  %v7195 = vmax.f32 %v7035, %v7043
  %v7196 = vmax.f32 %v7036, %v7044
  %v7197 = vmax.f32 %v7045, %v7053
  %v7198 = vmax.f32 %v7046, %v7054
  %v7199 = vmax.f32 %v7047, %v7055
  %v7200 = vmax.f32 %v7048, %v7056
  %v7201 = vmax.f32 %v7049, %v7057
  %v7202 = vmax.f32 %v7050, %v7058
  %v7203 = vmax.f32 %v7051, %v7059
  %v7204 = vmax.f32 %v7052, %v7060
  %v7205 = vmax.f32 %v7061, %v7069
  %v7206 = vmax.f32 %v7062, %v7070
  %v7207 = vmax.f32 %v7063, %v7071
  %v7208 = vmax.f32 %v7064, %v7072
  %v7209 = vmax.f32 %v7065, %v7073
  %v7210 = vmax.f32 %v7066, %v7074
  %v7211 = vmax.f32 %v7067, %v7075
  %v7212 = vmax.f32 %v7068, %v7076
  %v7213 = vmax.f32 %v7077, %v7085
  %v7214 = vmax.f32 %v7078, %v7086
  %v7215 = vmax.f32 %v7079, %v7087
  %v7216 = vmax.f32 %v7080, %v7088
  %v7217 = vmax.f32 %v7081, %v7089
  %v7218 = vmax.f32 %v7082, %v7090
  %v7219 = vmax.f32 %v7083, %v7091
  %v7220 = vmax.f32 %v7084, %v7092
  %v7221 = vmax.f32 %v7093, %v7101
  %v7222 = vmax.f32 %v7094, %v7102
  %v7223 = vmax.f32 %v7095, %v7103
  %v7224 = vmax.f32 %v7096, %v7104
  %v7225 = vmax.f32 %v7097, %v7105
  %v7226 = vmax.f32 %v7098, %v7106
  %v7227 = vmax.f32 %v7099, %v7107
  %v7228 = vmax.f32 %v7100, %v7108
  %v7229 = vmax.f32 %v7109, %v7117
  %v7230 = vmax.f32 %v7110, %v7118
  %v7231 = vmax.f32 %v7111, %v7119
  %v7232 = vmax.f32 %v7112, %v7120
  %v7233 = vmax.f32 %v7113, %v7121
  %v7234 = vmax.f32 %v7114, %v7122
  %v7235 = vmax.f32 %v7115, %v7123
  %v7236 = vmax.f32 %v7116, %v7124
  %v7237 = vmax.f32 %v7125, %v7133
  %v7238 = vmax.f32 %v7126, %v7134
  %v7239 = vmax.f32 %v7127, %v7135
  %v7240 = vmax.f32 %v7128, %v7136
  %v7241 = vmax.f32 %v7129, %v7137
  %v7242 = vmax.f32 %v7130, %v7138
  %v7243 = vmax.f32 %v7131, %v7139
  %v7244 = vmax.f32 %v7132, %v7140
  %v7245 = vmax.f32 %v7141, %v7145
  %v7246 = vmax.f32 %v7142, %v7146
  %v7247 = vmax.f32 %v7143, %v7147
  %v7248 = vmax.f32 %v7144, %v7148
  %v7249 = vmax.f32 %v7149, %v7153
  %v7250 = vmax.f32 %v7150, %v7154
  %v7251 = vmax.f32 %v7151, %v7155
  %v7252 = vmax.f32 %v7152, %v7156
  %v7253 = vmax.f32 %v7157, %v7161
  %v7254 = vmax.f32 %v7158, %v7162
  %v7255 = vmax.f32 %v7159, %v7163
  %v7256 = vmax.f32 %v7160, %v7164
  %v7257 = vmax.f32 %v7165, %v7169
  %v7258 = vmax.f32 %v7166, %v7170
  %v7259 = vmax.f32 %v7167, %v7171
  %v7260 = vmax.f32 %v7168, %v7172
  %v7261 = vmax.f32 %v7173, %v7177
  %v7262 = vmax.f32 %v7174, %v7178
  %v7263 = vmax.f32 %v7175, %v7179
  %v7264 = vmax.f32 %v7176, %v7180
  %v7265 = vmax.f32 %v7181, %v7185
  %v7266 = vmax.f32 %v7182, %v7186
  %v7267 = vmax.f32 %v7183, %v7187
  %v7268 = vmax.f32 %v7184, %v7188
  %v7269 = vmax.f32 %v7189, %v7193
  %v7270 = vmax.f32 %v7190, %v7194
  %v7271 = vmax.f32 %v7191, %v7195
  %v7272 = vmax.f32 %v7192, %v7196
  %v7273 = vmax.f32 %v7197, %v7201
  %v7274 = vmax.f32 %v7198, %v7202
  %v7275 = vmax.f32 %v7199, %v7203
  %v7276 = vmax.f32 %v7200, %v7204
  %v7277 = vmax.f32 %v7205, %v7209
  %v7278 = vmax.f32 %v7206, %v7210
  %v7279 = vmax.f32 %v7207, %v7211
  %v7280 = vmax.f32 %v7208, %v7212
  %v7281 = vmax.f32 %v7213, %v7217
  %v7282 = vmax.f32 %v7214, %v7218
  %v7283 = vmax.f32 %v7215, %v7219
  %v7284 = vmax.f32 %v7216, %v7220
  %v7285 = vmax.f32 %v7221, %v7225
  %v7286 = vmax.f32 %v7222, %v7226
  %v7287 = vmax.f32 %v7223, %v7227
  %v7288 = vmax.f32 %v7224, %v7228
  %v7289 = vmax.f32 %v7229, %v7233
  %v7290 = vmax.f32 %v7230, %v7234
  %v7291 = vmax.f32 %v7231, %v7235
  %v7292 = vmax.f32 %v7232, %v7236
  %v7293 = vmax.f32 %v7237, %v7241
  %v7294 = vmax.f32 %v7238, %v7242
  %v7295 = vmax.f32 %v7239, %v7243
  %v7296 = vmax.f32 %v7240, %v7244
  %v7297 = vpack.c.bf16 %v7246, %v7245
  %v7298 = vpack.c.bf16 %v7248, %v7247
  %v7299 = vpack.c.bf16 %v7250, %v7249
  %v7300 = vpack.c.bf16 %v7252, %v7251
  %v7301 = vpack.c.bf16 %v7254, %v7253
  %v7302 = vpack.c.bf16 %v7256, %v7255
  %v7303 = vpack.c.bf16 %v7258, %v7257
  %v7304 = vpack.c.bf16 %v7260, %v7259
  %v7305 = vpack.c.bf16 %v7262, %v7261
  %v7306 = vpack.c.bf16 %v7264, %v7263
  %v7307 = vpack.c.bf16 %v7266, %v7265
  %v7308 = vpack.c.bf16 %v7268, %v7267
  %v7309 = vpack.c.bf16 %v7270, %v7269
  %v7310 = vpack.c.bf16 %v7272, %v7271
  %v7311 = vpack.c.bf16 %v7274, %v7273
  %v7312 = vpack.c.bf16 %v7276, %v7275
  %v7313 = vpack.c.bf16 %v7278, %v7277
  %v7314 = vpack.c.bf16 %v7280, %v7279
  %v7315 = vpack.c.bf16 %v7282, %v7281
  %v7316 = vpack.c.bf16 %v7284, %v7283
  %v7317 = vpack.c.bf16 %v7286, %v7285
  %v7318 = vpack.c.bf16 %v7288, %v7287
  %v7319 = vpack.c.bf16 %v7290, %v7289
  %v7320 = vpack.c.bf16 %v7292, %v7291
  %v7321 = vpack.c.bf16 %v7294, %v7293
  %v7322 = vpack.c.bf16 %v7296, %v7295
  %v7323 = vld [vmem:[%s3] sm:$0xf]
  %v7324 = vld [vmem:[%s3 + $0x4] sm:$0xf]
  %v7325 = vld [vmem:[%s3 + $0x8] sm:$0xf]
  %v7326 = vld [vmem:[%s3 + $0xc] sm:$0xf]
  %v7327 = vld [vmem:[%s3 + $0x10] sm:$0xf]
  %v7328 = vld [vmem:[%s3 + $0x14] sm:$0xf]
  %v7329 = vld [vmem:[%s3 + $0x18] sm:$0xf]
  %v7330 = vld [vmem:[%s3 + $0x1c] sm:$0xf]
  %v7331 = vld [vmem:[%s3 + $0x20] sm:$0xf]
  %v7332 = vld [vmem:[%s3 + $0x24] sm:$0xf]
  %v7333 = vld [vmem:[%s3 + $0x28] sm:$0xf]
  %v7334 = vld [vmem:[%s3 + $0x2c] sm:$0xf]
  %v7335 = vld [vmem:[%s3 + $0x30] sm:$0xf]
  %v7336 = vld [vmem:[%s3 + $0x34] sm:$0xf]
  %v7337 = vld [vmem:[%s3 + $0x38] sm:$0xf]
  %v7338 = vld [vmem:[%s3 + $0x3c] sm:$0xf]
  %v7339 = vld [vmem:[%s3 + $0x40] sm:$0xf]
  %v7340 = vld [vmem:[%s3 + $0x44] sm:$0xf]
  %v7341 = vld [vmem:[%s3 + $0x48] sm:$0xf]
  %v7342 = vld [vmem:[%s3 + $0x4c] sm:$0xf]
  %v7343 = vld [vmem:[%s3 + $0x50] sm:$0xf]
  %v7344 = vld [vmem:[%s3 + $0x54] sm:$0xf]
  %v7345 = vld [vmem:[%s3 + $0x58] sm:$0xf]
  %v7346 = vld [vmem:[%s3 + $0x5c] sm:$0xf]
  %v7347 = vld [vmem:[%s3 + $0x60] sm:$0xf]
  %v7348 = vld [vmem:[%s3 + $0x64] sm:$0xf]
  %v7349 = vld [vmem:[%s3 + $0x68] sm:$0xf]
  %v7350 = vld [vmem:[%s3 + $0x6c] sm:$0xf]
  %v7351 = vld [vmem:[%s3 + $0x70] sm:$0xf]
  %v7352 = vld [vmem:[%s3 + $0x74] sm:$0xf]
  %v7353 = vld [vmem:[%s3 + $0x78] sm:$0xf]
  %v7354 = vld [vmem:[%s3 + $0x7c] sm:$0xf]
  %v7355 = vld [vmem:[%s3 + $0x80] sm:$0xf]
  %v7356 = vld [vmem:[%s3 + $0x84] sm:$0xf]
  %v7357 = vld [vmem:[%s3 + $0x88] sm:$0xf]
  %v7358 = vld [vmem:[%s3 + $0x8c] sm:$0xf]
  %v7359 = vld [vmem:[%s3 + $0x90] sm:$0xf]
  %v7360 = vld [vmem:[%s3 + $0x94] sm:$0xf]
  %v7361 = vld [vmem:[%s3 + $0x98] sm:$0xf]
  %v7362 = vld [vmem:[%s3 + $0x9c] sm:$0xf]
  %v7363 = vld [vmem:[%s3 + $0xa0] sm:$0xf]
  %v7364 = vld [vmem:[%s3 + $0xa4] sm:$0xf]
  %v7365 = vld [vmem:[%s3 + $0xa8] sm:$0xf]
  %v7366 = vld [vmem:[%s3 + $0xac] sm:$0xf]
  %v7367 = vld [vmem:[%s3 + $0xb0] sm:$0xf]
  %v7368 = vld [vmem:[%s3 + $0xb4] sm:$0xf]
  %v7369 = vld [vmem:[%s3 + $0xb8] sm:$0xf]
  %v7370 = vld [vmem:[%s3 + $0xbc] sm:$0xf]
  %v7371 = vld [vmem:[%s3 + $0xc0] sm:$0xf]
  %v7372 = vld [vmem:[%s3 + $0xc4] sm:$0xf]
  %v7373 = vld [vmem:[%s3 + $0xc8] sm:$0xf]
  %v7374 = vld [vmem:[%s3 + $0xcc] sm:$0xf]
  %v7375 = vld [vmem:[%s3 + $0xd0] sm:$0xf]
  %v7376 = vld [vmem:[%s3 + $0xd4] sm:$0xf]
  %v7377 = vld [vmem:[%s3 + $0xd8] sm:$0xf]
  %v7378 = vld [vmem:[%s3 + $0xdc] sm:$0xf]
  %v7379 = vld [vmem:[%s3 + $0xe0] sm:$0xf]
  %v7380 = vld [vmem:[%s3 + $0xe4] sm:$0xf]
  %v7381 = vld [vmem:[%s3 + $0xe8] sm:$0xf]
  %v7382 = vld [vmem:[%s3 + $0xec] sm:$0xf]
  %v7383 = vld [vmem:[%s3 + $0xf0] sm:$0xf]
  %v7384 = vld [vmem:[%s3 + $0xf4] sm:$0xf]
  %v7385 = vld [vmem:[%s3 + $0xf8] sm:$0xf]
  %v7386 = vld [vmem:[%s3 + $0xfc] sm:$0xf]
  %v7387 = vld [vmem:[%s3 + $0x100] sm:$0xf]
  %v7388 = vld [vmem:[%s3 + $0x104] sm:$0xf]
  %v7389 = vld [vmem:[%s3 + $0x108] sm:$0xf]
  %v7390 = vld [vmem:[%s3 + $0x10c] sm:$0xf]
  %v7391 = vld [vmem:[%s3 + $0x110] sm:$0xf]
  %v7392 = vld [vmem:[%s3 + $0x114] sm:$0xf]
  %v7393 = vld [vmem:[%s3 + $0x118] sm:$0xf]
  %v7394 = vld [vmem:[%s3 + $0x11c] sm:$0xf]
  %v7395 = vld [vmem:[%s3 + $0x120] sm:$0xf]
  %v7396 = vld [vmem:[%s3 + $0x124] sm:$0xf]
  %v7397 = vld [vmem:[%s3 + $0x128] sm:$0xf]
  %v7398 = vld [vmem:[%s3 + $0x12c] sm:$0xf]
  %v7399 = vld [vmem:[%s3 + $0x130] sm:$0xf]
  %v7400 = vld [vmem:[%s3 + $0x134] sm:$0xf]
  %v7401 = vld [vmem:[%s3 + $0x138] sm:$0xf]
  %v7402 = vld [vmem:[%s3 + $0x13c] sm:$0xf]
  %v7403 = vld [vmem:[%s3 + $0x140] sm:$0xf]
  %v7404 = vld [vmem:[%s3 + $0x144] sm:$0xf]
  %v7405 = vld [vmem:[%s3 + $0x148] sm:$0xf]
  %v7406 = vld [vmem:[%s3 + $0x14c] sm:$0xf]
  %v7407 = vld [vmem:[%s3 + $0x150] sm:$0xf]
  %v7408 = vld [vmem:[%s3 + $0x154] sm:$0xf]
  %v7409 = vld [vmem:[%s3 + $0x158] sm:$0xf]
  %v7410 = vld [vmem:[%s3 + $0x15c] sm:$0xf]
  %v7411 = vld [vmem:[%s3 + $0x160] sm:$0xf]
  %v7412 = vld [vmem:[%s3 + $0x164] sm:$0xf]
  %v7413 = vld [vmem:[%s3 + $0x168] sm:$0xf]
  %v7414 = vld [vmem:[%s3 + $0x16c] sm:$0xf]
  %v7415 = vld [vmem:[%s3 + $0x170] sm:$0xf]
  %v7416 = vld [vmem:[%s3 + $0x174] sm:$0xf]
  %v7417 = vld [vmem:[%s3 + $0x178] sm:$0xf]
  %v7418 = vld [vmem:[%s3 + $0x17c] sm:$0xf]
  %v7419 = vld [vmem:[%s3 + $0x180] sm:$0xf]
  %v7420 = vld [vmem:[%s3 + $0x184] sm:$0xf]
  %v7421 = vld [vmem:[%s3 + $0x188] sm:$0xf]
  %v7422 = vld [vmem:[%s3 + $0x18c] sm:$0xf]
  %v7423 = vld [vmem:[%s3 + $0x190] sm:$0xf]
  %v7424 = vld [vmem:[%s3 + $0x194] sm:$0xf]
  %v7425 = vld [vmem:[%s3 + $0x198] sm:$0xf]
  %v7426 = vld [vmem:[%s3 + $0x19c] sm:$0xf]
  %v7427 = vld [vmem:[%s3 + $0x1a0] sm:$0xf]
  %v7428 = vld [vmem:[%s3 + $0x1a4] sm:$0xf]
  %v7429 = vld [vmem:[%s3 + $0x1a8] sm:$0xf]
  %v7430 = vld [vmem:[%s3 + $0x1ac] sm:$0xf]
  %v7431 = vld [vmem:[%s3 + $0x1b0] sm:$0xf]
  %v7432 = vld [vmem:[%s3 + $0x1b4] sm:$0xf]
  %v7433 = vld [vmem:[%s3 + $0x1b8] sm:$0xf]
  %v7434 = vld [vmem:[%s3 + $0x1bc] sm:$0xf]
  %v7435 = vld [vmem:[%s3 + $0x1c0] sm:$0xf]
  %v7436 = vld [vmem:[%s3 + $0x1c4] sm:$0xf]
  %v7437 = vld [vmem:[%s3 + $0x1c8] sm:$0xf]
  %v7438 = vld [vmem:[%s3 + $0x1cc] sm:$0xf]
  %v7439 = vld [vmem:[%s3 + $0x1d0] sm:$0xf]
  %v7440 = vld [vmem:[%s3 + $0x1d4] sm:$0xf]
  %v7441 = vld [vmem:[%s3 + $0x1d8] sm:$0xf]
  %v7442 = vld [vmem:[%s3 + $0x1dc] sm:$0xf]
  %v7443 = vld [vmem:[%s3 + $0x1e0] sm:$0xf]
  %v7444 = vld [vmem:[%s3 + $0x1e4] sm:$0xf]
  %v7445 = vld [vmem:[%s3 + $0x1e8] sm:$0xf]
  %v7446 = vld [vmem:[%s3 + $0x1ec] sm:$0xf]
  %v7447 = vld [vmem:[%s3 + $0x1f0] sm:$0xf]
  %v7448 = vld [vmem:[%s3 + $0x1f4] sm:$0xf]
  %v7449 = vld [vmem:[%s3 + $0x1f8] sm:$0xf]
  %v7450 = vld [vmem:[%s3 + $0x1fc] sm:$0xf]
  %v7451 = vld [vmem:[%s3 + $0x200] sm:$0xf]
  %v7452 = vld [vmem:[%s3 + $0x204] sm:$0xf]
  %v7453 = vld [vmem:[%s3 + $0x208] sm:$0xf]
  %v7454 = vld [vmem:[%s3 + $0x20c] sm:$0xf]
  %v7455 = vld [vmem:[%s3 + $0x210] sm:$0xf]
  %v7456 = vld [vmem:[%s3 + $0x214] sm:$0xf]
  %v7457 = vld [vmem:[%s3 + $0x218] sm:$0xf]
  %v7458 = vld [vmem:[%s3 + $0x21c] sm:$0xf]
  %v7459 = vld [vmem:[%s3 + $0x220] sm:$0xf]
  %v7460 = vld [vmem:[%s3 + $0x224] sm:$0xf]
  %v7461 = vld [vmem:[%s3 + $0x228] sm:$0xf]
  %v7462 = vld [vmem:[%s3 + $0x22c] sm:$0xf]
  %v7463 = vld [vmem:[%s3 + $0x230] sm:$0xf]
  %v7464 = vld [vmem:[%s3 + $0x234] sm:$0xf]
  %v7465 = vld [vmem:[%s3 + $0x238] sm:$0xf]
  %v7466 = vld [vmem:[%s3 + $0x23c] sm:$0xf]
  %v7467 = vld [vmem:[%s3 + $0x240] sm:$0xf]
  %v7468 = vld [vmem:[%s3 + $0x244] sm:$0xf]
  %v7469 = vld [vmem:[%s3 + $0x248] sm:$0xf]
  %v7470 = vld [vmem:[%s3 + $0x24c] sm:$0xf]
  %v7471 = vld [vmem:[%s3 + $0x250] sm:$0xf]
  %v7472 = vld [vmem:[%s3 + $0x254] sm:$0xf]
  %v7473 = vld [vmem:[%s3 + $0x258] sm:$0xf]
  %v7474 = vld [vmem:[%s3 + $0x25c] sm:$0xf]
  %v7475 = vld [vmem:[%s3 + $0x260] sm:$0xf]
  %v7476 = vld [vmem:[%s3 + $0x264] sm:$0xf]
  %v7477 = vld [vmem:[%s3 + $0x268] sm:$0xf]
  %v7478 = vld [vmem:[%s3 + $0x26c] sm:$0xf]
  %v7479 = vld [vmem:[%s3 + $0x270] sm:$0xf]
  %v7480 = vld [vmem:[%s3 + $0x274] sm:$0xf]
  %v7481 = vld [vmem:[%s3 + $0x278] sm:$0xf]
  %v7482 = vld [vmem:[%s3 + $0x27c] sm:$0xf]
  %v7483 = vld [vmem:[%s3 + $0x280] sm:$0xf]
  %v7484 = vld [vmem:[%s3 + $0x284] sm:$0xf]
  %v7485 = vld [vmem:[%s3 + $0x288] sm:$0xf]
  %v7486 = vld [vmem:[%s3 + $0x28c] sm:$0xf]
  %v7487 = vld [vmem:[%s3 + $0x290] sm:$0xf]
  %v7488 = vld [vmem:[%s3 + $0x294] sm:$0xf]
  %v7489 = vld [vmem:[%s3 + $0x298] sm:$0xf]
  %v7490 = vld [vmem:[%s3 + $0x29c] sm:$0xf]
  %v7491 = vld [vmem:[%s3 + $0x2a0] sm:$0xf]
  %v7492 = vld [vmem:[%s3 + $0x2a4] sm:$0xf]
  %v7493 = vld [vmem:[%s3 + $0x2a8] sm:$0xf]
  %v7494 = vld [vmem:[%s3 + $0x2ac] sm:$0xf]
  %v7495 = vld [vmem:[%s3 + $0x2b0] sm:$0xf]
  %v7496 = vld [vmem:[%s3 + $0x2b4] sm:$0xf]
  %v7497 = vld [vmem:[%s3 + $0x2b8] sm:$0xf]
  %v7498 = vld [vmem:[%s3 + $0x2bc] sm:$0xf]
  %v7499 = vld [vmem:[%s3 + $0x2c0] sm:$0xf]
  %v7500 = vld [vmem:[%s3 + $0x2c4] sm:$0xf]
  %v7501 = vld [vmem:[%s3 + $0x2c8] sm:$0xf]
  %v7502 = vld [vmem:[%s3 + $0x2cc] sm:$0xf]
  %v7503 = vld [vmem:[%s3 + $0x2d0] sm:$0xf]
  %v7504 = vld [vmem:[%s3 + $0x2d4] sm:$0xf]
  %v7505 = vld [vmem:[%s3 + $0x2d8] sm:$0xf]
  %v7506 = vld [vmem:[%s3 + $0x2dc] sm:$0xf]
  %v7507 = vld [vmem:[%s3 + $0x2e0] sm:$0xf]
  %v7508 = vld [vmem:[%s3 + $0x2e4] sm:$0xf]
  %v7509 = vld [vmem:[%s3 + $0x2e8] sm:$0xf]
  %v7510 = vld [vmem:[%s3 + $0x2ec] sm:$0xf]
  %v7511 = vld [vmem:[%s3 + $0x2f0] sm:$0xf]
  %v7512 = vld [vmem:[%s3 + $0x2f4] sm:$0xf]
  %v7513 = vld [vmem:[%s3 + $0x2f8] sm:$0xf]
  %v7514 = vld [vmem:[%s3 + $0x2fc] sm:$0xf]
  %v7515 = vld [vmem:[%s3 + $0x300] sm:$0xf]
  %v7516 = vld [vmem:[%s3 + $0x304] sm:$0xf]
  %v7517 = vld [vmem:[%s3 + $0x308] sm:$0xf]
  %v7518 = vld [vmem:[%s3 + $0x30c] sm:$0xf]
  %v7519 = vld [vmem:[%s3 + $0x310] sm:$0xf]
  %v7520 = vld [vmem:[%s3 + $0x314] sm:$0xf]
  %v7521 = vld [vmem:[%s3 + $0x318] sm:$0xf]
  %v7522 = vld [vmem:[%s3 + $0x31c] sm:$0xf]
  %v7523 = vld [vmem:[%s3 + $0x320] sm:$0xf]
  %v7524 = vld [vmem:[%s3 + $0x324] sm:$0xf]
  %v7525 = vld [vmem:[%s3 + $0x328] sm:$0xf]
  %v7526 = vld [vmem:[%s3 + $0x32c] sm:$0xf]
  %v7527 = vld [vmem:[%s3 + $0x330] sm:$0xf]
  %v7528 = vld [vmem:[%s3 + $0x334] sm:$0xf]
  %v7529 = vld [vmem:[%s3 + $0x338] sm:$0xf]
  %v7530 = vld [vmem:[%s3 + $0x33c] sm:$0xf]
  %v7531 = vld [vmem:[%s3 + $0x340] sm:$0xf]
  %v7532 = vld [vmem:[%s3 + $0x344] sm:$0xf]
  %v7533 = vld [vmem:[%s3 + $0x348] sm:$0xf]
  %v7534 = vld [vmem:[%s3 + $0x34c] sm:$0xf]
  %v7535 = vld [vmem:[%s3 + $0x350] sm:$0xf]
  %v7536 = vld [vmem:[%s3 + $0x354] sm:$0xf]
  %v7537 = vld [vmem:[%s3 + $0x358] sm:$0xf]
  %v7538 = vld [vmem:[%s3 + $0x35c] sm:$0xf]
  %v7539 = vld [vmem:[%s3 + $0x360] sm:$0xf]
  %v7540 = vld [vmem:[%s3 + $0x364] sm:$0xf]
  %v7541 = vld [vmem:[%s3 + $0x368] sm:$0xf]
  %v7542 = vld [vmem:[%s3 + $0x36c] sm:$0xf]
  %v7543 = vld [vmem:[%s3 + $0x370] sm:$0xf]
  %v7544 = vld [vmem:[%s3 + $0x374] sm:$0xf]
  %v7545 = vld [vmem:[%s3 + $0x378] sm:$0xf]
  %v7546 = vld [vmem:[%s3 + $0x37c] sm:$0xf]
  %v7547 = vld [vmem:[%s3 + $0x380] sm:$0xf]
  %v7548 = vld [vmem:[%s3 + $0x384] sm:$0xf]
  %v7549 = vld [vmem:[%s3 + $0x388] sm:$0xf]
  %v7550 = vld [vmem:[%s3 + $0x38c] sm:$0xf]
  %v7551 = vld [vmem:[%s3 + $0x390] sm:$0xf]
  %v7552 = vld [vmem:[%s3 + $0x394] sm:$0xf]
  %v7553 = vld [vmem:[%s3 + $0x398] sm:$0xf]
  %v7554 = vld [vmem:[%s3 + $0x39c] sm:$0xf]
  %v7555 = vld [vmem:[%s3 + $0x3a0] sm:$0xf]
  %v7556 = vld [vmem:[%s3 + $0x3a4] sm:$0xf]
  %v7557 = vld [vmem:[%s3 + $0x3a8] sm:$0xf]
  %v7558 = vld [vmem:[%s3 + $0x3ac] sm:$0xf]
  %v7559 = vld [vmem:[%s3 + $0x3b0] sm:$0xf]
  %v7560 = vld [vmem:[%s3 + $0x3b4] sm:$0xf]
  %v7561 = vld [vmem:[%s3 + $0x3b8] sm:$0xf]
  %v7562 = vld [vmem:[%s3 + $0x3bc] sm:$0xf]
  %v7563 = vld [vmem:[%s3 + $0x3c0] sm:$0xf]
  %v7564 = vld [vmem:[%s3 + $0x3c4] sm:$0xf]
  %v7565 = vld [vmem:[%s3 + $0x3c8] sm:$0xf]
  %v7566 = vld [vmem:[%s3 + $0x3cc] sm:$0xf]
  %v7567 = vld [vmem:[%s3 + $0x3d0] sm:$0xf]
  %v7568 = vld [vmem:[%s3 + $0x3d4] sm:$0xf]
  %v7569 = vld [vmem:[%s3 + $0x3d8] sm:$0xf]
  %v7570 = vld [vmem:[%s3 + $0x3dc] sm:$0xf]
  %v7571 = vld [vmem:[%s3 + $0x3e0] sm:$0xf]
  %v7572 = vld [vmem:[%s3 + $0x3e4] sm:$0xf]
  %v7573 = vld [vmem:[%s3 + $0x3e8] sm:$0xf]
  %v7574 = vld [vmem:[%s3 + $0x3ec] sm:$0xf]
  %v7575 = vld [vmem:[%s3 + $0x3f0] sm:$0xf]
  %v7576 = vld [vmem:[%s3 + $0x3f4] sm:$0xf]
  %v7577 = vld [vmem:[%s3 + $0x3f8] sm:$0xf]
  %v7578 = vld [vmem:[%s3 + $0x3fc] sm:$0xf]
  %v7579 = vld [vmem:[%s3 + $0x400] sm:$0xf]
  %v7580 = vld [vmem:[%s3 + $0x404] sm:$0xf]
  %v7581 = vld [vmem:[%s3 + $0x408] sm:$0xf]
  %v7582 = vld [vmem:[%s3 + $0x40c] sm:$0xf]
  %v7583 = vld [vmem:[%s3 + $0x410] sm:$0xf]
  %v7584 = vld [vmem:[%s3 + $0x414] sm:$0xf]
  %v7585 = vld [vmem:[%s3 + $0x418] sm:$0xf]
  %v7586 = vld [vmem:[%s3 + $0x41c] sm:$0xf]
  %v7587 = vld [vmem:[%s3 + $0x420] sm:$0xf]
  %v7588 = vld [vmem:[%s3 + $0x424] sm:$0xf]
  %v7589 = vld [vmem:[%s3 + $0x428] sm:$0xf]
  %v7590 = vld [vmem:[%s3 + $0x42c] sm:$0xf]
  %v7591 = vld [vmem:[%s3 + $0x430] sm:$0xf]
  %v7592 = vld [vmem:[%s3 + $0x434] sm:$0xf]
  %v7593 = vld [vmem:[%s3 + $0x438] sm:$0xf]
  %v7594 = vld [vmem:[%s3 + $0x43c] sm:$0xf]
  %v7595 = vld [vmem:[%s3 + $0x440] sm:$0xf]
  %v7596 = vld [vmem:[%s3 + $0x444] sm:$0xf]
  %v7597 = vld [vmem:[%s3 + $0x448] sm:$0xf]
  %v7598 = vld [vmem:[%s3 + $0x44c] sm:$0xf]
  %v7599 = vld [vmem:[%s3 + $0x450] sm:$0xf]
  %v7600 = vld [vmem:[%s3 + $0x454] sm:$0xf]
  %v7601 = vld [vmem:[%s3 + $0x458] sm:$0xf]
  %v7602 = vld [vmem:[%s3 + $0x45c] sm:$0xf]
  %v7603 = vld [vmem:[%s3 + $0x460] sm:$0xf]
  %v7604 = vld [vmem:[%s3 + $0x464] sm:$0xf]
  %v7605 = vld [vmem:[%s3 + $0x468] sm:$0xf]
  %v7606 = vld [vmem:[%s3 + $0x46c] sm:$0xf]
  %v7607 = vld [vmem:[%s3 + $0x470] sm:$0xf]
  %v7608 = vld [vmem:[%s3 + $0x474] sm:$0xf]
  %v7609 = vld [vmem:[%s3 + $0x478] sm:$0xf]
  %v7610 = vld [vmem:[%s3 + $0x47c] sm:$0xf]
  %v7611 = vld [vmem:[%s3 + $0x480] sm:$0xf]
  %v7612 = vld [vmem:[%s3 + $0x484] sm:$0xf]
  %v7613 = vld [vmem:[%s3 + $0x488] sm:$0xf]
  %v7614 = vld [vmem:[%s3 + $0x48c] sm:$0xf]
  %v7615 = vld [vmem:[%s3 + $0x490] sm:$0xf]
  %v7616 = vld [vmem:[%s3 + $0x494] sm:$0xf]
  %v7617 = vld [vmem:[%s3 + $0x498] sm:$0xf]
  %v7618 = vld [vmem:[%s3 + $0x49c] sm:$0xf]
  %v7619 = vld [vmem:[%s3 + $0x4a0] sm:$0xf]
  %v7620 = vld [vmem:[%s3 + $0x4a4] sm:$0xf]
  %v7621 = vld [vmem:[%s3 + $0x4a8] sm:$0xf]
  %v7622 = vld [vmem:[%s3 + $0x4ac] sm:$0xf]
  %v7623 = vld [vmem:[%s3 + $0x4b0] sm:$0xf]
  %v7624 = vld [vmem:[%s3 + $0x4b4] sm:$0xf]
  %v7625 = vld [vmem:[%s3 + $0x4b8] sm:$0xf]
  %v7626 = vld [vmem:[%s3 + $0x4bc] sm:$0xf]
  %v7627 = vld [vmem:[%s3 + $0x4c0] sm:$0xf]
  %v7628 = vld [vmem:[%s3 + $0x4c4] sm:$0xf]
  %v7629 = vld [vmem:[%s3 + $0x4c8] sm:$0xf]
  %v7630 = vld [vmem:[%s3 + $0x4cc] sm:$0xf]
  %v7631 = vld [vmem:[%s3 + $0x4d0] sm:$0xf]
  %v7632 = vld [vmem:[%s3 + $0x4d4] sm:$0xf]
  %v7633 = vld [vmem:[%s3 + $0x4d8] sm:$0xf]
  %v7634 = vld [vmem:[%s3 + $0x4dc] sm:$0xf]
  %v7635 = vld [vmem:[%s3 + $0x4e0] sm:$0xf]
  %v7636 = vld [vmem:[%s3 + $0x4e4] sm:$0xf]
  %v7637 = vld [vmem:[%s3 + $0x4e8] sm:$0xf]
  %v7638 = vld [vmem:[%s3 + $0x4ec] sm:$0xf]
  %v7639 = vld [vmem:[%s3 + $0x4f0] sm:$0xf]
  %v7640 = vld [vmem:[%s3 + $0x4f4] sm:$0xf]
  %v7641 = vld [vmem:[%s3 + $0x4f8] sm:$0xf]
  %v7642 = vld [vmem:[%s3 + $0x4fc] sm:$0xf]
  %v7643 = vld [vmem:[%s3 + $0x500] sm:$0xf]
  %v7644 = vld [vmem:[%s3 + $0x504] sm:$0xf]
  %v7645 = vld [vmem:[%s3 + $0x508] sm:$0xf]
  %v7646 = vld [vmem:[%s3 + $0x50c] sm:$0xf]
  %v7647 = vld [vmem:[%s3 + $0x510] sm:$0xf]
  %v7648 = vld [vmem:[%s3 + $0x514] sm:$0xf]
  %v7649 = vld [vmem:[%s3 + $0x518] sm:$0xf]
  %v7650 = vld [vmem:[%s3 + $0x51c] sm:$0xf]
  %v7651 = vld [vmem:[%s3 + $0x520] sm:$0xf]
  %v7652 = vld [vmem:[%s3 + $0x524] sm:$0xf]
  %v7653 = vld [vmem:[%s3 + $0x528] sm:$0xf]
  %v7654 = vld [vmem:[%s3 + $0x52c] sm:$0xf]
  %v7655 = vld [vmem:[%s3 + $0x530] sm:$0xf]
  %v7656 = vld [vmem:[%s3 + $0x534] sm:$0xf]
  %v7657 = vld [vmem:[%s3 + $0x538] sm:$0xf]
  %v7658 = vld [vmem:[%s3 + $0x53c] sm:$0xf]
  %v7659 = vld [vmem:[%s3 + $0x540] sm:$0xf]
  %v7660 = vld [vmem:[%s3 + $0x544] sm:$0xf]
  %v7661 = vld [vmem:[%s3 + $0x548] sm:$0xf]
  %v7662 = vld [vmem:[%s3 + $0x54c] sm:$0xf]
  %v7663 = vld [vmem:[%s3 + $0x550] sm:$0xf]
  %v7664 = vld [vmem:[%s3 + $0x554] sm:$0xf]
  %v7665 = vld [vmem:[%s3 + $0x558] sm:$0xf]
  %v7666 = vld [vmem:[%s3 + $0x55c] sm:$0xf]
  %v7667 = vld [vmem:[%s3 + $0x560] sm:$0xf]
  %v7668 = vld [vmem:[%s3 + $0x564] sm:$0xf]
  %v7669 = vld [vmem:[%s3 + $0x568] sm:$0xf]
  %v7670 = vld [vmem:[%s3 + $0x56c] sm:$0xf]
  %v7671 = vld [vmem:[%s3 + $0x570] sm:$0xf]
  %v7672 = vld [vmem:[%s3 + $0x574] sm:$0xf]
  %v7673 = vld [vmem:[%s3 + $0x578] sm:$0xf]
  %v7674 = vld [vmem:[%s3 + $0x57c] sm:$0xf]
  %v7675 = vld [vmem:[%s3 + $0x580] sm:$0xf]
  %v7676 = vld [vmem:[%s3 + $0x584] sm:$0xf]
  %v7677 = vld [vmem:[%s3 + $0x588] sm:$0xf]
  %v7678 = vld [vmem:[%s3 + $0x58c] sm:$0xf]
  %v7679 = vld [vmem:[%s3 + $0x590] sm:$0xf]
  %v7680 = vld [vmem:[%s3 + $0x594] sm:$0xf]
  %v7681 = vld [vmem:[%s3 + $0x598] sm:$0xf]
  %v7682 = vld [vmem:[%s3 + $0x59c] sm:$0xf]
  %v7683 = vld [vmem:[%s3 + $0x5a0] sm:$0xf]
  %v7684 = vld [vmem:[%s3 + $0x5a4] sm:$0xf]
  %v7685 = vld [vmem:[%s3 + $0x5a8] sm:$0xf]
  %v7686 = vld [vmem:[%s3 + $0x5ac] sm:$0xf]
  %v7687 = vld [vmem:[%s3 + $0x5b0] sm:$0xf]
  %v7688 = vld [vmem:[%s3 + $0x5b4] sm:$0xf]
  %v7689 = vld [vmem:[%s3 + $0x5b8] sm:$0xf]
  %v7690 = vld [vmem:[%s3 + $0x5bc] sm:$0xf]
  %v7691 = vld [vmem:[%s3 + $0x5c0] sm:$0xf]
  %v7692 = vld [vmem:[%s3 + $0x5c4] sm:$0xf]
  %v7693 = vld [vmem:[%s3 + $0x5c8] sm:$0xf]
  %v7694 = vld [vmem:[%s3 + $0x5cc] sm:$0xf]
  %v7695 = vld [vmem:[%s3 + $0x5d0] sm:$0xf]
  %v7696 = vld [vmem:[%s3 + $0x5d4] sm:$0xf]
  %v7697 = vld [vmem:[%s3 + $0x5d8] sm:$0xf]
  %v7698 = vld [vmem:[%s3 + $0x5dc] sm:$0xf]
  %v7699 = vld [vmem:[%s3 + $0x5e0] sm:$0xf]
  %v7700 = vld [vmem:[%s3 + $0x5e4] sm:$0xf]
  %v7701 = vld [vmem:[%s3 + $0x5e8] sm:$0xf]
  %v7702 = vld [vmem:[%s3 + $0x5ec] sm:$0xf]
  %v7703 = vld [vmem:[%s3 + $0x5f0] sm:$0xf]
  %v7704 = vld [vmem:[%s3 + $0x5f4] sm:$0xf]
  %v7705 = vld [vmem:[%s3 + $0x5f8] sm:$0xf]
  %v7706 = vld [vmem:[%s3 + $0x5fc] sm:$0xf]
  %v7707 = vld [vmem:[%s3 + $0x600] sm:$0xf]
  %v7708 = vld [vmem:[%s3 + $0x604] sm:$0xf]
  %v7709 = vld [vmem:[%s3 + $0x608] sm:$0xf]
  %v7710 = vld [vmem:[%s3 + $0x60c] sm:$0xf]
  %v7711 = vld [vmem:[%s3 + $0x610] sm:$0xf]
  %v7712 = vld [vmem:[%s3 + $0x614] sm:$0xf]
  %v7713 = vld [vmem:[%s3 + $0x618] sm:$0xf]
  %v7714 = vld [vmem:[%s3 + $0x61c] sm:$0xf]
  %v7715 = vld [vmem:[%s3 + $0x620] sm:$0xf]
  %v7716 = vld [vmem:[%s3 + $0x624] sm:$0xf]
  %v7717 = vld [vmem:[%s3 + $0x628] sm:$0xf]
  %v7718 = vld [vmem:[%s3 + $0x62c] sm:$0xf]
  %v7719 = vld [vmem:[%s3 + $0x630] sm:$0xf]
  %v7720 = vld [vmem:[%s3 + $0x634] sm:$0xf]
  %v7721 = vld [vmem:[%s3 + $0x638] sm:$0xf]
  %v7722 = vld [vmem:[%s3 + $0x63c] sm:$0xf]
  %v7723 = vld [vmem:[%s3 + $0x640] sm:$0xf]
  %v7724 = vld [vmem:[%s3 + $0x644] sm:$0xf]
  %v7725 = vld [vmem:[%s3 + $0x648] sm:$0xf]
  %v7726 = vld [vmem:[%s3 + $0x64c] sm:$0xf]
  %v7727 = vld [vmem:[%s3 + $0x650] sm:$0xf]
  %v7728 = vld [vmem:[%s3 + $0x654] sm:$0xf]
  %v7729 = vld [vmem:[%s3 + $0x658] sm:$0xf]
  %v7730 = vld [vmem:[%s3 + $0x65c] sm:$0xf]
  %v7731 = vld [vmem:[%s3 + $0x660] sm:$0xf]
  %v7732 = vld [vmem:[%s3 + $0x664] sm:$0xf]
  %v7733 = vld [vmem:[%s3 + $0x668] sm:$0xf]
  %v7734 = vld [vmem:[%s3 + $0x66c] sm:$0xf]
  %v7735 = vld [vmem:[%s3 + $0x670] sm:$0xf]
  %v7736 = vld [vmem:[%s3 + $0x674] sm:$0xf]
  %v7737 = vld [vmem:[%s3 + $0x678] sm:$0xf]
  %v7738 = vld [vmem:[%s3 + $0x67c] sm:$0xf]
  %v7739 = vld [vmem:[%s3 + $0x680] sm:$0xf]
  %v7740 = vld [vmem:[%s3 + $0x684] sm:$0xf]
  %v7741 = vld [vmem:[%s3 + $0x688] sm:$0xf]
  %v7742 = vld [vmem:[%s3 + $0x68c] sm:$0xf]
  %v7743 = vld [vmem:[%s3 + $0x690] sm:$0xf]
  %v7744 = vld [vmem:[%s3 + $0x694] sm:$0xf]
  %v7745 = vld [vmem:[%s3 + $0x698] sm:$0xf]
  %v7746 = vld [vmem:[%s3 + $0x69c] sm:$0xf]
  %v7747 = vld [vmem:[%s3 + $0x6a0] sm:$0xf]
  %v7748 = vld [vmem:[%s3 + $0x6a4] sm:$0xf]
  %v7749 = vld [vmem:[%s3 + $0x6a8] sm:$0xf]
  %v7750 = vld [vmem:[%s3 + $0x6ac] sm:$0xf]
  %v7751 = vld [vmem:[%s3 + $0x6b0] sm:$0xf]
  %v7752 = vld [vmem:[%s3 + $0x6b4] sm:$0xf]
  %v7753 = vld [vmem:[%s3 + $0x6b8] sm:$0xf]
  %v7754 = vld [vmem:[%s3 + $0x6bc] sm:$0xf]
  %v7755 = vld [vmem:[%s3 + $0x6c0] sm:$0xf]
  %v7756 = vld [vmem:[%s3 + $0x6c4] sm:$0xf]
  %v7757 = vld [vmem:[%s3 + $0x6c8] sm:$0xf]
  %v7758 = vld [vmem:[%s3 + $0x6cc] sm:$0xf]
  %v7759 = vld [vmem:[%s3 + $0x6d0] sm:$0xf]
  %v7760 = vld [vmem:[%s3 + $0x6d4] sm:$0xf]
  %v7761 = vld [vmem:[%s3 + $0x6d8] sm:$0xf]
  %v7762 = vld [vmem:[%s3 + $0x6dc] sm:$0xf]
  %v7763 = vld [vmem:[%s3 + $0x6e0] sm:$0xf]
  %v7764 = vld [vmem:[%s3 + $0x6e4] sm:$0xf]
  %v7765 = vld [vmem:[%s3 + $0x6e8] sm:$0xf]
  %v7766 = vld [vmem:[%s3 + $0x6ec] sm:$0xf]
  %v7767 = vld [vmem:[%s3 + $0x6f0] sm:$0xf]
  %v7768 = vld [vmem:[%s3 + $0x6f4] sm:$0xf]
  %v7769 = vld [vmem:[%s3 + $0x6f8] sm:$0xf]
  %v7770 = vld [vmem:[%s3 + $0x6fc] sm:$0xf]
  %v7771 = vld [vmem:[%s3 + $0x700] sm:$0xf]
  %v7772 = vld [vmem:[%s3 + $0x704] sm:$0xf]
  %v7773 = vld [vmem:[%s3 + $0x708] sm:$0xf]
  %v7774 = vld [vmem:[%s3 + $0x70c] sm:$0xf]
  %v7775 = vld [vmem:[%s3 + $0x710] sm:$0xf]
  %v7776 = vld [vmem:[%s3 + $0x714] sm:$0xf]
  %v7777 = vld [vmem:[%s3 + $0x718] sm:$0xf]
  %v7778 = vld [vmem:[%s3 + $0x71c] sm:$0xf]
  %v7779 = vld [vmem:[%s3 + $0x720] sm:$0xf]
  %v7780 = vld [vmem:[%s3 + $0x724] sm:$0xf]
  %v7781 = vld [vmem:[%s3 + $0x728] sm:$0xf]
  %v7782 = vld [vmem:[%s3 + $0x72c] sm:$0xf]
  %v7783 = vld [vmem:[%s3 + $0x730] sm:$0xf]
  %v7784 = vld [vmem:[%s3 + $0x734] sm:$0xf]
  %v7785 = vld [vmem:[%s3 + $0x738] sm:$0xf]
  %v7786 = vld [vmem:[%s3 + $0x73c] sm:$0xf]
  %v7787 = vld [vmem:[%s3 + $0x740] sm:$0xf]
  %v7788 = vld [vmem:[%s3 + $0x744] sm:$0xf]
  %v7789 = vld [vmem:[%s3 + $0x748] sm:$0xf]
  %v7790 = vld [vmem:[%s3 + $0x74c] sm:$0xf]
  %v7791 = vld [vmem:[%s3 + $0x750] sm:$0xf]
  %v7792 = vld [vmem:[%s3 + $0x754] sm:$0xf]
  %v7793 = vld [vmem:[%s3 + $0x758] sm:$0xf]
  %v7794 = vld [vmem:[%s3 + $0x75c] sm:$0xf]
  %v7795 = vld [vmem:[%s3 + $0x760] sm:$0xf]
  %v7796 = vld [vmem:[%s3 + $0x764] sm:$0xf]
  %v7797 = vld [vmem:[%s3 + $0x768] sm:$0xf]
  %v7798 = vld [vmem:[%s3 + $0x76c] sm:$0xf]
  %v7799 = vld [vmem:[%s3 + $0x770] sm:$0xf]
  %v7800 = vld [vmem:[%s3 + $0x774] sm:$0xf]
  %v7801 = vld [vmem:[%s3 + $0x778] sm:$0xf]
  %v7802 = vld [vmem:[%s3 + $0x77c] sm:$0xf]
  %v7803 = vld [vmem:[%s3 + $0x780] sm:$0xf]
  %v7804 = vld [vmem:[%s3 + $0x784] sm:$0xf]
  %v7805 = vld [vmem:[%s3 + $0x788] sm:$0xf]
  %v7806 = vld [vmem:[%s3 + $0x78c] sm:$0xf]
  %v7807 = vld [vmem:[%s3 + $0x790] sm:$0xf]
  %v7808 = vld [vmem:[%s3 + $0x794] sm:$0xf]
  %v7809 = vld [vmem:[%s3 + $0x798] sm:$0xf]
  %v7810 = vld [vmem:[%s3 + $0x79c] sm:$0xf]
  %v7811 = vld [vmem:[%s3 + $0x7a0] sm:$0xf]
  %v7812 = vld [vmem:[%s3 + $0x7a4] sm:$0xf]
  %v7813 = vld [vmem:[%s3 + $0x7a8] sm:$0xf]
  %v7814 = vld [vmem:[%s3 + $0x7ac] sm:$0xf]
  %v7815 = vld [vmem:[%s3 + $0x7b0] sm:$0xf]
  %v7816 = vld [vmem:[%s3 + $0x7b4] sm:$0xf]
  %v7817 = vld [vmem:[%s3 + $0x7b8] sm:$0xf]
  %v7818 = vld [vmem:[%s3 + $0x7bc] sm:$0xf]
  %v7819 = vld [vmem:[%s3 + $0x7c0] sm:$0xf]
  %v7820 = vld [vmem:[%s3 + $0x7c4] sm:$0xf]
  %v7821 = vld [vmem:[%s3 + $0x7c8] sm:$0xf]
  %v7822 = vld [vmem:[%s3 + $0x7cc] sm:$0xf]
  %v7823 = vld [vmem:[%s3 + $0x7d0] sm:$0xf]
  %v7824 = vld [vmem:[%s3 + $0x7d4] sm:$0xf]
  %v7825 = vld [vmem:[%s3 + $0x7d8] sm:$0xf]
  %v7826 = vld [vmem:[%s3 + $0x7dc] sm:$0xf]
  %v7827 = vld [vmem:[%s3 + $0x7e0] sm:$0xf]
  %v7828 = vld [vmem:[%s3 + $0x7e4] sm:$0xf]
  %v7829 = vld [vmem:[%s3 + $0x7e8] sm:$0xf]
  %v7830 = vld [vmem:[%s3 + $0x7ec] sm:$0xf]
  %v7831 = vld [vmem:[%s3 + $0x7f0] sm:$0xf]
  %v7832 = vld [vmem:[%s3 + $0x7f4] sm:$0xf]
  %v7833 = vld [vmem:[%s3 + $0x7f8] sm:$0xf]
  %v7834 = vld [vmem:[%s3 + $0x7fc] sm:$0xf]
  %v7835 = vld [vmem:[%s3 + $0x800] sm:$0xf]
  %v7836 = vld [vmem:[%s3 + $0x804] sm:$0xf]
  %v7837 = vld [vmem:[%s3 + $0x808] sm:$0xf]
  %v7838 = vld [vmem:[%s3 + $0x80c] sm:$0xf]
  %v7839 = vld [vmem:[%s3 + $0x810] sm:$0xf]
  %v7840 = vld [vmem:[%s3 + $0x814] sm:$0xf]
  %v7841 = vld [vmem:[%s3 + $0x818] sm:$0xf]
  %v7842 = vld [vmem:[%s3 + $0x81c] sm:$0xf]
  %v7843 = vld [vmem:[%s3 + $0x820] sm:$0xf]
  %v7844 = vld [vmem:[%s3 + $0x824] sm:$0xf]
  %v7845 = vld [vmem:[%s3 + $0x828] sm:$0xf]
  %v7846 = vld [vmem:[%s3 + $0x82c] sm:$0xf]
  %v7847 = vld [vmem:[%s3 + $0x830] sm:$0xf]
  %v7848 = vld [vmem:[%s3 + $0x834] sm:$0xf]
  %v7849 = vld [vmem:[%s3 + $0x838] sm:$0xf]
  %v7850 = vld [vmem:[%s3 + $0x83c] sm:$0xf]
  %v7851 = vld [vmem:[%s3 + $0x840] sm:$0xf]
  %v7852 = vld [vmem:[%s3 + $0x844] sm:$0xf]
  %v7853 = vld [vmem:[%s3 + $0x848] sm:$0xf]
  %v7854 = vld [vmem:[%s3 + $0x84c] sm:$0xf]
  %v7855 = vld [vmem:[%s3 + $0x850] sm:$0xf]
  %v7856 = vld [vmem:[%s3 + $0x854] sm:$0xf]
  %v7857 = vld [vmem:[%s3 + $0x858] sm:$0xf]
  %v7858 = vld [vmem:[%s3 + $0x85c] sm:$0xf]
  %v7859 = vld [vmem:[%s3 + $0x860] sm:$0xf]
  %v7860 = vld [vmem:[%s3 + $0x864] sm:$0xf]
  %v7861 = vld [vmem:[%s3 + $0x868] sm:$0xf]
  %v7862 = vld [vmem:[%s3 + $0x86c] sm:$0xf]
  %v7863 = vld [vmem:[%s3 + $0x870] sm:$0xf]
  %v7864 = vld [vmem:[%s3 + $0x874] sm:$0xf]
  %v7865 = vld [vmem:[%s3 + $0x878] sm:$0xf]
  %v7866 = vld [vmem:[%s3 + $0x87c] sm:$0xf]
  %v7867 = vld [vmem:[%s3 + $0x880] sm:$0xf]
  %v7868 = vld [vmem:[%s3 + $0x884] sm:$0xf]
  %v7869 = vld [vmem:[%s3 + $0x888] sm:$0xf]
  %v7870 = vld [vmem:[%s3 + $0x88c] sm:$0xf]
  %v7871 = vld [vmem:[%s3 + $0x890] sm:$0xf]
  %v7872 = vld [vmem:[%s3 + $0x894] sm:$0xf]
  %v7873 = vld [vmem:[%s3 + $0x898] sm:$0xf]
  %v7874 = vld [vmem:[%s3 + $0x89c] sm:$0xf]
  %v7875 = vld [vmem:[%s3 + $0x8a0] sm:$0xf]
  %v7876 = vld [vmem:[%s3 + $0x8a4] sm:$0xf]
  %v7877 = vld [vmem:[%s3 + $0x8a8] sm:$0xf]
  %v7878 = vld [vmem:[%s3 + $0x8ac] sm:$0xf]
  %v7879 = vld [vmem:[%s3 + $0x8b0] sm:$0xf]
  %v7880 = vld [vmem:[%s3 + $0x8b4] sm:$0xf]
  %v7881 = vld [vmem:[%s3 + $0x8b8] sm:$0xf]
  %v7882 = vld [vmem:[%s3 + $0x8bc] sm:$0xf]
  %v7883 = vld [vmem:[%s3 + $0x8c0] sm:$0xf]
  %v7884 = vld [vmem:[%s3 + $0x8c4] sm:$0xf]
  %v7885 = vld [vmem:[%s3 + $0x8c8] sm:$0xf]
  %v7886 = vld [vmem:[%s3 + $0x8cc] sm:$0xf]
  %v7887 = vld [vmem:[%s3 + $0x8d0] sm:$0xf]
  %v7888 = vld [vmem:[%s3 + $0x8d4] sm:$0xf]
  %v7889 = vld [vmem:[%s3 + $0x8d8] sm:$0xf]
  %v7890 = vld [vmem:[%s3 + $0x8dc] sm:$0xf]
  %v7891 = vld [vmem:[%s3 + $0x8e0] sm:$0xf]
  %v7892 = vld [vmem:[%s3 + $0x8e4] sm:$0xf]
  %v7893 = vld [vmem:[%s3 + $0x8e8] sm:$0xf]
  %v7894 = vld [vmem:[%s3 + $0x8ec] sm:$0xf]
  %v7895 = vld [vmem:[%s3 + $0x8f0] sm:$0xf]
  %v7896 = vld [vmem:[%s3 + $0x8f4] sm:$0xf]
  %v7897 = vld [vmem:[%s3 + $0x8f8] sm:$0xf]
  %v7898 = vld [vmem:[%s3 + $0x8fc] sm:$0xf]
  %v7899 = vld [vmem:[%s3 + $0x900] sm:$0xf]
  %v7900 = vld [vmem:[%s3 + $0x904] sm:$0xf]
  %v7901 = vld [vmem:[%s3 + $0x908] sm:$0xf]
  %v7902 = vld [vmem:[%s3 + $0x90c] sm:$0xf]
  %v7903 = vld [vmem:[%s3 + $0x910] sm:$0xf]
  %v7904 = vld [vmem:[%s3 + $0x914] sm:$0xf]
  %v7905 = vld [vmem:[%s3 + $0x918] sm:$0xf]
  %v7906 = vld [vmem:[%s3 + $0x91c] sm:$0xf]
  %v7907 = vld [vmem:[%s3 + $0x920] sm:$0xf]
  %v7908 = vld [vmem:[%s3 + $0x924] sm:$0xf]
  %v7909 = vld [vmem:[%s3 + $0x928] sm:$0xf]
  %v7910 = vld [vmem:[%s3 + $0x92c] sm:$0xf]
  %v7911 = vld [vmem:[%s3 + $0x930] sm:$0xf]
  %v7912 = vld [vmem:[%s3 + $0x934] sm:$0xf]
  %v7913 = vld [vmem:[%s3 + $0x938] sm:$0xf]
  %v7914 = vld [vmem:[%s3 + $0x93c] sm:$0xf]
  %v7915 = vld [vmem:[%s3 + $0x940] sm:$0xf]
  %v7916 = vld [vmem:[%s3 + $0x944] sm:$0xf]
  %v7917 = vld [vmem:[%s3 + $0x948] sm:$0xf]
  %v7918 = vld [vmem:[%s3 + $0x94c] sm:$0xf]
  %v7919 = vld [vmem:[%s3 + $0x950] sm:$0xf]
  %v7920 = vld [vmem:[%s3 + $0x954] sm:$0xf]
  %v7921 = vld [vmem:[%s3 + $0x958] sm:$0xf]
  %v7922 = vld [vmem:[%s3 + $0x95c] sm:$0xf]
  %v7923 = vld [vmem:[%s3 + $0x960] sm:$0xf]
  %v7924 = vld [vmem:[%s3 + $0x964] sm:$0xf]
  %v7925 = vld [vmem:[%s3 + $0x968] sm:$0xf]
  %v7926 = vld [vmem:[%s3 + $0x96c] sm:$0xf]
  %v7927 = vld [vmem:[%s3 + $0x970] sm:$0xf]
  %v7928 = vld [vmem:[%s3 + $0x974] sm:$0xf]
  %v7929 = vld [vmem:[%s3 + $0x978] sm:$0xf]
  %v7930 = vld [vmem:[%s3 + $0x97c] sm:$0xf]
  %v7931 = vld [vmem:[%s3 + $0x980] sm:$0xf]
  %v7932 = vld [vmem:[%s3 + $0x984] sm:$0xf]
  %v7933 = vld [vmem:[%s3 + $0x988] sm:$0xf]
  %v7934 = vld [vmem:[%s3 + $0x98c] sm:$0xf]
  %v7935 = vld [vmem:[%s3 + $0x990] sm:$0xf]
  %v7936 = vld [vmem:[%s3 + $0x994] sm:$0xf]
  %v7937 = vld [vmem:[%s3 + $0x998] sm:$0xf]
  %v7938 = vld [vmem:[%s3 + $0x99c] sm:$0xf]
  %v7939 = vld [vmem:[%s3 + $0x9a0] sm:$0xf]
  %v7940 = vld [vmem:[%s3 + $0x9a4] sm:$0xf]
  %v7941 = vld [vmem:[%s3 + $0x9a8] sm:$0xf]
  %v7942 = vld [vmem:[%s3 + $0x9ac] sm:$0xf]
  %v7943 = vld [vmem:[%s3 + $0x9b0] sm:$0xf]
  %v7944 = vld [vmem:[%s3 + $0x9b4] sm:$0xf]
  %v7945 = vld [vmem:[%s3 + $0x9b8] sm:$0xf]
  %v7946 = vld [vmem:[%s3 + $0x9bc] sm:$0xf]
  %v7947 = vld [vmem:[%s3 + $0x9c0] sm:$0xf]
  %v7948 = vld [vmem:[%s3 + $0x9c4] sm:$0xf]
  %v7949 = vld [vmem:[%s3 + $0x9c8] sm:$0xf]
  %v7950 = vld [vmem:[%s3 + $0x9cc] sm:$0xf]
  %v7951 = vld [vmem:[%s3 + $0x9d0] sm:$0xf]
  %v7952 = vld [vmem:[%s3 + $0x9d4] sm:$0xf]
  %v7953 = vld [vmem:[%s3 + $0x9d8] sm:$0xf]
  %v7954 = vld [vmem:[%s3 + $0x9dc] sm:$0xf]
  %v7955 = vld [vmem:[%s3 + $0x9e0] sm:$0xf]
  %v7956 = vld [vmem:[%s3 + $0x9e4] sm:$0xf]
  %v7957 = vld [vmem:[%s3 + $0x9e8] sm:$0xf]
  %v7958 = vld [vmem:[%s3 + $0x9ec] sm:$0xf]
  %v7959 = vld [vmem:[%s3 + $0x9f0] sm:$0xf]
  %v7960 = vld [vmem:[%s3 + $0x9f4] sm:$0xf]
  %v7961 = vld [vmem:[%s3 + $0x9f8] sm:$0xf]
  %v7962 = vld [vmem:[%s3 + $0x9fc] sm:$0xf]
  %v7963 = vld [vmem:[%s3 + $0xa00] sm:$0xf]
  %v7964 = vld [vmem:[%s3 + $0xa04] sm:$0xf]
  %v7965 = vld [vmem:[%s3 + $0xa08] sm:$0xf]
  %v7966 = vld [vmem:[%s3 + $0xa0c] sm:$0xf]
  %v7967 = vld [vmem:[%s3 + $0xa10] sm:$0xf]
  %v7968 = vld [vmem:[%s3 + $0xa14] sm:$0xf]
  %v7969 = vld [vmem:[%s3 + $0xa18] sm:$0xf]
  %v7970 = vld [vmem:[%s3 + $0xa1c] sm:$0xf]
  %v7971 = vld [vmem:[%s3 + $0xa20] sm:$0xf]
  %v7972 = vld [vmem:[%s3 + $0xa24] sm:$0xf]
  %v7973 = vld [vmem:[%s3 + $0xa28] sm:$0xf]
  %v7974 = vld [vmem:[%s3 + $0xa2c] sm:$0xf]
  %v7975 = vld [vmem:[%s3 + $0xa30] sm:$0xf]
  %v7976 = vld [vmem:[%s3 + $0xa34] sm:$0xf]
  %v7977 = vld [vmem:[%s3 + $0xa38] sm:$0xf]
  %v7978 = vld [vmem:[%s3 + $0xa3c] sm:$0xf]
  %v7979 = vld [vmem:[%s3 + $0xa40] sm:$0xf]
  %v7980 = vld [vmem:[%s3 + $0xa44] sm:$0xf]
  %v7981 = vld [vmem:[%s3 + $0xa48] sm:$0xf]
  %v7982 = vld [vmem:[%s3 + $0xa4c] sm:$0xf]
  %v7983 = vld [vmem:[%s3 + $0xa50] sm:$0xf]
  %v7984 = vld [vmem:[%s3 + $0xa54] sm:$0xf]
  %v7985 = vld [vmem:[%s3 + $0xa58] sm:$0xf]
  %v7986 = vld [vmem:[%s3 + $0xa5c] sm:$0xf]
  %v7987 = vld [vmem:[%s3 + $0xa60] sm:$0xf]
  %v7988 = vld [vmem:[%s3 + $0xa64] sm:$0xf]
  %v7989 = vld [vmem:[%s3 + $0xa68] sm:$0xf]
  %v7990 = vld [vmem:[%s3 + $0xa6c] sm:$0xf]
  %v7991 = vld [vmem:[%s3 + $0xa70] sm:$0xf]
  %v7992 = vld [vmem:[%s3 + $0xa74] sm:$0xf]
  %v7993 = vld [vmem:[%s3 + $0xa78] sm:$0xf]
  %v7994 = vld [vmem:[%s3 + $0xa7c] sm:$0xf]
  %v7995 = vld [vmem:[%s3 + $0xa80] sm:$0xf]
  %v7996 = vld [vmem:[%s3 + $0xa84] sm:$0xf]
  %v7997 = vld [vmem:[%s3 + $0xa88] sm:$0xf]
  %v7998 = vld [vmem:[%s3 + $0xa8c] sm:$0xf]
  %v7999 = vld [vmem:[%s3 + $0xa90] sm:$0xf]
  %v8000 = vld [vmem:[%s3 + $0xa94] sm:$0xf]
  %v8001 = vld [vmem:[%s3 + $0xa98] sm:$0xf]
  %v8002 = vld [vmem:[%s3 + $0xa9c] sm:$0xf]
  %v8003 = vld [vmem:[%s3 + $0xaa0] sm:$0xf]
  %v8004 = vld [vmem:[%s3 + $0xaa4] sm:$0xf]
  %v8005 = vld [vmem:[%s3 + $0xaa8] sm:$0xf]
  %v8006 = vld [vmem:[%s3 + $0xaac] sm:$0xf]
  %v8007 = vld [vmem:[%s3 + $0xab0] sm:$0xf]
  %v8008 = vld [vmem:[%s3 + $0xab4] sm:$0xf]
  %v8009 = vld [vmem:[%s3 + $0xab8] sm:$0xf]
  %v8010 = vld [vmem:[%s3 + $0xabc] sm:$0xf]
  %v8011 = vld [vmem:[%s3 + $0xac0] sm:$0xf]
  %v8012 = vld [vmem:[%s3 + $0xac4] sm:$0xf]
  %v8013 = vld [vmem:[%s3 + $0xac8] sm:$0xf]
  %v8014 = vld [vmem:[%s3 + $0xacc] sm:$0xf]
  %v8015 = vld [vmem:[%s3 + $0xad0] sm:$0xf]
  %v8016 = vld [vmem:[%s3 + $0xad4] sm:$0xf]
  %v8017 = vld [vmem:[%s3 + $0xad8] sm:$0xf]
  %v8018 = vld [vmem:[%s3 + $0xadc] sm:$0xf]
  %v8019 = vld [vmem:[%s3 + $0xae0] sm:$0xf]
  %v8020 = vld [vmem:[%s3 + $0xae4] sm:$0xf]
  %v8021 = vld [vmem:[%s3 + $0xae8] sm:$0xf]
  %v8022 = vld [vmem:[%s3 + $0xaec] sm:$0xf]
  %v8023 = vld [vmem:[%s3 + $0xaf0] sm:$0xf]
  %v8024 = vld [vmem:[%s3 + $0xaf4] sm:$0xf]
  %v8025 = vld [vmem:[%s3 + $0xaf8] sm:$0xf]
  %v8026 = vld [vmem:[%s3 + $0xafc] sm:$0xf]
  %v8027 = vld [vmem:[%s3 + $0xb00] sm:$0xf]
  %v8028 = vld [vmem:[%s3 + $0xb04] sm:$0xf]
  %v8029 = vld [vmem:[%s3 + $0xb08] sm:$0xf]
  %v8030 = vld [vmem:[%s3 + $0xb0c] sm:$0xf]
  %v8031 = vld [vmem:[%s3 + $0xb10] sm:$0xf]
  %v8032 = vld [vmem:[%s3 + $0xb14] sm:$0xf]
  %v8033 = vld [vmem:[%s3 + $0xb18] sm:$0xf]
  %v8034 = vld [vmem:[%s3 + $0xb1c] sm:$0xf]
  %v8035 = vld [vmem:[%s3 + $0xb20] sm:$0xf]
  %v8036 = vld [vmem:[%s3 + $0xb24] sm:$0xf]
  %v8037 = vld [vmem:[%s3 + $0xb28] sm:$0xf]
  %v8038 = vld [vmem:[%s3 + $0xb2c] sm:$0xf]
  %v8039 = vld [vmem:[%s3 + $0xb30] sm:$0xf]
  %v8040 = vld [vmem:[%s3 + $0xb34] sm:$0xf]
  %v8041 = vld [vmem:[%s3 + $0xb38] sm:$0xf]
  %v8042 = vld [vmem:[%s3 + $0xb3c] sm:$0xf]
  %v8043 = vld [vmem:[%s3 + $0xb40] sm:$0xf]
  %v8044 = vld [vmem:[%s3 + $0xb44] sm:$0xf]
  %v8045 = vld [vmem:[%s3 + $0xb48] sm:$0xf]
  %v8046 = vld [vmem:[%s3 + $0xb4c] sm:$0xf]
  %v8047 = vld [vmem:[%s3 + $0xb50] sm:$0xf]
  %v8048 = vld [vmem:[%s3 + $0xb54] sm:$0xf]
  %v8049 = vld [vmem:[%s3 + $0xb58] sm:$0xf]
  %v8050 = vld [vmem:[%s3 + $0xb5c] sm:$0xf]
  %v8051 = vld [vmem:[%s3 + $0xb60] sm:$0xf]
  %v8052 = vld [vmem:[%s3 + $0xb64] sm:$0xf]
  %v8053 = vld [vmem:[%s3 + $0xb68] sm:$0xf]
  %v8054 = vld [vmem:[%s3 + $0xb6c] sm:$0xf]
  %v8055 = vld [vmem:[%s3 + $0xb70] sm:$0xf]
  %v8056 = vld [vmem:[%s3 + $0xb74] sm:$0xf]
  %v8057 = vld [vmem:[%s3 + $0xb78] sm:$0xf]
  %v8058 = vld [vmem:[%s3 + $0xb7c] sm:$0xf]
  %v8059 = vld [vmem:[%s3 + $0xb80] sm:$0xf]
  %v8060 = vld [vmem:[%s3 + $0xb84] sm:$0xf]
  %v8061 = vld [vmem:[%s3 + $0xb88] sm:$0xf]
  %v8062 = vld [vmem:[%s3 + $0xb8c] sm:$0xf]
  %v8063 = vld [vmem:[%s3 + $0xb90] sm:$0xf]
  %v8064 = vld [vmem:[%s3 + $0xb94] sm:$0xf]
  %v8065 = vld [vmem:[%s3 + $0xb98] sm:$0xf]
  %v8066 = vld [vmem:[%s3 + $0xb9c] sm:$0xf]
  %v8067 = vld [vmem:[%s3 + $0xba0] sm:$0xf]
  %v8068 = vld [vmem:[%s3 + $0xba4] sm:$0xf]
  %v8069 = vld [vmem:[%s3 + $0xba8] sm:$0xf]
  %v8070 = vld [vmem:[%s3 + $0xbac] sm:$0xf]
  %v8071 = vld [vmem:[%s3 + $0xbb0] sm:$0xf]
  %v8072 = vld [vmem:[%s3 + $0xbb4] sm:$0xf]
  %v8073 = vld [vmem:[%s3 + $0xbb8] sm:$0xf]
  %v8074 = vld [vmem:[%s3 + $0xbbc] sm:$0xf]
  %v8075 = vld [vmem:[%s3 + $0xbc0] sm:$0xf]
  %v8076 = vld [vmem:[%s3 + $0xbc4] sm:$0xf]
  %v8077 = vld [vmem:[%s3 + $0xbc8] sm:$0xf]
  %v8078 = vld [vmem:[%s3 + $0xbcc] sm:$0xf]
  %v8079 = vld [vmem:[%s3 + $0xbd0] sm:$0xf]
  %v8080 = vld [vmem:[%s3 + $0xbd4] sm:$0xf]
  %v8081 = vld [vmem:[%s3 + $0xbd8] sm:$0xf]
  %v8082 = vld [vmem:[%s3 + $0xbdc] sm:$0xf]
  %v8083 = vld [vmem:[%s3 + $0xbe0] sm:$0xf]
  %v8084 = vld [vmem:[%s3 + $0xbe4] sm:$0xf]
  %v8085 = vld [vmem:[%s3 + $0xbe8] sm:$0xf]
  %v8086 = vld [vmem:[%s3 + $0xbec] sm:$0xf]
  %v8087 = vld [vmem:[%s3 + $0xbf0] sm:$0xf]
  %v8088 = vld [vmem:[%s3 + $0xbf4] sm:$0xf]
  %v8089 = vld [vmem:[%s3 + $0xbf8] sm:$0xf]
  %v8090 = vld [vmem:[%s3 + $0xbfc] sm:$0xf]
  %v8091 = vld [vmem:[%s3 + $0xc00] sm:$0xf]
  %v8092 = vld [vmem:[%s3 + $0xc04] sm:$0xf]
  %v8093 = vld [vmem:[%s3 + $0xc08] sm:$0xf]
  %v8094 = vld [vmem:[%s3 + $0xc0c] sm:$0xf]
  %v8095 = vld [vmem:[%s3 + $0xc10] sm:$0xf]
  %v8096 = vld [vmem:[%s3 + $0xc14] sm:$0xf]
  %v8097 = vld [vmem:[%s3 + $0xc18] sm:$0xf]
  %v8098 = vld [vmem:[%s3 + $0xc1c] sm:$0xf]
  %v8099 = vld [vmem:[%s3 + $0xc20] sm:$0xf]
  %v8100 = vld [vmem:[%s3 + $0xc24] sm:$0xf]
  %v8101 = vld [vmem:[%s3 + $0xc28] sm:$0xf]
  %v8102 = vld [vmem:[%s3 + $0xc2c] sm:$0xf]
  %v8103 = vld [vmem:[%s3 + $0xc30] sm:$0xf]
  %v8104 = vld [vmem:[%s3 + $0xc34] sm:$0xf]
  %v8105 = vld [vmem:[%s3 + $0xc38] sm:$0xf]
  %v8106 = vld [vmem:[%s3 + $0xc3c] sm:$0xf]
  %v8107 = vld [vmem:[%s3 + $0xc40] sm:$0xf]
  %v8108 = vld [vmem:[%s3 + $0xc44] sm:$0xf]
  %v8109 = vld [vmem:[%s3 + $0xc48] sm:$0xf]
  %v8110 = vld [vmem:[%s3 + $0xc4c] sm:$0xf]
  %v8111 = vld [vmem:[%s3 + $0xc50] sm:$0xf]
  %v8112 = vld [vmem:[%s3 + $0xc54] sm:$0xf]
  %v8113 = vld [vmem:[%s3 + $0xc58] sm:$0xf]
  %v8114 = vld [vmem:[%s3 + $0xc5c] sm:$0xf]
  %v8115 = vld [vmem:[%s3 + $0xc60] sm:$0xf]
  %v8116 = vld [vmem:[%s3 + $0xc64] sm:$0xf]
  %v8117 = vld [vmem:[%s3 + $0xc68] sm:$0xf]
  %v8118 = vld [vmem:[%s3 + $0xc6c] sm:$0xf]
  %v8119 = vld [vmem:[%s3 + $0xc70] sm:$0xf]
  %v8120 = vld [vmem:[%s3 + $0xc74] sm:$0xf]
  %v8121 = vld [vmem:[%s3 + $0xc78] sm:$0xf]
  %v8122 = vld [vmem:[%s3 + $0xc7c] sm:$0xf]
  %v8123 = vld [vmem:[%s3 + $0xc80] sm:$0xf]
  %v8124 = vld [vmem:[%s3 + $0xc84] sm:$0xf]
  %v8125 = vld [vmem:[%s3 + $0xc88] sm:$0xf]
  %v8126 = vld [vmem:[%s3 + $0xc8c] sm:$0xf]
  %v8127 = vld [vmem:[%s3 + $0xc90] sm:$0xf]
  %v8128 = vld [vmem:[%s3 + $0xc94] sm:$0xf]
  %v8129 = vld [vmem:[%s3 + $0xc98] sm:$0xf]
  %v8130 = vld [vmem:[%s3 + $0xc9c] sm:$0xf]
  %v8131 = vld [vmem:[%s3 + $0xca0] sm:$0xf]
  %v8132 = vld [vmem:[%s3 + $0xca4] sm:$0xf]
  %v8133 = vld [vmem:[%s3 + $0xca8] sm:$0xf]
  %v8134 = vld [vmem:[%s3 + $0xcac] sm:$0xf]
  %v8135 = vld [vmem:[%s3 + $0xcb0] sm:$0xf]
  %v8136 = vld [vmem:[%s3 + $0xcb4] sm:$0xf]
  %v8137 = vld [vmem:[%s3 + $0xcb8] sm:$0xf]
  %v8138 = vld [vmem:[%s3 + $0xcbc] sm:$0xf]
  %v8139 = vld [vmem:[%s3 + $0xcc0] sm:$0xf]
  %v8140 = vld [vmem:[%s3 + $0xcc4] sm:$0xf]
  %v8141 = vld [vmem:[%s3 + $0xcc8] sm:$0xf]
  %v8142 = vld [vmem:[%s3 + $0xccc] sm:$0xf]
  %v8143 = vld [vmem:[%s3 + $0xcd0] sm:$0xf]
  %v8144 = vld [vmem:[%s3 + $0xcd4] sm:$0xf]
  %v8145 = vld [vmem:[%s3 + $0xcd8] sm:$0xf]
  %v8146 = vld [vmem:[%s3 + $0xcdc] sm:$0xf]
  %v8147 = vld [vmem:[%s3 + $0xce0] sm:$0xf]
  %v8148 = vld [vmem:[%s3 + $0xce4] sm:$0xf]
  %v8149 = vld [vmem:[%s3 + $0xce8] sm:$0xf]
  %v8150 = vld [vmem:[%s3 + $0xcec] sm:$0xf]
  %v8151 = vld [vmem:[%s3 + $0xcf0] sm:$0xf]
  %v8152 = vld [vmem:[%s3 + $0xcf4] sm:$0xf]
  %v8153 = vld [vmem:[%s3 + $0xcf8] sm:$0xf]
  %v8154 = vld [vmem:[%s3 + $0xcfc] sm:$0xf]
  %v8157 = vunpack.c.l.b16 %v7297
  %v8158 = vunpack.c.h.b16 %v7297
  %v8159 = vunpack.c.l.b16 %v7298
  %v8160 = vunpack.c.h.b16 %v7298
  %v8161 = vpack.c.b16 %v8157, %v8157
  %v8162 = vpack.c.b16 %v8158, %v8158
  %v8163 = vpack.c.b16 %v8159, %v8159
  %v8164 = vpack.c.b16 %v8160, %v8160
  %v8233 = vunpack.c.l.b16 %v7323
  %v8234 = vunpack.c.l.b16 %v7324
  %v8235 = vunpack.c.l.b16 %v7325
  %v8236 = vunpack.c.l.b16 %v7326
  %v8237 = vunpack.c.l.b16 %v7327
  %v8238 = vunpack.c.l.b16 %v7328
  %v8239 = vunpack.c.l.b16 %v7329
  %v8240 = vunpack.c.l.b16 %v7330
  %v8241 = vunpack.c.l.b16 %v7331
  %v8242 = vunpack.c.l.b16 %v7332
  %v8243 = vunpack.c.l.b16 %v7333
  %v8244 = vunpack.c.l.b16 %v7334
  %v8245 = vunpack.c.l.b16 %v7335
  %v8246 = vunpack.c.l.b16 %v7336
  %v8247 = vunpack.c.l.b16 %v7337
  %v8248 = vunpack.c.l.b16 %v7338
  %v8249 = vunpack.c.l.b16 %v7339
  %v8250 = vunpack.c.l.b16 %v7340
  %v8251 = vunpack.c.l.b16 %v7341
  %v8252 = vunpack.c.l.b16 %v7342
  %v8253 = vunpack.c.l.b16 %v7343
  %v8254 = vunpack.c.l.b16 %v7344
  %v8255 = vunpack.c.l.b16 %v7345
  %v8256 = vunpack.c.l.b16 %v7346
  %v8257 = vunpack.c.l.b16 %v7347
  %v8258 = vunpack.c.l.b16 %v7348
  %v8259 = vunpack.c.l.b16 %v7349
  %v8260 = vunpack.c.l.b16 %v7350
  %v8261 = vunpack.c.l.b16 %v7351
  %v8262 = vunpack.c.l.b16 %v7352
  %v8263 = vunpack.c.l.b16 %v7353
  %v8264 = vunpack.c.l.b16 %v7354
  %v8265 = vunpack.c.l.b16 %v7355
  %v8266 = vunpack.c.l.b16 %v7356
  %v8267 = vunpack.c.l.b16 %v7357
  %v8268 = vunpack.c.l.b16 %v7358
  %v8269 = vunpack.c.l.b16 %v7359
  %v8270 = vunpack.c.l.b16 %v7360
  %v8271 = vunpack.c.l.b16 %v7361
  %v8272 = vunpack.c.l.b16 %v7362
  %v8273 = vunpack.c.l.b16 %v7363
  %v8274 = vunpack.c.l.b16 %v7364
  %v8275 = vunpack.c.l.b16 %v7365
  %v8276 = vunpack.c.l.b16 %v7366
  %v8277 = vunpack.c.l.b16 %v7367
  %v8278 = vunpack.c.l.b16 %v7368
  %v8279 = vunpack.c.l.b16 %v7369
  %v8280 = vunpack.c.l.b16 %v7370
  %v8281 = vunpack.c.l.b16 %v7371
  %v8282 = vunpack.c.l.b16 %v7372
  %v8283 = vunpack.c.l.b16 %v7373
  %v8284 = vunpack.c.l.b16 %v7374
  %v8285 = vunpack.c.l.b16 %v7375
  %v8286 = vunpack.c.l.b16 %v7376
  %v8287 = vunpack.c.l.b16 %v7377
  %v8288 = vunpack.c.l.b16 %v7378
  %v8289 = vunpack.c.l.b16 %v7379
  %v8290 = vunpack.c.l.b16 %v7380
  %v8291 = vunpack.c.l.b16 %v7381
  %v8292 = vunpack.c.l.b16 %v7382
  %v8293 = vunpack.c.l.b16 %v7383
  %v8294 = vunpack.c.l.b16 %v7384
  %v8295 = vunpack.c.l.b16 %v7385
  %v8296 = vunpack.c.l.b16 %v7386
  %v8297 = vpack.c.b16 %v8234, %v8233
  %v8298 = vpack.c.b16 %v8236, %v8235
  %v8299 = vpack.c.b16 %v8238, %v8237
  %v8300 = vpack.c.b16 %v8240, %v8239
  %v8301 = vpack.c.b16 %v8242, %v8241
  %v8302 = vpack.c.b16 %v8244, %v8243
  %v8303 = vpack.c.b16 %v8246, %v8245
  %v8304 = vpack.c.b16 %v8248, %v8247
  %v8305 = vpack.c.b16 %v8250, %v8249
  %v8306 = vpack.c.b16 %v8252, %v8251
  %v8307 = vpack.c.b16 %v8254, %v8253
  %v8308 = vpack.c.b16 %v8256, %v8255
  %v8309 = vpack.c.b16 %v8258, %v8257
  %v8310 = vpack.c.b16 %v8260, %v8259
  %v8311 = vpack.c.b16 %v8262, %v8261
  %v8312 = vpack.c.b16 %v8264, %v8263
  %v8313 = vpack.c.b16 %v8266, %v8265
  %v8314 = vpack.c.b16 %v8268, %v8267
  %v8315 = vpack.c.b16 %v8270, %v8269
  %v8316 = vpack.c.b16 %v8272, %v8271
  %v8317 = vpack.c.b16 %v8274, %v8273
  %v8318 = vpack.c.b16 %v8276, %v8275
  %v8319 = vpack.c.b16 %v8278, %v8277
  %v8320 = vpack.c.b16 %v8280, %v8279
  %v8321 = vpack.c.b16 %v8282, %v8281
  %v8322 = vpack.c.b16 %v8284, %v8283
  %v8323 = vpack.c.b16 %v8286, %v8285
  %v8324 = vpack.c.b16 %v8288, %v8287
  %v8325 = vpack.c.b16 %v8290, %v8289
  %v8326 = vpack.c.b16 %v8292, %v8291
  %v8327 = vpack.c.b16 %v8294, %v8293
  %v8328 = vpack.c.b16 %v8296, %v8295
  %8361 = vmatpush.bf16.msra.mxu0 %v8304
  %8362 = vmatpush.bf16.msra.mxu0 %v8303
  %8363 = vmatpush.bf16.msra.mxu0 %v8302
  %8364 = vmatpush.bf16.msra.mxu0 %v8301
  %8365 = vmatpush.bf16.msra.mxu0 %v8300
  %8366 = vmatpush.bf16.msra.mxu0 %v8299
  %8367 = vmatpush.bf16.msra.mxu0 %v8298
  %8368 = vmatpush.bf16.msra.mxu0 %v8297
  %8369 = vmatmul.bf16.gmra.mxu0 %v8161
  %v8370 = vpop.f32.mrf.mxu0
  %v8371 = vadd.f32 0.0, %v8370
  %v8372 = vpop.f32.mrf.mxu0
  %8373 = vdwg.mxu0
  %8374 = vmatpush.bf16.msra.mxu0 %v8312
  %8375 = vmatpush.bf16.msra.mxu0 %v8311
  %8376 = vmatpush.bf16.msra.mxu0 %v8310
  %8377 = vmatpush.bf16.msra.mxu0 %v8309
  %8378 = vmatpush.bf16.msra.mxu0 %v8308
  %8379 = vmatpush.bf16.msra.mxu0 %v8307
  %8380 = vmatpush.bf16.msra.mxu0 %v8306
  %8381 = vmatpush.bf16.msra.mxu0 %v8305
  %8382 = vmatmul.bf16.gmra.mxu0 %v8162
  %v8383 = vpop.f32.mrf.mxu0
  %v8384 = vadd.f32 %v8371, %v8383
  %v8385 = vpop.f32.mrf.mxu0
  %8386 = vdwg.mxu0
  %8387 = vmatpush.bf16.msra.mxu0 %v8320
  %8388 = vmatpush.bf16.msra.mxu0 %v8319
  %8389 = vmatpush.bf16.msra.mxu0 %v8318
  %8390 = vmatpush.bf16.msra.mxu0 %v8317
  %8391 = vmatpush.bf16.msra.mxu0 %v8316
  %8392 = vmatpush.bf16.msra.mxu0 %v8315
  %8393 = vmatpush.bf16.msra.mxu0 %v8314
  %8394 = vmatpush.bf16.msra.mxu0 %v8313
  %8395 = vmatmul.bf16.gmra.mxu0 %v8163
  %v8396 = vpop.f32.mrf.mxu0
  %v8397 = vadd.f32 %v8384, %v8396
  %v8398 = vpop.f32.mrf.mxu0
  %8399 = vdwg.mxu0
  %8400 = vmatpush.bf16.msra.mxu0 %v8328
  %8401 = vmatpush.bf16.msra.mxu0 %v8327
  %8402 = vmatpush.bf16.msra.mxu0 %v8326
  %8403 = vmatpush.bf16.msra.mxu0 %v8325
  %8404 = vmatpush.bf16.msra.mxu0 %v8324
  %8405 = vmatpush.bf16.msra.mxu0 %v8323
  %8406 = vmatpush.bf16.msra.mxu0 %v8322
  %8407 = vmatpush.bf16.msra.mxu0 %v8321
  %8408 = vmatmul.bf16.gmra.mxu0 %v8164
  %v8409 = vpop.f32.mrf.mxu0
  %v8410 = vadd.f32 %v8397, %v8409
  %v8411 = vpop.f32.mrf.mxu0
  %8412 = vdwg.mxu0
  %v8415 = vunpack.c.l.b16 %v7299
  %v8416 = vunpack.c.h.b16 %v7299
  %v8417 = vunpack.c.l.b16 %v7300
  %v8418 = vunpack.c.h.b16 %v7300
  %v8419 = vpack.c.b16 %v8415, %v8415
  %v8420 = vpack.c.b16 %v8416, %v8416
  %v8421 = vpack.c.b16 %v8417, %v8417
  %v8422 = vpack.c.b16 %v8418, %v8418
  %v8491 = vunpack.c.l.b16 %v7387
  %v8492 = vunpack.c.l.b16 %v7388
  %v8493 = vunpack.c.l.b16 %v7389
  %v8494 = vunpack.c.l.b16 %v7390
  %v8495 = vunpack.c.l.b16 %v7391
  %v8496 = vunpack.c.l.b16 %v7392
  %v8497 = vunpack.c.l.b16 %v7393
  %v8498 = vunpack.c.l.b16 %v7394
  %v8499 = vunpack.c.l.b16 %v7395
  %v8500 = vunpack.c.l.b16 %v7396
  %v8501 = vunpack.c.l.b16 %v7397
  %v8502 = vunpack.c.l.b16 %v7398
  %v8503 = vunpack.c.l.b16 %v7399
  %v8504 = vunpack.c.l.b16 %v7400
  %v8505 = vunpack.c.l.b16 %v7401
  %v8506 = vunpack.c.l.b16 %v7402
  %v8507 = vunpack.c.l.b16 %v7403
  %v8508 = vunpack.c.l.b16 %v7404
  %v8509 = vunpack.c.l.b16 %v7405
  %v8510 = vunpack.c.l.b16 %v7406
  %v8511 = vunpack.c.l.b16 %v7407
  %v8512 = vunpack.c.l.b16 %v7408
  %v8513 = vunpack.c.l.b16 %v7409
  %v8514 = vunpack.c.l.b16 %v7410
  %v8515 = vunpack.c.l.b16 %v7411
  %v8516 = vunpack.c.l.b16 %v7412
  %v8517 = vunpack.c.l.b16 %v7413
  %v8518 = vunpack.c.l.b16 %v7414
  %v8519 = vunpack.c.l.b16 %v7415
  %v8520 = vunpack.c.l.b16 %v7416
  %v8521 = vunpack.c.l.b16 %v7417
  %v8522 = vunpack.c.l.b16 %v7418
  %v8523 = vunpack.c.l.b16 %v7419
  %v8524 = vunpack.c.l.b16 %v7420
  %v8525 = vunpack.c.l.b16 %v7421
  %v8526 = vunpack.c.l.b16 %v7422
  %v8527 = vunpack.c.l.b16 %v7423
  %v8528 = vunpack.c.l.b16 %v7424
  %v8529 = vunpack.c.l.b16 %v7425
  %v8530 = vunpack.c.l.b16 %v7426
  %v8531 = vunpack.c.l.b16 %v7427
  %v8532 = vunpack.c.l.b16 %v7428
  %v8533 = vunpack.c.l.b16 %v7429
  %v8534 = vunpack.c.l.b16 %v7430
  %v8535 = vunpack.c.l.b16 %v7431
  %v8536 = vunpack.c.l.b16 %v7432
  %v8537 = vunpack.c.l.b16 %v7433
  %v8538 = vunpack.c.l.b16 %v7434
  %v8539 = vunpack.c.l.b16 %v7435
  %v8540 = vunpack.c.l.b16 %v7436
  %v8541 = vunpack.c.l.b16 %v7437
  %v8542 = vunpack.c.l.b16 %v7438
  %v8543 = vunpack.c.l.b16 %v7439
  %v8544 = vunpack.c.l.b16 %v7440
  %v8545 = vunpack.c.l.b16 %v7441
  %v8546 = vunpack.c.l.b16 %v7442
  %v8547 = vunpack.c.l.b16 %v7443
  %v8548 = vunpack.c.l.b16 %v7444
  %v8549 = vunpack.c.l.b16 %v7445
  %v8550 = vunpack.c.l.b16 %v7446
  %v8551 = vunpack.c.l.b16 %v7447
  %v8552 = vunpack.c.l.b16 %v7448
  %v8553 = vunpack.c.l.b16 %v7449
  %v8554 = vunpack.c.l.b16 %v7450
  %v8555 = vpack.c.b16 %v8492, %v8491
  %v8556 = vpack.c.b16 %v8494, %v8493
  %v8557 = vpack.c.b16 %v8496, %v8495
  %v8558 = vpack.c.b16 %v8498, %v8497
  %v8559 = vpack.c.b16 %v8500, %v8499
  %v8560 = vpack.c.b16 %v8502, %v8501
  %v8561 = vpack.c.b16 %v8504, %v8503
  %v8562 = vpack.c.b16 %v8506, %v8505
  %v8563 = vpack.c.b16 %v8508, %v8507
  %v8564 = vpack.c.b16 %v8510, %v8509
  %v8565 = vpack.c.b16 %v8512, %v8511
  %v8566 = vpack.c.b16 %v8514, %v8513
  %v8567 = vpack.c.b16 %v8516, %v8515
  %v8568 = vpack.c.b16 %v8518, %v8517
  %v8569 = vpack.c.b16 %v8520, %v8519
  %v8570 = vpack.c.b16 %v8522, %v8521
  %v8571 = vpack.c.b16 %v8524, %v8523
  %v8572 = vpack.c.b16 %v8526, %v8525
  %v8573 = vpack.c.b16 %v8528, %v8527
  %v8574 = vpack.c.b16 %v8530, %v8529
  %v8575 = vpack.c.b16 %v8532, %v8531
  %v8576 = vpack.c.b16 %v8534, %v8533
  %v8577 = vpack.c.b16 %v8536, %v8535
  %v8578 = vpack.c.b16 %v8538, %v8537
  %v8579 = vpack.c.b16 %v8540, %v8539
  %v8580 = vpack.c.b16 %v8542, %v8541
  %v8581 = vpack.c.b16 %v8544, %v8543
  %v8582 = vpack.c.b16 %v8546, %v8545
  %v8583 = vpack.c.b16 %v8548, %v8547
  %v8584 = vpack.c.b16 %v8550, %v8549
  %v8585 = vpack.c.b16 %v8552, %v8551
  %v8586 = vpack.c.b16 %v8554, %v8553
  %8619 = vmatpush.bf16.msra.mxu0 %v8562
  %8620 = vmatpush.bf16.msra.mxu0 %v8561
  %8621 = vmatpush.bf16.msra.mxu0 %v8560
  %8622 = vmatpush.bf16.msra.mxu0 %v8559
  %8623 = vmatpush.bf16.msra.mxu0 %v8558
  %8624 = vmatpush.bf16.msra.mxu0 %v8557
  %8625 = vmatpush.bf16.msra.mxu0 %v8556
  %8626 = vmatpush.bf16.msra.mxu0 %v8555
  %8627 = vmatmul.bf16.gmra.mxu0 %v8419
  %v8628 = vpop.f32.mrf.mxu0
  %v8629 = vadd.f32 0.0, %v8628
  %v8630 = vpop.f32.mrf.mxu0
  %8631 = vdwg.mxu0
  %8632 = vmatpush.bf16.msra.mxu0 %v8570
  %8633 = vmatpush.bf16.msra.mxu0 %v8569
  %8634 = vmatpush.bf16.msra.mxu0 %v8568
  %8635 = vmatpush.bf16.msra.mxu0 %v8567
  %8636 = vmatpush.bf16.msra.mxu0 %v8566
  %8637 = vmatpush.bf16.msra.mxu0 %v8565
  %8638 = vmatpush.bf16.msra.mxu0 %v8564
  %8639 = vmatpush.bf16.msra.mxu0 %v8563
  %8640 = vmatmul.bf16.gmra.mxu0 %v8420
  %v8641 = vpop.f32.mrf.mxu0
  %v8642 = vadd.f32 %v8629, %v8641
  %v8643 = vpop.f32.mrf.mxu0
  %8644 = vdwg.mxu0
  %8645 = vmatpush.bf16.msra.mxu0 %v8578
  %8646 = vmatpush.bf16.msra.mxu0 %v8577
  %8647 = vmatpush.bf16.msra.mxu0 %v8576
  %8648 = vmatpush.bf16.msra.mxu0 %v8575
  %8649 = vmatpush.bf16.msra.mxu0 %v8574
  %8650 = vmatpush.bf16.msra.mxu0 %v8573
  %8651 = vmatpush.bf16.msra.mxu0 %v8572
  %8652 = vmatpush.bf16.msra.mxu0 %v8571
  %8653 = vmatmul.bf16.gmra.mxu0 %v8421
  %v8654 = vpop.f32.mrf.mxu0
  %v8655 = vadd.f32 %v8642, %v8654
  %v8656 = vpop.f32.mrf.mxu0
  %8657 = vdwg.mxu0
  %8658 = vmatpush.bf16.msra.mxu0 %v8586
  %8659 = vmatpush.bf16.msra.mxu0 %v8585
  %8660 = vmatpush.bf16.msra.mxu0 %v8584
  %8661 = vmatpush.bf16.msra.mxu0 %v8583
  %8662 = vmatpush.bf16.msra.mxu0 %v8582
  %8663 = vmatpush.bf16.msra.mxu0 %v8581
  %8664 = vmatpush.bf16.msra.mxu0 %v8580
  %8665 = vmatpush.bf16.msra.mxu0 %v8579
  %8666 = vmatmul.bf16.gmra.mxu0 %v8422
  %v8667 = vpop.f32.mrf.mxu0
  %v8668 = vadd.f32 %v8655, %v8667
  %v8669 = vpop.f32.mrf.mxu0
  %8670 = vdwg.mxu0
  %v8673 = vunpack.c.l.b16 %v7301
  %v8674 = vunpack.c.h.b16 %v7301
  %v8675 = vunpack.c.l.b16 %v7302
  %v8676 = vunpack.c.h.b16 %v7302
  %v8677 = vpack.c.b16 %v8673, %v8673
  %v8678 = vpack.c.b16 %v8674, %v8674
  %v8679 = vpack.c.b16 %v8675, %v8675
  %v8680 = vpack.c.b16 %v8676, %v8676
  %v8749 = vunpack.c.l.b16 %v7451
  %v8750 = vunpack.c.l.b16 %v7452
  %v8751 = vunpack.c.l.b16 %v7453
  %v8752 = vunpack.c.l.b16 %v7454
  %v8753 = vunpack.c.l.b16 %v7455
  %v8754 = vunpack.c.l.b16 %v7456
  %v8755 = vunpack.c.l.b16 %v7457
  %v8756 = vunpack.c.l.b16 %v7458
  %v8757 = vunpack.c.l.b16 %v7459
  %v8758 = vunpack.c.l.b16 %v7460
  %v8759 = vunpack.c.l.b16 %v7461
  %v8760 = vunpack.c.l.b16 %v7462
  %v8761 = vunpack.c.l.b16 %v7463
  %v8762 = vunpack.c.l.b16 %v7464
  %v8763 = vunpack.c.l.b16 %v7465
  %v8764 = vunpack.c.l.b16 %v7466
  %v8765 = vunpack.c.l.b16 %v7467
  %v8766 = vunpack.c.l.b16 %v7468
  %v8767 = vunpack.c.l.b16 %v7469
  %v8768 = vunpack.c.l.b16 %v7470
  %v8769 = vunpack.c.l.b16 %v7471
  %v8770 = vunpack.c.l.b16 %v7472
  %v8771 = vunpack.c.l.b16 %v7473
  %v8772 = vunpack.c.l.b16 %v7474
  %v8773 = vunpack.c.l.b16 %v7475
  %v8774 = vunpack.c.l.b16 %v7476
  %v8775 = vunpack.c.l.b16 %v7477
  %v8776 = vunpack.c.l.b16 %v7478
  %v8777 = vunpack.c.l.b16 %v7479
  %v8778 = vunpack.c.l.b16 %v7480
  %v8779 = vunpack.c.l.b16 %v7481
  %v8780 = vunpack.c.l.b16 %v7482
  %v8781 = vunpack.c.l.b16 %v7483
  %v8782 = vunpack.c.l.b16 %v7484
  %v8783 = vunpack.c.l.b16 %v7485
  %v8784 = vunpack.c.l.b16 %v7486
  %v8785 = vunpack.c.l.b16 %v7487
  %v8786 = vunpack.c.l.b16 %v7488
  %v8787 = vunpack.c.l.b16 %v7489
  %v8788 = vunpack.c.l.b16 %v7490
  %v8789 = vunpack.c.l.b16 %v7491
  %v8790 = vunpack.c.l.b16 %v7492
  %v8791 = vunpack.c.l.b16 %v7493
  %v8792 = vunpack.c.l.b16 %v7494
  %v8793 = vunpack.c.l.b16 %v7495
  %v8794 = vunpack.c.l.b16 %v7496
  %v8795 = vunpack.c.l.b16 %v7497
  %v8796 = vunpack.c.l.b16 %v7498
  %v8797 = vunpack.c.l.b16 %v7499
  %v8798 = vunpack.c.l.b16 %v7500
  %v8799 = vunpack.c.l.b16 %v7501
  %v8800 = vunpack.c.l.b16 %v7502
  %v8801 = vunpack.c.l.b16 %v7503
  %v8802 = vunpack.c.l.b16 %v7504
  %v8803 = vunpack.c.l.b16 %v7505
  %v8804 = vunpack.c.l.b16 %v7506
  %v8805 = vunpack.c.l.b16 %v7507
  %v8806 = vunpack.c.l.b16 %v7508
  %v8807 = vunpack.c.l.b16 %v7509
  %v8808 = vunpack.c.l.b16 %v7510
  %v8809 = vunpack.c.l.b16 %v7511
  %v8810 = vunpack.c.l.b16 %v7512
  %v8811 = vunpack.c.l.b16 %v7513
  %v8812 = vunpack.c.l.b16 %v7514
  %v8813 = vpack.c.b16 %v8750, %v8749
  %v8814 = vpack.c.b16 %v8752, %v8751
  %v8815 = vpack.c.b16 %v8754, %v8753
  %v8816 = vpack.c.b16 %v8756, %v8755
  %v8817 = vpack.c.b16 %v8758, %v8757
  %v8818 = vpack.c.b16 %v8760, %v8759
  %v8819 = vpack.c.b16 %v8762, %v8761
  %v8820 = vpack.c.b16 %v8764, %v8763
  %v8821 = vpack.c.b16 %v8766, %v8765
  %v8822 = vpack.c.b16 %v8768, %v8767
  %v8823 = vpack.c.b16 %v8770, %v8769
  %v8824 = vpack.c.b16 %v8772, %v8771
  %v8825 = vpack.c.b16 %v8774, %v8773
  %v8826 = vpack.c.b16 %v8776, %v8775
  %v8827 = vpack.c.b16 %v8778, %v8777
  %v8828 = vpack.c.b16 %v8780, %v8779
  %v8829 = vpack.c.b16 %v8782, %v8781
  %v8830 = vpack.c.b16 %v8784, %v8783
  %v8831 = vpack.c.b16 %v8786, %v8785
  %v8832 = vpack.c.b16 %v8788, %v8787
  %v8833 = vpack.c.b16 %v8790, %v8789
  %v8834 = vpack.c.b16 %v8792, %v8791
  %v8835 = vpack.c.b16 %v8794, %v8793
  %v8836 = vpack.c.b16 %v8796, %v8795
  %v8837 = vpack.c.b16 %v8798, %v8797
  %v8838 = vpack.c.b16 %v8800, %v8799
  %v8839 = vpack.c.b16 %v8802, %v8801
  %v8840 = vpack.c.b16 %v8804, %v8803
  %v8841 = vpack.c.b16 %v8806, %v8805
  %v8842 = vpack.c.b16 %v8808, %v8807
  %v8843 = vpack.c.b16 %v8810, %v8809
  %v8844 = vpack.c.b16 %v8812, %v8811
  %8877 = vmatpush.bf16.msra.mxu0 %v8820
  %8878 = vmatpush.bf16.msra.mxu0 %v8819
  %8879 = vmatpush.bf16.msra.mxu0 %v8818
  %8880 = vmatpush.bf16.msra.mxu0 %v8817
  %8881 = vmatpush.bf16.msra.mxu0 %v8816
  %8882 = vmatpush.bf16.msra.mxu0 %v8815
  %8883 = vmatpush.bf16.msra.mxu0 %v8814
  %8884 = vmatpush.bf16.msra.mxu0 %v8813
  %8885 = vmatmul.bf16.gmra.mxu0 %v8677
  %v8886 = vpop.f32.mrf.mxu0
  %v8887 = vadd.f32 0.0, %v8886
  %v8888 = vpop.f32.mrf.mxu0
  %8889 = vdwg.mxu0
  %8890 = vmatpush.bf16.msra.mxu0 %v8828
  %8891 = vmatpush.bf16.msra.mxu0 %v8827
  %8892 = vmatpush.bf16.msra.mxu0 %v8826
  %8893 = vmatpush.bf16.msra.mxu0 %v8825
  %8894 = vmatpush.bf16.msra.mxu0 %v8824
  %8895 = vmatpush.bf16.msra.mxu0 %v8823
  %8896 = vmatpush.bf16.msra.mxu0 %v8822
  %8897 = vmatpush.bf16.msra.mxu0 %v8821
  %8898 = vmatmul.bf16.gmra.mxu0 %v8678
  %v8899 = vpop.f32.mrf.mxu0
  %v8900 = vadd.f32 %v8887, %v8899
  %v8901 = vpop.f32.mrf.mxu0
  %8902 = vdwg.mxu0
  %8903 = vmatpush.bf16.msra.mxu0 %v8836
  %8904 = vmatpush.bf16.msra.mxu0 %v8835
  %8905 = vmatpush.bf16.msra.mxu0 %v8834
  %8906 = vmatpush.bf16.msra.mxu0 %v8833
  %8907 = vmatpush.bf16.msra.mxu0 %v8832
  %8908 = vmatpush.bf16.msra.mxu0 %v8831
  %8909 = vmatpush.bf16.msra.mxu0 %v8830
  %8910 = vmatpush.bf16.msra.mxu0 %v8829
  %8911 = vmatmul.bf16.gmra.mxu0 %v8679
  %v8912 = vpop.f32.mrf.mxu0
  %v8913 = vadd.f32 %v8900, %v8912
  %v8914 = vpop.f32.mrf.mxu0
  %8915 = vdwg.mxu0
  %8916 = vmatpush.bf16.msra.mxu0 %v8844
  %8917 = vmatpush.bf16.msra.mxu0 %v8843
  %8918 = vmatpush.bf16.msra.mxu0 %v8842
  %8919 = vmatpush.bf16.msra.mxu0 %v8841
  %8920 = vmatpush.bf16.msra.mxu0 %v8840
  %8921 = vmatpush.bf16.msra.mxu0 %v8839
  %8922 = vmatpush.bf16.msra.mxu0 %v8838
  %8923 = vmatpush.bf16.msra.mxu0 %v8837
  %8924 = vmatmul.bf16.gmra.mxu0 %v8680
  %v8925 = vpop.f32.mrf.mxu0
  %v8926 = vadd.f32 %v8913, %v8925
  %v8927 = vpop.f32.mrf.mxu0
  %8928 = vdwg.mxu0
  %v8931 = vunpack.c.l.b16 %v7303
  %v8932 = vunpack.c.h.b16 %v7303
  %v8933 = vunpack.c.l.b16 %v7304
  %v8934 = vunpack.c.h.b16 %v7304
  %v8935 = vpack.c.b16 %v8931, %v8931
  %v8936 = vpack.c.b16 %v8932, %v8932
  %v8937 = vpack.c.b16 %v8933, %v8933
  %v8938 = vpack.c.b16 %v8934, %v8934
  %v9007 = vunpack.c.l.b16 %v7515
  %v9008 = vunpack.c.l.b16 %v7516
  %v9009 = vunpack.c.l.b16 %v7517
  %v9010 = vunpack.c.l.b16 %v7518
  %v9011 = vunpack.c.l.b16 %v7519
  %v9012 = vunpack.c.l.b16 %v7520
  %v9013 = vunpack.c.l.b16 %v7521
  %v9014 = vunpack.c.l.b16 %v7522
  %v9015 = vunpack.c.l.b16 %v7523
  %v9016 = vunpack.c.l.b16 %v7524
  %v9017 = vunpack.c.l.b16 %v7525
  %v9018 = vunpack.c.l.b16 %v7526
  %v9019 = vunpack.c.l.b16 %v7527
  %v9020 = vunpack.c.l.b16 %v7528
  %v9021 = vunpack.c.l.b16 %v7529
  %v9022 = vunpack.c.l.b16 %v7530
  %v9023 = vunpack.c.l.b16 %v7531
  %v9024 = vunpack.c.l.b16 %v7532
  %v9025 = vunpack.c.l.b16 %v7533
  %v9026 = vunpack.c.l.b16 %v7534
  %v9027 = vunpack.c.l.b16 %v7535
  %v9028 = vunpack.c.l.b16 %v7536
  %v9029 = vunpack.c.l.b16 %v7537
  %v9030 = vunpack.c.l.b16 %v7538
  %v9031 = vunpack.c.l.b16 %v7539
  %v9032 = vunpack.c.l.b16 %v7540
  %v9033 = vunpack.c.l.b16 %v7541
  %v9034 = vunpack.c.l.b16 %v7542
  %v9035 = vunpack.c.l.b16 %v7543
  %v9036 = vunpack.c.l.b16 %v7544
  %v9037 = vunpack.c.l.b16 %v7545
  %v9038 = vunpack.c.l.b16 %v7546
  %v9039 = vunpack.c.l.b16 %v7547
  %v9040 = vunpack.c.l.b16 %v7548
  %v9041 = vunpack.c.l.b16 %v7549
  %v9042 = vunpack.c.l.b16 %v7550
  %v9043 = vunpack.c.l.b16 %v7551
  %v9044 = vunpack.c.l.b16 %v7552
  %v9045 = vunpack.c.l.b16 %v7553
  %v9046 = vunpack.c.l.b16 %v7554
  %v9047 = vunpack.c.l.b16 %v7555
  %v9048 = vunpack.c.l.b16 %v7556
  %v9049 = vunpack.c.l.b16 %v7557
  %v9050 = vunpack.c.l.b16 %v7558
  %v9051 = vunpack.c.l.b16 %v7559
  %v9052 = vunpack.c.l.b16 %v7560
  %v9053 = vunpack.c.l.b16 %v7561
  %v9054 = vunpack.c.l.b16 %v7562
  %v9055 = vunpack.c.l.b16 %v7563
  %v9056 = vunpack.c.l.b16 %v7564
  %v9057 = vunpack.c.l.b16 %v7565
  %v9058 = vunpack.c.l.b16 %v7566
  %v9059 = vunpack.c.l.b16 %v7567
  %v9060 = vunpack.c.l.b16 %v7568
  %v9061 = vunpack.c.l.b16 %v7569
  %v9062 = vunpack.c.l.b16 %v7570
  %v9063 = vunpack.c.l.b16 %v7571
  %v9064 = vunpack.c.l.b16 %v7572
  %v9065 = vunpack.c.l.b16 %v7573
  %v9066 = vunpack.c.l.b16 %v7574
  %v9067 = vunpack.c.l.b16 %v7575
  %v9068 = vunpack.c.l.b16 %v7576
  %v9069 = vunpack.c.l.b16 %v7577
  %v9070 = vunpack.c.l.b16 %v7578
  %v9071 = vpack.c.b16 %v9008, %v9007
  %v9072 = vpack.c.b16 %v9010, %v9009
  %v9073 = vpack.c.b16 %v9012, %v9011
  %v9074 = vpack.c.b16 %v9014, %v9013
  %v9075 = vpack.c.b16 %v9016, %v9015
  %v9076 = vpack.c.b16 %v9018, %v9017
  %v9077 = vpack.c.b16 %v9020, %v9019
  %v9078 = vpack.c.b16 %v9022, %v9021
  %v9079 = vpack.c.b16 %v9024, %v9023
  %v9080 = vpack.c.b16 %v9026, %v9025
  %v9081 = vpack.c.b16 %v9028, %v9027
  %v9082 = vpack.c.b16 %v9030, %v9029
  %v9083 = vpack.c.b16 %v9032, %v9031
  %v9084 = vpack.c.b16 %v9034, %v9033
  %v9085 = vpack.c.b16 %v9036, %v9035
  %v9086 = vpack.c.b16 %v9038, %v9037
  %v9087 = vpack.c.b16 %v9040, %v9039
  %v9088 = vpack.c.b16 %v9042, %v9041
  %v9089 = vpack.c.b16 %v9044, %v9043
  %v9090 = vpack.c.b16 %v9046, %v9045
  %v9091 = vpack.c.b16 %v9048, %v9047
  %v9092 = vpack.c.b16 %v9050, %v9049
  %v9093 = vpack.c.b16 %v9052, %v9051
  %v9094 = vpack.c.b16 %v9054, %v9053
  %v9095 = vpack.c.b16 %v9056, %v9055
  %v9096 = vpack.c.b16 %v9058, %v9057
  %v9097 = vpack.c.b16 %v9060, %v9059
  %v9098 = vpack.c.b16 %v9062, %v9061
  %v9099 = vpack.c.b16 %v9064, %v9063
  %v9100 = vpack.c.b16 %v9066, %v9065
  %v9101 = vpack.c.b16 %v9068, %v9067
  %v9102 = vpack.c.b16 %v9070, %v9069
  %9135 = vmatpush.bf16.msra.mxu0 %v9078
  %9136 = vmatpush.bf16.msra.mxu0 %v9077
  %9137 = vmatpush.bf16.msra.mxu0 %v9076
  %9138 = vmatpush.bf16.msra.mxu0 %v9075
  %9139 = vmatpush.bf16.msra.mxu0 %v9074
  %9140 = vmatpush.bf16.msra.mxu0 %v9073
  %9141 = vmatpush.bf16.msra.mxu0 %v9072
  %9142 = vmatpush.bf16.msra.mxu0 %v9071
  %9143 = vmatmul.bf16.gmra.mxu0 %v8935
  %v9144 = vpop.f32.mrf.mxu0
  %v9145 = vadd.f32 0.0, %v9144
  %v9146 = vpop.f32.mrf.mxu0
  %9147 = vdwg.mxu0
  %9148 = vmatpush.bf16.msra.mxu0 %v9086
  %9149 = vmatpush.bf16.msra.mxu0 %v9085
  %9150 = vmatpush.bf16.msra.mxu0 %v9084
  %9151 = vmatpush.bf16.msra.mxu0 %v9083
  %9152 = vmatpush.bf16.msra.mxu0 %v9082
  %9153 = vmatpush.bf16.msra.mxu0 %v9081
  %9154 = vmatpush.bf16.msra.mxu0 %v9080
  %9155 = vmatpush.bf16.msra.mxu0 %v9079
  %9156 = vmatmul.bf16.gmra.mxu0 %v8936
  %v9157 = vpop.f32.mrf.mxu0
  %v9158 = vadd.f32 %v9145, %v9157
  %v9159 = vpop.f32.mrf.mxu0
  %9160 = vdwg.mxu0
  %9161 = vmatpush.bf16.msra.mxu0 %v9094
  %9162 = vmatpush.bf16.msra.mxu0 %v9093
  %9163 = vmatpush.bf16.msra.mxu0 %v9092
  %9164 = vmatpush.bf16.msra.mxu0 %v9091
  %9165 = vmatpush.bf16.msra.mxu0 %v9090
  %9166 = vmatpush.bf16.msra.mxu0 %v9089
  %9167 = vmatpush.bf16.msra.mxu0 %v9088
  %9168 = vmatpush.bf16.msra.mxu0 %v9087
  %9169 = vmatmul.bf16.gmra.mxu0 %v8937
  %v9170 = vpop.f32.mrf.mxu0
  %v9171 = vadd.f32 %v9158, %v9170
  %v9172 = vpop.f32.mrf.mxu0
  %9173 = vdwg.mxu0
  %9174 = vmatpush.bf16.msra.mxu0 %v9102
  %9175 = vmatpush.bf16.msra.mxu0 %v9101
  %9176 = vmatpush.bf16.msra.mxu0 %v9100
  %9177 = vmatpush.bf16.msra.mxu0 %v9099
  %9178 = vmatpush.bf16.msra.mxu0 %v9098
  %9179 = vmatpush.bf16.msra.mxu0 %v9097
  %9180 = vmatpush.bf16.msra.mxu0 %v9096
  %9181 = vmatpush.bf16.msra.mxu0 %v9095
  %9182 = vmatmul.bf16.gmra.mxu0 %v8938
  %v9183 = vpop.f32.mrf.mxu0
  %v9184 = vadd.f32 %v9171, %v9183
  %v9185 = vpop.f32.mrf.mxu0
  %9186 = vdwg.mxu0
  %v9189 = vunpack.c.l.b16 %v7305
  %v9190 = vunpack.c.h.b16 %v7305
  %v9191 = vunpack.c.l.b16 %v7306
  %v9192 = vunpack.c.h.b16 %v7306
  %v9193 = vpack.c.b16 %v9189, %v9189
  %v9194 = vpack.c.b16 %v9190, %v9190
  %v9195 = vpack.c.b16 %v9191, %v9191
  %v9196 = vpack.c.b16 %v9192, %v9192
  %v9265 = vunpack.c.l.b16 %v7579
  %v9266 = vunpack.c.l.b16 %v7580
  %v9267 = vunpack.c.l.b16 %v7581
  %v9268 = vunpack.c.l.b16 %v7582
  %v9269 = vunpack.c.l.b16 %v7583
  %v9270 = vunpack.c.l.b16 %v7584
  %v9271 = vunpack.c.l.b16 %v7585
  %v9272 = vunpack.c.l.b16 %v7586
  %v9273 = vunpack.c.l.b16 %v7587
  %v9274 = vunpack.c.l.b16 %v7588
  %v9275 = vunpack.c.l.b16 %v7589
  %v9276 = vunpack.c.l.b16 %v7590
  %v9277 = vunpack.c.l.b16 %v7591
  %v9278 = vunpack.c.l.b16 %v7592
  %v9279 = vunpack.c.l.b16 %v7593
  %v9280 = vunpack.c.l.b16 %v7594
  %v9281 = vunpack.c.l.b16 %v7595
  %v9282 = vunpack.c.l.b16 %v7596
  %v9283 = vunpack.c.l.b16 %v7597
  %v9284 = vunpack.c.l.b16 %v7598
  %v9285 = vunpack.c.l.b16 %v7599
  %v9286 = vunpack.c.l.b16 %v7600
  %v9287 = vunpack.c.l.b16 %v7601
  %v9288 = vunpack.c.l.b16 %v7602
  %v9289 = vunpack.c.l.b16 %v7603
  %v9290 = vunpack.c.l.b16 %v7604
  %v9291 = vunpack.c.l.b16 %v7605
  %v9292 = vunpack.c.l.b16 %v7606
  %v9293 = vunpack.c.l.b16 %v7607
  %v9294 = vunpack.c.l.b16 %v7608
  %v9295 = vunpack.c.l.b16 %v7609
  %v9296 = vunpack.c.l.b16 %v7610
  %v9297 = vunpack.c.l.b16 %v7611
  %v9298 = vunpack.c.l.b16 %v7612
  %v9299 = vunpack.c.l.b16 %v7613
  %v9300 = vunpack.c.l.b16 %v7614
  %v9301 = vunpack.c.l.b16 %v7615
  %v9302 = vunpack.c.l.b16 %v7616
  %v9303 = vunpack.c.l.b16 %v7617
  %v9304 = vunpack.c.l.b16 %v7618
  %v9305 = vunpack.c.l.b16 %v7619
  %v9306 = vunpack.c.l.b16 %v7620
  %v9307 = vunpack.c.l.b16 %v7621
  %v9308 = vunpack.c.l.b16 %v7622
  %v9309 = vunpack.c.l.b16 %v7623
  %v9310 = vunpack.c.l.b16 %v7624
  %v9311 = vunpack.c.l.b16 %v7625
  %v9312 = vunpack.c.l.b16 %v7626
  %v9313 = vunpack.c.l.b16 %v7627
  %v9314 = vunpack.c.l.b16 %v7628
  %v9315 = vunpack.c.l.b16 %v7629
  %v9316 = vunpack.c.l.b16 %v7630
  %v9317 = vunpack.c.l.b16 %v7631
  %v9318 = vunpack.c.l.b16 %v7632
  %v9319 = vunpack.c.l.b16 %v7633
  %v9320 = vunpack.c.l.b16 %v7634
  %v9321 = vunpack.c.l.b16 %v7635
  %v9322 = vunpack.c.l.b16 %v7636
  %v9323 = vunpack.c.l.b16 %v7637
  %v9324 = vunpack.c.l.b16 %v7638
  %v9325 = vunpack.c.l.b16 %v7639
  %v9326 = vunpack.c.l.b16 %v7640
  %v9327 = vunpack.c.l.b16 %v7641
  %v9328 = vunpack.c.l.b16 %v7642
  %v9329 = vpack.c.b16 %v9266, %v9265
  %v9330 = vpack.c.b16 %v9268, %v9267
  %v9331 = vpack.c.b16 %v9270, %v9269
  %v9332 = vpack.c.b16 %v9272, %v9271
  %v9333 = vpack.c.b16 %v9274, %v9273
  %v9334 = vpack.c.b16 %v9276, %v9275
  %v9335 = vpack.c.b16 %v9278, %v9277
  %v9336 = vpack.c.b16 %v9280, %v9279
  %v9337 = vpack.c.b16 %v9282, %v9281
  %v9338 = vpack.c.b16 %v9284, %v9283
  %v9339 = vpack.c.b16 %v9286, %v9285
  %v9340 = vpack.c.b16 %v9288, %v9287
  %v9341 = vpack.c.b16 %v9290, %v9289
  %v9342 = vpack.c.b16 %v9292, %v9291
  %v9343 = vpack.c.b16 %v9294, %v9293
  %v9344 = vpack.c.b16 %v9296, %v9295
  %v9345 = vpack.c.b16 %v9298, %v9297
  %v9346 = vpack.c.b16 %v9300, %v9299
  %v9347 = vpack.c.b16 %v9302, %v9301
  %v9348 = vpack.c.b16 %v9304, %v9303
  %v9349 = vpack.c.b16 %v9306, %v9305
  %v9350 = vpack.c.b16 %v9308, %v9307
  %v9351 = vpack.c.b16 %v9310, %v9309
  %v9352 = vpack.c.b16 %v9312, %v9311
  %v9353 = vpack.c.b16 %v9314, %v9313
  %v9354 = vpack.c.b16 %v9316, %v9315
  %v9355 = vpack.c.b16 %v9318, %v9317
  %v9356 = vpack.c.b16 %v9320, %v9319
  %v9357 = vpack.c.b16 %v9322, %v9321
  %v9358 = vpack.c.b16 %v9324, %v9323
  %v9359 = vpack.c.b16 %v9326, %v9325
  %v9360 = vpack.c.b16 %v9328, %v9327
  %9393 = vmatpush.bf16.msra.mxu0 %v9336
  %9394 = vmatpush.bf16.msra.mxu0 %v9335
  %9395 = vmatpush.bf16.msra.mxu0 %v9334
  %9396 = vmatpush.bf16.msra.mxu0 %v9333
  %9397 = vmatpush.bf16.msra.mxu0 %v9332
  %9398 = vmatpush.bf16.msra.mxu0 %v9331
  %9399 = vmatpush.bf16.msra.mxu0 %v9330
  %9400 = vmatpush.bf16.msra.mxu0 %v9329
  %9401 = vmatmul.bf16.gmra.mxu0 %v9193
  %v9402 = vpop.f32.mrf.mxu0
  %v9403 = vadd.f32 0.0, %v9402
  %v9404 = vpop.f32.mrf.mxu0
  %9405 = vdwg.mxu0
  %9406 = vmatpush.bf16.msra.mxu0 %v9344
  %9407 = vmatpush.bf16.msra.mxu0 %v9343
  %9408 = vmatpush.bf16.msra.mxu0 %v9342
  %9409 = vmatpush.bf16.msra.mxu0 %v9341
  %9410 = vmatpush.bf16.msra.mxu0 %v9340
  %9411 = vmatpush.bf16.msra.mxu0 %v9339
  %9412 = vmatpush.bf16.msra.mxu0 %v9338
  %9413 = vmatpush.bf16.msra.mxu0 %v9337
  %9414 = vmatmul.bf16.gmra.mxu0 %v9194
  %v9415 = vpop.f32.mrf.mxu0
  %v9416 = vadd.f32 %v9403, %v9415
  %v9417 = vpop.f32.mrf.mxu0
  %9418 = vdwg.mxu0
  %9419 = vmatpush.bf16.msra.mxu0 %v9352
  %9420 = vmatpush.bf16.msra.mxu0 %v9351
  %9421 = vmatpush.bf16.msra.mxu0 %v9350
  %9422 = vmatpush.bf16.msra.mxu0 %v9349
  %9423 = vmatpush.bf16.msra.mxu0 %v9348
  %9424 = vmatpush.bf16.msra.mxu0 %v9347
  %9425 = vmatpush.bf16.msra.mxu0 %v9346
  %9426 = vmatpush.bf16.msra.mxu0 %v9345
  %9427 = vmatmul.bf16.gmra.mxu0 %v9195
  %v9428 = vpop.f32.mrf.mxu0
  %v9429 = vadd.f32 %v9416, %v9428
  %v9430 = vpop.f32.mrf.mxu0
  %9431 = vdwg.mxu0
  %9432 = vmatpush.bf16.msra.mxu0 %v9360
  %9433 = vmatpush.bf16.msra.mxu0 %v9359
  %9434 = vmatpush.bf16.msra.mxu0 %v9358
  %9435 = vmatpush.bf16.msra.mxu0 %v9357
  %9436 = vmatpush.bf16.msra.mxu0 %v9356
  %9437 = vmatpush.bf16.msra.mxu0 %v9355
  %9438 = vmatpush.bf16.msra.mxu0 %v9354
  %9439 = vmatpush.bf16.msra.mxu0 %v9353
  %9440 = vmatmul.bf16.gmra.mxu0 %v9196
  %v9441 = vpop.f32.mrf.mxu0
  %v9442 = vadd.f32 %v9429, %v9441
  %v9443 = vpop.f32.mrf.mxu0
  %9444 = vdwg.mxu0
  %v9447 = vunpack.c.l.b16 %v7307
  %v9448 = vunpack.c.h.b16 %v7307
  %v9449 = vunpack.c.l.b16 %v7308
  %v9450 = vunpack.c.h.b16 %v7308
  %v9451 = vpack.c.b16 %v9447, %v9447
  %v9452 = vpack.c.b16 %v9448, %v9448
  %v9453 = vpack.c.b16 %v9449, %v9449
  %v9454 = vpack.c.b16 %v9450, %v9450
  %v9523 = vunpack.c.l.b16 %v7643
  %v9524 = vunpack.c.l.b16 %v7644
  %v9525 = vunpack.c.l.b16 %v7645
  %v9526 = vunpack.c.l.b16 %v7646
  %v9527 = vunpack.c.l.b16 %v7647
  %v9528 = vunpack.c.l.b16 %v7648
  %v9529 = vunpack.c.l.b16 %v7649
  %v9530 = vunpack.c.l.b16 %v7650
  %v9531 = vunpack.c.l.b16 %v7651
  %v9532 = vunpack.c.l.b16 %v7652
  %v9533 = vunpack.c.l.b16 %v7653
  %v9534 = vunpack.c.l.b16 %v7654
  %v9535 = vunpack.c.l.b16 %v7655
  %v9536 = vunpack.c.l.b16 %v7656
  %v9537 = vunpack.c.l.b16 %v7657
  %v9538 = vunpack.c.l.b16 %v7658
  %v9539 = vunpack.c.l.b16 %v7659
  %v9540 = vunpack.c.l.b16 %v7660
  %v9541 = vunpack.c.l.b16 %v7661
  %v9542 = vunpack.c.l.b16 %v7662
  %v9543 = vunpack.c.l.b16 %v7663
  %v9544 = vunpack.c.l.b16 %v7664
  %v9545 = vunpack.c.l.b16 %v7665
  %v9546 = vunpack.c.l.b16 %v7666
  %v9547 = vunpack.c.l.b16 %v7667
  %v9548 = vunpack.c.l.b16 %v7668
  %v9549 = vunpack.c.l.b16 %v7669
  %v9550 = vunpack.c.l.b16 %v7670
  %v9551 = vunpack.c.l.b16 %v7671
  %v9552 = vunpack.c.l.b16 %v7672
  %v9553 = vunpack.c.l.b16 %v7673
  %v9554 = vunpack.c.l.b16 %v7674
  %v9555 = vunpack.c.l.b16 %v7675
  %v9556 = vunpack.c.l.b16 %v7676
  %v9557 = vunpack.c.l.b16 %v7677
  %v9558 = vunpack.c.l.b16 %v7678
  %v9559 = vunpack.c.l.b16 %v7679
  %v9560 = vunpack.c.l.b16 %v7680
  %v9561 = vunpack.c.l.b16 %v7681
  %v9562 = vunpack.c.l.b16 %v7682
  %v9563 = vunpack.c.l.b16 %v7683
  %v9564 = vunpack.c.l.b16 %v7684
  %v9565 = vunpack.c.l.b16 %v7685
  %v9566 = vunpack.c.l.b16 %v7686
  %v9567 = vunpack.c.l.b16 %v7687
  %v9568 = vunpack.c.l.b16 %v7688
  %v9569 = vunpack.c.l.b16 %v7689
  %v9570 = vunpack.c.l.b16 %v7690
  %v9571 = vunpack.c.l.b16 %v7691
  %v9572 = vunpack.c.l.b16 %v7692
  %v9573 = vunpack.c.l.b16 %v7693
  %v9574 = vunpack.c.l.b16 %v7694
  %v9575 = vunpack.c.l.b16 %v7695
  %v9576 = vunpack.c.l.b16 %v7696
  %v9577 = vunpack.c.l.b16 %v7697
  %v9578 = vunpack.c.l.b16 %v7698
  %v9579 = vunpack.c.l.b16 %v7699
  %v9580 = vunpack.c.l.b16 %v7700
  %v9581 = vunpack.c.l.b16 %v7701
  %v9582 = vunpack.c.l.b16 %v7702
  %v9583 = vunpack.c.l.b16 %v7703
  %v9584 = vunpack.c.l.b16 %v7704
  %v9585 = vunpack.c.l.b16 %v7705
  %v9586 = vunpack.c.l.b16 %v7706
  %v9587 = vpack.c.b16 %v9524, %v9523
  %v9588 = vpack.c.b16 %v9526, %v9525
  %v9589 = vpack.c.b16 %v9528, %v9527
  %v9590 = vpack.c.b16 %v9530, %v9529
  %v9591 = vpack.c.b16 %v9532, %v9531
  %v9592 = vpack.c.b16 %v9534, %v9533
  %v9593 = vpack.c.b16 %v9536, %v9535
  %v9594 = vpack.c.b16 %v9538, %v9537
  %v9595 = vpack.c.b16 %v9540, %v9539
  %v9596 = vpack.c.b16 %v9542, %v9541
  %v9597 = vpack.c.b16 %v9544, %v9543
  %v9598 = vpack.c.b16 %v9546, %v9545
  %v9599 = vpack.c.b16 %v9548, %v9547
  %v9600 = vpack.c.b16 %v9550, %v9549
  %v9601 = vpack.c.b16 %v9552, %v9551
  %v9602 = vpack.c.b16 %v9554, %v9553
  %v9603 = vpack.c.b16 %v9556, %v9555
  %v9604 = vpack.c.b16 %v9558, %v9557
  %v9605 = vpack.c.b16 %v9560, %v9559
  %v9606 = vpack.c.b16 %v9562, %v9561
  %v9607 = vpack.c.b16 %v9564, %v9563
  %v9608 = vpack.c.b16 %v9566, %v9565
  %v9609 = vpack.c.b16 %v9568, %v9567
  %v9610 = vpack.c.b16 %v9570, %v9569
  %v9611 = vpack.c.b16 %v9572, %v9571
  %v9612 = vpack.c.b16 %v9574, %v9573
  %v9613 = vpack.c.b16 %v9576, %v9575
  %v9614 = vpack.c.b16 %v9578, %v9577
  %v9615 = vpack.c.b16 %v9580, %v9579
  %v9616 = vpack.c.b16 %v9582, %v9581
  %v9617 = vpack.c.b16 %v9584, %v9583
  %v9618 = vpack.c.b16 %v9586, %v9585
  %9651 = vmatpush.bf16.msra.mxu0 %v9594
  %9652 = vmatpush.bf16.msra.mxu0 %v9593
  %9653 = vmatpush.bf16.msra.mxu0 %v9592
  %9654 = vmatpush.bf16.msra.mxu0 %v9591
  %9655 = vmatpush.bf16.msra.mxu0 %v9590
  %9656 = vmatpush.bf16.msra.mxu0 %v9589
  %9657 = vmatpush.bf16.msra.mxu0 %v9588
  %9658 = vmatpush.bf16.msra.mxu0 %v9587
  %9659 = vmatmul.bf16.gmra.mxu0 %v9451
  %v9660 = vpop.f32.mrf.mxu0
  %v9661 = vadd.f32 0.0, %v9660
  %v9662 = vpop.f32.mrf.mxu0
  %9663 = vdwg.mxu0
  %9664 = vmatpush.bf16.msra.mxu0 %v9602
  %9665 = vmatpush.bf16.msra.mxu0 %v9601
  %9666 = vmatpush.bf16.msra.mxu0 %v9600
  %9667 = vmatpush.bf16.msra.mxu0 %v9599
  %9668 = vmatpush.bf16.msra.mxu0 %v9598
  %9669 = vmatpush.bf16.msra.mxu0 %v9597
  %9670 = vmatpush.bf16.msra.mxu0 %v9596
  %9671 = vmatpush.bf16.msra.mxu0 %v9595
  %9672 = vmatmul.bf16.gmra.mxu0 %v9452
  %v9673 = vpop.f32.mrf.mxu0
  %v9674 = vadd.f32 %v9661, %v9673
  %v9675 = vpop.f32.mrf.mxu0
  %9676 = vdwg.mxu0
  %9677 = vmatpush.bf16.msra.mxu0 %v9610
  %9678 = vmatpush.bf16.msra.mxu0 %v9609
  %9679 = vmatpush.bf16.msra.mxu0 %v9608
  %9680 = vmatpush.bf16.msra.mxu0 %v9607
  %9681 = vmatpush.bf16.msra.mxu0 %v9606
  %9682 = vmatpush.bf16.msra.mxu0 %v9605
  %9683 = vmatpush.bf16.msra.mxu0 %v9604
  %9684 = vmatpush.bf16.msra.mxu0 %v9603
  %9685 = vmatmul.bf16.gmra.mxu0 %v9453
  %v9686 = vpop.f32.mrf.mxu0
  %v9687 = vadd.f32 %v9674, %v9686
  %v9688 = vpop.f32.mrf.mxu0
  %9689 = vdwg.mxu0
  %9690 = vmatpush.bf16.msra.mxu0 %v9618
  %9691 = vmatpush.bf16.msra.mxu0 %v9617
  %9692 = vmatpush.bf16.msra.mxu0 %v9616
  %9693 = vmatpush.bf16.msra.mxu0 %v9615
  %9694 = vmatpush.bf16.msra.mxu0 %v9614
  %9695 = vmatpush.bf16.msra.mxu0 %v9613
  %9696 = vmatpush.bf16.msra.mxu0 %v9612
  %9697 = vmatpush.bf16.msra.mxu0 %v9611
  %9698 = vmatmul.bf16.gmra.mxu0 %v9454
  %v9699 = vpop.f32.mrf.mxu0
  %v9700 = vadd.f32 %v9687, %v9699
  %v9701 = vpop.f32.mrf.mxu0
  %9702 = vdwg.mxu0
  %v9705 = vunpack.c.l.b16 %v7309
  %v9706 = vunpack.c.h.b16 %v7309
  %v9707 = vunpack.c.l.b16 %v7310
  %v9708 = vunpack.c.h.b16 %v7310
  %v9709 = vpack.c.b16 %v9705, %v9705
  %v9710 = vpack.c.b16 %v9706, %v9706
  %v9711 = vpack.c.b16 %v9707, %v9707
  %v9712 = vpack.c.b16 %v9708, %v9708
  %v9781 = vunpack.c.l.b16 %v7707
  %v9782 = vunpack.c.l.b16 %v7708
  %v9783 = vunpack.c.l.b16 %v7709
  %v9784 = vunpack.c.l.b16 %v7710
  %v9785 = vunpack.c.l.b16 %v7711
  %v9786 = vunpack.c.l.b16 %v7712
  %v9787 = vunpack.c.l.b16 %v7713
  %v9788 = vunpack.c.l.b16 %v7714
  %v9789 = vunpack.c.l.b16 %v7715
  %v9790 = vunpack.c.l.b16 %v7716
  %v9791 = vunpack.c.l.b16 %v7717
  %v9792 = vunpack.c.l.b16 %v7718
  %v9793 = vunpack.c.l.b16 %v7719
  %v9794 = vunpack.c.l.b16 %v7720
  %v9795 = vunpack.c.l.b16 %v7721
  %v9796 = vunpack.c.l.b16 %v7722
  %v9797 = vunpack.c.l.b16 %v7723
  %v9798 = vunpack.c.l.b16 %v7724
  %v9799 = vunpack.c.l.b16 %v7725
  %v9800 = vunpack.c.l.b16 %v7726
  %v9801 = vunpack.c.l.b16 %v7727
  %v9802 = vunpack.c.l.b16 %v7728
  %v9803 = vunpack.c.l.b16 %v7729
  %v9804 = vunpack.c.l.b16 %v7730
  %v9805 = vunpack.c.l.b16 %v7731
  %v9806 = vunpack.c.l.b16 %v7732
  %v9807 = vunpack.c.l.b16 %v7733
  %v9808 = vunpack.c.l.b16 %v7734
  %v9809 = vunpack.c.l.b16 %v7735
  %v9810 = vunpack.c.l.b16 %v7736
  %v9811 = vunpack.c.l.b16 %v7737
  %v9812 = vunpack.c.l.b16 %v7738
  %v9813 = vunpack.c.l.b16 %v7739
  %v9814 = vunpack.c.l.b16 %v7740
  %v9815 = vunpack.c.l.b16 %v7741
  %v9816 = vunpack.c.l.b16 %v7742
  %v9817 = vunpack.c.l.b16 %v7743
  %v9818 = vunpack.c.l.b16 %v7744
  %v9819 = vunpack.c.l.b16 %v7745
  %v9820 = vunpack.c.l.b16 %v7746
  %v9821 = vunpack.c.l.b16 %v7747
  %v9822 = vunpack.c.l.b16 %v7748
  %v9823 = vunpack.c.l.b16 %v7749
  %v9824 = vunpack.c.l.b16 %v7750
  %v9825 = vunpack.c.l.b16 %v7751
  %v9826 = vunpack.c.l.b16 %v7752
  %v9827 = vunpack.c.l.b16 %v7753
  %v9828 = vunpack.c.l.b16 %v7754
  %v9829 = vunpack.c.l.b16 %v7755
  %v9830 = vunpack.c.l.b16 %v7756
  %v9831 = vunpack.c.l.b16 %v7757
  %v9832 = vunpack.c.l.b16 %v7758
  %v9833 = vunpack.c.l.b16 %v7759
  %v9834 = vunpack.c.l.b16 %v7760
  %v9835 = vunpack.c.l.b16 %v7761
  %v9836 = vunpack.c.l.b16 %v7762
  %v9837 = vunpack.c.l.b16 %v7763
  %v9838 = vunpack.c.l.b16 %v7764
  %v9839 = vunpack.c.l.b16 %v7765
  %v9840 = vunpack.c.l.b16 %v7766
  %v9841 = vunpack.c.l.b16 %v7767
  %v9842 = vunpack.c.l.b16 %v7768
  %v9843 = vunpack.c.l.b16 %v7769
  %v9844 = vunpack.c.l.b16 %v7770
  %v9845 = vpack.c.b16 %v9782, %v9781
  %v9846 = vpack.c.b16 %v9784, %v9783
  %v9847 = vpack.c.b16 %v9786, %v9785
  %v9848 = vpack.c.b16 %v9788, %v9787
  %v9849 = vpack.c.b16 %v9790, %v9789
  %v9850 = vpack.c.b16 %v9792, %v9791
  %v9851 = vpack.c.b16 %v9794, %v9793
  %v9852 = vpack.c.b16 %v9796, %v9795
  %v9853 = vpack.c.b16 %v9798, %v9797
  %v9854 = vpack.c.b16 %v9800, %v9799
  %v9855 = vpack.c.b16 %v9802, %v9801
  %v9856 = vpack.c.b16 %v9804, %v9803
  %v9857 = vpack.c.b16 %v9806, %v9805
  %v9858 = vpack.c.b16 %v9808, %v9807
  %v9859 = vpack.c.b16 %v9810, %v9809
  %v9860 = vpack.c.b16 %v9812, %v9811
  %v9861 = vpack.c.b16 %v9814, %v9813
  %v9862 = vpack.c.b16 %v9816, %v9815
  %v9863 = vpack.c.b16 %v9818, %v9817
  %v9864 = vpack.c.b16 %v9820, %v9819
  %v9865 = vpack.c.b16 %v9822, %v9821
  %v9866 = vpack.c.b16 %v9824, %v9823
  %v9867 = vpack.c.b16 %v9826, %v9825
  %v9868 = vpack.c.b16 %v9828, %v9827
  %v9869 = vpack.c.b16 %v9830, %v9829
  %v9870 = vpack.c.b16 %v9832, %v9831
  %v9871 = vpack.c.b16 %v9834, %v9833
  %v9872 = vpack.c.b16 %v9836, %v9835
  %v9873 = vpack.c.b16 %v9838, %v9837
  %v9874 = vpack.c.b16 %v9840, %v9839
  %v9875 = vpack.c.b16 %v9842, %v9841
  %v9876 = vpack.c.b16 %v9844, %v9843
  %9909 = vmatpush.bf16.msra.mxu0 %v9852
  %9910 = vmatpush.bf16.msra.mxu0 %v9851
  %9911 = vmatpush.bf16.msra.mxu0 %v9850
  %9912 = vmatpush.bf16.msra.mxu0 %v9849
  %9913 = vmatpush.bf16.msra.mxu0 %v9848
  %9914 = vmatpush.bf16.msra.mxu0 %v9847
  %9915 = vmatpush.bf16.msra.mxu0 %v9846
  %9916 = vmatpush.bf16.msra.mxu0 %v9845
  %9917 = vmatmul.bf16.gmra.mxu0 %v9709
  %v9918 = vpop.f32.mrf.mxu0
  %v9919 = vadd.f32 0.0, %v9918
  %v9920 = vpop.f32.mrf.mxu0
  %9921 = vdwg.mxu0
  %9922 = vmatpush.bf16.msra.mxu0 %v9860
  %9923 = vmatpush.bf16.msra.mxu0 %v9859
  %9924 = vmatpush.bf16.msra.mxu0 %v9858
  %9925 = vmatpush.bf16.msra.mxu0 %v9857
  %9926 = vmatpush.bf16.msra.mxu0 %v9856
  %9927 = vmatpush.bf16.msra.mxu0 %v9855
  %9928 = vmatpush.bf16.msra.mxu0 %v9854
  %9929 = vmatpush.bf16.msra.mxu0 %v9853
  %9930 = vmatmul.bf16.gmra.mxu0 %v9710
  %v9931 = vpop.f32.mrf.mxu0
  %v9932 = vadd.f32 %v9919, %v9931
  %v9933 = vpop.f32.mrf.mxu0
  %9934 = vdwg.mxu0
  %9935 = vmatpush.bf16.msra.mxu0 %v9868
  %9936 = vmatpush.bf16.msra.mxu0 %v9867
  %9937 = vmatpush.bf16.msra.mxu0 %v9866
  %9938 = vmatpush.bf16.msra.mxu0 %v9865
  %9939 = vmatpush.bf16.msra.mxu0 %v9864
  %9940 = vmatpush.bf16.msra.mxu0 %v9863
  %9941 = vmatpush.bf16.msra.mxu0 %v9862
  %9942 = vmatpush.bf16.msra.mxu0 %v9861
  %9943 = vmatmul.bf16.gmra.mxu0 %v9711
  %v9944 = vpop.f32.mrf.mxu0
  %v9945 = vadd.f32 %v9932, %v9944
  %v9946 = vpop.f32.mrf.mxu0
  %9947 = vdwg.mxu0
  %9948 = vmatpush.bf16.msra.mxu0 %v9876
  %9949 = vmatpush.bf16.msra.mxu0 %v9875
  %9950 = vmatpush.bf16.msra.mxu0 %v9874
  %9951 = vmatpush.bf16.msra.mxu0 %v9873
  %9952 = vmatpush.bf16.msra.mxu0 %v9872
  %9953 = vmatpush.bf16.msra.mxu0 %v9871
  %9954 = vmatpush.bf16.msra.mxu0 %v9870
  %9955 = vmatpush.bf16.msra.mxu0 %v9869
  %9956 = vmatmul.bf16.gmra.mxu0 %v9712
  %v9957 = vpop.f32.mrf.mxu0
  %v9958 = vadd.f32 %v9945, %v9957
  %v9959 = vpop.f32.mrf.mxu0
  %9960 = vdwg.mxu0
  %v9963 = vunpack.c.l.b16 %v7311
  %v9964 = vunpack.c.h.b16 %v7311
  %v9965 = vunpack.c.l.b16 %v7312
  %v9966 = vunpack.c.h.b16 %v7312
  %v9967 = vpack.c.b16 %v9963, %v9963
  %v9968 = vpack.c.b16 %v9964, %v9964
  %v9969 = vpack.c.b16 %v9965, %v9965
  %v9970 = vpack.c.b16 %v9966, %v9966
  %v10039 = vunpack.c.l.b16 %v7771
  %v10040 = vunpack.c.l.b16 %v7772
  %v10041 = vunpack.c.l.b16 %v7773
  %v10042 = vunpack.c.l.b16 %v7774
  %v10043 = vunpack.c.l.b16 %v7775
  %v10044 = vunpack.c.l.b16 %v7776
  %v10045 = vunpack.c.l.b16 %v7777
  %v10046 = vunpack.c.l.b16 %v7778
  %v10047 = vunpack.c.l.b16 %v7779
  %v10048 = vunpack.c.l.b16 %v7780
  %v10049 = vunpack.c.l.b16 %v7781
  %v10050 = vunpack.c.l.b16 %v7782
  %v10051 = vunpack.c.l.b16 %v7783
  %v10052 = vunpack.c.l.b16 %v7784
  %v10053 = vunpack.c.l.b16 %v7785
  %v10054 = vunpack.c.l.b16 %v7786
  %v10055 = vunpack.c.l.b16 %v7787
  %v10056 = vunpack.c.l.b16 %v7788
  %v10057 = vunpack.c.l.b16 %v7789
  %v10058 = vunpack.c.l.b16 %v7790
  %v10059 = vunpack.c.l.b16 %v7791
  %v10060 = vunpack.c.l.b16 %v7792
  %v10061 = vunpack.c.l.b16 %v7793
  %v10062 = vunpack.c.l.b16 %v7794
  %v10063 = vunpack.c.l.b16 %v7795
  %v10064 = vunpack.c.l.b16 %v7796
  %v10065 = vunpack.c.l.b16 %v7797
  %v10066 = vunpack.c.l.b16 %v7798
  %v10067 = vunpack.c.l.b16 %v7799
  %v10068 = vunpack.c.l.b16 %v7800
  %v10069 = vunpack.c.l.b16 %v7801
  %v10070 = vunpack.c.l.b16 %v7802
  %v10071 = vunpack.c.l.b16 %v7803
  %v10072 = vunpack.c.l.b16 %v7804
  %v10073 = vunpack.c.l.b16 %v7805
  %v10074 = vunpack.c.l.b16 %v7806
  %v10075 = vunpack.c.l.b16 %v7807
  %v10076 = vunpack.c.l.b16 %v7808
  %v10077 = vunpack.c.l.b16 %v7809
  %v10078 = vunpack.c.l.b16 %v7810
  %v10079 = vunpack.c.l.b16 %v7811
  %v10080 = vunpack.c.l.b16 %v7812
  %v10081 = vunpack.c.l.b16 %v7813
  %v10082 = vunpack.c.l.b16 %v7814
  %v10083 = vunpack.c.l.b16 %v7815
  %v10084 = vunpack.c.l.b16 %v7816
  %v10085 = vunpack.c.l.b16 %v7817
  %v10086 = vunpack.c.l.b16 %v7818
  %v10087 = vunpack.c.l.b16 %v7819
  %v10088 = vunpack.c.l.b16 %v7820
  %v10089 = vunpack.c.l.b16 %v7821
  %v10090 = vunpack.c.l.b16 %v7822
  %v10091 = vunpack.c.l.b16 %v7823
  %v10092 = vunpack.c.l.b16 %v7824
  %v10093 = vunpack.c.l.b16 %v7825
  %v10094 = vunpack.c.l.b16 %v7826
  %v10095 = vunpack.c.l.b16 %v7827
  %v10096 = vunpack.c.l.b16 %v7828
  %v10097 = vunpack.c.l.b16 %v7829
  %v10098 = vunpack.c.l.b16 %v7830
  %v10099 = vunpack.c.l.b16 %v7831
  %v10100 = vunpack.c.l.b16 %v7832
  %v10101 = vunpack.c.l.b16 %v7833
  %v10102 = vunpack.c.l.b16 %v7834
  %v10103 = vpack.c.b16 %v10040, %v10039
  %v10104 = vpack.c.b16 %v10042, %v10041
  %v10105 = vpack.c.b16 %v10044, %v10043
  %v10106 = vpack.c.b16 %v10046, %v10045
  %v10107 = vpack.c.b16 %v10048, %v10047
  %v10108 = vpack.c.b16 %v10050, %v10049
  %v10109 = vpack.c.b16 %v10052, %v10051
  %v10110 = vpack.c.b16 %v10054, %v10053
  %v10111 = vpack.c.b16 %v10056, %v10055
  %v10112 = vpack.c.b16 %v10058, %v10057
  %v10113 = vpack.c.b16 %v10060, %v10059
  %v10114 = vpack.c.b16 %v10062, %v10061
  %v10115 = vpack.c.b16 %v10064, %v10063
  %v10116 = vpack.c.b16 %v10066, %v10065
  %v10117 = vpack.c.b16 %v10068, %v10067
  %v10118 = vpack.c.b16 %v10070, %v10069
  %v10119 = vpack.c.b16 %v10072, %v10071
  %v10120 = vpack.c.b16 %v10074, %v10073
  %v10121 = vpack.c.b16 %v10076, %v10075
  %v10122 = vpack.c.b16 %v10078, %v10077
  %v10123 = vpack.c.b16 %v10080, %v10079
  %v10124 = vpack.c.b16 %v10082, %v10081
  %v10125 = vpack.c.b16 %v10084, %v10083
  %v10126 = vpack.c.b16 %v10086, %v10085
  %v10127 = vpack.c.b16 %v10088, %v10087
  %v10128 = vpack.c.b16 %v10090, %v10089
  %v10129 = vpack.c.b16 %v10092, %v10091
  %v10130 = vpack.c.b16 %v10094, %v10093
  %v10131 = vpack.c.b16 %v10096, %v10095
  %v10132 = vpack.c.b16 %v10098, %v10097
  %v10133 = vpack.c.b16 %v10100, %v10099
  %v10134 = vpack.c.b16 %v10102, %v10101
  %10167 = vmatpush.bf16.msra.mxu0 %v10110
  %10168 = vmatpush.bf16.msra.mxu0 %v10109
  %10169 = vmatpush.bf16.msra.mxu0 %v10108
  %10170 = vmatpush.bf16.msra.mxu0 %v10107
  %10171 = vmatpush.bf16.msra.mxu0 %v10106
  %10172 = vmatpush.bf16.msra.mxu0 %v10105
  %10173 = vmatpush.bf16.msra.mxu0 %v10104
  %10174 = vmatpush.bf16.msra.mxu0 %v10103
  %10175 = vmatmul.bf16.gmra.mxu0 %v9967
  %v10176 = vpop.f32.mrf.mxu0
  %v10177 = vadd.f32 0.0, %v10176
  %v10178 = vpop.f32.mrf.mxu0
  %10179 = vdwg.mxu0
  %10180 = vmatpush.bf16.msra.mxu0 %v10118
  %10181 = vmatpush.bf16.msra.mxu0 %v10117
  %10182 = vmatpush.bf16.msra.mxu0 %v10116
  %10183 = vmatpush.bf16.msra.mxu0 %v10115
  %10184 = vmatpush.bf16.msra.mxu0 %v10114
  %10185 = vmatpush.bf16.msra.mxu0 %v10113
  %10186 = vmatpush.bf16.msra.mxu0 %v10112
  %10187 = vmatpush.bf16.msra.mxu0 %v10111
  %10188 = vmatmul.bf16.gmra.mxu0 %v9968
  %v10189 = vpop.f32.mrf.mxu0
  %v10190 = vadd.f32 %v10177, %v10189
  %v10191 = vpop.f32.mrf.mxu0
  %10192 = vdwg.mxu0
  %10193 = vmatpush.bf16.msra.mxu0 %v10126
  %10194 = vmatpush.bf16.msra.mxu0 %v10125
  %10195 = vmatpush.bf16.msra.mxu0 %v10124
  %10196 = vmatpush.bf16.msra.mxu0 %v10123
  %10197 = vmatpush.bf16.msra.mxu0 %v10122
  %10198 = vmatpush.bf16.msra.mxu0 %v10121
  %10199 = vmatpush.bf16.msra.mxu0 %v10120
  %10200 = vmatpush.bf16.msra.mxu0 %v10119
  %10201 = vmatmul.bf16.gmra.mxu0 %v9969
  %v10202 = vpop.f32.mrf.mxu0
  %v10203 = vadd.f32 %v10190, %v10202
  %v10204 = vpop.f32.mrf.mxu0
  %10205 = vdwg.mxu0
  %10206 = vmatpush.bf16.msra.mxu0 %v10134
  %10207 = vmatpush.bf16.msra.mxu0 %v10133
  %10208 = vmatpush.bf16.msra.mxu0 %v10132
  %10209 = vmatpush.bf16.msra.mxu0 %v10131
  %10210 = vmatpush.bf16.msra.mxu0 %v10130
  %10211 = vmatpush.bf16.msra.mxu0 %v10129
  %10212 = vmatpush.bf16.msra.mxu0 %v10128
  %10213 = vmatpush.bf16.msra.mxu0 %v10127
  %10214 = vmatmul.bf16.gmra.mxu0 %v9970
  %v10215 = vpop.f32.mrf.mxu0
  %v10216 = vadd.f32 %v10203, %v10215
  %v10217 = vpop.f32.mrf.mxu0
  %10218 = vdwg.mxu0
  %v10221 = vunpack.c.l.b16 %v7313
  %v10222 = vunpack.c.h.b16 %v7313
  %v10223 = vunpack.c.l.b16 %v7314
  %v10224 = vunpack.c.h.b16 %v7314
  %v10225 = vpack.c.b16 %v10221, %v10221
  %v10226 = vpack.c.b16 %v10222, %v10222
  %v10227 = vpack.c.b16 %v10223, %v10223
  %v10228 = vpack.c.b16 %v10224, %v10224
  %v10297 = vunpack.c.l.b16 %v7835
  %v10298 = vunpack.c.l.b16 %v7836
  %v10299 = vunpack.c.l.b16 %v7837
  %v10300 = vunpack.c.l.b16 %v7838
  %v10301 = vunpack.c.l.b16 %v7839
  %v10302 = vunpack.c.l.b16 %v7840
  %v10303 = vunpack.c.l.b16 %v7841
  %v10304 = vunpack.c.l.b16 %v7842
  %v10305 = vunpack.c.l.b16 %v7843
  %v10306 = vunpack.c.l.b16 %v7844
  %v10307 = vunpack.c.l.b16 %v7845
  %v10308 = vunpack.c.l.b16 %v7846
  %v10309 = vunpack.c.l.b16 %v7847
  %v10310 = vunpack.c.l.b16 %v7848
  %v10311 = vunpack.c.l.b16 %v7849
  %v10312 = vunpack.c.l.b16 %v7850
  %v10313 = vunpack.c.l.b16 %v7851
  %v10314 = vunpack.c.l.b16 %v7852
  %v10315 = vunpack.c.l.b16 %v7853
  %v10316 = vunpack.c.l.b16 %v7854
  %v10317 = vunpack.c.l.b16 %v7855
  %v10318 = vunpack.c.l.b16 %v7856
  %v10319 = vunpack.c.l.b16 %v7857
  %v10320 = vunpack.c.l.b16 %v7858
  %v10321 = vunpack.c.l.b16 %v7859
  %v10322 = vunpack.c.l.b16 %v7860
  %v10323 = vunpack.c.l.b16 %v7861
  %v10324 = vunpack.c.l.b16 %v7862
  %v10325 = vunpack.c.l.b16 %v7863
  %v10326 = vunpack.c.l.b16 %v7864
  %v10327 = vunpack.c.l.b16 %v7865
  %v10328 = vunpack.c.l.b16 %v7866
  %v10329 = vunpack.c.l.b16 %v7867
  %v10330 = vunpack.c.l.b16 %v7868
  %v10331 = vunpack.c.l.b16 %v7869
  %v10332 = vunpack.c.l.b16 %v7870
  %v10333 = vunpack.c.l.b16 %v7871
  %v10334 = vunpack.c.l.b16 %v7872
  %v10335 = vunpack.c.l.b16 %v7873
  %v10336 = vunpack.c.l.b16 %v7874
  %v10337 = vunpack.c.l.b16 %v7875
  %v10338 = vunpack.c.l.b16 %v7876
  %v10339 = vunpack.c.l.b16 %v7877
  %v10340 = vunpack.c.l.b16 %v7878
  %v10341 = vunpack.c.l.b16 %v7879
  %v10342 = vunpack.c.l.b16 %v7880
  %v10343 = vunpack.c.l.b16 %v7881
  %v10344 = vunpack.c.l.b16 %v7882
  %v10345 = vunpack.c.l.b16 %v7883
  %v10346 = vunpack.c.l.b16 %v7884
  %v10347 = vunpack.c.l.b16 %v7885
  %v10348 = vunpack.c.l.b16 %v7886
  %v10349 = vunpack.c.l.b16 %v7887
  %v10350 = vunpack.c.l.b16 %v7888
  %v10351 = vunpack.c.l.b16 %v7889
  %v10352 = vunpack.c.l.b16 %v7890
  %v10353 = vunpack.c.l.b16 %v7891
  %v10354 = vunpack.c.l.b16 %v7892
  %v10355 = vunpack.c.l.b16 %v7893
  %v10356 = vunpack.c.l.b16 %v7894
  %v10357 = vunpack.c.l.b16 %v7895
  %v10358 = vunpack.c.l.b16 %v7896
  %v10359 = vunpack.c.l.b16 %v7897
  %v10360 = vunpack.c.l.b16 %v7898
  %v10361 = vpack.c.b16 %v10298, %v10297
  %v10362 = vpack.c.b16 %v10300, %v10299
  %v10363 = vpack.c.b16 %v10302, %v10301
  %v10364 = vpack.c.b16 %v10304, %v10303
  %v10365 = vpack.c.b16 %v10306, %v10305
  %v10366 = vpack.c.b16 %v10308, %v10307
  %v10367 = vpack.c.b16 %v10310, %v10309
  %v10368 = vpack.c.b16 %v10312, %v10311
  %v10369 = vpack.c.b16 %v10314, %v10313
  %v10370 = vpack.c.b16 %v10316, %v10315
  %v10371 = vpack.c.b16 %v10318, %v10317
  %v10372 = vpack.c.b16 %v10320, %v10319
  %v10373 = vpack.c.b16 %v10322, %v10321
  %v10374 = vpack.c.b16 %v10324, %v10323
  %v10375 = vpack.c.b16 %v10326, %v10325
  %v10376 = vpack.c.b16 %v10328, %v10327
  %v10377 = vpack.c.b16 %v10330, %v10329
  %v10378 = vpack.c.b16 %v10332, %v10331
  %v10379 = vpack.c.b16 %v10334, %v10333
  %v10380 = vpack.c.b16 %v10336, %v10335
  %v10381 = vpack.c.b16 %v10338, %v10337
  %v10382 = vpack.c.b16 %v10340, %v10339
  %v10383 = vpack.c.b16 %v10342, %v10341
  %v10384 = vpack.c.b16 %v10344, %v10343
  %v10385 = vpack.c.b16 %v10346, %v10345
  %v10386 = vpack.c.b16 %v10348, %v10347
  %v10387 = vpack.c.b16 %v10350, %v10349
  %v10388 = vpack.c.b16 %v10352, %v10351
  %v10389 = vpack.c.b16 %v10354, %v10353
  %v10390 = vpack.c.b16 %v10356, %v10355
  %v10391 = vpack.c.b16 %v10358, %v10357
  %v10392 = vpack.c.b16 %v10360, %v10359
  %10425 = vmatpush.bf16.msra.mxu0 %v10368
  %10426 = vmatpush.bf16.msra.mxu0 %v10367
  %10427 = vmatpush.bf16.msra.mxu0 %v10366
  %10428 = vmatpush.bf16.msra.mxu0 %v10365
  %10429 = vmatpush.bf16.msra.mxu0 %v10364
  %10430 = vmatpush.bf16.msra.mxu0 %v10363
  %10431 = vmatpush.bf16.msra.mxu0 %v10362
  %10432 = vmatpush.bf16.msra.mxu0 %v10361
  %10433 = vmatmul.bf16.gmra.mxu0 %v10225
  %v10434 = vpop.f32.mrf.mxu0
  %v10435 = vadd.f32 0.0, %v10434
  %v10436 = vpop.f32.mrf.mxu0
  %10437 = vdwg.mxu0
  %10438 = vmatpush.bf16.msra.mxu0 %v10376
  %10439 = vmatpush.bf16.msra.mxu0 %v10375
  %10440 = vmatpush.bf16.msra.mxu0 %v10374
  %10441 = vmatpush.bf16.msra.mxu0 %v10373
  %10442 = vmatpush.bf16.msra.mxu0 %v10372
  %10443 = vmatpush.bf16.msra.mxu0 %v10371
  %10444 = vmatpush.bf16.msra.mxu0 %v10370
  %10445 = vmatpush.bf16.msra.mxu0 %v10369
  %10446 = vmatmul.bf16.gmra.mxu0 %v10226
  %v10447 = vpop.f32.mrf.mxu0
  %v10448 = vadd.f32 %v10435, %v10447
  %v10449 = vpop.f32.mrf.mxu0
  %10450 = vdwg.mxu0
  %10451 = vmatpush.bf16.msra.mxu0 %v10384
  %10452 = vmatpush.bf16.msra.mxu0 %v10383
  %10453 = vmatpush.bf16.msra.mxu0 %v10382
  %10454 = vmatpush.bf16.msra.mxu0 %v10381
  %10455 = vmatpush.bf16.msra.mxu0 %v10380
  %10456 = vmatpush.bf16.msra.mxu0 %v10379
  %10457 = vmatpush.bf16.msra.mxu0 %v10378
  %10458 = vmatpush.bf16.msra.mxu0 %v10377
  %10459 = vmatmul.bf16.gmra.mxu0 %v10227
  %v10460 = vpop.f32.mrf.mxu0
  %v10461 = vadd.f32 %v10448, %v10460
  %v10462 = vpop.f32.mrf.mxu0
  %10463 = vdwg.mxu0
  %10464 = vmatpush.bf16.msra.mxu0 %v10392
  %10465 = vmatpush.bf16.msra.mxu0 %v10391
  %10466 = vmatpush.bf16.msra.mxu0 %v10390
  %10467 = vmatpush.bf16.msra.mxu0 %v10389
  %10468 = vmatpush.bf16.msra.mxu0 %v10388
  %10469 = vmatpush.bf16.msra.mxu0 %v10387
  %10470 = vmatpush.bf16.msra.mxu0 %v10386
  %10471 = vmatpush.bf16.msra.mxu0 %v10385
  %10472 = vmatmul.bf16.gmra.mxu0 %v10228
  %v10473 = vpop.f32.mrf.mxu0
  %v10474 = vadd.f32 %v10461, %v10473
  %v10475 = vpop.f32.mrf.mxu0
  %10476 = vdwg.mxu0
  %v10479 = vunpack.c.l.b16 %v7315
  %v10480 = vunpack.c.h.b16 %v7315
  %v10481 = vunpack.c.l.b16 %v7316
  %v10482 = vunpack.c.h.b16 %v7316
  %v10483 = vpack.c.b16 %v10479, %v10479
  %v10484 = vpack.c.b16 %v10480, %v10480
  %v10485 = vpack.c.b16 %v10481, %v10481
  %v10486 = vpack.c.b16 %v10482, %v10482
  %v10555 = vunpack.c.l.b16 %v7899
  %v10556 = vunpack.c.l.b16 %v7900
  %v10557 = vunpack.c.l.b16 %v7901
  %v10558 = vunpack.c.l.b16 %v7902
  %v10559 = vunpack.c.l.b16 %v7903
  %v10560 = vunpack.c.l.b16 %v7904
  %v10561 = vunpack.c.l.b16 %v7905
  %v10562 = vunpack.c.l.b16 %v7906
  %v10563 = vunpack.c.l.b16 %v7907
  %v10564 = vunpack.c.l.b16 %v7908
  %v10565 = vunpack.c.l.b16 %v7909
  %v10566 = vunpack.c.l.b16 %v7910
  %v10567 = vunpack.c.l.b16 %v7911
  %v10568 = vunpack.c.l.b16 %v7912
  %v10569 = vunpack.c.l.b16 %v7913
  %v10570 = vunpack.c.l.b16 %v7914
  %v10571 = vunpack.c.l.b16 %v7915
  %v10572 = vunpack.c.l.b16 %v7916
  %v10573 = vunpack.c.l.b16 %v7917
  %v10574 = vunpack.c.l.b16 %v7918
  %v10575 = vunpack.c.l.b16 %v7919
  %v10576 = vunpack.c.l.b16 %v7920
  %v10577 = vunpack.c.l.b16 %v7921
  %v10578 = vunpack.c.l.b16 %v7922
  %v10579 = vunpack.c.l.b16 %v7923
  %v10580 = vunpack.c.l.b16 %v7924
  %v10581 = vunpack.c.l.b16 %v7925
  %v10582 = vunpack.c.l.b16 %v7926
  %v10583 = vunpack.c.l.b16 %v7927
  %v10584 = vunpack.c.l.b16 %v7928
  %v10585 = vunpack.c.l.b16 %v7929
  %v10586 = vunpack.c.l.b16 %v7930
  %v10587 = vunpack.c.l.b16 %v7931
  %v10588 = vunpack.c.l.b16 %v7932
  %v10589 = vunpack.c.l.b16 %v7933
  %v10590 = vunpack.c.l.b16 %v7934
  %v10591 = vunpack.c.l.b16 %v7935
  %v10592 = vunpack.c.l.b16 %v7936
  %v10593 = vunpack.c.l.b16 %v7937
  %v10594 = vunpack.c.l.b16 %v7938
  %v10595 = vunpack.c.l.b16 %v7939
  %v10596 = vunpack.c.l.b16 %v7940
  %v10597 = vunpack.c.l.b16 %v7941
  %v10598 = vunpack.c.l.b16 %v7942
  %v10599 = vunpack.c.l.b16 %v7943
  %v10600 = vunpack.c.l.b16 %v7944
  %v10601 = vunpack.c.l.b16 %v7945
  %v10602 = vunpack.c.l.b16 %v7946
  %v10603 = vunpack.c.l.b16 %v7947
  %v10604 = vunpack.c.l.b16 %v7948
  %v10605 = vunpack.c.l.b16 %v7949
  %v10606 = vunpack.c.l.b16 %v7950
  %v10607 = vunpack.c.l.b16 %v7951
  %v10608 = vunpack.c.l.b16 %v7952
  %v10609 = vunpack.c.l.b16 %v7953
  %v10610 = vunpack.c.l.b16 %v7954
  %v10611 = vunpack.c.l.b16 %v7955
  %v10612 = vunpack.c.l.b16 %v7956
  %v10613 = vunpack.c.l.b16 %v7957
  %v10614 = vunpack.c.l.b16 %v7958
  %v10615 = vunpack.c.l.b16 %v7959
  %v10616 = vunpack.c.l.b16 %v7960
  %v10617 = vunpack.c.l.b16 %v7961
  %v10618 = vunpack.c.l.b16 %v7962
  %v10619 = vpack.c.b16 %v10556, %v10555
  %v10620 = vpack.c.b16 %v10558, %v10557
  %v10621 = vpack.c.b16 %v10560, %v10559
  %v10622 = vpack.c.b16 %v10562, %v10561
  %v10623 = vpack.c.b16 %v10564, %v10563
  %v10624 = vpack.c.b16 %v10566, %v10565
  %v10625 = vpack.c.b16 %v10568, %v10567
  %v10626 = vpack.c.b16 %v10570, %v10569
  %v10627 = vpack.c.b16 %v10572, %v10571
  %v10628 = vpack.c.b16 %v10574, %v10573
  %v10629 = vpack.c.b16 %v10576, %v10575
  %v10630 = vpack.c.b16 %v10578, %v10577
  %v10631 = vpack.c.b16 %v10580, %v10579
  %v10632 = vpack.c.b16 %v10582, %v10581
  %v10633 = vpack.c.b16 %v10584, %v10583
  %v10634 = vpack.c.b16 %v10586, %v10585
  %v10635 = vpack.c.b16 %v10588, %v10587
  %v10636 = vpack.c.b16 %v10590, %v10589
  %v10637 = vpack.c.b16 %v10592, %v10591
  %v10638 = vpack.c.b16 %v10594, %v10593
  %v10639 = vpack.c.b16 %v10596, %v10595
  %v10640 = vpack.c.b16 %v10598, %v10597
  %v10641 = vpack.c.b16 %v10600, %v10599
  %v10642 = vpack.c.b16 %v10602, %v10601
  %v10643 = vpack.c.b16 %v10604, %v10603
  %v10644 = vpack.c.b16 %v10606, %v10605
  %v10645 = vpack.c.b16 %v10608, %v10607
  %v10646 = vpack.c.b16 %v10610, %v10609
  %v10647 = vpack.c.b16 %v10612, %v10611
  %v10648 = vpack.c.b16 %v10614, %v10613
  %v10649 = vpack.c.b16 %v10616, %v10615
  %v10650 = vpack.c.b16 %v10618, %v10617
  %10683 = vmatpush.bf16.msra.mxu0 %v10626
  %10684 = vmatpush.bf16.msra.mxu0 %v10625
  %10685 = vmatpush.bf16.msra.mxu0 %v10624
  %10686 = vmatpush.bf16.msra.mxu0 %v10623
  %10687 = vmatpush.bf16.msra.mxu0 %v10622
  %10688 = vmatpush.bf16.msra.mxu0 %v10621
  %10689 = vmatpush.bf16.msra.mxu0 %v10620
  %10690 = vmatpush.bf16.msra.mxu0 %v10619
  %10691 = vmatmul.bf16.gmra.mxu0 %v10483
  %v10692 = vpop.f32.mrf.mxu0
  %v10693 = vadd.f32 0.0, %v10692
  %v10694 = vpop.f32.mrf.mxu0
  %10695 = vdwg.mxu0
  %10696 = vmatpush.bf16.msra.mxu0 %v10634
  %10697 = vmatpush.bf16.msra.mxu0 %v10633
  %10698 = vmatpush.bf16.msra.mxu0 %v10632
  %10699 = vmatpush.bf16.msra.mxu0 %v10631
  %10700 = vmatpush.bf16.msra.mxu0 %v10630
  %10701 = vmatpush.bf16.msra.mxu0 %v10629
  %10702 = vmatpush.bf16.msra.mxu0 %v10628
  %10703 = vmatpush.bf16.msra.mxu0 %v10627
  %10704 = vmatmul.bf16.gmra.mxu0 %v10484
  %v10705 = vpop.f32.mrf.mxu0
  %v10706 = vadd.f32 %v10693, %v10705
  %v10707 = vpop.f32.mrf.mxu0
  %10708 = vdwg.mxu0
  %10709 = vmatpush.bf16.msra.mxu0 %v10642
  %10710 = vmatpush.bf16.msra.mxu0 %v10641
  %10711 = vmatpush.bf16.msra.mxu0 %v10640
  %10712 = vmatpush.bf16.msra.mxu0 %v10639
  %10713 = vmatpush.bf16.msra.mxu0 %v10638
  %10714 = vmatpush.bf16.msra.mxu0 %v10637
  %10715 = vmatpush.bf16.msra.mxu0 %v10636
  %10716 = vmatpush.bf16.msra.mxu0 %v10635
  %10717 = vmatmul.bf16.gmra.mxu0 %v10485
  %v10718 = vpop.f32.mrf.mxu0
  %v10719 = vadd.f32 %v10706, %v10718
  %v10720 = vpop.f32.mrf.mxu0
  %10721 = vdwg.mxu0
  %10722 = vmatpush.bf16.msra.mxu0 %v10650
  %10723 = vmatpush.bf16.msra.mxu0 %v10649
  %10724 = vmatpush.bf16.msra.mxu0 %v10648
  %10725 = vmatpush.bf16.msra.mxu0 %v10647
  %10726 = vmatpush.bf16.msra.mxu0 %v10646
  %10727 = vmatpush.bf16.msra.mxu0 %v10645
  %10728 = vmatpush.bf16.msra.mxu0 %v10644
  %10729 = vmatpush.bf16.msra.mxu0 %v10643
  %10730 = vmatmul.bf16.gmra.mxu0 %v10486
  %v10731 = vpop.f32.mrf.mxu0
  %v10732 = vadd.f32 %v10719, %v10731
  %v10733 = vpop.f32.mrf.mxu0
  %10734 = vdwg.mxu0
  %v10737 = vunpack.c.l.b16 %v7317
  %v10738 = vunpack.c.h.b16 %v7317
  %v10739 = vunpack.c.l.b16 %v7318
  %v10740 = vunpack.c.h.b16 %v7318
  %v10741 = vpack.c.b16 %v10737, %v10737
  %v10742 = vpack.c.b16 %v10738, %v10738
  %v10743 = vpack.c.b16 %v10739, %v10739
  %v10744 = vpack.c.b16 %v10740, %v10740
  %v10813 = vunpack.c.l.b16 %v7963
  %v10814 = vunpack.c.l.b16 %v7964
  %v10815 = vunpack.c.l.b16 %v7965
  %v10816 = vunpack.c.l.b16 %v7966
  %v10817 = vunpack.c.l.b16 %v7967
  %v10818 = vunpack.c.l.b16 %v7968
  %v10819 = vunpack.c.l.b16 %v7969
  %v10820 = vunpack.c.l.b16 %v7970
  %v10821 = vunpack.c.l.b16 %v7971
  %v10822 = vunpack.c.l.b16 %v7972
  %v10823 = vunpack.c.l.b16 %v7973
  %v10824 = vunpack.c.l.b16 %v7974
  %v10825 = vunpack.c.l.b16 %v7975
  %v10826 = vunpack.c.l.b16 %v7976
  %v10827 = vunpack.c.l.b16 %v7977
  %v10828 = vunpack.c.l.b16 %v7978
  %v10829 = vunpack.c.l.b16 %v7979
  %v10830 = vunpack.c.l.b16 %v7980
  %v10831 = vunpack.c.l.b16 %v7981
  %v10832 = vunpack.c.l.b16 %v7982
  %v10833 = vunpack.c.l.b16 %v7983
  %v10834 = vunpack.c.l.b16 %v7984
  %v10835 = vunpack.c.l.b16 %v7985
  %v10836 = vunpack.c.l.b16 %v7986
  %v10837 = vunpack.c.l.b16 %v7987
  %v10838 = vunpack.c.l.b16 %v7988
  %v10839 = vunpack.c.l.b16 %v7989
  %v10840 = vunpack.c.l.b16 %v7990
  %v10841 = vunpack.c.l.b16 %v7991
  %v10842 = vunpack.c.l.b16 %v7992
  %v10843 = vunpack.c.l.b16 %v7993
  %v10844 = vunpack.c.l.b16 %v7994
  %v10845 = vunpack.c.l.b16 %v7995
  %v10846 = vunpack.c.l.b16 %v7996
  %v10847 = vunpack.c.l.b16 %v7997
  %v10848 = vunpack.c.l.b16 %v7998
  %v10849 = vunpack.c.l.b16 %v7999
  %v10850 = vunpack.c.l.b16 %v8000
  %v10851 = vunpack.c.l.b16 %v8001
  %v10852 = vunpack.c.l.b16 %v8002
  %v10853 = vunpack.c.l.b16 %v8003
  %v10854 = vunpack.c.l.b16 %v8004
  %v10855 = vunpack.c.l.b16 %v8005
  %v10856 = vunpack.c.l.b16 %v8006
  %v10857 = vunpack.c.l.b16 %v8007
  %v10858 = vunpack.c.l.b16 %v8008
  %v10859 = vunpack.c.l.b16 %v8009
  %v10860 = vunpack.c.l.b16 %v8010
  %v10861 = vunpack.c.l.b16 %v8011
  %v10862 = vunpack.c.l.b16 %v8012
  %v10863 = vunpack.c.l.b16 %v8013
  %v10864 = vunpack.c.l.b16 %v8014
  %v10865 = vunpack.c.l.b16 %v8015
  %v10866 = vunpack.c.l.b16 %v8016
  %v10867 = vunpack.c.l.b16 %v8017
  %v10868 = vunpack.c.l.b16 %v8018
  %v10869 = vunpack.c.l.b16 %v8019
  %v10870 = vunpack.c.l.b16 %v8020
  %v10871 = vunpack.c.l.b16 %v8021
  %v10872 = vunpack.c.l.b16 %v8022
  %v10873 = vunpack.c.l.b16 %v8023
  %v10874 = vunpack.c.l.b16 %v8024
  %v10875 = vunpack.c.l.b16 %v8025
  %v10876 = vunpack.c.l.b16 %v8026
  %v10877 = vpack.c.b16 %v10814, %v10813
  %v10878 = vpack.c.b16 %v10816, %v10815
  %v10879 = vpack.c.b16 %v10818, %v10817
  %v10880 = vpack.c.b16 %v10820, %v10819
  %v10881 = vpack.c.b16 %v10822, %v10821
  %v10882 = vpack.c.b16 %v10824, %v10823
  %v10883 = vpack.c.b16 %v10826, %v10825
  %v10884 = vpack.c.b16 %v10828, %v10827
  %v10885 = vpack.c.b16 %v10830, %v10829
  %v10886 = vpack.c.b16 %v10832, %v10831
  %v10887 = vpack.c.b16 %v10834, %v10833
  %v10888 = vpack.c.b16 %v10836, %v10835
  %v10889 = vpack.c.b16 %v10838, %v10837
  %v10890 = vpack.c.b16 %v10840, %v10839
  %v10891 = vpack.c.b16 %v10842, %v10841
  %v10892 = vpack.c.b16 %v10844, %v10843
  %v10893 = vpack.c.b16 %v10846, %v10845
  %v10894 = vpack.c.b16 %v10848, %v10847
  %v10895 = vpack.c.b16 %v10850, %v10849
  %v10896 = vpack.c.b16 %v10852, %v10851
  %v10897 = vpack.c.b16 %v10854, %v10853
  %v10898 = vpack.c.b16 %v10856, %v10855
  %v10899 = vpack.c.b16 %v10858, %v10857
  %v10900 = vpack.c.b16 %v10860, %v10859
  %v10901 = vpack.c.b16 %v10862, %v10861
  %v10902 = vpack.c.b16 %v10864, %v10863
  %v10903 = vpack.c.b16 %v10866, %v10865
  %v10904 = vpack.c.b16 %v10868, %v10867
  %v10905 = vpack.c.b16 %v10870, %v10869
  %v10906 = vpack.c.b16 %v10872, %v10871
  %v10907 = vpack.c.b16 %v10874, %v10873
  %v10908 = vpack.c.b16 %v10876, %v10875
  %10941 = vmatpush.bf16.msra.mxu0 %v10884
  %10942 = vmatpush.bf16.msra.mxu0 %v10883
  %10943 = vmatpush.bf16.msra.mxu0 %v10882
  %10944 = vmatpush.bf16.msra.mxu0 %v10881
  %10945 = vmatpush.bf16.msra.mxu0 %v10880
  %10946 = vmatpush.bf16.msra.mxu0 %v10879
  %10947 = vmatpush.bf16.msra.mxu0 %v10878
  %10948 = vmatpush.bf16.msra.mxu0 %v10877
  %10949 = vmatmul.bf16.gmra.mxu0 %v10741
  %v10950 = vpop.f32.mrf.mxu0
  %v10951 = vadd.f32 0.0, %v10950
  %v10952 = vpop.f32.mrf.mxu0
  %10953 = vdwg.mxu0
  %10954 = vmatpush.bf16.msra.mxu0 %v10892
  %10955 = vmatpush.bf16.msra.mxu0 %v10891
  %10956 = vmatpush.bf16.msra.mxu0 %v10890
  %10957 = vmatpush.bf16.msra.mxu0 %v10889
  %10958 = vmatpush.bf16.msra.mxu0 %v10888
  %10959 = vmatpush.bf16.msra.mxu0 %v10887
  %10960 = vmatpush.bf16.msra.mxu0 %v10886
  %10961 = vmatpush.bf16.msra.mxu0 %v10885
  %10962 = vmatmul.bf16.gmra.mxu0 %v10742
  %v10963 = vpop.f32.mrf.mxu0
  %v10964 = vadd.f32 %v10951, %v10963
  %v10965 = vpop.f32.mrf.mxu0
  %10966 = vdwg.mxu0
  %10967 = vmatpush.bf16.msra.mxu0 %v10900
  %10968 = vmatpush.bf16.msra.mxu0 %v10899
  %10969 = vmatpush.bf16.msra.mxu0 %v10898
  %10970 = vmatpush.bf16.msra.mxu0 %v10897
  %10971 = vmatpush.bf16.msra.mxu0 %v10896
  %10972 = vmatpush.bf16.msra.mxu0 %v10895
  %10973 = vmatpush.bf16.msra.mxu0 %v10894
  %10974 = vmatpush.bf16.msra.mxu0 %v10893
  %10975 = vmatmul.bf16.gmra.mxu0 %v10743
  %v10976 = vpop.f32.mrf.mxu0
  %v10977 = vadd.f32 %v10964, %v10976
  %v10978 = vpop.f32.mrf.mxu0
  %10979 = vdwg.mxu0
  %10980 = vmatpush.bf16.msra.mxu0 %v10908
  %10981 = vmatpush.bf16.msra.mxu0 %v10907
  %10982 = vmatpush.bf16.msra.mxu0 %v10906
  %10983 = vmatpush.bf16.msra.mxu0 %v10905
  %10984 = vmatpush.bf16.msra.mxu0 %v10904
  %10985 = vmatpush.bf16.msra.mxu0 %v10903
  %10986 = vmatpush.bf16.msra.mxu0 %v10902
  %10987 = vmatpush.bf16.msra.mxu0 %v10901
  %10988 = vmatmul.bf16.gmra.mxu0 %v10744
  %v10989 = vpop.f32.mrf.mxu0
  %v10990 = vadd.f32 %v10977, %v10989
  %v10991 = vpop.f32.mrf.mxu0
  %10992 = vdwg.mxu0
  %v10995 = vunpack.c.l.b16 %v7319
  %v10996 = vunpack.c.h.b16 %v7319
  %v10997 = vunpack.c.l.b16 %v7320
  %v10998 = vunpack.c.h.b16 %v7320
  %v10999 = vpack.c.b16 %v10995, %v10995
  %v11000 = vpack.c.b16 %v10996, %v10996
  %v11001 = vpack.c.b16 %v10997, %v10997
  %v11002 = vpack.c.b16 %v10998, %v10998
  %v11071 = vunpack.c.l.b16 %v8027
  %v11072 = vunpack.c.l.b16 %v8028
  %v11073 = vunpack.c.l.b16 %v8029
  %v11074 = vunpack.c.l.b16 %v8030
  %v11075 = vunpack.c.l.b16 %v8031
  %v11076 = vunpack.c.l.b16 %v8032
  %v11077 = vunpack.c.l.b16 %v8033
  %v11078 = vunpack.c.l.b16 %v8034
  %v11079 = vunpack.c.l.b16 %v8035
  %v11080 = vunpack.c.l.b16 %v8036
  %v11081 = vunpack.c.l.b16 %v8037
  %v11082 = vunpack.c.l.b16 %v8038
  %v11083 = vunpack.c.l.b16 %v8039
  %v11084 = vunpack.c.l.b16 %v8040
  %v11085 = vunpack.c.l.b16 %v8041
  %v11086 = vunpack.c.l.b16 %v8042
  %v11087 = vunpack.c.l.b16 %v8043
  %v11088 = vunpack.c.l.b16 %v8044
  %v11089 = vunpack.c.l.b16 %v8045
  %v11090 = vunpack.c.l.b16 %v8046
  %v11091 = vunpack.c.l.b16 %v8047
  %v11092 = vunpack.c.l.b16 %v8048
  %v11093 = vunpack.c.l.b16 %v8049
  %v11094 = vunpack.c.l.b16 %v8050
  %v11095 = vunpack.c.l.b16 %v8051
  %v11096 = vunpack.c.l.b16 %v8052
  %v11097 = vunpack.c.l.b16 %v8053
  %v11098 = vunpack.c.l.b16 %v8054
  %v11099 = vunpack.c.l.b16 %v8055
  %v11100 = vunpack.c.l.b16 %v8056
  %v11101 = vunpack.c.l.b16 %v8057
  %v11102 = vunpack.c.l.b16 %v8058
  %v11103 = vunpack.c.l.b16 %v8059
  %v11104 = vunpack.c.l.b16 %v8060
  %v11105 = vunpack.c.l.b16 %v8061
  %v11106 = vunpack.c.l.b16 %v8062
  %v11107 = vunpack.c.l.b16 %v8063
  %v11108 = vunpack.c.l.b16 %v8064
  %v11109 = vunpack.c.l.b16 %v8065
  %v11110 = vunpack.c.l.b16 %v8066
  %v11111 = vunpack.c.l.b16 %v8067
  %v11112 = vunpack.c.l.b16 %v8068
  %v11113 = vunpack.c.l.b16 %v8069
  %v11114 = vunpack.c.l.b16 %v8070
  %v11115 = vunpack.c.l.b16 %v8071
  %v11116 = vunpack.c.l.b16 %v8072
  %v11117 = vunpack.c.l.b16 %v8073
  %v11118 = vunpack.c.l.b16 %v8074
  %v11119 = vunpack.c.l.b16 %v8075
  %v11120 = vunpack.c.l.b16 %v8076
  %v11121 = vunpack.c.l.b16 %v8077
  %v11122 = vunpack.c.l.b16 %v8078
  %v11123 = vunpack.c.l.b16 %v8079
  %v11124 = vunpack.c.l.b16 %v8080
  %v11125 = vunpack.c.l.b16 %v8081
  %v11126 = vunpack.c.l.b16 %v8082
  %v11127 = vunpack.c.l.b16 %v8083
  %v11128 = vunpack.c.l.b16 %v8084
  %v11129 = vunpack.c.l.b16 %v8085
  %v11130 = vunpack.c.l.b16 %v8086
  %v11131 = vunpack.c.l.b16 %v8087
  %v11132 = vunpack.c.l.b16 %v8088
  %v11133 = vunpack.c.l.b16 %v8089
  %v11134 = vunpack.c.l.b16 %v8090
  %v11135 = vpack.c.b16 %v11072, %v11071
  %v11136 = vpack.c.b16 %v11074, %v11073
  %v11137 = vpack.c.b16 %v11076, %v11075
  %v11138 = vpack.c.b16 %v11078, %v11077
  %v11139 = vpack.c.b16 %v11080, %v11079
  %v11140 = vpack.c.b16 %v11082, %v11081
  %v11141 = vpack.c.b16 %v11084, %v11083
  %v11142 = vpack.c.b16 %v11086, %v11085
  %v11143 = vpack.c.b16 %v11088, %v11087
  %v11144 = vpack.c.b16 %v11090, %v11089
  %v11145 = vpack.c.b16 %v11092, %v11091
  %v11146 = vpack.c.b16 %v11094, %v11093
  %v11147 = vpack.c.b16 %v11096, %v11095
  %v11148 = vpack.c.b16 %v11098, %v11097
  %v11149 = vpack.c.b16 %v11100, %v11099
  %v11150 = vpack.c.b16 %v11102, %v11101
  %v11151 = vpack.c.b16 %v11104, %v11103
  %v11152 = vpack.c.b16 %v11106, %v11105
  %v11153 = vpack.c.b16 %v11108, %v11107
  %v11154 = vpack.c.b16 %v11110, %v11109
  %v11155 = vpack.c.b16 %v11112, %v11111
  %v11156 = vpack.c.b16 %v11114, %v11113
  %v11157 = vpack.c.b16 %v11116, %v11115
  %v11158 = vpack.c.b16 %v11118, %v11117
  %v11159 = vpack.c.b16 %v11120, %v11119
  %v11160 = vpack.c.b16 %v11122, %v11121
  %v11161 = vpack.c.b16 %v11124, %v11123
  %v11162 = vpack.c.b16 %v11126, %v11125
  %v11163 = vpack.c.b16 %v11128, %v11127
  %v11164 = vpack.c.b16 %v11130, %v11129
  %v11165 = vpack.c.b16 %v11132, %v11131
  %v11166 = vpack.c.b16 %v11134, %v11133
  %11199 = vmatpush.bf16.msra.mxu0 %v11142
  %11200 = vmatpush.bf16.msra.mxu0 %v11141
  %11201 = vmatpush.bf16.msra.mxu0 %v11140
  %11202 = vmatpush.bf16.msra.mxu0 %v11139
  %11203 = vmatpush.bf16.msra.mxu0 %v11138
  %11204 = vmatpush.bf16.msra.mxu0 %v11137
  %11205 = vmatpush.bf16.msra.mxu0 %v11136
  %11206 = vmatpush.bf16.msra.mxu0 %v11135
  %11207 = vmatmul.bf16.gmra.mxu0 %v10999
  %v11208 = vpop.f32.mrf.mxu0
  %v11209 = vadd.f32 0.0, %v11208
  %v11210 = vpop.f32.mrf.mxu0
  %11211 = vdwg.mxu0
  %11212 = vmatpush.bf16.msra.mxu0 %v11150
  %11213 = vmatpush.bf16.msra.mxu0 %v11149
  %11214 = vmatpush.bf16.msra.mxu0 %v11148
  %11215 = vmatpush.bf16.msra.mxu0 %v11147
  %11216 = vmatpush.bf16.msra.mxu0 %v11146
  %11217 = vmatpush.bf16.msra.mxu0 %v11145
  %11218 = vmatpush.bf16.msra.mxu0 %v11144
  %11219 = vmatpush.bf16.msra.mxu0 %v11143
  %11220 = vmatmul.bf16.gmra.mxu0 %v11000
  %v11221 = vpop.f32.mrf.mxu0
  %v11222 = vadd.f32 %v11209, %v11221
  %v11223 = vpop.f32.mrf.mxu0
  %11224 = vdwg.mxu0
  %11225 = vmatpush.bf16.msra.mxu0 %v11158
  %11226 = vmatpush.bf16.msra.mxu0 %v11157
  %11227 = vmatpush.bf16.msra.mxu0 %v11156
  %11228 = vmatpush.bf16.msra.mxu0 %v11155
  %11229 = vmatpush.bf16.msra.mxu0 %v11154
  %11230 = vmatpush.bf16.msra.mxu0 %v11153
  %11231 = vmatpush.bf16.msra.mxu0 %v11152
  %11232 = vmatpush.bf16.msra.mxu0 %v11151
  %11233 = vmatmul.bf16.gmra.mxu0 %v11001
  %v11234 = vpop.f32.mrf.mxu0
  %v11235 = vadd.f32 %v11222, %v11234
  %v11236 = vpop.f32.mrf.mxu0
  %11237 = vdwg.mxu0
  %11238 = vmatpush.bf16.msra.mxu0 %v11166
  %11239 = vmatpush.bf16.msra.mxu0 %v11165
  %11240 = vmatpush.bf16.msra.mxu0 %v11164
  %11241 = vmatpush.bf16.msra.mxu0 %v11163
  %11242 = vmatpush.bf16.msra.mxu0 %v11162
  %11243 = vmatpush.bf16.msra.mxu0 %v11161
  %11244 = vmatpush.bf16.msra.mxu0 %v11160
  %11245 = vmatpush.bf16.msra.mxu0 %v11159
  %11246 = vmatmul.bf16.gmra.mxu0 %v11002
  %v11247 = vpop.f32.mrf.mxu0
  %v11248 = vadd.f32 %v11235, %v11247
  %v11249 = vpop.f32.mrf.mxu0
  %11250 = vdwg.mxu0
  %v11253 = vunpack.c.l.b16 %v7321
  %v11254 = vunpack.c.h.b16 %v7321
  %v11255 = vunpack.c.l.b16 %v7322
  %v11256 = vunpack.c.h.b16 %v7322
  %v11257 = vpack.c.b16 %v11253, %v11253
  %v11258 = vpack.c.b16 %v11254, %v11254
  %v11259 = vpack.c.b16 %v11255, %v11255
  %v11260 = vpack.c.b16 %v11256, %v11256
  %v11329 = vunpack.c.l.b16 %v8091
  %v11330 = vunpack.c.l.b16 %v8092
  %v11331 = vunpack.c.l.b16 %v8093
  %v11332 = vunpack.c.l.b16 %v8094
  %v11333 = vunpack.c.l.b16 %v8095
  %v11334 = vunpack.c.l.b16 %v8096
  %v11335 = vunpack.c.l.b16 %v8097
  %v11336 = vunpack.c.l.b16 %v8098
  %v11337 = vunpack.c.l.b16 %v8099
  %v11338 = vunpack.c.l.b16 %v8100
  %v11339 = vunpack.c.l.b16 %v8101
  %v11340 = vunpack.c.l.b16 %v8102
  %v11341 = vunpack.c.l.b16 %v8103
  %v11342 = vunpack.c.l.b16 %v8104
  %v11343 = vunpack.c.l.b16 %v8105
  %v11344 = vunpack.c.l.b16 %v8106
  %v11345 = vunpack.c.l.b16 %v8107
  %v11346 = vunpack.c.l.b16 %v8108
  %v11347 = vunpack.c.l.b16 %v8109
  %v11348 = vunpack.c.l.b16 %v8110
  %v11349 = vunpack.c.l.b16 %v8111
  %v11350 = vunpack.c.l.b16 %v8112
  %v11351 = vunpack.c.l.b16 %v8113
  %v11352 = vunpack.c.l.b16 %v8114
  %v11353 = vunpack.c.l.b16 %v8115
  %v11354 = vunpack.c.l.b16 %v8116
  %v11355 = vunpack.c.l.b16 %v8117
  %v11356 = vunpack.c.l.b16 %v8118
  %v11357 = vunpack.c.l.b16 %v8119
  %v11358 = vunpack.c.l.b16 %v8120
  %v11359 = vunpack.c.l.b16 %v8121
  %v11360 = vunpack.c.l.b16 %v8122
  %v11361 = vunpack.c.l.b16 %v8123
  %v11362 = vunpack.c.l.b16 %v8124
  %v11363 = vunpack.c.l.b16 %v8125
  %v11364 = vunpack.c.l.b16 %v8126
  %v11365 = vunpack.c.l.b16 %v8127
  %v11366 = vunpack.c.l.b16 %v8128
  %v11367 = vunpack.c.l.b16 %v8129
  %v11368 = vunpack.c.l.b16 %v8130
  %v11369 = vunpack.c.l.b16 %v8131
  %v11370 = vunpack.c.l.b16 %v8132
  %v11371 = vunpack.c.l.b16 %v8133
  %v11372 = vunpack.c.l.b16 %v8134
  %v11373 = vunpack.c.l.b16 %v8135
  %v11374 = vunpack.c.l.b16 %v8136
  %v11375 = vunpack.c.l.b16 %v8137
  %v11376 = vunpack.c.l.b16 %v8138
  %v11377 = vunpack.c.l.b16 %v8139
  %v11378 = vunpack.c.l.b16 %v8140
  %v11379 = vunpack.c.l.b16 %v8141
  %v11380 = vunpack.c.l.b16 %v8142
  %v11381 = vunpack.c.l.b16 %v8143
  %v11382 = vunpack.c.l.b16 %v8144
  %v11383 = vunpack.c.l.b16 %v8145
  %v11384 = vunpack.c.l.b16 %v8146
  %v11385 = vunpack.c.l.b16 %v8147
  %v11386 = vunpack.c.l.b16 %v8148
  %v11387 = vunpack.c.l.b16 %v8149
  %v11388 = vunpack.c.l.b16 %v8150
  %v11389 = vunpack.c.l.b16 %v8151
  %v11390 = vunpack.c.l.b16 %v8152
  %v11391 = vunpack.c.l.b16 %v8153
  %v11392 = vunpack.c.l.b16 %v8154
  %v11393 = vpack.c.b16 %v11330, %v11329
  %v11394 = vpack.c.b16 %v11332, %v11331
  %v11395 = vpack.c.b16 %v11334, %v11333
  %v11396 = vpack.c.b16 %v11336, %v11335
  %v11397 = vpack.c.b16 %v11338, %v11337
  %v11398 = vpack.c.b16 %v11340, %v11339
  %v11399 = vpack.c.b16 %v11342, %v11341
  %v11400 = vpack.c.b16 %v11344, %v11343
  %v11401 = vpack.c.b16 %v11346, %v11345
  %v11402 = vpack.c.b16 %v11348, %v11347
  %v11403 = vpack.c.b16 %v11350, %v11349
  %v11404 = vpack.c.b16 %v11352, %v11351
  %v11405 = vpack.c.b16 %v11354, %v11353
  %v11406 = vpack.c.b16 %v11356, %v11355
  %v11407 = vpack.c.b16 %v11358, %v11357
  %v11408 = vpack.c.b16 %v11360, %v11359
  %v11409 = vpack.c.b16 %v11362, %v11361
  %v11410 = vpack.c.b16 %v11364, %v11363
  %v11411 = vpack.c.b16 %v11366, %v11365
  %v11412 = vpack.c.b16 %v11368, %v11367
  %v11413 = vpack.c.b16 %v11370, %v11369
  %v11414 = vpack.c.b16 %v11372, %v11371
  %v11415 = vpack.c.b16 %v11374, %v11373
  %v11416 = vpack.c.b16 %v11376, %v11375
  %v11417 = vpack.c.b16 %v11378, %v11377
  %v11418 = vpack.c.b16 %v11380, %v11379
  %v11419 = vpack.c.b16 %v11382, %v11381
  %v11420 = vpack.c.b16 %v11384, %v11383
  %v11421 = vpack.c.b16 %v11386, %v11385
  %v11422 = vpack.c.b16 %v11388, %v11387
  %v11423 = vpack.c.b16 %v11390, %v11389
  %v11424 = vpack.c.b16 %v11392, %v11391
  %11457 = vmatpush.bf16.msra.mxu0 %v11400
  %11458 = vmatpush.bf16.msra.mxu0 %v11399
  %11459 = vmatpush.bf16.msra.mxu0 %v11398
  %11460 = vmatpush.bf16.msra.mxu0 %v11397
  %11461 = vmatpush.bf16.msra.mxu0 %v11396
  %11462 = vmatpush.bf16.msra.mxu0 %v11395
  %11463 = vmatpush.bf16.msra.mxu0 %v11394
  %11464 = vmatpush.bf16.msra.mxu0 %v11393
  %11465 = vmatmul.bf16.gmra.mxu0 %v11257
  %v11466 = vpop.f32.mrf.mxu0
  %v11467 = vadd.f32 0.0, %v11466
  %v11468 = vpop.f32.mrf.mxu0
  %11469 = vdwg.mxu0
  %11470 = vmatpush.bf16.msra.mxu0 %v11408
  %11471 = vmatpush.bf16.msra.mxu0 %v11407
  %11472 = vmatpush.bf16.msra.mxu0 %v11406
  %11473 = vmatpush.bf16.msra.mxu0 %v11405
  %11474 = vmatpush.bf16.msra.mxu0 %v11404
  %11475 = vmatpush.bf16.msra.mxu0 %v11403
  %11476 = vmatpush.bf16.msra.mxu0 %v11402
  %11477 = vmatpush.bf16.msra.mxu0 %v11401
  %11478 = vmatmul.bf16.gmra.mxu0 %v11258
  %v11479 = vpop.f32.mrf.mxu0
  %v11480 = vadd.f32 %v11467, %v11479
  %v11481 = vpop.f32.mrf.mxu0
  %11482 = vdwg.mxu0
  %11483 = vmatpush.bf16.msra.mxu0 %v11416
  %11484 = vmatpush.bf16.msra.mxu0 %v11415
  %11485 = vmatpush.bf16.msra.mxu0 %v11414
  %11486 = vmatpush.bf16.msra.mxu0 %v11413
  %11487 = vmatpush.bf16.msra.mxu0 %v11412
  %11488 = vmatpush.bf16.msra.mxu0 %v11411
  %11489 = vmatpush.bf16.msra.mxu0 %v11410
  %11490 = vmatpush.bf16.msra.mxu0 %v11409
  %11491 = vmatmul.bf16.gmra.mxu0 %v11259
  %v11492 = vpop.f32.mrf.mxu0
  %v11493 = vadd.f32 %v11480, %v11492
  %v11494 = vpop.f32.mrf.mxu0
  %11495 = vdwg.mxu0
  %11496 = vmatpush.bf16.msra.mxu0 %v11424
  %11497 = vmatpush.bf16.msra.mxu0 %v11423
  %11498 = vmatpush.bf16.msra.mxu0 %v11422
  %11499 = vmatpush.bf16.msra.mxu0 %v11421
  %11500 = vmatpush.bf16.msra.mxu0 %v11420
  %11501 = vmatpush.bf16.msra.mxu0 %v11419
  %11502 = vmatpush.bf16.msra.mxu0 %v11418
  %11503 = vmatpush.bf16.msra.mxu0 %v11417
  %11504 = vmatmul.bf16.gmra.mxu0 %v11260
  %v11505 = vpop.f32.mrf.mxu0
  %v11506 = vadd.f32 %v11493, %v11505
  %v11507 = vpop.f32.mrf.mxu0
  %11508 = vdwg.mxu0
  %v11509 = vadd.f32 %v8410, %v8668
  %v11510 = vadd.f32 %v11509, %v8926
  %v11511 = vadd.f32 %v11510, %v9184
  %v11512 = vadd.f32 %v11511, %v9442
  %v11513 = vadd.f32 %v11512, %v9700
  %v11514 = vadd.f32 %v11513, %v9958
  %v11515 = vadd.f32 %v11514, %v10216
  %v11516 = vadd.f32 %v11515, %v10474
  %v11517 = vadd.f32 %v11516, %v10732
  %v11518 = vadd.f32 %v11517, %v10990
  %v11519 = vadd.f32 %v11518, %v11248
  %v11520 = vadd.f32 %v11519, %v11506
  %v11521 = vld [vmem:[%s4] sm:$0x1]
  %v11523 = vperm.slane %v11521, 0
  %v11525 = vadd.f32 %v11520, %v11523
  %11526 = vst [vmem:[%s5] sm:$0xff] %v11525
  // Predicated region
  $region22: #{vanilla_cnn_forward.1} parent=0 // pred_check
    _
  $region23: #{vanilla_cnn_forward.1} parent=0 // pred_check_branch
    %11528 = sbr.rel (0) target = $region25
  $region24: #{vanilla_cnn_forward.1} parent=0 // pred_region
    _
  $region25: #{vanilla_cnn_forward.1} parent=0 // pred_fallthru
    _
  // Predicated region
  $region26: #{vanilla_cnn_forward.1} parent=0 // pred_check
    _
  $region27: #{vanilla_cnn_forward.1} parent=0 // pred_check_branch
    %11530 = sbr.rel (0) target = $region29
  $region28: #{vanilla_cnn_forward.1} parent=0 // pred_region
    _
  $region29: #{vanilla_cnn_forward.1} parent=0 // pred_fallthru
    _

</llo_original>
